<compile_context>
chip_gen: v5e
topology: v5e:2x2
jax: 0.10.0
libtpu: 0.0.40
codegen_flags: <defaults>
</compile_context>

<pallas_src>
import functools
import math

import jax
import jax.numpy as jnp
from jax.experimental import pallas as pl
from jax.experimental.pallas import tpu as pltpu


MATMUL_DTYPE = jnp.bfloat16   # MXU operand dtype
ACT_DTYPE = jnp.bfloat16      # intermediate activation storage dtype


# ----------------------------------------------------------------------------
# Pallas kernel: lane-dense transposed matmul
#   O[N, M] = W[N, K] @ X[K, M] + b[N, 1]   (optional fused ReLU)
# N = Cout (small, sublane axis), M = Nb*H*W (large, lane axis), K reduction
# tiled over the last grid axis with an f32 VMEM accumulator (P3 pattern).
# ----------------------------------------------------------------------------
def _mm_t_kernel(w_ref, x_ref, b_ref, o_ref, acc_ref, *, relu):
    @pl.when(pl.program_id(2) == 0)
    def _():
        acc_ref[...] = jnp.zeros_like(acc_ref)

    acc_ref[...] += jnp.dot(w_ref[...], x_ref[...],
                            preferred_element_type=jnp.float32)

    @pl.when(pl.program_id(2) == pl.num_programs(2) - 1)
    def _():
        # Epilogue stays in f32 (v5e has no bf16 VPU path); store in o_ref dtype.
        y = acc_ref[...] + b_ref[...]          # (tn, tm) + (tn, 1) lane-broadcast
        if relu:
            y = jnp.maximum(y, 0.0)
        o_ref[...] = y.astype(o_ref.dtype)


def _round_up(x, m):
    return ((x + m - 1) // m) * m


@functools.lru_cache(maxsize=None)
def _chip_config():
    """Per-generation tile table (review: smaller M tiles on v7x for 2-TC
    parallelism; bigger tiles on v5e/v6e which have 128 MiB physical VMEM)."""
    kind = ""
    try:
        kind = jax.devices()[0].device_kind.lower()
    except Exception:  # pragma: no cover - defensive; fall through to default
        pass
    if "v5" in kind:
        # v5e: 4x128x128 MXU, 1 vst slot, 128 MiB VMEM, lowest HBM BW.
        return dict(m_tile=1024, m_cap=1024, k_tile=512, k_cap=2048,
                    n_tile=128, n_cap=256, vmem_ceiling=96 << 20)
    if "v6" in kind:
        # v6e: 2x256x256 MXU, 128 MiB VMEM.
        return dict(m_tile=1024, m_cap=1024, k_tile=1024, k_cap=2048,
                    n_tile=128, n_cap=256, vmem_ceiling=96 << 20)
    # v7x / unknown: 64 MiB VMEM, 2 TensorCores -> smaller M tiles so the
    # 'parallel' M axis splits into >=2 blocks whenever M >= 512.
    return dict(m_tile=256, m_cap=256, k_tile=512, k_cap=2048,
                n_tile=128, n_cap=256, vmem_ceiling=40 << 20)


def _block(dim, full_cap, tile):
    """Small dim -> full-extent block (no padding, no divisibility constraint).
    Large dim -> tile; pad up only if the tile doesn't divide (never on the
    power-of-two hot path of this net)."""
    if dim <= full_cap:
        return dim, dim
    return tile, _round_up(dim, tile)


def _vmem_limit_bytes(tn, tm, tk, n_buf, out_itemsize, ceiling):
    """Derive the scoped-VMEM budget from the actual block working set."""
    per_buf = tk * tm * 2 + tn * tk * 2 + tn * 4        # x + w (bf16) + b (f32)
    fixed = 2 * tn * tm * out_itemsize + tn * tm * 4    # out (double-buf) + acc
    need = n_buf * per_buf + fixed
    need = int(need * 1.5) + (8 << 20)                  # headroom for glue/scratch
    return max(16 << 20, min(need, ceiling))


def pallas_matmul_t(w, x, b, *, relu, out_dtype=ACT_DTYPE):
    """w: (N, K), x: (K, M), b: (N,) or (N, 1)  ->  (N, M) = w @ x + b."""
    N, K = w.shape
    K2, M = x.shape
    assert K == K2, (K, K2)

    cfg = _chip_config()
    w = w.astype(MATMUL_DTYPE)
    x = x.astype(MATMUL_DTYPE)
    b = b.reshape(N, 1).astype(jnp.float32)

    tn, Np = _block(N, cfg["n_cap"], cfg["n_tile"])
    tk, Kp = _block(K, cfg["k_cap"], cfg["k_tile"])
    tm, Mp = _block(M, cfg["m_cap"], cfg["m_tile"])

    # Padding only triggers when a tiled dim isn't an exact multiple; zero-fill
    # keeps the accumulation/bias on padded rows/cols harmless (sliced away).
    if Np != N:
        w = jnp.pad(w, ((0, Np - N), (0, 0)))
        b = jnp.pad(b, ((0, Np - N), (0, 0)))
    if Kp != K:
        w = jnp.pad(w, ((0, 0), (0, Kp - K)))
        x = jnp.pad(x, ((0, Kp - K), (0, 0)))
    if Mp != M:
        x = jnp.pad(x, ((0, 0), (0, Mp - M)))

    grid = (Np // tn, Mp // tm, Kp // tk)
    k_steps = grid[2]

    # Triple-buffer the streamed operands when the K reduction is deep enough
    # for DMA to be exposed (thin-N layers have low arithmetic intensity).
    stream_kwargs = dict(pipeline_mode=pl.Buffered(3)) if k_steps > 2 else {}
    n_buf = 3 if k_steps > 2 else 2

    vmem_limit = _vmem_limit_bytes(tn, tm, tk, n_buf,
                                   jnp.dtype(out_dtype).itemsize,
                                   cfg["vmem_ceiling"])

    out = pl.pallas_call(
        functools.partial(_mm_t_kernel, relu=relu),
        out_shape=jax.ShapeDtypeStruct((Np, Mp), out_dtype),
        grid=grid,
        in_specs=[
            pl.BlockSpec((tn, tk), lambda n, m, k: (n, k), **stream_kwargs),
            pl.BlockSpec((tk, tm), lambda n, m, k: (k, m), **stream_kwargs),
            pl.BlockSpec((tn, 1), lambda n, m, k: (n, 0)),
        ],
        out_specs=pl.BlockSpec((tn, tm), lambda n, m, k: (n, m)),
        scratch_shapes=[pltpu.VMEM((tn, tm), jnp.float32)],
        compiler_params=pltpu.CompilerParams(
            # N and M are independent ('parallel', sharded across TCs on v7x);
            # K is the reduction and stays last / 'arbitrary'.
            dimension_semantics=("parallel", "parallel", "arbitrary"),
            vmem_limit_bytes=vmem_limit,
        ),
    )(w, x, b)

    if (Np, Mp) != (N, M):
        out = out[:N, :M]
    return out


# ----------------------------------------------------------------------------
# Conv / pool primitives (channel-major activations: (C, Nb, H, W)).
# ----------------------------------------------------------------------------
def conv3x3(x, p, *, relu=True, out_dtype=ACT_DTYPE):
    """3x3 conv, stride 1, same padding.  p['w']: (Cout, 9*Cin), p['b']: (Cout, 1)."""
    C, Nb, H, W = x.shape
    cout = p["w"].shape[0]
    xp = jnp.pad(x, ((0, 0), (0, 0), (1, 1), (1, 1)))
    # TODO(synk): fuse this im2col into the Pallas kernel (K grid axis over the
    # 9 taps with element-offset index_maps over xp) to drop the 9x HBM read
    # amplification; kept in XLA for robustness at 1x1..16x16 spatial sizes.
    cols = [xp[:, :, di:di + H, dj:dj + W] for di in range(3) for dj in range(3)]
    patches = jnp.concatenate(cols, axis=0).reshape(9 * C, Nb * H * W)
    y = pallas_matmul_t(p["w"], patches, p["b"], relu=relu, out_dtype=out_dtype)
    return y.reshape(cout, Nb, H, W)


def conv1x1(x, p, *, relu=False, out_dtype=ACT_DTYPE):
    C, Nb, H, W = x.shape
    cout = p["w"].shape[0]
    y = pallas_matmul_t(p["w"], x.reshape(C, Nb * H * W), p["b"],
                        relu=relu, out_dtype=out_dtype)
    return y.reshape(cout, Nb, H, W)


def tconv2x2(x, p, *, out_dtype=ACT_DTYPE):
    """ConvTranspose2d k=2, s=2.  p['w']: (4*Cout, Cin), p['b']: (4*Cout, 1)."""
    Cin, Nb, H, W = x.shape
    cout = p["w"].shape[0] // 4
    y = pallas_matmul_t(p["w"], x.reshape(Cin, Nb * H * W), p["b"],
                        relu=False, out_dtype=out_dtype)
    # TODO(synk): fuse this 2x2 pixel-shuffle into the kernel's output BlockSpec
    # to save one HBM round-trip of the upsampled feature map.
    y = y.reshape(2, 2, cout, Nb, H, W).transpose(2, 3, 4, 0, 5, 1)
    return y.reshape(cout, Nb, 2 * H, 2 * W)


def maxpool2(x):
    C, Nb, H, W = x.shape
    return x.reshape(C, Nb, H // 2, 2, W // 2, 2).max(axis=(3, 5))


# ----------------------------------------------------------------------------
# Parameter initialization (deterministic, PyTorch-default-like uniform).
# Weights are converted to the lane-dense matmul layout + bf16 ONCE here.
# ----------------------------------------------------------------------------
def _conv_mm_params(key, cin, cout, k):
    kw, kb = jax.random.split(key)
    bound = 1.0 / math.sqrt(cin * k * k)
    w = jax.random.uniform(kw, (cout, cin, k, k), jnp.float32, -bound, bound)
    b = jax.random.uniform(kb, (cout,), jnp.float32, -bound, bound)
    # (Cout,Cin,kh,kw) -> (Cout,kh,kw,Cin) -> (Cout, k*k*Cin): columns are
    # tap-major / channel-minor, matching the im2col row order in conv3x3.
    w_nk = jnp.transpose(w, (0, 2, 3, 1)).reshape(cout, k * k * cin).astype(MATMUL_DTYPE)
    return dict(w=w_nk, b=b.reshape(cout, 1))


def _tconv_mm_params(key, cin, cout):
    kw, kb = jax.random.split(key)
    bound = 1.0 / math.sqrt(cin * 4)
    w = jax.random.uniform(kw, (cin, cout, 2, 2), jnp.float32, -bound, bound)
    b = jax.random.uniform(kb, (cout,), jnp.float32, -bound, bound)
    # (Cin,Cout,kh,kw) -> (kh,kw,Cout,Cin) -> (4*Cout, Cin): rows tap-major /
    # out-channel minor, matching the pixel-shuffle in tconv2x2.
    w_nk = jnp.transpose(w, (2, 3, 1, 0)).reshape(4 * cout, cin).astype(MATMUL_DTYPE)
    return dict(w=w_nk, b=jnp.tile(b, 4).reshape(4 * cout, 1))


def init_unet(key, f):
    keys = iter(jax.random.split(key, 32))

    def dconv(cin, cout):
        return dict(c1=_conv_mm_params(next(keys), cin, cout, 3),
                    c2=_conv_mm_params(next(keys), cout, cout, 3))

    def upblk(cin, cout):
        return dict(up=_tconv_mm_params(next(keys), cin, cout),
                    conv=dconv(2 * cout, cout))

    return dict(
        down1=dconv(1, f),
        down2=dconv(f, 2 * f),
        down3=dconv(2 * f, 4 * f),
        down4=dconv(4 * f, 8 * f),
        bridge=dconv(8 * f, 16 * f),
        up1=upblk(16 * f, 8 * f),
        up2=upblk(8 * f, 4 * f),
        up3=upblk(4 * f, 2 * f),
        up4=upblk(2 * f, f),
        outc=_conv_mm_params(next(keys), f, 1, 1),
    )


# ----------------------------------------------------------------------------
# Forward passes.
# ----------------------------------------------------------------------------
def double_conv(x, p):
    # TODO(synk): fuse both convs of a block into a single pallas_call (keep the
    # intermediate tile + its halo in VMEM) to halve dispatch count.
    x = conv3x3(x, p["c1"], relu=True)
    x = conv3x3(x, p["c2"], relu=True)
    return x


def up_block(x, skip, p):
    x = tconv2x2(x, p["up"])
    # TODO(synk): fuse this concat into the following matmul as a two-operand
    # accumulation (Y = W_up@X_up + W_skip@X_skip) to avoid the HBM round-trip.
    # NOTE: channel order is cat([upsampled, skip]); must match the reference
    # um.Up_Block convention if real weights are ever loaded.
    x = jnp.concatenate([x, skip], axis=0)
    return double_conv(x, p["conv"])


def unet_forward(params, x_cnhw):
    c1 = double_conv(x_cnhw, params["down1"]); x1 = maxpool2(c1)
    c2 = double_conv(x1, params["down2"]);     x2 = maxpool2(c2)
    c3 = double_conv(x2, params["down3"]);     x3 = maxpool2(c3)
    c4 = double_conv(x3, params["down4"]);     x4 = maxpool2(c4)
    bridge = double_conv(x4, params["bridge"])
    x = up_block(bridge, c4, params["up1"])
    x = up_block(x, c3, params["up2"])
    x = up_block(x, c2, params["up3"])
    x = up_block(x, c1, params["up4"])
    # Final conv of each U-Net stays f32 so returned mask/recon keep f32 parity.
    return conv1x1(x, params["outc"], relu=False, out_dtype=jnp.float32)


@jax.jit
def wnet_forward(params_enc, params_dec, x_nchw):
    """Matches Wnet.forward: mask = u_enc(x); reconstruction = u_dec(mask)."""
    x = jnp.transpose(x_nchw, (1, 0, 2, 3)).astype(ACT_DTYPE)   # NCHW -> C,N,H,W
    mask = unet_forward(params_enc, x)                           # (1,Nb,H,W) f32
    recon = unet_forward(params_dec, mask.astype(ACT_DTYPE))     # (1,Nb,H,W) f32
    mask_nchw = jnp.transpose(mask, (1, 0, 2, 3))
    recon_nchw = jnp.transpose(recon, (1, 0, 2, 3))
    return recon_nchw, mask_nchw


if __name__ == "__main__":
    filters = 4
    key = jax.random.PRNGKey(0)
    k_x, k_enc, k_dec = jax.random.split(key, 3)

    # Wnet input: single-channel image, NCHW like the PyTorch module.
    x = jax.random.normal(k_x, (2, 1, 16, 16), jnp.float32)

    params_enc = init_unet(k_enc, filters)
    params_dec = init_unet(k_dec, filters)

    recon, mask = wnet_forward(params_enc, params_dec, x)
    recon = jax.block_until_ready(recon)
    mask = jax.block_until_ready(mask)

    assert recon.shape == (2, 1, 16, 16), recon.shape
    assert mask.shape == (2, 1, 16, 16), mask.shape
    assert recon.dtype == jnp.float32 and mask.dtype == jnp.float32
    assert jnp.all(jnp.isfinite(recon)) and jnp.all(jnp.isfinite(mask))
    print("KERNEL_OK")
</pallas_src>

<mosaic_0001>
module attributes {stable_mosaic.version = 11 : i64} {
  func.func @_mm_t_kernel(%arg0: i32, %arg1: i32, %arg2: i32, %arg3: memref<4x9xbf16, #tpu.memory_space<vmem>>, %arg4: memref<9x256xbf16, #tpu.memory_space<vmem>>, %arg5: memref<4x1xf32, #tpu.memory_space<vmem>>, %arg6: memref<4x256xbf16, #tpu.memory_space<vmem>>, %arg7: memref<4x256xf32, #tpu.memory_space<vmem>>) attributes {dimension_semantics = [#tpu.dimension_semantics<parallel>, #tpu.dimension_semantics<parallel>, #tpu.dimension_semantics<arbitrary>], iteration_bounds = array<i64: 1, 2, 1>, scalar_prefetch = 0 : i64, scratch_operands = 1 : i64, tpu.core_type = #tpu.core_type<tc>, window_params = [{transform_indices = @transform_0, window_bounds = array<i64: 4, 9>}, {transform_indices = @transform_1, window_bounds = array<i64: 9, 256>}, {transform_indices = @transform_2, window_bounds = array<i64: 4, 1>}, {transform_indices = @transform_3, window_bounds = array<i64: 4, 256>}]} {
    %c0_i32 = arith.constant 0 : i32
    %0 = arith.cmpi eq, %arg2, %c0_i32 : i32
    %1 = arith.extui %0 : i1 to i32
    %c0_i32_0 = arith.constant 0 : i32
    %2 = arith.cmpi ne, %1, %c0_i32_0 : i32
    scf.if %2 {
      %cst_10 = arith.constant 0.000000e+00 : f32
      %12 = vector.broadcast %cst_10 : f32 to vector<4x256xf32>
      %c0_11 = arith.constant 0 : index
      %c0_12 = arith.constant 0 : index
      %13 = vector.load %arg7[%c0_11, %c0_12] : memref<4x256xf32, #tpu.memory_space<vmem>>, vector<4x256xf32>
      tpu.vector_store %arg7[%c0_11, %c0_12], %12 {strides = array<i32>} : memref<4x256xf32, #tpu.memory_space<vmem>>, vector<4x256xf32>,
    } else {
    }
    %c0 = arith.constant 0 : index
    %c0_1 = arith.constant 0 : index
    %3 = vector.load %arg7[%c0, %c0_1] : memref<4x256xf32, #tpu.memory_space<vmem>>, vector<4x256xf32>
    %c0_2 = arith.constant 0 : index
    %c0_3 = arith.constant 0 : index
    %4 = vector.load %arg3[%c0_2, %c0_3] : memref<4x9xbf16, #tpu.memory_space<vmem>>, vector<4x9xbf16>
    %c0_4 = arith.constant 0 : index
    %c0_5 = arith.constant 0 : index
    %5 = vector.load %arg4[%c0_4, %c0_5] : memref<9x256xbf16, #tpu.memory_space<vmem>>, vector<9x256xbf16>
    %cst = arith.constant dense<0.000000e+00> : vector<4x256xf32>
    %6 = tpu.matmul %4, %5, %cst {dimension_numbers = #tpu.dot_dimension_numbers<[1], [0], [0], [1], [0, 0, 1, 1], [], []>} : vector<4x9xbf16>, vector<9x256xbf16>, vector<4x256xf32> -> vector<4x256xf32>
    %7 = arith.addf %3, %6 : vector<4x256xf32>
    %c0_6 = arith.constant 0 : index
    %c0_7 = arith.constant 0 : index
    %8 = vector.load %arg7[%c0_6, %c0_7] : memref<4x256xf32, #tpu.memory_space<vmem>>, vector<4x256xf32>
    tpu.vector_store %arg7[%c0_6, %c0_7], %7 {strides = array<i32>} : memref<4x256xf32, #tpu.memory_space<vmem>>, vector<4x256xf32>,
    %c0_i32_8 = arith.constant 0 : i32
    %9 = arith.cmpi eq, %arg2, %c0_i32_8 : i32
    %10 = arith.extui %9 : i1 to i32
    %c0_i32_9 = arith.constant 0 : i32
    %11 = arith.cmpi ne, %10, %c0_i32_9 : i32
    scf.if %11 {
      %c0_10 = arith.constant 0 : index
      %c0_11 = arith.constant 0 : index
      %12 = vector.load %arg7[%c0_10, %c0_11] : memref<4x256xf32, #tpu.memory_space<vmem>>, vector<4x256xf32>
      %c0_12 = arith.constant 0 : index
      %c0_13 = arith.constant 0 : index
      %13 = vector.load %arg5[%c0_12, %c0_13] : memref<4x1xf32, #tpu.memory_space<vmem>>, vector<4x1xf32>
      %14 = vector.broadcast %13 : vector<4x1xf32> to vector<4x256xf32>
      %15 = arith.addf %12, %14 : vector<4x256xf32>
      %cst_14 = arith.constant 0.000000e+00 : f32
      %16 = vector.broadcast %cst_14 : f32 to vector<4x256xf32>
      %17 = arith.maximumf %15, %16 : vector<4x256xf32>
      %18 = arith.truncf %17 : vector<4x256xf32> to vector<4x256xbf16>
      %c0_15 = arith.constant 0 : index
      %c0_16 = arith.constant 0 : index
      %19 = vector.load %arg6[%c0_15, %c0_16] : memref<4x256xbf16, #tpu.memory_space<vmem>>, vector<4x256xbf16>
      tpu.vector_store %arg6[%c0_15, %c0_16], %18 {strides = array<i32>} : memref<4x256xbf16, #tpu.memory_space<vmem>>, vector<4x256xbf16>,
    } else {
    }
    return
  }
  func.func @transform_0(%arg0: i32, %arg1: i32, %arg2: i32) -> (i32, i32) {
    %c0_i32 = arith.constant 0 : i32
    return %arg0, %arg2 : i32, i32
  }
  func.func @transform_1(%arg0: i32, %arg1: i32, %arg2: i32) -> (i32, i32) {
    %c0_i32 = arith.constant 0 : i32
    return %arg2, %arg1 : i32, i32
  }
  func.func @transform_2(%arg0: i32, %arg1: i32, %arg2: i32) -> (i32, i32) {
    %c0_i32 = arith.constant 0 : i32
    %c0_i32_0 = arith.constant 0 : i32
    return %arg0, %c0_i32 : i32, i32
  }
  func.func @transform_3(%arg0: i32, %arg1: i32, %arg2: i32) -> (i32, i32) {
    %c0_i32 = arith.constant 0 : i32
    return %arg0, %arg1 : i32, i32
  }
}

module attributes {stable_mosaic.version = 11 : i64} {
  func.func @_mm_t_kernel(%arg0: i32, %arg1: i32, %arg2: i32, %arg3: memref<4x36xbf16, #tpu.memory_space<vmem>>, %arg4: memref<36x256xbf16, #tpu.memory_space<vmem>>, %arg5: memref<4x1xf32, #tpu.memory_space<vmem>>, %arg6: memref<4x256xbf16, #tpu.memory_space<vmem>>, %arg7: memref<4x256xf32, #tpu.memory_space<vmem>>) attributes {dimension_semantics = [#tpu.dimension_semantics<parallel>, #tpu.dimension_semantics<parallel>, #tpu.dimension_semantics<arbitrary>], iteration_bounds = array<i64: 1, 2, 1>, scalar_prefetch = 0 : i64, scratch_operands = 1 : i64, tpu.core_type = #tpu.core_type<tc>, window_params = [{transform_indices = @transform_0, window_bounds = array<i64: 4, 36>}, {transform_indices = @transform_1, window_bounds = array<i64: 36, 256>}, {transform_indices = @transform_2, window_bounds = array<i64: 4, 1>}, {transform_indices = @transform_3, window_bounds = array<i64: 4, 256>}]} {
    %c0_i32 = arith.constant 0 : i32
    %0 = arith.cmpi eq, %arg2, %c0_i32 : i32
    %1 = arith.extui %0 : i1 to i32
    %c0_i32_0 = arith.constant 0 : i32
    %2 = arith.cmpi ne, %1, %c0_i32_0 : i32
    scf.if %2 {
      %cst_10 = arith.constant 0.000000e+00 : f32
      %12 = vector.broadcast %cst_10 : f32 to vector<4x256xf32>
      %c0_11 = arith.constant 0 : index
      %c0_12 = arith.constant 0 : index
      %13 = vector.load %arg7[%c0_11, %c0_12] : memref<4x256xf32, #tpu.memory_space<vmem>>, vector<4x256xf32>
      tpu.vector_store %arg7[%c0_11, %c0_12], %12 {strides = array<i32>} : memref<4x256xf32, #tpu.memory_space<vmem>>, vector<4x256xf32>,
    } else {
    }
    %c0 = arith.constant 0 : index
    %c0_1 = arith.constant 0 : index
    %3 = vector.load %arg7[%c0, %c0_1] : memref<4x256xf32, #tpu.memory_space<vmem>>, vector<4x256xf32>
    %c0_2 = arith.constant 0 : index
    %c0_3 = arith.constant 0 : index
    %4 = vector.load %arg3[%c0_2, %c0_3] : memref<4x36xbf16, #tpu.memory_space<vmem>>, vector<4x36xbf16>
    %c0_4 = arith.constant 0 : index
    %c0_5 = arith.constant 0 : index
    %5 = vector.load %arg4[%c0_4, %c0_5] : memref<36x256xbf16, #tpu.memory_space<vmem>>, vector<36x256xbf16>
    %cst = arith.constant dense<0.000000e+00> : vector<4x256xf32>
    %6 = tpu.matmul %4, %5, %cst {dimension_numbers = #tpu.dot_dimension_numbers<[1], [0], [0], [1], [0, 0, 1, 1], [], []>} : vector<4x36xbf16>, vector<36x256xbf16>, vector<4x256xf32> -> vector<4x256xf32>
    %7 = arith.addf %3, %6 : vector<4x256xf32>
    %c0_6 = arith.constant 0 : index
    %c0_7 = arith.constant 0 : index
    %8 = vector.load %arg7[%c0_6, %c0_7] : memref<4x256xf32, #tpu.memory_space<vmem>>, vector<4x256xf32>
    tpu.vector_store %arg7[%c0_6, %c0_7], %7 {strides = array<i32>} : memref<4x256xf32, #tpu.memory_space<vmem>>, vector<4x256xf32>,
    %c0_i32_8 = arith.constant 0 : i32
    %9 = arith.cmpi eq, %arg2, %c0_i32_8 : i32
    %10 = arith.extui %9 : i1 to i32
    %c0_i32_9 = arith.constant 0 : i32
    %11 = arith.cmpi ne, %10, %c0_i32_9 : i32
    scf.if %11 {
      %c0_10 = arith.constant 0 : index
      %c0_11 = arith.constant 0 : index
      %12 = vector.load %arg7[%c0_10, %c0_11] : memref<4x256xf32, #tpu.memory_space<vmem>>, vector<4x256xf32>
      %c0_12 = arith.constant 0 : index
      %c0_13 = arith.constant 0 : index
      %13 = vector.load %arg5[%c0_12, %c0_13] : memref<4x1xf32, #tpu.memory_space<vmem>>, vector<4x1xf32>
      %14 = vector.broadcast %13 : vector<4x1xf32> to vector<4x256xf32>
      %15 = arith.addf %12, %14 : vector<4x256xf32>
      %cst_14 = arith.constant 0.000000e+00 : f32
      %16 = vector.broadcast %cst_14 : f32 to vector<4x256xf32>
      %17 = arith.maximumf %15, %16 : vector<4x256xf32>
      %18 = arith.truncf %17 : vector<4x256xf32> to vector<4x256xbf16>
      %c0_15 = arith.constant 0 : index
      %c0_16 = arith.constant 0 : index
      %19 = vector.load %arg6[%c0_15, %c0_16] : memref<4x256xbf16, #tpu.memory_space<vmem>>, vector<4x256xbf16>
      tpu.vector_store %arg6[%c0_15, %c0_16], %18 {strides = array<i32>} : memref<4x256xbf16, #tpu.memory_space<vmem>>, vector<4x256xbf16>,
    } else {
    }
    return
  }
  func.func @transform_0(%arg0: i32, %arg1: i32, %arg2: i32) -> (i32, i32) {
    %c0_i32 = arith.constant 0 : i32
    return %arg0, %arg2 : i32, i32
  }
  func.func @transform_1(%arg0: i32, %arg1: i32, %arg2: i32) -> (i32, i32) {
    %c0_i32 = arith.constant 0 : i32
    return %arg2, %arg1 : i32, i32
  }
  func.func @transform_2(%arg0: i32, %arg1: i32, %arg2: i32) -> (i32, i32) {
    %c0_i32 = arith.constant 0 : i32
    %c0_i32_0 = arith.constant 0 : i32
    return %arg0, %c0_i32 : i32, i32
  }
  func.func @transform_3(%arg0: i32, %arg1: i32, %arg2: i32) -> (i32, i32) {
    %c0_i32 = arith.constant 0 : i32
    return %arg0, %arg1 : i32, i32
  }
}

module attributes {stable_mosaic.version = 11 : i64} {
  func.func @_mm_t_kernel(%arg0: i32, %arg1: i32, %arg2: i32, %arg3: memref<8x36xbf16, #tpu.memory_space<vmem>>, %arg4: memref<36x128xbf16, #tpu.memory_space<vmem>>, %arg5: memref<8x1xf32, #tpu.memory_space<vmem>>, %arg6: memref<8x128xbf16, #tpu.memory_space<vmem>>, %arg7: memref<8x128xf32, #tpu.memory_space<vmem>>) attributes {dimension_semantics = [#tpu.dimension_semantics<parallel>, #tpu.dimension_semantics<parallel>, #tpu.dimension_semantics<arbitrary>], iteration_bounds = array<i64: 1, 1, 1>, scalar_prefetch = 0 : i64, scratch_operands = 1 : i64, tpu.core_type = #tpu.core_type<tc>, window_params = [{transform_indices = @transform_0, window_bounds = array<i64: 8, 36>}, {transform_indices = @transform_1, window_bounds = array<i64: 36, 128>}, {transform_indices = @transform_2, window_bounds = array<i64: 8, 1>}, {transform_indices = @transform_3, window_bounds = array<i64: 8, 128>}]} {
    %c0_i32 = arith.constant 0 : i32
    %0 = arith.cmpi eq, %arg2, %c0_i32 : i32
    %1 = arith.extui %0 : i1 to i32
    %c0_i32_0 = arith.constant 0 : i32
    %2 = arith.cmpi ne, %1, %c0_i32_0 : i32
    scf.if %2 {
      %cst_10 = arith.constant 0.000000e+00 : f32
      %12 = vector.broadcast %cst_10 : f32 to vector<8x128xf32>
      %c0_11 = arith.constant 0 : index
      %c0_12 = arith.constant 0 : index
      %13 = vector.load %arg7[%c0_11, %c0_12] : memref<8x128xf32, #tpu.memory_space<vmem>>, vector<8x128xf32>
      tpu.vector_store %arg7[%c0_11, %c0_12], %12 {strides = array<i32>} : memref<8x128xf32, #tpu.memory_space<vmem>>, vector<8x128xf32>,
    } else {
    }
    %c0 = arith.constant 0 : index
    %c0_1 = arith.constant 0 : index
    %3 = vector.load %arg7[%c0, %c0_1] : memref<8x128xf32, #tpu.memory_space<vmem>>, vector<8x128xf32>
    %c0_2 = arith.constant 0 : index
    %c0_3 = arith.constant 0 : index
    %4 = vector.load %arg3[%c0_2, %c0_3] : memref<8x36xbf16, #tpu.memory_space<vmem>>, vector<8x36xbf16>
    %c0_4 = arith.constant 0 : index
    %c0_5 = arith.constant 0 : index
    %5 = vector.load %arg4[%c0_4, %c0_5] : memref<36x128xbf16, #tpu.memory_space<vmem>>, vector<36x128xbf16>
    %cst = arith.constant dense<0.000000e+00> : vector<8x128xf32>
    %6 = tpu.matmul %4, %5, %cst {dimension_numbers = #tpu.dot_dimension_numbers<[1], [0], [0], [1], [0, 0, 1, 1], [], []>} : vector<8x36xbf16>, vector<36x128xbf16>, vector<8x128xf32> -> vector<8x128xf32>
    %7 = arith.addf %3, %6 : vector<8x128xf32>
    %c0_6 = arith.constant 0 : index
    %c0_7 = arith.constant 0 : index
    %8 = vector.load %arg7[%c0_6, %c0_7] : memref<8x128xf32, #tpu.memory_space<vmem>>, vector<8x128xf32>
    tpu.vector_store %arg7[%c0_6, %c0_7], %7 {strides = array<i32>} : memref<8x128xf32, #tpu.memory_space<vmem>>, vector<8x128xf32>,
    %c0_i32_8 = arith.constant 0 : i32
    %9 = arith.cmpi eq, %arg2, %c0_i32_8 : i32
    %10 = arith.extui %9 : i1 to i32
    %c0_i32_9 = arith.constant 0 : i32
    %11 = arith.cmpi ne, %10, %c0_i32_9 : i32
    scf.if %11 {
      %c0_10 = arith.constant 0 : index
      %c0_11 = arith.constant 0 : index
      %12 = vector.load %arg7[%c0_10, %c0_11] : memref<8x128xf32, #tpu.memory_space<vmem>>, vector<8x128xf32>
      %c0_12 = arith.constant 0 : index
      %c0_13 = arith.constant 0 : index
      %13 = vector.load %arg5[%c0_12, %c0_13] : memref<8x1xf32, #tpu.memory_space<vmem>>, vector<8x1xf32>
      %14 = vector.broadcast %13 : vector<8x1xf32> to vector<8x128xf32>
      %15 = arith.addf %12, %14 : vector<8x128xf32>
      %cst_14 = arith.constant 0.000000e+00 : f32
      %16 = vector.broadcast %cst_14 : f32 to vector<8x128xf32>
      %17 = arith.maximumf %15, %16 : vector<8x128xf32>
      %18 = arith.truncf %17 : vector<8x128xf32> to vector<8x128xbf16>
      %c0_15 = arith.constant 0 : index
      %c0_16 = arith.constant 0 : index
      %19 = vector.load %arg6[%c0_15, %c0_16] : memref<8x128xbf16, #tpu.memory_space<vmem>>, vector<8x128xbf16>
      tpu.vector_store %arg6[%c0_15, %c0_16], %18 {strides = array<i32>} : memref<8x128xbf16, #tpu.memory_space<vmem>>, vector<8x128xbf16>,
    } else {
    }
    return
  }
  func.func @transform_0(%arg0: i32, %arg1: i32, %arg2: i32) -> (i32, i32) {
    %c0_i32 = arith.constant 0 : i32
    return %arg0, %arg2 : i32, i32
  }
  func.func @transform_1(%arg0: i32, %arg1: i32, %arg2: i32) -> (i32, i32) {
    %c0_i32 = arith.constant 0 : i32
    return %arg2, %arg1 : i32, i32
  }
  func.func @transform_2(%arg0: i32, %arg1: i32, %arg2: i32) -> (i32, i32) {
    %c0_i32 = arith.constant 0 : i32
    %c0_i32_0 = arith.constant 0 : i32
    return %arg0, %c0_i32 : i32, i32
  }
  func.func @transform_3(%arg0: i32, %arg1: i32, %arg2: i32) -> (i32, i32) {
    %c0_i32 = arith.constant 0 : i32
    return %arg0, %arg1 : i32, i32
  }
}

module attributes {stable_mosaic.version = 11 : i64} {
  func.func @_mm_t_kernel(%arg0: i32, %arg1: i32, %arg2: i32, %arg3: memref<8x72xbf16, #tpu.memory_space<vmem>>, %arg4: memref<72x128xbf16, #tpu.memory_space<vmem>>, %arg5: memref<8x1xf32, #tpu.memory_space<vmem>>, %arg6: memref<8x128xbf16, #tpu.memory_space<vmem>>, %arg7: memref<8x128xf32, #tpu.memory_space<vmem>>) attributes {dimension_semantics = [#tpu.dimension_semantics<parallel>, #tpu.dimension_semantics<parallel>, #tpu.dimension_semantics<arbitrary>], iteration_bounds = array<i64: 1, 1, 1>, scalar_prefetch = 0 : i64, scratch_operands = 1 : i64, tpu.core_type = #tpu.core_type<tc>, window_params = [{transform_indices = @transform_0, window_bounds = array<i64: 8, 72>}, {transform_indices = @transform_1, window_bounds = array<i64: 72, 128>}, {transform_indices = @transform_2, window_bounds = array<i64: 8, 1>}, {transform_indices = @transform_3, window_bounds = array<i64: 8, 128>}]} {
    %c0_i32 = arith.constant 0 : i32
    %0 = arith.cmpi eq, %arg2, %c0_i32 : i32
    %1 = arith.extui %0 : i1 to i32
    %c0_i32_0 = arith.constant 0 : i32
    %2 = arith.cmpi ne, %1, %c0_i32_0 : i32
    scf.if %2 {
      %cst_10 = arith.constant 0.000000e+00 : f32
      %12 = vector.broadcast %cst_10 : f32 to vector<8x128xf32>
      %c0_11 = arith.constant 0 : index
      %c0_12 = arith.constant 0 : index
      %13 = vector.load %arg7[%c0_11, %c0_12] : memref<8x128xf32, #tpu.memory_space<vmem>>, vector<8x128xf32>
      tpu.vector_store %arg7[%c0_11, %c0_12], %12 {strides = array<i32>} : memref<8x128xf32, #tpu.memory_space<vmem>>, vector<8x128xf32>,
    } else {
    }
    %c0 = arith.constant 0 : index
    %c0_1 = arith.constant 0 : index
    %3 = vector.load %arg7[%c0, %c0_1] : memref<8x128xf32, #tpu.memory_space<vmem>>, vector<8x128xf32>
    %c0_2 = arith.constant 0 : index
    %c0_3 = arith.constant 0 : index
    %4 = vector.load %arg3[%c0_2, %c0_3] : memref<8x72xbf16, #tpu.memory_space<vmem>>, vector<8x72xbf16>
    %c0_4 = arith.constant 0 : index
    %c0_5 = arith.constant 0 : index
    %5 = vector.load %arg4[%c0_4, %c0_5] : memref<72x128xbf16, #tpu.memory_space<vmem>>, vector<72x128xbf16>
    %cst = arith.constant dense<0.000000e+00> : vector<8x128xf32>
    %6 = tpu.matmul %4, %5, %cst {dimension_numbers = #tpu.dot_dimension_numbers<[1], [0], [0], [1], [0, 0, 1, 1], [], []>} : vector<8x72xbf16>, vector<72x128xbf16>, vector<8x128xf32> -> vector<8x128xf32>
    %7 = arith.addf %3, %6 : vector<8x128xf32>
    %c0_6 = arith.constant 0 : index
    %c0_7 = arith.constant 0 : index
    %8 = vector.load %arg7[%c0_6, %c0_7] : memref<8x128xf32, #tpu.memory_space<vmem>>, vector<8x128xf32>
    tpu.vector_store %arg7[%c0_6, %c0_7], %7 {strides = array<i32>} : memref<8x128xf32, #tpu.memory_space<vmem>>, vector<8x128xf32>,
    %c0_i32_8 = arith.constant 0 : i32
    %9 = arith.cmpi eq, %arg2, %c0_i32_8 : i32
    %10 = arith.extui %9 : i1 to i32
    %c0_i32_9 = arith.constant 0 : i32
    %11 = arith.cmpi ne, %10, %c0_i32_9 : i32
    scf.if %11 {
      %c0_10 = arith.constant 0 : index
      %c0_11 = arith.constant 0 : index
      %12 = vector.load %arg7[%c0_10, %c0_11] : memref<8x128xf32, #tpu.memory_space<vmem>>, vector<8x128xf32>
      %c0_12 = arith.constant 0 : index
      %c0_13 = arith.constant 0 : index
      %13 = vector.load %arg5[%c0_12, %c0_13] : memref<8x1xf32, #tpu.memory_space<vmem>>, vector<8x1xf32>
      %14 = vector.broadcast %13 : vector<8x1xf32> to vector<8x128xf32>
      %15 = arith.addf %12, %14 : vector<8x128xf32>
      %cst_14 = arith.constant 0.000000e+00 : f32
      %16 = vector.broadcast %cst_14 : f32 to vector<8x128xf32>
      %17 = arith.maximumf %15, %16 : vector<8x128xf32>
      %18 = arith.truncf %17 : vector<8x128xf32> to vector<8x128xbf16>
      %c0_15 = arith.constant 0 : index
      %c0_16 = arith.constant 0 : index
      %19 = vector.load %arg6[%c0_15, %c0_16] : memref<8x128xbf16, #tpu.memory_space<vmem>>, vector<8x128xbf16>
      tpu.vector_store %arg6[%c0_15, %c0_16], %18 {strides = array<i32>} : memref<8x128xbf16, #tpu.memory_space<vmem>>, vector<8x128xbf16>,
    } else {
    }
    return
  }
  func.func @transform_0(%arg0: i32, %arg1: i32, %arg2: i32) -> (i32, i32) {
    %c0_i32 = arith.constant 0 : i32
    return %arg0, %arg2 : i32, i32
  }
  func.func @transform_1(%arg0: i32, %arg1: i32, %arg2: i32) -> (i32, i32) {
    %c0_i32 = arith.constant 0 : i32
    return %arg2, %arg1 : i32, i32
  }
  func.func @transform_2(%arg0: i32, %arg1: i32, %arg2: i32) -> (i32, i32) {
    %c0_i32 = arith.constant 0 : i32
    %c0_i32_0 = arith.constant 0 : i32
    return %arg0, %c0_i32 : i32, i32
  }
  func.func @transform_3(%arg0: i32, %arg1: i32, %arg2: i32) -> (i32, i32) {
    %c0_i32 = arith.constant 0 : i32
    return %arg0, %arg1 : i32, i32
  }
}

module attributes {stable_mosaic.version = 11 : i64} {
  func.func @_mm_t_kernel(%arg0: i32, %arg1: i32, %arg2: i32, %arg3: memref<16x72xbf16, #tpu.memory_space<vmem>>, %arg4: memref<72x32xbf16, #tpu.memory_space<vmem>>, %arg5: memref<16x1xf32, #tpu.memory_space<vmem>>, %arg6: memref<16x32xbf16, #tpu.memory_space<vmem>>, %arg7: memref<16x32xf32, #tpu.memory_space<vmem>>) attributes {dimension_semantics = [#tpu.dimension_semantics<parallel>, #tpu.dimension_semantics<parallel>, #tpu.dimension_semantics<arbitrary>], iteration_bounds = array<i64: 1, 1, 1>, scalar_prefetch = 0 : i64, scratch_operands = 1 : i64, tpu.core_type = #tpu.core_type<tc>, window_params = [{transform_indices = @transform_0, window_bounds = array<i64: 16, 72>}, {transform_indices = @transform_1, window_bounds = array<i64: 72, 32>}, {transform_indices = @transform_2, window_bounds = array<i64: 16, 1>}, {transform_indices = @transform_3, window_bounds = array<i64: 16, 32>}]} {
    %c0_i32 = arith.constant 0 : i32
    %0 = arith.cmpi eq, %arg2, %c0_i32 : i32
    %1 = arith.extui %0 : i1 to i32
    %c0_i32_0 = arith.constant 0 : i32
    %2 = arith.cmpi ne, %1, %c0_i32_0 : i32
    scf.if %2 {
      %cst_10 = arith.constant 0.000000e+00 : f32
      %12 = vector.broadcast %cst_10 : f32 to vector<16x32xf32>
      %c0_11 = arith.constant 0 : index
      %c0_12 = arith.constant 0 : index
      %13 = vector.load %arg7[%c0_11, %c0_12] : memref<16x32xf32, #tpu.memory_space<vmem>>, vector<16x32xf32>
      tpu.vector_store %arg7[%c0_11, %c0_12], %12 {strides = array<i32>} : memref<16x32xf32, #tpu.memory_space<vmem>>, vector<16x32xf32>,
    } else {
    }
    %c0 = arith.constant 0 : index
    %c0_1 = arith.constant 0 : index
    %3 = vector.load %arg7[%c0, %c0_1] : memref<16x32xf32, #tpu.memory_space<vmem>>, vector<16x32xf32>
    %c0_2 = arith.constant 0 : index
    %c0_3 = arith.constant 0 : index
    %4 = vector.load %arg3[%c0_2, %c0_3] : memref<16x72xbf16, #tpu.memory_space<vmem>>, vector<16x72xbf16>
    %c0_4 = arith.constant 0 : index
    %c0_5 = arith.constant 0 : index
    %5 = vector.load %arg4[%c0_4, %c0_5] : memref<72x32xbf16, #tpu.memory_space<vmem>>, vector<72x32xbf16>
    %cst = arith.constant dense<0.000000e+00> : vector<16x32xf32>
    %6 = tpu.matmul %4, %5, %cst {dimension_numbers = #tpu.dot_dimension_numbers<[1], [0], [0], [1], [0, 0, 1, 1], [], []>} : vector<16x72xbf16>, vector<72x32xbf16>, vector<16x32xf32> -> vector<16x32xf32>
    %7 = arith.addf %3, %6 : vector<16x32xf32>
    %c0_6 = arith.constant 0 : index
    %c0_7 = arith.constant 0 : index
    %8 = vector.load %arg7[%c0_6, %c0_7] : memref<16x32xf32, #tpu.memory_space<vmem>>, vector<16x32xf32>
    tpu.vector_store %arg7[%c0_6, %c0_7], %7 {strides = array<i32>} : memref<16x32xf32, #tpu.memory_space<vmem>>, vector<16x32xf32>,
    %c0_i32_8 = arith.constant 0 : i32
    %9 = arith.cmpi eq, %arg2, %c0_i32_8 : i32
    %10 = arith.extui %9 : i1 to i32
    %c0_i32_9 = arith.constant 0 : i32
    %11 = arith.cmpi ne, %10, %c0_i32_9 : i32
    scf.if %11 {
      %c0_10 = arith.constant 0 : index
      %c0_11 = arith.constant 0 : index
      %12 = vector.load %arg7[%c0_10, %c0_11] : memref<16x32xf32, #tpu.memory_space<vmem>>, vector<16x32xf32>
      %c0_12 = arith.constant 0 : index
      %c0_13 = arith.constant 0 : index
      %13 = vector.load %arg5[%c0_12, %c0_13] : memref<16x1xf32, #tpu.memory_space<vmem>>, vector<16x1xf32>
      %14 = vector.broadcast %13 : vector<16x1xf32> to vector<16x32xf32>
      %15 = arith.addf %12, %14 : vector<16x32xf32>
      %cst_14 = arith.constant 0.000000e+00 : f32
      %16 = vector.broadcast %cst_14 : f32 to vector<16x32xf32>
      %17 = arith.maximumf %15, %16 : vector<16x32xf32>
      %18 = arith.truncf %17 : vector<16x32xf32> to vector<16x32xbf16>
      %c0_15 = arith.constant 0 : index
      %c0_16 = arith.constant 0 : index
      %19 = vector.load %arg6[%c0_15, %c0_16] : memref<16x32xbf16, #tpu.memory_space<vmem>>, vector<16x32xbf16>
      tpu.vector_store %arg6[%c0_15, %c0_16], %18 {strides = array<i32>} : memref<16x32xbf16, #tpu.memory_space<vmem>>, vector<16x32xbf16>,
    } else {
    }
    return
  }
  func.func @transform_0(%arg0: i32, %arg1: i32, %arg2: i32) -> (i32, i32) {
    %c0_i32 = arith.constant 0 : i32
    return %arg0, %arg2 : i32, i32
  }
  func.func @transform_1(%arg0: i32, %arg1: i32, %arg2: i32) -> (i32, i32) {
    %c0_i32 = arith.constant 0 : i32
    return %arg2, %arg1 : i32, i32
  }
  func.func @transform_2(%arg0: i32, %arg1: i32, %arg2: i32) -> (i32, i32) {
    %c0_i32 = arith.constant 0 : i32
    %c0_i32_0 = arith.constant 0 : i32
    return %arg0, %c0_i32 : i32, i32
  }
  func.func @transform_3(%arg0: i32, %arg1: i32, %arg2: i32) -> (i32, i32) {
    %c0_i32 = arith.constant 0 : i32
    return %arg0, %arg1 : i32, i32
  }
}

module attributes {stable_mosaic.version = 11 : i64} {
  func.func @_mm_t_kernel(%arg0: i32, %arg1: i32, %arg2: i32, %arg3: memref<16x144xbf16, #tpu.memory_space<vmem>>, %arg4: memref<144x32xbf16, #tpu.memory_space<vmem>>, %arg5: memref<16x1xf32, #tpu.memory_space<vmem>>, %arg6: memref<16x32xbf16, #tpu.memory_space<vmem>>, %arg7: memref<16x32xf32, #tpu.memory_space<vmem>>) attributes {dimension_semantics = [#tpu.dimension_semantics<parallel>, #tpu.dimension_semantics<parallel>, #tpu.dimension_semantics<arbitrary>], iteration_bounds = array<i64: 1, 1, 1>, scalar_prefetch = 0 : i64, scratch_operands = 1 : i64, tpu.core_type = #tpu.core_type<tc>, window_params = [{transform_indices = @transform_0, window_bounds = array<i64: 16, 144>}, {transform_indices = @transform_1, window_bounds = array<i64: 144, 32>}, {transform_indices = @transform_2, window_bounds = array<i64: 16, 1>}, {transform_indices = @transform_3, window_bounds = array<i64: 16, 32>}]} {
    %c0_i32 = arith.constant 0 : i32
    %0 = arith.cmpi eq, %arg2, %c0_i32 : i32
    %1 = arith.extui %0 : i1 to i32
    %c0_i32_0 = arith.constant 0 : i32
    %2 = arith.cmpi ne, %1, %c0_i32_0 : i32
    scf.if %2 {
      %cst_10 = arith.constant 0.000000e+00 : f32
      %12 = vector.broadcast %cst_10 : f32 to vector<16x32xf32>
      %c0_11 = arith.constant 0 : index
      %c0_12 = arith.constant 0 : index
      %13 = vector.load %arg7[%c0_11, %c0_12] : memref<16x32xf32, #tpu.memory_space<vmem>>, vector<16x32xf32>
      tpu.vector_store %arg7[%c0_11, %c0_12], %12 {strides = array<i32>} : memref<16x32xf32, #tpu.memory_space<vmem>>, vector<16x32xf32>,
    } else {
    }
    %c0 = arith.constant 0 : index
    %c0_1 = arith.constant 0 : index
    %3 = vector.load %arg7[%c0, %c0_1] : memref<16x32xf32, #tpu.memory_space<vmem>>, vector<16x32xf32>
    %c0_2 = arith.constant 0 : index
    %c0_3 = arith.constant 0 : index
    %4 = vector.load %arg3[%c0_2, %c0_3] : memref<16x144xbf16, #tpu.memory_space<vmem>>, vector<16x144xbf16>
    %c0_4 = arith.constant 0 : index
    %c0_5 = arith.constant 0 : index
    %5 = vector.load %arg4[%c0_4, %c0_5] : memref<144x32xbf16, #tpu.memory_space<vmem>>, vector<144x32xbf16>
    %cst = arith.constant dense<0.000000e+00> : vector<16x32xf32>
    %6 = tpu.matmul %4, %5, %cst {dimension_numbers = #tpu.dot_dimension_numbers<[1], [0], [0], [1], [0, 0, 1, 1], [], []>} : vector<16x144xbf16>, vector<144x32xbf16>, vector<16x32xf32> -> vector<16x32xf32>
    %7 = arith.addf %3, %6 : vector<16x32xf32>
    %c0_6 = arith.constant 0 : index
    %c0_7 = arith.constant 0 : index
    %8 = vector.load %arg7[%c0_6, %c0_7] : memref<16x32xf32, #tpu.memory_space<vmem>>, vector<16x32xf32>
    tpu.vector_store %arg7[%c0_6, %c0_7], %7 {strides = array<i32>} : memref<16x32xf32, #tpu.memory_space<vmem>>, vector<16x32xf32>,
    %c0_i32_8 = arith.constant 0 : i32
    %9 = arith.cmpi eq, %arg2, %c0_i32_8 : i32
    %10 = arith.extui %9 : i1 to i32
    %c0_i32_9 = arith.constant 0 : i32
    %11 = arith.cmpi ne, %10, %c0_i32_9 : i32
    scf.if %11 {
      %c0_10 = arith.constant 0 : index
      %c0_11 = arith.constant 0 : index
      %12 = vector.load %arg7[%c0_10, %c0_11] : memref<16x32xf32, #tpu.memory_space<vmem>>, vector<16x32xf32>
      %c0_12 = arith.constant 0 : index
      %c0_13 = arith.constant 0 : index
      %13 = vector.load %arg5[%c0_12, %c0_13] : memref<16x1xf32, #tpu.memory_space<vmem>>, vector<16x1xf32>
      %14 = vector.broadcast %13 : vector<16x1xf32> to vector<16x32xf32>
      %15 = arith.addf %12, %14 : vector<16x32xf32>
      %cst_14 = arith.constant 0.000000e+00 : f32
      %16 = vector.broadcast %cst_14 : f32 to vector<16x32xf32>
      %17 = arith.maximumf %15, %16 : vector<16x32xf32>
      %18 = arith.truncf %17 : vector<16x32xf32> to vector<16x32xbf16>
      %c0_15 = arith.constant 0 : index
      %c0_16 = arith.constant 0 : index
      %19 = vector.load %arg6[%c0_15, %c0_16] : memref<16x32xbf16, #tpu.memory_space<vmem>>, vector<16x32xbf16>
      tpu.vector_store %arg6[%c0_15, %c0_16], %18 {strides = array<i32>} : memref<16x32xbf16, #tpu.memory_space<vmem>>, vector<16x32xbf16>,
    } else {
    }
    return
  }
  func.func @transform_0(%arg0: i32, %arg1: i32, %arg2: i32) -> (i32, i32) {
    %c0_i32 = arith.constant 0 : i32
    return %arg0, %arg2 : i32, i32
  }
  func.func @transform_1(%arg0: i32, %arg1: i32, %arg2: i32) -> (i32, i32) {
    %c0_i32 = arith.constant 0 : i32
    return %arg2, %arg1 : i32, i32
  }
  func.func @transform_2(%arg0: i32, %arg1: i32, %arg2: i32) -> (i32, i32) {
    %c0_i32 = arith.constant 0 : i32
    %c0_i32_0 = arith.constant 0 : i32
    return %arg0, %c0_i32 : i32, i32
  }
  func.func @transform_3(%arg0: i32, %arg1: i32, %arg2: i32) -> (i32, i32) {
    %c0_i32 = arith.constant 0 : i32
    return %arg0, %arg1 : i32, i32
  }
}

module attributes {stable_mosaic.version = 11 : i64} {
  func.func @_mm_t_kernel(%arg0: i32, %arg1: i32, %arg2: i32, %arg3: memref<32x144xbf16, #tpu.memory_space<vmem>>, %arg4: memref<144x8xbf16, #tpu.memory_space<vmem>>, %arg5: memref<32x1xf32, #tpu.memory_space<vmem>>, %arg6: memref<32x8xbf16, #tpu.memory_space<vmem>>, %arg7: memref<32x8xf32, #tpu.memory_space<vmem>>) attributes {dimension_semantics = [#tpu.dimension_semantics<parallel>, #tpu.dimension_semantics<parallel>, #tpu.dimension_semantics<arbitrary>], iteration_bounds = array<i64: 1, 1, 1>, scalar_prefetch = 0 : i64, scratch_operands = 1 : i64, tpu.core_type = #tpu.core_type<tc>, window_params = [{transform_indices = @transform_0, window_bounds = array<i64: 32, 144>}, {transform_indices = @transform_1, window_bounds = array<i64: 144, 8>}, {transform_indices = @transform_2, window_bounds = array<i64: 32, 1>}, {transform_indices = @transform_3, window_bounds = array<i64: 32, 8>}]} {
    %c0_i32 = arith.constant 0 : i32
    %0 = arith.cmpi eq, %arg2, %c0_i32 : i32
    %1 = arith.extui %0 : i1 to i32
    %c0_i32_0 = arith.constant 0 : i32
    %2 = arith.cmpi ne, %1, %c0_i32_0 : i32
    scf.if %2 {
      %cst_10 = arith.constant 0.000000e+00 : f32
      %12 = vector.broadcast %cst_10 : f32 to vector<32x8xf32>
      %c0_11 = arith.constant 0 : index
      %c0_12 = arith.constant 0 : index
      %13 = vector.load %arg7[%c0_11, %c0_12] : memref<32x8xf32, #tpu.memory_space<vmem>>, vector<32x8xf32>
      tpu.vector_store %arg7[%c0_11, %c0_12], %12 {strides = array<i32>} : memref<32x8xf32, #tpu.memory_space<vmem>>, vector<32x8xf32>,
    } else {
    }
    %c0 = arith.constant 0 : index
    %c0_1 = arith.constant 0 : index
    %3 = vector.load %arg7[%c0, %c0_1] : memref<32x8xf32, #tpu.memory_space<vmem>>, vector<32x8xf32>
    %c0_2 = arith.constant 0 : index
    %c0_3 = arith.constant 0 : index
    %4 = vector.load %arg3[%c0_2, %c0_3] : memref<32x144xbf16, #tpu.memory_space<vmem>>, vector<32x144xbf16>
    %c0_4 = arith.constant 0 : index
    %c0_5 = arith.constant 0 : index
    %5 = vector.load %arg4[%c0_4, %c0_5] : memref<144x8xbf16, #tpu.memory_space<vmem>>, vector<144x8xbf16>
    %cst = arith.constant dense<0.000000e+00> : vector<32x8xf32>
    %6 = tpu.matmul %4, %5, %cst {dimension_numbers = #tpu.dot_dimension_numbers<[1], [0], [0], [1], [0, 0, 1, 1], [], []>} : vector<32x144xbf16>, vector<144x8xbf16>, vector<32x8xf32> -> vector<32x8xf32>
    %7 = arith.addf %3, %6 : vector<32x8xf32>
    %c0_6 = arith.constant 0 : index
    %c0_7 = arith.constant 0 : index
    %8 = vector.load %arg7[%c0_6, %c0_7] : memref<32x8xf32, #tpu.memory_space<vmem>>, vector<32x8xf32>
    tpu.vector_store %arg7[%c0_6, %c0_7], %7 {strides = array<i32>} : memref<32x8xf32, #tpu.memory_space<vmem>>, vector<32x8xf32>,
    %c0_i32_8 = arith.constant 0 : i32
    %9 = arith.cmpi eq, %arg2, %c0_i32_8 : i32
    %10 = arith.extui %9 : i1 to i32
    %c0_i32_9 = arith.constant 0 : i32
    %11 = arith.cmpi ne, %10, %c0_i32_9 : i32
    scf.if %11 {
      %c0_10 = arith.constant 0 : index
      %c0_11 = arith.constant 0 : index
      %12 = vector.load %arg7[%c0_10, %c0_11] : memref<32x8xf32, #tpu.memory_space<vmem>>, vector<32x8xf32>
      %c0_12 = arith.constant 0 : index
      %c0_13 = arith.constant 0 : index
      %13 = vector.load %arg5[%c0_12, %c0_13] : memref<32x1xf32, #tpu.memory_space<vmem>>, vector<32x1xf32>
      %14 = vector.broadcast %13 : vector<32x1xf32> to vector<32x8xf32>
      %15 = arith.addf %12, %14 : vector<32x8xf32>
      %cst_14 = arith.constant 0.000000e+00 : f32
      %16 = vector.broadcast %cst_14 : f32 to vector<32x8xf32>
      %17 = arith.maximumf %15, %16 : vector<32x8xf32>
      %18 = arith.truncf %17 : vector<32x8xf32> to vector<32x8xbf16>
      %c0_15 = arith.constant 0 : index
      %c0_16 = arith.constant 0 : index
      %19 = vector.load %arg6[%c0_15, %c0_16] : memref<32x8xbf16, #tpu.memory_space<vmem>>, vector<32x8xbf16>
      tpu.vector_store %arg6[%c0_15, %c0_16], %18 {strides = array<i32>} : memref<32x8xbf16, #tpu.memory_space<vmem>>, vector<32x8xbf16>,
    } else {
    }
    return
  }
  func.func @transform_0(%arg0: i32, %arg1: i32, %arg2: i32) -> (i32, i32) {
    %c0_i32 = arith.constant 0 : i32
    return %arg0, %arg2 : i32, i32
  }
  func.func @transform_1(%arg0: i32, %arg1: i32, %arg2: i32) -> (i32, i32) {
    %c0_i32 = arith.constant 0 : i32
    return %arg2, %arg1 : i32, i32
  }
  func.func @transform_2(%arg0: i32, %arg1: i32, %arg2: i32) -> (i32, i32) {
    %c0_i32 = arith.constant 0 : i32
    %c0_i32_0 = arith.constant 0 : i32
    return %arg0, %c0_i32 : i32, i32
  }
  func.func @transform_3(%arg0: i32, %arg1: i32, %arg2: i32) -> (i32, i32) {
    %c0_i32 = arith.constant 0 : i32
    return %arg0, %arg1 : i32, i32
  }
}

module attributes {stable_mosaic.version = 11 : i64} {
  func.func @_mm_t_kernel(%arg0: i32, %arg1: i32, %arg2: i32, %arg3: memref<32x288xbf16, #tpu.memory_space<vmem>>, %arg4: memref<288x8xbf16, #tpu.memory_space<vmem>>, %arg5: memref<32x1xf32, #tpu.memory_space<vmem>>, %arg6: memref<32x8xbf16, #tpu.memory_space<vmem>>, %arg7: memref<32x8xf32, #tpu.memory_space<vmem>>) attributes {dimension_semantics = [#tpu.dimension_semantics<parallel>, #tpu.dimension_semantics<parallel>, #tpu.dimension_semantics<arbitrary>], iteration_bounds = array<i64: 1, 1, 1>, scalar_prefetch = 0 : i64, scratch_operands = 1 : i64, tpu.core_type = #tpu.core_type<tc>, window_params = [{transform_indices = @transform_0, window_bounds = array<i64: 32, 288>}, {transform_indices = @transform_1, window_bounds = array<i64: 288, 8>}, {transform_indices = @transform_2, window_bounds = array<i64: 32, 1>}, {transform_indices = @transform_3, window_bounds = array<i64: 32, 8>}]} {
    %c0_i32 = arith.constant 0 : i32
    %0 = arith.cmpi eq, %arg2, %c0_i32 : i32
    %1 = arith.extui %0 : i1 to i32
    %c0_i32_0 = arith.constant 0 : i32
    %2 = arith.cmpi ne, %1, %c0_i32_0 : i32
    scf.if %2 {
      %cst_10 = arith.constant 0.000000e+00 : f32
      %12 = vector.broadcast %cst_10 : f32 to vector<32x8xf32>
      %c0_11 = arith.constant 0 : index
      %c0_12 = arith.constant 0 : index
      %13 = vector.load %arg7[%c0_11, %c0_12] : memref<32x8xf32, #tpu.memory_space<vmem>>, vector<32x8xf32>
      tpu.vector_store %arg7[%c0_11, %c0_12], %12 {strides = array<i32>} : memref<32x8xf32, #tpu.memory_space<vmem>>, vector<32x8xf32>,
    } else {
    }
    %c0 = arith.constant 0 : index
    %c0_1 = arith.constant 0 : index
    %3 = vector.load %arg7[%c0, %c0_1] : memref<32x8xf32, #tpu.memory_space<vmem>>, vector<32x8xf32>
    %c0_2 = arith.constant 0 : index
    %c0_3 = arith.constant 0 : index
    %4 = vector.load %arg3[%c0_2, %c0_3] : memref<32x288xbf16, #tpu.memory_space<vmem>>, vector<32x288xbf16>
    %c0_4 = arith.constant 0 : index
    %c0_5 = arith.constant 0 : index
    %5 = vector.load %arg4[%c0_4, %c0_5] : memref<288x8xbf16, #tpu.memory_space<vmem>>, vector<288x8xbf16>
    %cst = arith.constant dense<0.000000e+00> : vector<32x8xf32>
    %6 = tpu.matmul %4, %5, %cst {dimension_numbers = #tpu.dot_dimension_numbers<[1], [0], [0], [1], [0, 0, 1, 1], [], []>} : vector<32x288xbf16>, vector<288x8xbf16>, vector<32x8xf32> -> vector<32x8xf32>
    %7 = arith.addf %3, %6 : vector<32x8xf32>
    %c0_6 = arith.constant 0 : index
    %c0_7 = arith.constant 0 : index
    %8 = vector.load %arg7[%c0_6, %c0_7] : memref<32x8xf32, #tpu.memory_space<vmem>>, vector<32x8xf32>
    tpu.vector_store %arg7[%c0_6, %c0_7], %7 {strides = array<i32>} : memref<32x8xf32, #tpu.memory_space<vmem>>, vector<32x8xf32>,
    %c0_i32_8 = arith.constant 0 : i32
    %9 = arith.cmpi eq, %arg2, %c0_i32_8 : i32
    %10 = arith.extui %9 : i1 to i32
    %c0_i32_9 = arith.constant 0 : i32
    %11 = arith.cmpi ne, %10, %c0_i32_9 : i32
    scf.if %11 {
      %c0_10 = arith.constant 0 : index
      %c0_11 = arith.constant 0 : index
      %12 = vector.load %arg7[%c0_10, %c0_11] : memref<32x8xf32, #tpu.memory_space<vmem>>, vector<32x8xf32>
      %c0_12 = arith.constant 0 : index
      %c0_13 = arith.constant 0 : index
      %13 = vector.load %arg5[%c0_12, %c0_13] : memref<32x1xf32, #tpu.memory_space<vmem>>, vector<32x1xf32>
      %14 = vector.broadcast %13 : vector<32x1xf32> to vector<32x8xf32>
      %15 = arith.addf %12, %14 : vector<32x8xf32>
      %cst_14 = arith.constant 0.000000e+00 : f32
      %16 = vector.broadcast %cst_14 : f32 to vector<32x8xf32>
      %17 = arith.maximumf %15, %16 : vector<32x8xf32>
      %18 = arith.truncf %17 : vector<32x8xf32> to vector<32x8xbf16>
      %c0_15 = arith.constant 0 : index
      %c0_16 = arith.constant 0 : index
      %19 = vector.load %arg6[%c0_15, %c0_16] : memref<32x8xbf16, #tpu.memory_space<vmem>>, vector<32x8xbf16>
      tpu.vector_store %arg6[%c0_15, %c0_16], %18 {strides = array<i32>} : memref<32x8xbf16, #tpu.memory_space<vmem>>, vector<32x8xbf16>,
    } else {
    }
    return
  }
  func.func @transform_0(%arg0: i32, %arg1: i32, %arg2: i32) -> (i32, i32) {
    %c0_i32 = arith.constant 0 : i32
    return %arg0, %arg2 : i32, i32
  }
  func.func @transform_1(%arg0: i32, %arg1: i32, %arg2: i32) -> (i32, i32) {
    %c0_i32 = arith.constant 0 : i32
    return %arg2, %arg1 : i32, i32
  }
  func.func @transform_2(%arg0: i32, %arg1: i32, %arg2: i32) -> (i32, i32) {
    %c0_i32 = arith.constant 0 : i32
    %c0_i32_0 = arith.constant 0 : i32
    return %arg0, %c0_i32 : i32, i32
  }
  func.func @transform_3(%arg0: i32, %arg1: i32, %arg2: i32) -> (i32, i32) {
    %c0_i32 = arith.constant 0 : i32
    return %arg0, %arg1 : i32, i32
  }
}

module attributes {stable_mosaic.version = 11 : i64} {
  func.func @_mm_t_kernel(%arg0: i32, %arg1: i32, %arg2: i32, %arg3: memref<64x288xbf16, #tpu.memory_space<vmem>>, %arg4: memref<288x2xbf16, #tpu.memory_space<vmem>>, %arg5: memref<64x1xf32, #tpu.memory_space<vmem>>, %arg6: memref<64x2xbf16, #tpu.memory_space<vmem>>, %arg7: memref<64x2xf32, #tpu.memory_space<vmem>>) attributes {dimension_semantics = [#tpu.dimension_semantics<parallel>, #tpu.dimension_semantics<parallel>, #tpu.dimension_semantics<arbitrary>], iteration_bounds = array<i64: 1, 1, 1>, scalar_prefetch = 0 : i64, scratch_operands = 1 : i64, tpu.core_type = #tpu.core_type<tc>, window_params = [{transform_indices = @transform_0, window_bounds = array<i64: 64, 288>}, {transform_indices = @transform_1, window_bounds = array<i64: 288, 2>}, {transform_indices = @transform_2, window_bounds = array<i64: 64, 1>}, {transform_indices = @transform_3, window_bounds = array<i64: 64, 2>}]} {
    %c0_i32 = arith.constant 0 : i32
    %0 = arith.cmpi eq, %arg2, %c0_i32 : i32
    %1 = arith.extui %0 : i1 to i32
    %c0_i32_0 = arith.constant 0 : i32
    %2 = arith.cmpi ne, %1, %c0_i32_0 : i32
    scf.if %2 {
      %cst_10 = arith.constant 0.000000e+00 : f32
      %12 = vector.broadcast %cst_10 : f32 to vector<64x2xf32>
      %c0_11 = arith.constant 0 : index
      %c0_12 = arith.constant 0 : index
      %13 = vector.load %arg7[%c0_11, %c0_12] : memref<64x2xf32, #tpu.memory_space<vmem>>, vector<64x2xf32>
      tpu.vector_store %arg7[%c0_11, %c0_12], %12 {strides = array<i32>} : memref<64x2xf32, #tpu.memory_space<vmem>>, vector<64x2xf32>,
    } else {
    }
    %c0 = arith.constant 0 : index
    %c0_1 = arith.constant 0 : index
    %3 = vector.load %arg7[%c0, %c0_1] : memref<64x2xf32, #tpu.memory_space<vmem>>, vector<64x2xf32>
    %c0_2 = arith.constant 0 : index
    %c0_3 = arith.constant 0 : index
    %4 = vector.load %arg3[%c0_2, %c0_3] : memref<64x288xbf16, #tpu.memory_space<vmem>>, vector<64x288xbf16>
    %c0_4 = arith.constant 0 : index
    %c0_5 = arith.constant 0 : index
    %5 = vector.load %arg4[%c0_4, %c0_5] : memref<288x2xbf16, #tpu.memory_space<vmem>>, vector<288x2xbf16>
    %cst = arith.constant dense<0.000000e+00> : vector<64x2xf32>
    %6 = tpu.matmul %4, %5, %cst {dimension_numbers = #tpu.dot_dimension_numbers<[1], [0], [0], [1], [0, 0, 1, 1], [], []>} : vector<64x288xbf16>, vector<288x2xbf16>, vector<64x2xf32> -> vector<64x2xf32>
    %7 = arith.addf %3, %6 : vector<64x2xf32>
    %c0_6 = arith.constant 0 : index
    %c0_7 = arith.constant 0 : index
    %8 = vector.load %arg7[%c0_6, %c0_7] : memref<64x2xf32, #tpu.memory_space<vmem>>, vector<64x2xf32>
    tpu.vector_store %arg7[%c0_6, %c0_7], %7 {strides = array<i32>} : memref<64x2xf32, #tpu.memory_space<vmem>>, vector<64x2xf32>,
    %c0_i32_8 = arith.constant 0 : i32
    %9 = arith.cmpi eq, %arg2, %c0_i32_8 : i32
    %10 = arith.extui %9 : i1 to i32
    %c0_i32_9 = arith.constant 0 : i32
    %11 = arith.cmpi ne, %10, %c0_i32_9 : i32
    scf.if %11 {
      %c0_10 = arith.constant 0 : index
      %c0_11 = arith.constant 0 : index
      %12 = vector.load %arg7[%c0_10, %c0_11] : memref<64x2xf32, #tpu.memory_space<vmem>>, vector<64x2xf32>
      %c0_12 = arith.constant 0 : index
      %c0_13 = arith.constant 0 : index
      %13 = vector.load %arg5[%c0_12, %c0_13] : memref<64x1xf32, #tpu.memory_space<vmem>>, vector<64x1xf32>
      %14 = vector.broadcast %13 : vector<64x1xf32> to vector<64x2xf32>
      %15 = arith.addf %12, %14 : vector<64x2xf32>
      %cst_14 = arith.constant 0.000000e+00 : f32
      %16 = vector.broadcast %cst_14 : f32 to vector<64x2xf32>
      %17 = arith.maximumf %15, %16 : vector<64x2xf32>
      %18 = arith.truncf %17 : vector<64x2xf32> to vector<64x2xbf16>
      %c0_15 = arith.constant 0 : index
      %c0_16 = arith.constant 0 : index
      %19 = vector.load %arg6[%c0_15, %c0_16] : memref<64x2xbf16, #tpu.memory_space<vmem>>, vector<64x2xbf16>
      tpu.vector_store %arg6[%c0_15, %c0_16], %18 {strides = array<i32>} : memref<64x2xbf16, #tpu.memory_space<vmem>>, vector<64x2xbf16>,
    } else {
    }
    return
  }
  func.func @transform_0(%arg0: i32, %arg1: i32, %arg2: i32) -> (i32, i32) {
    %c0_i32 = arith.constant 0 : i32
    return %arg0, %arg2 : i32, i32
  }
  func.func @transform_1(%arg0: i32, %arg1: i32, %arg2: i32) -> (i32, i32) {
    %c0_i32 = arith.constant 0 : i32
    return %arg2, %arg1 : i32, i32
  }
  func.func @transform_2(%arg0: i32, %arg1: i32, %arg2: i32) -> (i32, i32) {
    %c0_i32 = arith.constant 0 : i32
    %c0_i32_0 = arith.constant 0 : i32
    return %arg0, %c0_i32 : i32, i32
  }
  func.func @transform_3(%arg0: i32, %arg1: i32, %arg2: i32) -> (i32, i32) {
    %c0_i32 = arith.constant 0 : i32
    return %arg0, %arg1 : i32, i32
  }
}

module attributes {stable_mosaic.version = 11 : i64} {
  func.func @_mm_t_kernel(%arg0: i32, %arg1: i32, %arg2: i32, %arg3: memref<64x576xbf16, #tpu.memory_space<vmem>>, %arg4: memref<576x2xbf16, #tpu.memory_space<vmem>>, %arg5: memref<64x1xf32, #tpu.memory_space<vmem>>, %arg6: memref<64x2xbf16, #tpu.memory_space<vmem>>, %arg7: memref<64x2xf32, #tpu.memory_space<vmem>>) attributes {dimension_semantics = [#tpu.dimension_semantics<parallel>, #tpu.dimension_semantics<parallel>, #tpu.dimension_semantics<arbitrary>], iteration_bounds = array<i64: 1, 1, 1>, scalar_prefetch = 0 : i64, scratch_operands = 1 : i64, tpu.core_type = #tpu.core_type<tc>, window_params = [{transform_indices = @transform_0, window_bounds = array<i64: 64, 576>}, {transform_indices = @transform_1, window_bounds = array<i64: 576, 2>}, {transform_indices = @transform_2, window_bounds = array<i64: 64, 1>}, {transform_indices = @transform_3, window_bounds = array<i64: 64, 2>}]} {
    %c0_i32 = arith.constant 0 : i32
    %0 = arith.cmpi eq, %arg2, %c0_i32 : i32
    %1 = arith.extui %0 : i1 to i32
    %c0_i32_0 = arith.constant 0 : i32
    %2 = arith.cmpi ne, %1, %c0_i32_0 : i32
    scf.if %2 {
      %cst_10 = arith.constant 0.000000e+00 : f32
      %12 = vector.broadcast %cst_10 : f32 to vector<64x2xf32>
      %c0_11 = arith.constant 0 : index
      %c0_12 = arith.constant 0 : index
      %13 = vector.load %arg7[%c0_11, %c0_12] : memref<64x2xf32, #tpu.memory_space<vmem>>, vector<64x2xf32>
      tpu.vector_store %arg7[%c0_11, %c0_12], %12 {strides = array<i32>} : memref<64x2xf32, #tpu.memory_space<vmem>>, vector<64x2xf32>,
    } else {
    }
    %c0 = arith.constant 0 : index
    %c0_1 = arith.constant 0 : index
    %3 = vector.load %arg7[%c0, %c0_1] : memref<64x2xf32, #tpu.memory_space<vmem>>, vector<64x2xf32>
    %c0_2 = arith.constant 0 : index
    %c0_3 = arith.constant 0 : index
    %4 = vector.load %arg3[%c0_2, %c0_3] : memref<64x576xbf16, #tpu.memory_space<vmem>>, vector<64x576xbf16>
    %c0_4 = arith.constant 0 : index
    %c0_5 = arith.constant 0 : index
    %5 = vector.load %arg4[%c0_4, %c0_5] : memref<576x2xbf16, #tpu.memory_space<vmem>>, vector<576x2xbf16>
    %cst = arith.constant dense<0.000000e+00> : vector<64x2xf32>
    %6 = tpu.matmul %4, %5, %cst {dimension_numbers = #tpu.dot_dimension_numbers<[1], [0], [0], [1], [0, 0, 1, 1], [], []>} : vector<64x576xbf16>, vector<576x2xbf16>, vector<64x2xf32> -> vector<64x2xf32>
    %7 = arith.addf %3, %6 : vector<64x2xf32>
    %c0_6 = arith.constant 0 : index
    %c0_7 = arith.constant 0 : index
    %8 = vector.load %arg7[%c0_6, %c0_7] : memref<64x2xf32, #tpu.memory_space<vmem>>, vector<64x2xf32>
    tpu.vector_store %arg7[%c0_6, %c0_7], %7 {strides = array<i32>} : memref<64x2xf32, #tpu.memory_space<vmem>>, vector<64x2xf32>,
    %c0_i32_8 = arith.constant 0 : i32
    %9 = arith.cmpi eq, %arg2, %c0_i32_8 : i32
    %10 = arith.extui %9 : i1 to i32
    %c0_i32_9 = arith.constant 0 : i32
    %11 = arith.cmpi ne, %10, %c0_i32_9 : i32
    scf.if %11 {
      %c0_10 = arith.constant 0 : index
      %c0_11 = arith.constant 0 : index
      %12 = vector.load %arg7[%c0_10, %c0_11] : memref<64x2xf32, #tpu.memory_space<vmem>>, vector<64x2xf32>
      %c0_12 = arith.constant 0 : index
      %c0_13 = arith.constant 0 : index
      %13 = vector.load %arg5[%c0_12, %c0_13] : memref<64x1xf32, #tpu.memory_space<vmem>>, vector<64x1xf32>
      %14 = vector.broadcast %13 : vector<64x1xf32> to vector<64x2xf32>
      %15 = arith.addf %12, %14 : vector<64x2xf32>
      %cst_14 = arith.constant 0.000000e+00 : f32
      %16 = vector.broadcast %cst_14 : f32 to vector<64x2xf32>
      %17 = arith.maximumf %15, %16 : vector<64x2xf32>
      %18 = arith.truncf %17 : vector<64x2xf32> to vector<64x2xbf16>
      %c0_15 = arith.constant 0 : index
      %c0_16 = arith.constant 0 : index
      %19 = vector.load %arg6[%c0_15, %c0_16] : memref<64x2xbf16, #tpu.memory_space<vmem>>, vector<64x2xbf16>
      tpu.vector_store %arg6[%c0_15, %c0_16], %18 {strides = array<i32>} : memref<64x2xbf16, #tpu.memory_space<vmem>>, vector<64x2xbf16>,
    } else {
    }
    return
  }
  func.func @transform_0(%arg0: i32, %arg1: i32, %arg2: i32) -> (i32, i32) {
    %c0_i32 = arith.constant 0 : i32
    return %arg0, %arg2 : i32, i32
  }
  func.func @transform_1(%arg0: i32, %arg1: i32, %arg2: i32) -> (i32, i32) {
    %c0_i32 = arith.constant 0 : i32
    return %arg2, %arg1 : i32, i32
  }
  func.func @transform_2(%arg0: i32, %arg1: i32, %arg2: i32) -> (i32, i32) {
    %c0_i32 = arith.constant 0 : i32
    %c0_i32_0 = arith.constant 0 : i32
    return %arg0, %c0_i32 : i32, i32
  }
  func.func @transform_3(%arg0: i32, %arg1: i32, %arg2: i32) -> (i32, i32) {
    %c0_i32 = arith.constant 0 : i32
    return %arg0, %arg1 : i32, i32
  }
}

module attributes {stable_mosaic.version = 11 : i64} {
  func.func @_mm_t_kernel(%arg0: i32, %arg1: i32, %arg2: i32, %arg3: memref<128x64xbf16, #tpu.memory_space<vmem>>, %arg4: memref<64x2xbf16, #tpu.memory_space<vmem>>, %arg5: memref<128x1xf32, #tpu.memory_space<vmem>>, %arg6: memref<128x2xbf16, #tpu.memory_space<vmem>>, %arg7: memref<128x2xf32, #tpu.memory_space<vmem>>) attributes {dimension_semantics = [#tpu.dimension_semantics<parallel>, #tpu.dimension_semantics<parallel>, #tpu.dimension_semantics<arbitrary>], iteration_bounds = array<i64: 1, 1, 1>, scalar_prefetch = 0 : i64, scratch_operands = 1 : i64, tpu.core_type = #tpu.core_type<tc>, window_params = [{transform_indices = @transform_0, window_bounds = array<i64: 128, 64>}, {transform_indices = @transform_1, window_bounds = array<i64: 64, 2>}, {transform_indices = @transform_2, window_bounds = array<i64: 128, 1>}, {transform_indices = @transform_3, window_bounds = array<i64: 128, 2>}]} {
    %c0_i32 = arith.constant 0 : i32
    %0 = arith.cmpi eq, %arg2, %c0_i32 : i32
    %1 = arith.extui %0 : i1 to i32
    %c0_i32_0 = arith.constant 0 : i32
    %2 = arith.cmpi ne, %1, %c0_i32_0 : i32
    scf.if %2 {
      %cst_10 = arith.constant 0.000000e+00 : f32
      %12 = vector.broadcast %cst_10 : f32 to vector<128x2xf32>
      %c0_11 = arith.constant 0 : index
      %c0_12 = arith.constant 0 : index
      %13 = vector.load %arg7[%c0_11, %c0_12] : memref<128x2xf32, #tpu.memory_space<vmem>>, vector<128x2xf32>
      tpu.vector_store %arg7[%c0_11, %c0_12], %12 {strides = array<i32>} : memref<128x2xf32, #tpu.memory_space<vmem>>, vector<128x2xf32>,
    } else {
    }
    %c0 = arith.constant 0 : index
    %c0_1 = arith.constant 0 : index
    %3 = vector.load %arg7[%c0, %c0_1] : memref<128x2xf32, #tpu.memory_space<vmem>>, vector<128x2xf32>
    %c0_2 = arith.constant 0 : index
    %c0_3 = arith.constant 0 : index
    %4 = vector.load %arg3[%c0_2, %c0_3] : memref<128x64xbf16, #tpu.memory_space<vmem>>, vector<128x64xbf16>
    %c0_4 = arith.constant 0 : index
    %c0_5 = arith.constant 0 : index
    %5 = vector.load %arg4[%c0_4, %c0_5] : memref<64x2xbf16, #tpu.memory_space<vmem>>, vector<64x2xbf16>
    %cst = arith.constant dense<0.000000e+00> : vector<128x2xf32>
    %6 = tpu.matmul %4, %5, %cst {dimension_numbers = #tpu.dot_dimension_numbers<[1], [0], [0], [1], [0, 0, 1, 1], [], []>} : vector<128x64xbf16>, vector<64x2xbf16>, vector<128x2xf32> -> vector<128x2xf32>
    %7 = arith.addf %3, %6 : vector<128x2xf32>
    %c0_6 = arith.constant 0 : index
    %c0_7 = arith.constant 0 : index
    %8 = vector.load %arg7[%c0_6, %c0_7] : memref<128x2xf32, #tpu.memory_space<vmem>>, vector<128x2xf32>
    tpu.vector_store %arg7[%c0_6, %c0_7], %7 {strides = array<i32>} : memref<128x2xf32, #tpu.memory_space<vmem>>, vector<128x2xf32>,
    %c0_i32_8 = arith.constant 0 : i32
    %9 = arith.cmpi eq, %arg2, %c0_i32_8 : i32
    %10 = arith.extui %9 : i1 to i32
    %c0_i32_9 = arith.constant 0 : i32
    %11 = arith.cmpi ne, %10, %c0_i32_9 : i32
    scf.if %11 {
      %c0_10 = arith.constant 0 : index
      %c0_11 = arith.constant 0 : index
      %12 = vector.load %arg7[%c0_10, %c0_11] : memref<128x2xf32, #tpu.memory_space<vmem>>, vector<128x2xf32>
      %c0_12 = arith.constant 0 : index
      %c0_13 = arith.constant 0 : index
      %13 = vector.load %arg5[%c0_12, %c0_13] : memref<128x1xf32, #tpu.memory_space<vmem>>, vector<128x1xf32>
      %14 = vector.broadcast %13 : vector<128x1xf32> to vector<128x2xf32>
      %15 = arith.addf %12, %14 : vector<128x2xf32>
      %16 = arith.truncf %15 : vector<128x2xf32> to vector<128x2xbf16>
      %c0_14 = arith.constant 0 : index
      %c0_15 = arith.constant 0 : index
      %17 = vector.load %arg6[%c0_14, %c0_15] : memref<128x2xbf16, #tpu.memory_space<vmem>>, vector<128x2xbf16>
      tpu.vector_store %arg6[%c0_14, %c0_15], %16 {strides = array<i32>} : memref<128x2xbf16, #tpu.memory_space<vmem>>, vector<128x2xbf16>,
    } else {
    }
    return
  }
  func.func @transform_0(%arg0: i32, %arg1: i32, %arg2: i32) -> (i32, i32) {
    %c0_i32 = arith.constant 0 : i32
    return %arg0, %arg2 : i32, i32
  }
  func.func @transform_1(%arg0: i32, %arg1: i32, %arg2: i32) -> (i32, i32) {
    %c0_i32 = arith.constant 0 : i32
    return %arg2, %arg1 : i32, i32
  }
  func.func @transform_2(%arg0: i32, %arg1: i32, %arg2: i32) -> (i32, i32) {
    %c0_i32 = arith.constant 0 : i32
    %c0_i32_0 = arith.constant 0 : i32
    return %arg0, %c0_i32 : i32, i32
  }
  func.func @transform_3(%arg0: i32, %arg1: i32, %arg2: i32) -> (i32, i32) {
    %c0_i32 = arith.constant 0 : i32
    return %arg0, %arg1 : i32, i32
  }
}

module attributes {stable_mosaic.version = 11 : i64} {
  func.func @_mm_t_kernel(%arg0: i32, %arg1: i32, %arg2: i32, %arg3: memref<64x32xbf16, #tpu.memory_space<vmem>>, %arg4: memref<32x8xbf16, #tpu.memory_space<vmem>>, %arg5: memref<64x1xf32, #tpu.memory_space<vmem>>, %arg6: memref<64x8xbf16, #tpu.memory_space<vmem>>, %arg7: memref<64x8xf32, #tpu.memory_space<vmem>>) attributes {dimension_semantics = [#tpu.dimension_semantics<parallel>, #tpu.dimension_semantics<parallel>, #tpu.dimension_semantics<arbitrary>], iteration_bounds = array<i64: 1, 1, 1>, scalar_prefetch = 0 : i64, scratch_operands = 1 : i64, tpu.core_type = #tpu.core_type<tc>, window_params = [{transform_indices = @transform_0, window_bounds = array<i64: 64, 32>}, {transform_indices = @transform_1, window_bounds = array<i64: 32, 8>}, {transform_indices = @transform_2, window_bounds = array<i64: 64, 1>}, {transform_indices = @transform_3, window_bounds = array<i64: 64, 8>}]} {
    %c0_i32 = arith.constant 0 : i32
    %0 = arith.cmpi eq, %arg2, %c0_i32 : i32
    %1 = arith.extui %0 : i1 to i32
    %c0_i32_0 = arith.constant 0 : i32
    %2 = arith.cmpi ne, %1, %c0_i32_0 : i32
    scf.if %2 {
      %cst_10 = arith.constant 0.000000e+00 : f32
      %12 = vector.broadcast %cst_10 : f32 to vector<64x8xf32>
      %c0_11 = arith.constant 0 : index
      %c0_12 = arith.constant 0 : index
      %13 = vector.load %arg7[%c0_11, %c0_12] : memref<64x8xf32, #tpu.memory_space<vmem>>, vector<64x8xf32>
      tpu.vector_store %arg7[%c0_11, %c0_12], %12 {strides = array<i32>} : memref<64x8xf32, #tpu.memory_space<vmem>>, vector<64x8xf32>,
    } else {
    }
    %c0 = arith.constant 0 : index
    %c0_1 = arith.constant 0 : index
    %3 = vector.load %arg7[%c0, %c0_1] : memref<64x8xf32, #tpu.memory_space<vmem>>, vector<64x8xf32>
    %c0_2 = arith.constant 0 : index
    %c0_3 = arith.constant 0 : index
    %4 = vector.load %arg3[%c0_2, %c0_3] : memref<64x32xbf16, #tpu.memory_space<vmem>>, vector<64x32xbf16>
    %c0_4 = arith.constant 0 : index
    %c0_5 = arith.constant 0 : index
    %5 = vector.load %arg4[%c0_4, %c0_5] : memref<32x8xbf16, #tpu.memory_space<vmem>>, vector<32x8xbf16>
    %cst = arith.constant dense<0.000000e+00> : vector<64x8xf32>
    %6 = tpu.matmul %4, %5, %cst {dimension_numbers = #tpu.dot_dimension_numbers<[1], [0], [0], [1], [0, 0, 1, 1], [], []>} : vector<64x32xbf16>, vector<32x8xbf16>, vector<64x8xf32> -> vector<64x8xf32>
    %7 = arith.addf %3, %6 : vector<64x8xf32>
    %c0_6 = arith.constant 0 : index
    %c0_7 = arith.constant 0 : index
    %8 = vector.load %arg7[%c0_6, %c0_7] : memref<64x8xf32, #tpu.memory_space<vmem>>, vector<64x8xf32>
    tpu.vector_store %arg7[%c0_6, %c0_7], %7 {strides = array<i32>} : memref<64x8xf32, #tpu.memory_space<vmem>>, vector<64x8xf32>,
    %c0_i32_8 = arith.constant 0 : i32
    %9 = arith.cmpi eq, %arg2, %c0_i32_8 : i32
    %10 = arith.extui %9 : i1 to i32
    %c0_i32_9 = arith.constant 0 : i32
    %11 = arith.cmpi ne, %10, %c0_i32_9 : i32
    scf.if %11 {
      %c0_10 = arith.constant 0 : index
      %c0_11 = arith.constant 0 : index
      %12 = vector.load %arg7[%c0_10, %c0_11] : memref<64x8xf32, #tpu.memory_space<vmem>>, vector<64x8xf32>
      %c0_12 = arith.constant 0 : index
      %c0_13 = arith.constant 0 : index
      %13 = vector.load %arg5[%c0_12, %c0_13] : memref<64x1xf32, #tpu.memory_space<vmem>>, vector<64x1xf32>
      %14 = vector.broadcast %13 : vector<64x1xf32> to vector<64x8xf32>
      %15 = arith.addf %12, %14 : vector<64x8xf32>
      %16 = arith.truncf %15 : vector<64x8xf32> to vector<64x8xbf16>
      %c0_14 = arith.constant 0 : index
      %c0_15 = arith.constant 0 : index
      %17 = vector.load %arg6[%c0_14, %c0_15] : memref<64x8xbf16, #tpu.memory_space<vmem>>, vector<64x8xbf16>
      tpu.vector_store %arg6[%c0_14, %c0_15], %16 {strides = array<i32>} : memref<64x8xbf16, #tpu.memory_space<vmem>>, vector<64x8xbf16>,
    } else {
    }
    return
  }
  func.func @transform_0(%arg0: i32, %arg1: i32, %arg2: i32) -> (i32, i32) {
    %c0_i32 = arith.constant 0 : i32
    return %arg0, %arg2 : i32, i32
  }
  func.func @transform_1(%arg0: i32, %arg1: i32, %arg2: i32) -> (i32, i32) {
    %c0_i32 = arith.constant 0 : i32
    return %arg2, %arg1 : i32, i32
  }
  func.func @transform_2(%arg0: i32, %arg1: i32, %arg2: i32) -> (i32, i32) {
    %c0_i32 = arith.constant 0 : i32
    %c0_i32_0 = arith.constant 0 : i32
    return %arg0, %c0_i32 : i32, i32
  }
  func.func @transform_3(%arg0: i32, %arg1: i32, %arg2: i32) -> (i32, i32) {
    %c0_i32 = arith.constant 0 : i32
    return %arg0, %arg1 : i32, i32
  }
}

module attributes {stable_mosaic.version = 11 : i64} {
  func.func @_mm_t_kernel(%arg0: i32, %arg1: i32, %arg2: i32, %arg3: memref<32x576xbf16, #tpu.memory_space<vmem>>, %arg4: memref<576x8xbf16, #tpu.memory_space<vmem>>, %arg5: memref<32x1xf32, #tpu.memory_space<vmem>>, %arg6: memref<32x8xbf16, #tpu.memory_space<vmem>>, %arg7: memref<32x8xf32, #tpu.memory_space<vmem>>) attributes {dimension_semantics = [#tpu.dimension_semantics<parallel>, #tpu.dimension_semantics<parallel>, #tpu.dimension_semantics<arbitrary>], iteration_bounds = array<i64: 1, 1, 1>, scalar_prefetch = 0 : i64, scratch_operands = 1 : i64, tpu.core_type = #tpu.core_type<tc>, window_params = [{transform_indices = @transform_0, window_bounds = array<i64: 32, 576>}, {transform_indices = @transform_1, window_bounds = array<i64: 576, 8>}, {transform_indices = @transform_2, window_bounds = array<i64: 32, 1>}, {transform_indices = @transform_3, window_bounds = array<i64: 32, 8>}]} {
    %c0_i32 = arith.constant 0 : i32
    %0 = arith.cmpi eq, %arg2, %c0_i32 : i32
    %1 = arith.extui %0 : i1 to i32
    %c0_i32_0 = arith.constant 0 : i32
    %2 = arith.cmpi ne, %1, %c0_i32_0 : i32
    scf.if %2 {
      %cst_10 = arith.constant 0.000000e+00 : f32
      %12 = vector.broadcast %cst_10 : f32 to vector<32x8xf32>
      %c0_11 = arith.constant 0 : index
      %c0_12 = arith.constant 0 : index
      %13 = vector.load %arg7[%c0_11, %c0_12] : memref<32x8xf32, #tpu.memory_space<vmem>>, vector<32x8xf32>
      tpu.vector_store %arg7[%c0_11, %c0_12], %12 {strides = array<i32>} : memref<32x8xf32, #tpu.memory_space<vmem>>, vector<32x8xf32>,
    } else {
    }
    %c0 = arith.constant 0 : index
    %c0_1 = arith.constant 0 : index
    %3 = vector.load %arg7[%c0, %c0_1] : memref<32x8xf32, #tpu.memory_space<vmem>>, vector<32x8xf32>
    %c0_2 = arith.constant 0 : index
    %c0_3 = arith.constant 0 : index
    %4 = vector.load %arg3[%c0_2, %c0_3] : memref<32x576xbf16, #tpu.memory_space<vmem>>, vector<32x576xbf16>
    %c0_4 = arith.constant 0 : index
    %c0_5 = arith.constant 0 : index
    %5 = vector.load %arg4[%c0_4, %c0_5] : memref<576x8xbf16, #tpu.memory_space<vmem>>, vector<576x8xbf16>
    %cst = arith.constant dense<0.000000e+00> : vector<32x8xf32>
    %6 = tpu.matmul %4, %5, %cst {dimension_numbers = #tpu.dot_dimension_numbers<[1], [0], [0], [1], [0, 0, 1, 1], [], []>} : vector<32x576xbf16>, vector<576x8xbf16>, vector<32x8xf32> -> vector<32x8xf32>
    %7 = arith.addf %3, %6 : vector<32x8xf32>
    %c0_6 = arith.constant 0 : index
    %c0_7 = arith.constant 0 : index
    %8 = vector.load %arg7[%c0_6, %c0_7] : memref<32x8xf32, #tpu.memory_space<vmem>>, vector<32x8xf32>
    tpu.vector_store %arg7[%c0_6, %c0_7], %7 {strides = array<i32>} : memref<32x8xf32, #tpu.memory_space<vmem>>, vector<32x8xf32>,
    %c0_i32_8 = arith.constant 0 : i32
    %9 = arith.cmpi eq, %arg2, %c0_i32_8 : i32
    %10 = arith.extui %9 : i1 to i32
    %c0_i32_9 = arith.constant 0 : i32
    %11 = arith.cmpi ne, %10, %c0_i32_9 : i32
    scf.if %11 {
      %c0_10 = arith.constant 0 : index
      %c0_11 = arith.constant 0 : index
      %12 = vector.load %arg7[%c0_10, %c0_11] : memref<32x8xf32, #tpu.memory_space<vmem>>, vector<32x8xf32>
      %c0_12 = arith.constant 0 : index
      %c0_13 = arith.constant 0 : index
      %13 = vector.load %arg5[%c0_12, %c0_13] : memref<32x1xf32, #tpu.memory_space<vmem>>, vector<32x1xf32>
      %14 = vector.broadcast %13 : vector<32x1xf32> to vector<32x8xf32>
      %15 = arith.addf %12, %14 : vector<32x8xf32>
      %cst_14 = arith.constant 0.000000e+00 : f32
      %16 = vector.broadcast %cst_14 : f32 to vector<32x8xf32>
      %17 = arith.maximumf %15, %16 : vector<32x8xf32>
      %18 = arith.truncf %17 : vector<32x8xf32> to vector<32x8xbf16>
      %c0_15 = arith.constant 0 : index
      %c0_16 = arith.constant 0 : index
      %19 = vector.load %arg6[%c0_15, %c0_16] : memref<32x8xbf16, #tpu.memory_space<vmem>>, vector<32x8xbf16>
      tpu.vector_store %arg6[%c0_15, %c0_16], %18 {strides = array<i32>} : memref<32x8xbf16, #tpu.memory_space<vmem>>, vector<32x8xbf16>,
    } else {
    }
    return
  }
  func.func @transform_0(%arg0: i32, %arg1: i32, %arg2: i32) -> (i32, i32) {
    %c0_i32 = arith.constant 0 : i32
    return %arg0, %arg2 : i32, i32
  }
  func.func @transform_1(%arg0: i32, %arg1: i32, %arg2: i32) -> (i32, i32) {
    %c0_i32 = arith.constant 0 : i32
    return %arg2, %arg1 : i32, i32
  }
  func.func @transform_2(%arg0: i32, %arg1: i32, %arg2: i32) -> (i32, i32) {
    %c0_i32 = arith.constant 0 : i32
    %c0_i32_0 = arith.constant 0 : i32
    return %arg0, %c0_i32 : i32, i32
  }
  func.func @transform_3(%arg0: i32, %arg1: i32, %arg2: i32) -> (i32, i32) {
    %c0_i32 = arith.constant 0 : i32
    return %arg0, %arg1 : i32, i32
  }
}

module attributes {stable_mosaic.version = 11 : i64} {
  func.func @_mm_t_kernel(%arg0: i32, %arg1: i32, %arg2: i32, %arg3: memref<32x16xbf16, #tpu.memory_space<vmem>>, %arg4: memref<16x32xbf16, #tpu.memory_space<vmem>>, %arg5: memref<32x1xf32, #tpu.memory_space<vmem>>, %arg6: memref<32x32xbf16, #tpu.memory_space<vmem>>, %arg7: memref<32x32xf32, #tpu.memory_space<vmem>>) attributes {dimension_semantics = [#tpu.dimension_semantics<parallel>, #tpu.dimension_semantics<parallel>, #tpu.dimension_semantics<arbitrary>], iteration_bounds = array<i64: 1, 1, 1>, scalar_prefetch = 0 : i64, scratch_operands = 1 : i64, tpu.core_type = #tpu.core_type<tc>, window_params = [{transform_indices = @transform_0, window_bounds = array<i64: 32, 16>}, {transform_indices = @transform_1, window_bounds = array<i64: 16, 32>}, {transform_indices = @transform_2, window_bounds = array<i64: 32, 1>}, {transform_indices = @transform_3, window_bounds = array<i64: 32, 32>}]} {
    %c0_i32 = arith.constant 0 : i32
    %0 = arith.cmpi eq, %arg2, %c0_i32 : i32
    %1 = arith.extui %0 : i1 to i32
    %c0_i32_0 = arith.constant 0 : i32
    %2 = arith.cmpi ne, %1, %c0_i32_0 : i32
    scf.if %2 {
      %cst_10 = arith.constant 0.000000e+00 : f32
      %12 = vector.broadcast %cst_10 : f32 to vector<32x32xf32>
      %c0_11 = arith.constant 0 : index
      %c0_12 = arith.constant 0 : index
      %13 = vector.load %arg7[%c0_11, %c0_12] : memref<32x32xf32, #tpu.memory_space<vmem>>, vector<32x32xf32>
      tpu.vector_store %arg7[%c0_11, %c0_12], %12 {strides = array<i32>} : memref<32x32xf32, #tpu.memory_space<vmem>>, vector<32x32xf32>,
    } else {
    }
    %c0 = arith.constant 0 : index
    %c0_1 = arith.constant 0 : index
    %3 = vector.load %arg7[%c0, %c0_1] : memref<32x32xf32, #tpu.memory_space<vmem>>, vector<32x32xf32>
    %c0_2 = arith.constant 0 : index
    %c0_3 = arith.constant 0 : index
    %4 = vector.load %arg3[%c0_2, %c0_3] : memref<32x16xbf16, #tpu.memory_space<vmem>>, vector<32x16xbf16>
    %c0_4 = arith.constant 0 : index
    %c0_5 = arith.constant 0 : index
    %5 = vector.load %arg4[%c0_4, %c0_5] : memref<16x32xbf16, #tpu.memory_space<vmem>>, vector<16x32xbf16>
    %cst = arith.constant dense<0.000000e+00> : vector<32x32xf32>
    %6 = tpu.matmul %4, %5, %cst {dimension_numbers = #tpu.dot_dimension_numbers<[1], [0], [0], [1], [0, 0, 1, 1], [], []>} : vector<32x16xbf16>, vector<16x32xbf16>, vector<32x32xf32> -> vector<32x32xf32>
    %7 = arith.addf %3, %6 : vector<32x32xf32>
    %c0_6 = arith.constant 0 : index
    %c0_7 = arith.constant 0 : index
    %8 = vector.load %arg7[%c0_6, %c0_7] : memref<32x32xf32, #tpu.memory_space<vmem>>, vector<32x32xf32>
    tpu.vector_store %arg7[%c0_6, %c0_7], %7 {strides = array<i32>} : memref<32x32xf32, #tpu.memory_space<vmem>>, vector<32x32xf32>,
    %c0_i32_8 = arith.constant 0 : i32
    %9 = arith.cmpi eq, %arg2, %c0_i32_8 : i32
    %10 = arith.extui %9 : i1 to i32
    %c0_i32_9 = arith.constant 0 : i32
    %11 = arith.cmpi ne, %10, %c0_i32_9 : i32
    scf.if %11 {
      %c0_10 = arith.constant 0 : index
      %c0_11 = arith.constant 0 : index
      %12 = vector.load %arg7[%c0_10, %c0_11] : memref<32x32xf32, #tpu.memory_space<vmem>>, vector<32x32xf32>
      %c0_12 = arith.constant 0 : index
      %c0_13 = arith.constant 0 : index
      %13 = vector.load %arg5[%c0_12, %c0_13] : memref<32x1xf32, #tpu.memory_space<vmem>>, vector<32x1xf32>
      %14 = vector.broadcast %13 : vector<32x1xf32> to vector<32x32xf32>
      %15 = arith.addf %12, %14 : vector<32x32xf32>
      %16 = arith.truncf %15 : vector<32x32xf32> to vector<32x32xbf16>
      %c0_14 = arith.constant 0 : index
      %c0_15 = arith.constant 0 : index
      %17 = vector.load %arg6[%c0_14, %c0_15] : memref<32x32xbf16, #tpu.memory_space<vmem>>, vector<32x32xbf16>
      tpu.vector_store %arg6[%c0_14, %c0_15], %16 {strides = array<i32>} : memref<32x32xbf16, #tpu.memory_space<vmem>>, vector<32x32xbf16>,
    } else {
    }
    return
  }
  func.func @transform_0(%arg0: i32, %arg1: i32, %arg2: i32) -> (i32, i32) {
    %c0_i32 = arith.constant 0 : i32
    return %arg0, %arg2 : i32, i32
  }
  func.func @transform_1(%arg0: i32, %arg1: i32, %arg2: i32) -> (i32, i32) {
    %c0_i32 = arith.constant 0 : i32
    return %arg2, %arg1 : i32, i32
  }
  func.func @transform_2(%arg0: i32, %arg1: i32, %arg2: i32) -> (i32, i32) {
    %c0_i32 = arith.constant 0 : i32
    %c0_i32_0 = arith.constant 0 : i32
    return %arg0, %c0_i32 : i32, i32
  }
  func.func @transform_3(%arg0: i32, %arg1: i32, %arg2: i32) -> (i32, i32) {
    %c0_i32 = arith.constant 0 : i32
    return %arg0, %arg1 : i32, i32
  }
}

module attributes {stable_mosaic.version = 11 : i64} {
  func.func @_mm_t_kernel(%arg0: i32, %arg1: i32, %arg2: i32, %arg3: memref<16x288xbf16, #tpu.memory_space<vmem>>, %arg4: memref<288x32xbf16, #tpu.memory_space<vmem>>, %arg5: memref<16x1xf32, #tpu.memory_space<vmem>>, %arg6: memref<16x32xbf16, #tpu.memory_space<vmem>>, %arg7: memref<16x32xf32, #tpu.memory_space<vmem>>) attributes {dimension_semantics = [#tpu.dimension_semantics<parallel>, #tpu.dimension_semantics<parallel>, #tpu.dimension_semantics<arbitrary>], iteration_bounds = array<i64: 1, 1, 1>, scalar_prefetch = 0 : i64, scratch_operands = 1 : i64, tpu.core_type = #tpu.core_type<tc>, window_params = [{transform_indices = @transform_0, window_bounds = array<i64: 16, 288>}, {transform_indices = @transform_1, window_bounds = array<i64: 288, 32>}, {transform_indices = @transform_2, window_bounds = array<i64: 16, 1>}, {transform_indices = @transform_3, window_bounds = array<i64: 16, 32>}]} {
    %c0_i32 = arith.constant 0 : i32
    %0 = arith.cmpi eq, %arg2, %c0_i32 : i32
    %1 = arith.extui %0 : i1 to i32
    %c0_i32_0 = arith.constant 0 : i32
    %2 = arith.cmpi ne, %1, %c0_i32_0 : i32
    scf.if %2 {
      %cst_10 = arith.constant 0.000000e+00 : f32
      %12 = vector.broadcast %cst_10 : f32 to vector<16x32xf32>
      %c0_11 = arith.constant 0 : index
      %c0_12 = arith.constant 0 : index
      %13 = vector.load %arg7[%c0_11, %c0_12] : memref<16x32xf32, #tpu.memory_space<vmem>>, vector<16x32xf32>
      tpu.vector_store %arg7[%c0_11, %c0_12], %12 {strides = array<i32>} : memref<16x32xf32, #tpu.memory_space<vmem>>, vector<16x32xf32>,
    } else {
    }
    %c0 = arith.constant 0 : index
    %c0_1 = arith.constant 0 : index
    %3 = vector.load %arg7[%c0, %c0_1] : memref<16x32xf32, #tpu.memory_space<vmem>>, vector<16x32xf32>
    %c0_2 = arith.constant 0 : index
    %c0_3 = arith.constant 0 : index
    %4 = vector.load %arg3[%c0_2, %c0_3] : memref<16x288xbf16, #tpu.memory_space<vmem>>, vector<16x288xbf16>
    %c0_4 = arith.constant 0 : index
    %c0_5 = arith.constant 0 : index
    %5 = vector.load %arg4[%c0_4, %c0_5] : memref<288x32xbf16, #tpu.memory_space<vmem>>, vector<288x32xbf16>
    %cst = arith.constant dense<0.000000e+00> : vector<16x32xf32>
    %6 = tpu.matmul %4, %5, %cst {dimension_numbers = #tpu.dot_dimension_numbers<[1], [0], [0], [1], [0, 0, 1, 1], [], []>} : vector<16x288xbf16>, vector<288x32xbf16>, vector<16x32xf32> -> vector<16x32xf32>
    %7 = arith.addf %3, %6 : vector<16x32xf32>
    %c0_6 = arith.constant 0 : index
    %c0_7 = arith.constant 0 : index
    %8 = vector.load %arg7[%c0_6, %c0_7] : memref<16x32xf32, #tpu.memory_space<vmem>>, vector<16x32xf32>
    tpu.vector_store %arg7[%c0_6, %c0_7], %7 {strides = array<i32>} : memref<16x32xf32, #tpu.memory_space<vmem>>, vector<16x32xf32>,
    %c0_i32_8 = arith.constant 0 : i32
    %9 = arith.cmpi eq, %arg2, %c0_i32_8 : i32
    %10 = arith.extui %9 : i1 to i32
    %c0_i32_9 = arith.constant 0 : i32
    %11 = arith.cmpi ne, %10, %c0_i32_9 : i32
    scf.if %11 {
      %c0_10 = arith.constant 0 : index
      %c0_11 = arith.constant 0 : index
      %12 = vector.load %arg7[%c0_10, %c0_11] : memref<16x32xf32, #tpu.memory_space<vmem>>, vector<16x32xf32>
      %c0_12 = arith.constant 0 : index
      %c0_13 = arith.constant 0 : index
      %13 = vector.load %arg5[%c0_12, %c0_13] : memref<16x1xf32, #tpu.memory_space<vmem>>, vector<16x1xf32>
      %14 = vector.broadcast %13 : vector<16x1xf32> to vector<16x32xf32>
      %15 = arith.addf %12, %14 : vector<16x32xf32>
      %cst_14 = arith.constant 0.000000e+00 : f32
      %16 = vector.broadcast %cst_14 : f32 to vector<16x32xf32>
      %17 = arith.maximumf %15, %16 : vector<16x32xf32>
      %18 = arith.truncf %17 : vector<16x32xf32> to vector<16x32xbf16>
      %c0_15 = arith.constant 0 : index
      %c0_16 = arith.constant 0 : index
      %19 = vector.load %arg6[%c0_15, %c0_16] : memref<16x32xbf16, #tpu.memory_space<vmem>>, vector<16x32xbf16>
      tpu.vector_store %arg6[%c0_15, %c0_16], %18 {strides = array<i32>} : memref<16x32xbf16, #tpu.memory_space<vmem>>, vector<16x32xbf16>,
    } else {
    }
    return
  }
  func.func @transform_0(%arg0: i32, %arg1: i32, %arg2: i32) -> (i32, i32) {
    %c0_i32 = arith.constant 0 : i32
    return %arg0, %arg2 : i32, i32
  }
  func.func @transform_1(%arg0: i32, %arg1: i32, %arg2: i32) -> (i32, i32) {
    %c0_i32 = arith.constant 0 : i32
    return %arg2, %arg1 : i32, i32
  }
  func.func @transform_2(%arg0: i32, %arg1: i32, %arg2: i32) -> (i32, i32) {
    %c0_i32 = arith.constant 0 : i32
    %c0_i32_0 = arith.constant 0 : i32
    return %arg0, %c0_i32 : i32, i32
  }
  func.func @transform_3(%arg0: i32, %arg1: i32, %arg2: i32) -> (i32, i32) {
    %c0_i32 = arith.constant 0 : i32
    return %arg0, %arg1 : i32, i32
  }
}

module attributes {stable_mosaic.version = 11 : i64} {
  func.func @_mm_t_kernel(%arg0: i32, %arg1: i32, %arg2: i32, %arg3: memref<8x144xbf16, #tpu.memory_space<vmem>>, %arg4: memref<144x128xbf16, #tpu.memory_space<vmem>>, %arg5: memref<8x1xf32, #tpu.memory_space<vmem>>, %arg6: memref<8x128xbf16, #tpu.memory_space<vmem>>, %arg7: memref<8x128xf32, #tpu.memory_space<vmem>>) attributes {dimension_semantics = [#tpu.dimension_semantics<parallel>, #tpu.dimension_semantics<parallel>, #tpu.dimension_semantics<arbitrary>], iteration_bounds = array<i64: 1, 1, 1>, scalar_prefetch = 0 : i64, scratch_operands = 1 : i64, tpu.core_type = #tpu.core_type<tc>, window_params = [{transform_indices = @transform_0, window_bounds = array<i64: 8, 144>}, {transform_indices = @transform_1, window_bounds = array<i64: 144, 128>}, {transform_indices = @transform_2, window_bounds = array<i64: 8, 1>}, {transform_indices = @transform_3, window_bounds = array<i64: 8, 128>}]} {
    %c0_i32 = arith.constant 0 : i32
    %0 = arith.cmpi eq, %arg2, %c0_i32 : i32
    %1 = arith.extui %0 : i1 to i32
    %c0_i32_0 = arith.constant 0 : i32
    %2 = arith.cmpi ne, %1, %c0_i32_0 : i32
    scf.if %2 {
      %cst_10 = arith.constant 0.000000e+00 : f32
      %12 = vector.broadcast %cst_10 : f32 to vector<8x128xf32>
      %c0_11 = arith.constant 0 : index
      %c0_12 = arith.constant 0 : index
      %13 = vector.load %arg7[%c0_11, %c0_12] : memref<8x128xf32, #tpu.memory_space<vmem>>, vector<8x128xf32>
      tpu.vector_store %arg7[%c0_11, %c0_12], %12 {strides = array<i32>} : memref<8x128xf32, #tpu.memory_space<vmem>>, vector<8x128xf32>,
    } else {
    }
    %c0 = arith.constant 0 : index
    %c0_1 = arith.constant 0 : index
    %3 = vector.load %arg7[%c0, %c0_1] : memref<8x128xf32, #tpu.memory_space<vmem>>, vector<8x128xf32>
    %c0_2 = arith.constant 0 : index
    %c0_3 = arith.constant 0 : index
    %4 = vector.load %arg3[%c0_2, %c0_3] : memref<8x144xbf16, #tpu.memory_space<vmem>>, vector<8x144xbf16>
    %c0_4 = arith.constant 0 : index
    %c0_5 = arith.constant 0 : index
    %5 = vector.load %arg4[%c0_4, %c0_5] : memref<144x128xbf16, #tpu.memory_space<vmem>>, vector<144x128xbf16>
    %cst = arith.constant dense<0.000000e+00> : vector<8x128xf32>
    %6 = tpu.matmul %4, %5, %cst {dimension_numbers = #tpu.dot_dimension_numbers<[1], [0], [0], [1], [0, 0, 1, 1], [], []>} : vector<8x144xbf16>, vector<144x128xbf16>, vector<8x128xf32> -> vector<8x128xf32>
    %7 = arith.addf %3, %6 : vector<8x128xf32>
    %c0_6 = arith.constant 0 : index
    %c0_7 = arith.constant 0 : index
    %8 = vector.load %arg7[%c0_6, %c0_7] : memref<8x128xf32, #tpu.memory_space<vmem>>, vector<8x128xf32>
    tpu.vector_store %arg7[%c0_6, %c0_7], %7 {strides = array<i32>} : memref<8x128xf32, #tpu.memory_space<vmem>>, vector<8x128xf32>,
    %c0_i32_8 = arith.constant 0 : i32
    %9 = arith.cmpi eq, %arg2, %c0_i32_8 : i32
    %10 = arith.extui %9 : i1 to i32
    %c0_i32_9 = arith.constant 0 : i32
    %11 = arith.cmpi ne, %10, %c0_i32_9 : i32
    scf.if %11 {
      %c0_10 = arith.constant 0 : index
      %c0_11 = arith.constant 0 : index
      %12 = vector.load %arg7[%c0_10, %c0_11] : memref<8x128xf32, #tpu.memory_space<vmem>>, vector<8x128xf32>
      %c0_12 = arith.constant 0 : index
      %c0_13 = arith.constant 0 : index
      %13 = vector.load %arg5[%c0_12, %c0_13] : memref<8x1xf32, #tpu.memory_space<vmem>>, vector<8x1xf32>
      %14 = vector.broadcast %13 : vector<8x1xf32> to vector<8x128xf32>
      %15 = arith.addf %12, %14 : vector<8x128xf32>
      %cst_14 = arith.constant 0.000000e+00 : f32
      %16 = vector.broadcast %cst_14 : f32 to vector<8x128xf32>
      %17 = arith.maximumf %15, %16 : vector<8x128xf32>
      %18 = arith.truncf %17 : vector<8x128xf32> to vector<8x128xbf16>
      %c0_15 = arith.constant 0 : index
      %c0_16 = arith.constant 0 : index
      %19 = vector.load %arg6[%c0_15, %c0_16] : memref<8x128xbf16, #tpu.memory_space<vmem>>, vector<8x128xbf16>
      tpu.vector_store %arg6[%c0_15, %c0_16], %18 {strides = array<i32>} : memref<8x128xbf16, #tpu.memory_space<vmem>>, vector<8x128xbf16>,
    } else {
    }
    return
  }
  func.func @transform_0(%arg0: i32, %arg1: i32, %arg2: i32) -> (i32, i32) {
    %c0_i32 = arith.constant 0 : i32
    return %arg0, %arg2 : i32, i32
  }
  func.func @transform_1(%arg0: i32, %arg1: i32, %arg2: i32) -> (i32, i32) {
    %c0_i32 = arith.constant 0 : i32
    return %arg2, %arg1 : i32, i32
  }
  func.func @transform_2(%arg0: i32, %arg1: i32, %arg2: i32) -> (i32, i32) {
    %c0_i32 = arith.constant 0 : i32
    %c0_i32_0 = arith.constant 0 : i32
    return %arg0, %c0_i32 : i32, i32
  }
  func.func @transform_3(%arg0: i32, %arg1: i32, %arg2: i32) -> (i32, i32) {
    %c0_i32 = arith.constant 0 : i32
    return %arg0, %arg1 : i32, i32
  }
}

module attributes {stable_mosaic.version = 11 : i64} {
  func.func @_mm_t_kernel(%arg0: i32, %arg1: i32, %arg2: i32, %arg3: memref<16x8xbf16, #tpu.memory_space<vmem>>, %arg4: memref<8x128xbf16, #tpu.memory_space<vmem>>, %arg5: memref<16x1xf32, #tpu.memory_space<vmem>>, %arg6: memref<16x128xbf16, #tpu.memory_space<vmem>>, %arg7: memref<16x128xf32, #tpu.memory_space<vmem>>) attributes {dimension_semantics = [#tpu.dimension_semantics<parallel>, #tpu.dimension_semantics<parallel>, #tpu.dimension_semantics<arbitrary>], iteration_bounds = array<i64: 1, 1, 1>, scalar_prefetch = 0 : i64, scratch_operands = 1 : i64, tpu.core_type = #tpu.core_type<tc>, window_params = [{transform_indices = @transform_0, window_bounds = array<i64: 16, 8>}, {transform_indices = @transform_1, window_bounds = array<i64: 8, 128>}, {transform_indices = @transform_2, window_bounds = array<i64: 16, 1>}, {transform_indices = @transform_3, window_bounds = array<i64: 16, 128>}]} {
    %c0_i32 = arith.constant 0 : i32
    %0 = arith.cmpi eq, %arg2, %c0_i32 : i32
    %1 = arith.extui %0 : i1 to i32
    %c0_i32_0 = arith.constant 0 : i32
    %2 = arith.cmpi ne, %1, %c0_i32_0 : i32
    scf.if %2 {
      %cst_10 = arith.constant 0.000000e+00 : f32
      %12 = vector.broadcast %cst_10 : f32 to vector<16x128xf32>
      %c0_11 = arith.constant 0 : index
      %c0_12 = arith.constant 0 : index
      %13 = vector.load %arg7[%c0_11, %c0_12] : memref<16x128xf32, #tpu.memory_space<vmem>>, vector<16x128xf32>
      tpu.vector_store %arg7[%c0_11, %c0_12], %12 {strides = array<i32>} : memref<16x128xf32, #tpu.memory_space<vmem>>, vector<16x128xf32>,
    } else {
    }
    %c0 = arith.constant 0 : index
    %c0_1 = arith.constant 0 : index
    %3 = vector.load %arg7[%c0, %c0_1] : memref<16x128xf32, #tpu.memory_space<vmem>>, vector<16x128xf32>
    %c0_2 = arith.constant 0 : index
    %c0_3 = arith.constant 0 : index
    %4 = vector.load %arg3[%c0_2, %c0_3] : memref<16x8xbf16, #tpu.memory_space<vmem>>, vector<16x8xbf16>
    %c0_4 = arith.constant 0 : index
    %c0_5 = arith.constant 0 : index
    %5 = vector.load %arg4[%c0_4, %c0_5] : memref<8x128xbf16, #tpu.memory_space<vmem>>, vector<8x128xbf16>
    %cst = arith.constant dense<0.000000e+00> : vector<16x128xf32>
    %6 = tpu.matmul %4, %5, %cst {dimension_numbers = #tpu.dot_dimension_numbers<[1], [0], [0], [1], [0, 0, 1, 1], [], []>} : vector<16x8xbf16>, vector<8x128xbf16>, vector<16x128xf32> -> vector<16x128xf32>
    %7 = arith.addf %3, %6 : vector<16x128xf32>
    %c0_6 = arith.constant 0 : index
    %c0_7 = arith.constant 0 : index
    %8 = vector.load %arg7[%c0_6, %c0_7] : memref<16x128xf32, #tpu.memory_space<vmem>>, vector<16x128xf32>
    tpu.vector_store %arg7[%c0_6, %c0_7], %7 {strides = array<i32>} : memref<16x128xf32, #tpu.memory_space<vmem>>, vector<16x128xf32>,
    %c0_i32_8 = arith.constant 0 : i32
    %9 = arith.cmpi eq, %arg2, %c0_i32_8 : i32
    %10 = arith.extui %9 : i1 to i32
    %c0_i32_9 = arith.constant 0 : i32
    %11 = arith.cmpi ne, %10, %c0_i32_9 : i32
    scf.if %11 {
      %c0_10 = arith.constant 0 : index
      %c0_11 = arith.constant 0 : index
      %12 = vector.load %arg7[%c0_10, %c0_11] : memref<16x128xf32, #tpu.memory_space<vmem>>, vector<16x128xf32>
      %c0_12 = arith.constant 0 : index
      %c0_13 = arith.constant 0 : index
      %13 = vector.load %arg5[%c0_12, %c0_13] : memref<16x1xf32, #tpu.memory_space<vmem>>, vector<16x1xf32>
      %14 = vector.broadcast %13 : vector<16x1xf32> to vector<16x128xf32>
      %15 = arith.addf %12, %14 : vector<16x128xf32>
      %16 = arith.truncf %15 : vector<16x128xf32> to vector<16x128xbf16>
      %c0_14 = arith.constant 0 : index
      %c0_15 = arith.constant 0 : index
      %17 = vector.load %arg6[%c0_14, %c0_15] : memref<16x128xbf16, #tpu.memory_space<vmem>>, vector<16x128xbf16>
      tpu.vector_store %arg6[%c0_14, %c0_15], %16 {strides = array<i32>} : memref<16x128xbf16, #tpu.memory_space<vmem>>, vector<16x128xbf16>,
    } else {
    }
    return
  }
  func.func @transform_0(%arg0: i32, %arg1: i32, %arg2: i32) -> (i32, i32) {
    %c0_i32 = arith.constant 0 : i32
    return %arg0, %arg2 : i32, i32
  }
  func.func @transform_1(%arg0: i32, %arg1: i32, %arg2: i32) -> (i32, i32) {
    %c0_i32 = arith.constant 0 : i32
    return %arg2, %arg1 : i32, i32
  }
  func.func @transform_2(%arg0: i32, %arg1: i32, %arg2: i32) -> (i32, i32) {
    %c0_i32 = arith.constant 0 : i32
    %c0_i32_0 = arith.constant 0 : i32
    return %arg0, %c0_i32 : i32, i32
  }
  func.func @transform_3(%arg0: i32, %arg1: i32, %arg2: i32) -> (i32, i32) {
    %c0_i32 = arith.constant 0 : i32
    return %arg0, %arg1 : i32, i32
  }
}

module attributes {stable_mosaic.version = 11 : i64} {
  func.func @_mm_t_kernel(%arg0: i32, %arg1: i32, %arg2: i32, %arg3: memref<1x4xbf16, #tpu.memory_space<vmem>>, %arg4: memref<4x256xbf16, #tpu.memory_space<vmem>>, %arg5: memref<1x1xf32, #tpu.memory_space<vmem>>, %arg6: memref<1x256xf32, #tpu.memory_space<vmem>>, %arg7: memref<1x256xf32, #tpu.memory_space<vmem>>) attributes {dimension_semantics = [#tpu.dimension_semantics<parallel>, #tpu.dimension_semantics<parallel>, #tpu.dimension_semantics<arbitrary>], iteration_bounds = array<i64: 1, 2, 1>, scalar_prefetch = 0 : i64, scratch_operands = 1 : i64, tpu.core_type = #tpu.core_type<tc>, window_params = [{transform_indices = @transform_0, window_bounds = array<i64: 1, 4>}, {transform_indices = @transform_1, window_bounds = array<i64: 4, 256>}, {transform_indices = @transform_2, window_bounds = array<i64: 1, 1>}, {transform_indices = @transform_3, window_bounds = array<i64: 1, 256>}]} {
    %c0_i32 = arith.constant 0 : i32
    %0 = arith.cmpi eq, %arg2, %c0_i32 : i32
    %1 = arith.extui %0 : i1 to i32
    %c0_i32_0 = arith.constant 0 : i32
    %2 = arith.cmpi ne, %1, %c0_i32_0 : i32
    scf.if %2 {
      %cst_10 = arith.constant 0.000000e+00 : f32
      %12 = vector.broadcast %cst_10 : f32 to vector<1x256xf32>
      %c0_11 = arith.constant 0 : index
      %c0_12 = arith.constant 0 : index
      %13 = vector.load %arg7[%c0_11, %c0_12] : memref<1x256xf32, #tpu.memory_space<vmem>>, vector<1x256xf32>
      tpu.vector_store %arg7[%c0_11, %c0_12], %12 {strides = array<i32>} : memref<1x256xf32, #tpu.memory_space<vmem>>, vector<1x256xf32>,
    } else {
    }
    %c0 = arith.constant 0 : index
    %c0_1 = arith.constant 0 : index
    %3 = vector.load %arg7[%c0, %c0_1] : memref<1x256xf32, #tpu.memory_space<vmem>>, vector<1x256xf32>
    %c0_2 = arith.constant 0 : index
    %c0_3 = arith.constant 0 : index
    %4 = vector.load %arg3[%c0_2, %c0_3] : memref<1x4xbf16, #tpu.memory_space<vmem>>, vector<1x4xbf16>
    %c0_4 = arith.constant 0 : index
    %c0_5 = arith.constant 0 : index
    %5 = vector.load %arg4[%c0_4, %c0_5] : memref<4x256xbf16, #tpu.memory_space<vmem>>, vector<4x256xbf16>
    %cst = arith.constant dense<0.000000e+00> : vector<1x256xf32>
    %6 = tpu.matmul %4, %5, %cst {dimension_numbers = #tpu.dot_dimension_numbers<[1], [0], [0], [1], [0, 0, 1, 1], [], []>} : vector<1x4xbf16>, vector<4x256xbf16>, vector<1x256xf32> -> vector<1x256xf32>
    %7 = arith.addf %3, %6 : vector<1x256xf32>
    %c0_6 = arith.constant 0 : index
    %c0_7 = arith.constant 0 : index
    %8 = vector.load %arg7[%c0_6, %c0_7] : memref<1x256xf32, #tpu.memory_space<vmem>>, vector<1x256xf32>
    tpu.vector_store %arg7[%c0_6, %c0_7], %7 {strides = array<i32>} : memref<1x256xf32, #tpu.memory_space<vmem>>, vector<1x256xf32>,
    %c0_i32_8 = arith.constant 0 : i32
    %9 = arith.cmpi eq, %arg2, %c0_i32_8 : i32
    %10 = arith.extui %9 : i1 to i32
    %c0_i32_9 = arith.constant 0 : i32
    %11 = arith.cmpi ne, %10, %c0_i32_9 : i32
    scf.if %11 {
      %c0_10 = arith.constant 0 : index
      %c0_11 = arith.constant 0 : index
      %12 = vector.load %arg7[%c0_10, %c0_11] : memref<1x256xf32, #tpu.memory_space<vmem>>, vector<1x256xf32>
      %c0_12 = arith.constant 0 : index
      %c0_13 = arith.constant 0 : index
      %13 = vector.load %arg5[%c0_12, %c0_13] : memref<1x1xf32, #tpu.memory_space<vmem>>, vector<1x1xf32>
      %14 = vector.broadcast %13 : vector<1x1xf32> to vector<1x256xf32>
      %15 = arith.addf %12, %14 : vector<1x256xf32>
      %c0_14 = arith.constant 0 : index
      %c0_15 = arith.constant 0 : index
      %16 = vector.load %arg6[%c0_14, %c0_15] : memref<1x256xf32, #tpu.memory_space<vmem>>, vector<1x256xf32>
      tpu.vector_store %arg6[%c0_14, %c0_15], %15 {strides = array<i32>} : memref<1x256xf32, #tpu.memory_space<vmem>>, vector<1x256xf32>,
    } else {
    }
    return
  }
  func.func @transform_0(%arg0: i32, %arg1: i32, %arg2: i32) -> (i32, i32) {
    %c0_i32 = arith.constant 0 : i32
    return %arg0, %arg2 : i32, i32
  }
  func.func @transform_1(%arg0: i32, %arg1: i32, %arg2: i32) -> (i32, i32) {
    %c0_i32 = arith.constant 0 : i32
    return %arg2, %arg1 : i32, i32
  }
  func.func @transform_2(%arg0: i32, %arg1: i32, %arg2: i32) -> (i32, i32) {
    %c0_i32 = arith.constant 0 : i32
    %c0_i32_0 = arith.constant 0 : i32
    return %arg0, %c0_i32 : i32, i32
  }
  func.func @transform_3(%arg0: i32, %arg1: i32, %arg2: i32) -> (i32, i32) {
    %c0_i32 = arith.constant 0 : i32
    return %arg0, %arg1 : i32, i32
  }
}

module attributes {stable_mosaic.version = 11 : i64} {
  func.func @_mm_t_kernel(%arg0: i32, %arg1: i32, %arg2: i32, %arg3: memref<4x72xbf16, #tpu.memory_space<vmem>>, %arg4: memref<72x256xbf16, #tpu.memory_space<vmem>>, %arg5: memref<4x1xf32, #tpu.memory_space<vmem>>, %arg6: memref<4x256xbf16, #tpu.memory_space<vmem>>, %arg7: memref<4x256xf32, #tpu.memory_space<vmem>>) attributes {dimension_semantics = [#tpu.dimension_semantics<parallel>, #tpu.dimension_semantics<parallel>, #tpu.dimension_semantics<arbitrary>], iteration_bounds = array<i64: 1, 2, 1>, scalar_prefetch = 0 : i64, scratch_operands = 1 : i64, tpu.core_type = #tpu.core_type<tc>, window_params = [{transform_indices = @transform_0, window_bounds = array<i64: 4, 72>}, {transform_indices = @transform_1, window_bounds = array<i64: 72, 256>}, {transform_indices = @transform_2, window_bounds = array<i64: 4, 1>}, {transform_indices = @transform_3, window_bounds = array<i64: 4, 256>}]} {
    %c0_i32 = arith.constant 0 : i32
    %0 = arith.cmpi eq, %arg2, %c0_i32 : i32
    %1 = arith.extui %0 : i1 to i32
    %c0_i32_0 = arith.constant 0 : i32
    %2 = arith.cmpi ne, %1, %c0_i32_0 : i32
    scf.if %2 {
      %cst_10 = arith.constant 0.000000e+00 : f32
      %12 = vector.broadcast %cst_10 : f32 to vector<4x256xf32>
      %c0_11 = arith.constant 0 : index
      %c0_12 = arith.constant 0 : index
      %13 = vector.load %arg7[%c0_11, %c0_12] : memref<4x256xf32, #tpu.memory_space<vmem>>, vector<4x256xf32>
      tpu.vector_store %arg7[%c0_11, %c0_12], %12 {strides = array<i32>} : memref<4x256xf32, #tpu.memory_space<vmem>>, vector<4x256xf32>,
    } else {
    }
    %c0 = arith.constant 0 : index
    %c0_1 = arith.constant 0 : index
    %3 = vector.load %arg7[%c0, %c0_1] : memref<4x256xf32, #tpu.memory_space<vmem>>, vector<4x256xf32>
    %c0_2 = arith.constant 0 : index
    %c0_3 = arith.constant 0 : index
    %4 = vector.load %arg3[%c0_2, %c0_3] : memref<4x72xbf16, #tpu.memory_space<vmem>>, vector<4x72xbf16>
    %c0_4 = arith.constant 0 : index
    %c0_5 = arith.constant 0 : index
    %5 = vector.load %arg4[%c0_4, %c0_5] : memref<72x256xbf16, #tpu.memory_space<vmem>>, vector<72x256xbf16>
    %cst = arith.constant dense<0.000000e+00> : vector<4x256xf32>
    %6 = tpu.matmul %4, %5, %cst {dimension_numbers = #tpu.dot_dimension_numbers<[1], [0], [0], [1], [0, 0, 1, 1], [], []>} : vector<4x72xbf16>, vector<72x256xbf16>, vector<4x256xf32> -> vector<4x256xf32>
    %7 = arith.addf %3, %6 : vector<4x256xf32>
    %c0_6 = arith.constant 0 : index
    %c0_7 = arith.constant 0 : index
    %8 = vector.load %arg7[%c0_6, %c0_7] : memref<4x256xf32, #tpu.memory_space<vmem>>, vector<4x256xf32>
    tpu.vector_store %arg7[%c0_6, %c0_7], %7 {strides = array<i32>} : memref<4x256xf32, #tpu.memory_space<vmem>>, vector<4x256xf32>,
    %c0_i32_8 = arith.constant 0 : i32
    %9 = arith.cmpi eq, %arg2, %c0_i32_8 : i32
    %10 = arith.extui %9 : i1 to i32
    %c0_i32_9 = arith.constant 0 : i32
    %11 = arith.cmpi ne, %10, %c0_i32_9 : i32
    scf.if %11 {
      %c0_10 = arith.constant 0 : index
      %c0_11 = arith.constant 0 : index
      %12 = vector.load %arg7[%c0_10, %c0_11] : memref<4x256xf32, #tpu.memory_space<vmem>>, vector<4x256xf32>
      %c0_12 = arith.constant 0 : index
      %c0_13 = arith.constant 0 : index
      %13 = vector.load %arg5[%c0_12, %c0_13] : memref<4x1xf32, #tpu.memory_space<vmem>>, vector<4x1xf32>
      %14 = vector.broadcast %13 : vector<4x1xf32> to vector<4x256xf32>
      %15 = arith.addf %12, %14 : vector<4x256xf32>
      %cst_14 = arith.constant 0.000000e+00 : f32
      %16 = vector.broadcast %cst_14 : f32 to vector<4x256xf32>
      %17 = arith.maximumf %15, %16 : vector<4x256xf32>
      %18 = arith.truncf %17 : vector<4x256xf32> to vector<4x256xbf16>
      %c0_15 = arith.constant 0 : index
      %c0_16 = arith.constant 0 : index
      %19 = vector.load %arg6[%c0_15, %c0_16] : memref<4x256xbf16, #tpu.memory_space<vmem>>, vector<4x256xbf16>
      tpu.vector_store %arg6[%c0_15, %c0_16], %18 {strides = array<i32>} : memref<4x256xbf16, #tpu.memory_space<vmem>>, vector<4x256xbf16>,
    } else {
    }
    return
  }
  func.func @transform_0(%arg0: i32, %arg1: i32, %arg2: i32) -> (i32, i32) {
    %c0_i32 = arith.constant 0 : i32
    return %arg0, %arg2 : i32, i32
  }
  func.func @transform_1(%arg0: i32, %arg1: i32, %arg2: i32) -> (i32, i32) {
    %c0_i32 = arith.constant 0 : i32
    return %arg2, %arg1 : i32, i32
  }
  func.func @transform_2(%arg0: i32, %arg1: i32, %arg2: i32) -> (i32, i32) {
    %c0_i32 = arith.constant 0 : i32
    %c0_i32_0 = arith.constant 0 : i32
    return %arg0, %c0_i32 : i32, i32
  }
  func.func @transform_3(%arg0: i32, %arg1: i32, %arg2: i32) -> (i32, i32) {
    %c0_i32 = arith.constant 0 : i32
    return %arg0, %arg1 : i32, i32
  }
}

</mosaic_0001>

<llo_original>
// kernel: wnet_forward.46
$region0: #{wnet_forward.46}
  #allocation0 [shape = 'u32[]', space=smem, size = 0x4, offset = 0x4, fixed_abs, tag = 'smem constant byte address 0x4 - core index']
  #allocation1 [shape = 'u32[72,128]{1,0:T(1,128)}', space=vmem, size = 0x9000, scoped, tag = 'internal scratch']
  #allocation2 [shape = 'f32[4,256]{1,0:T(4,128)}', space=vmem, size = 0x1000, scoped, tag = 'scratch operand']
  %s0 = inlined_call_operand.vmem [shape: bf16[4,9], index: 0, kind: input, shape index: {}]
  %s1 = inlined_call_operand.vmem [shape: bf16[9,512], index: 1, kind: input, shape index: {}]
  %s2 = inlined_call_operand.vmem [shape: f32[4,1], index: 2, kind: input, shape index: {}]
  %s3 = inlined_call_operand.vmem [shape: bf16[4,512], index: 3, kind: output, shape index: {}]
  %s4 = sld [smem:[#allocation0]]
  $region91: #{wnet_forward.46} parent=0
    _
  %s6 = ssub.s32 1, %s4
  %s7 = scalar_select 0, %s6, %s4
  $region1: #{wnet_forward.46} parent=0
    #allocation3 [shape = 'u8[16384]{0}', space=vmem, size = 0x4000, scoped, tag = 'input window, operand 1']
    loop: start=0, step=1, limit=4
    $region2: #{wnet_forward.46} parent=1 // loop_pre_header
      _
    $region3: #{wnet_forward.46} parent=1 // loop_header
      %s9 = sphi 0, %s13
      %p10 = scmp.ge.s32.totalorder %s9, 4
      %s16 = sphi 0, %s35
      %s17 = sphi 0, %s31
      %s18 = sphi 0, %s27
      %s19 = sphi 0, %s16
      %s20 = sphi 0, %s17
      %s21 = sphi 0, %s18
      %s22 = sphi 0, %s19
      %s23 = sphi 0, %s20
      %s24 = sphi 0, %s21
      %s40 = sphi 0, %s42
      %s43 = sphi 0, %s40
      %s44 = sphi 0, %s43
      %s60 = sphi 0, %s44
      %s68 = sphi 0, %s70
      %s71 = sphi 0, %s68
      %s72 = sphi 0, %s71
      %s88 = sphi 0, %s72
      %s94 = sphi 0, %s96
      %s97 = sphi 0, %s94
      %s98 = sphi 0, %s97
      %s114 = sphi 0, %s98
      %s122 = sphi 0, %s124
      %s125 = sphi 0, %s122
      %s126 = sphi 0, %s125
      %s142 = sphi 0, %s126
    $region4: #{wnet_forward.46} parent=1 // loop_header_branch
      %12 = sbr.rel (%p10) target = $region8
    $region5: #{wnet_forward.46} parent=1 // loop_body
      %s14 = ssub.s32 %s9, 1
      %s15 = ssub.s32 %s9, 2
      %s25 = sadd.s32 1, %s18
      %p26 = scmp.ge.s32.totalorder %s25, 1
      %s27 = scalar_select %p26, 0, %s25
      %s28 = sadd.s32 1, %s17
      %s29 = scalar_select %p26, %s28, %s17
      %p30 = scmp.ge.s32.totalorder %s29, 2
      %s31 = scalar_select %p30, 0, %s29
      %s32 = sadd.s32 1, %s16
      %s33 = scalar_select %p30, %s32, %s16
      %p34 = scmp.ge.s32.totalorder %s33, 1
      %s35 = scalar_select %p34, 0, %s33
      %s36 = ssub.s32 %s16, %s35
      %s37 = ssub.s32 %s18, %s27
      %s38 = sor.u32 %s36, %s37
      %p39 = scmp.eq.s32.totalorder %s38, 0
      %s41 = sadd.s32 %s40, 1
      %s42 = scalar_select %p39, %s40, %s41
      %p45 = pneg %p39
      %p46 = scmp.eq.s32.totalorder %s9, 1
      %p47 = por %p45, %p46
      %p48 = scmp.ne.s32.totalorder %s40, %s43
      %p49 = scmp.eq.s32.totalorder %s9, 0
      %p50 = por %p48, %p49
      %p51 = scmp.ne.s32.totalorder %s40, %s43
      %p52 = scmp.eq.s32.totalorder %s14, 1
      %p53 = por %p51, %p52
      %p54 = scmp.ne.s32.totalorder %s43, %s44
      %p55 = scmp.eq.s32.totalorder %s14, 0
      %p56 = por %p54, %p55
      %p57 = scmp.ne.s32.totalorder %s43, %s44
      %p58 = scmp.eq.s32.totalorder %s15, 1
      %p59 = por %p57, %p58
      %p61 = scmp.ne.s32.totalorder %s44, %s60
      %p62 = scmp.eq.s32.totalorder %s15, 0
      %p63 = por %p61, %p62
      %s64 = ssub.s32 %s18, %s27
      %s65 = ssub.s32 %s17, %s31
      %s66 = sor.u32 %s64, %s65
      %p67 = scmp.eq.s32.totalorder %s66, 0
      %s69 = sadd.s32 %s68, 1
      %s70 = scalar_select %p67, %s68, %s69
      %p73 = pneg %p67
      %p74 = scmp.eq.s32.totalorder %s9, 1
      %p75 = por %p73, %p74
      %p76 = scmp.ne.s32.totalorder %s68, %s71
      %p77 = scmp.eq.s32.totalorder %s9, 0
      %p78 = por %p76, %p77
      %p79 = scmp.ne.s32.totalorder %s68, %s71
      %p80 = scmp.eq.s32.totalorder %s14, 1
      %p81 = por %p79, %p80
      %p82 = scmp.ne.s32.totalorder %s71, %s72
      %p83 = scmp.eq.s32.totalorder %s14, 0
      %p84 = por %p82, %p83
      %p85 = scmp.ne.s32.totalorder %s71, %s72
      %p86 = scmp.eq.s32.totalorder %s15, 1
      %p87 = por %p85, %p86
      %p89 = scmp.ne.s32.totalorder %s72, %s88
      %p90 = scmp.eq.s32.totalorder %s15, 0
      %p91 = por %p89, %p90
      %s92 = ssub.s32 %s16, %s35
      %p93 = scmp.eq.s32.totalorder %s92, 0
      %s95 = sadd.s32 %s94, 1
      %s96 = scalar_select %p93, %s94, %s95
      %p99 = pneg %p93
      %p100 = scmp.eq.s32.totalorder %s9, 1
      %p101 = por %p99, %p100
      %p102 = scmp.ne.s32.totalorder %s94, %s97
      %p103 = scmp.eq.s32.totalorder %s9, 0
      %p104 = por %p102, %p103
      %p105 = scmp.ne.s32.totalorder %s94, %s97
      %p106 = scmp.eq.s32.totalorder %s14, 1
      %p107 = por %p105, %p106
      %p108 = scmp.ne.s32.totalorder %s97, %s98
      %p109 = scmp.eq.s32.totalorder %s14, 0
      %p110 = por %p108, %p109
      %p111 = scmp.ne.s32.totalorder %s97, %s98
      %p112 = scmp.eq.s32.totalorder %s15, 1
      %p113 = por %p111, %p112
      %p115 = scmp.ne.s32.totalorder %s98, %s114
      %p116 = scmp.eq.s32.totalorder %s15, 0
      %p117 = por %p115, %p116
      %s118 = ssub.s32 %s16, %s35
      %s119 = ssub.s32 %s17, %s31
      %s120 = sor.u32 %s118, %s119
      %p121 = scmp.eq.s32.totalorder %s120, 0
      %s123 = sadd.s32 %s122, 1
      %s124 = scalar_select %p121, %s122, %s123
      %p127 = pneg %p121
      %p128 = scmp.eq.s32.totalorder %s9, 1
      %p129 = por %p127, %p128
      %p130 = scmp.ne.s32.totalorder %s122, %s125
      %p131 = scmp.eq.s32.totalorder %s9, 0
      %p132 = por %p130, %p131
      %p133 = scmp.ne.s32.totalorder %s122, %s125
      %p134 = scmp.eq.s32.totalorder %s14, 1
      %p135 = por %p133, %p134
      %p136 = scmp.ne.s32.totalorder %s125, %s126
      %p137 = scmp.eq.s32.totalorder %s14, 0
      %p138 = por %p136, %p137
      %p139 = scmp.ne.s32.totalorder %s125, %s126
      %p140 = scmp.eq.s32.totalorder %s15, 1
      %p141 = por %p139, %p140
      %p143 = scmp.ne.s32.totalorder %s126, %s142
      %p144 = scmp.eq.s32.totalorder %s15, 0
      %p145 = por %p143, %p144
      %p146 = scmp.le.s32.totalorder 1, %s9
      %p147 = scmp.lt.s32.totalorder %s9, 3
      %p148 = pnand %p146, %p147
      %p149 = pneg %p148
      // Predicated region
      $region9: #{wnet_forward.46} parent=5 // pred_check
        _
      $region10: #{wnet_forward.46} parent=5 // pred_check_branch
        %151 = sbr.rel (%p148) target = $region12
      $region11: #{wnet_forward.46} parent=5 // pred_region
        %s152 = ssub.s32 %s9, 1
        // Predicated region
        $region13: #{wnet_forward.46} parent=11 // pred_check
          %p153 = pneg %p56
        $region14: #{wnet_forward.46} parent=11 // pred_check_branch
          %155 = sbr.rel (%p153) target = $region16
        $region15: #{wnet_forward.46} parent=11 // pred_region
          %p156 = scmp.lt.s32.totalorder %s19, 0
          %s157 = scalar_select %p156, %s19, 0
          %p158 = scmp.lt.s32.totalorder %s21, 0
          %s159 = scalar_select %p158, %s21, 0
          %s160 = sadd.s32 %s159, %s157
          %s161 = smul.addr %s160, 2
          %s162 = scalar_lea.vmem %s0, %s161
        $region16: #{wnet_forward.46} parent=11 // pred_fallthru
          _
        // Predicated region
        $region17: #{wnet_forward.46} parent=11 // pred_check
          %p163 = pneg %p110
        $region18: #{wnet_forward.46} parent=11 // pred_check_branch
          %165 = sbr.rel (%p163) target = $region20
        $region19: #{wnet_forward.46} parent=11 // pred_region
          %p166 = scmp.lt.s32.totalorder %s19, 0
          %s167 = scalar_select %p166, %s19, 0
          %s168 = smul.addr %s167, 4
          %s169 = scalar_lea.vmem %s2, %s168
        $region20: #{wnet_forward.46} parent=11 // pred_fallthru
          _
      $region12: #{wnet_forward.46} parent=5 // pred_fallthru
        _
      %p170 = scmp.lt.s32.totalorder %s9, 2
      // Predicated region
      $region21: #{wnet_forward.46} parent=5 // pred_check
        %p171 = pneg %p170
      $region22: #{wnet_forward.46} parent=5 // pred_check_branch
        %173 = sbr.rel (%p171) target = $region24
      $region23: #{wnet_forward.46} parent=5 // pred_region
        // Predicated region
        $region25: #{wnet_forward.46} parent=23 // pred_check
          %p174 = pneg %p78
        $region26: #{wnet_forward.46} parent=23 // pred_check_branch
          %176 = sbr.rel (%p174) target = $region28
        $region27: #{wnet_forward.46} parent=23 // pred_region
          %s177 = sand.u32 %s68, 1
          %s178 = sand.u32 %s68, 1
          %s179 = smul.addr %s178, 16
          %s180 = scalar_lea.vmem [#allocation3], %s179
          %s181 = smul.u32 2, %s18
          %s182 = smul.u32 2, %s17
          %s183 = smul.addr %s181, 4
          %s184 = sadd.s32 %s182, %s183
          %s185 = smul.addr %s184, 4
          %s186 = scalar_lea.vmem %s1, %s185
          // Predicated region
          $region29: #{wnet_forward.46} parent=27 // pred_check
            _
          $region30: #{wnet_forward.46} parent=27 // pred_check_branch
            %188 = sbr.rel (0) target = $region32
          $region31: #{wnet_forward.46} parent=27 // pred_region
            // Predicated region
            $region33: #{wnet_forward.46} parent=31 // pred_check
              _
            $region34: #{wnet_forward.46} parent=31 // pred_check_branch
              %190 = sbr.rel (0) target = $region36
            $region35: #{wnet_forward.46} parent=31 // pred_region
              // Predicated region
              $region48: #{wnet_forward.46} parent=35 // pred_check
                _
              $region49: #{wnet_forward.46} parent=35 // pred_check_branch
                %208 = sbr.rel (0) target = $region51
              $region50: #{wnet_forward.46} parent=35 // pred_region
                loop: start=0, step=1, limit=1
                $region52: #{wnet_forward.46} parent=50 // loop_pre_header
                  _
                $region53: #{wnet_forward.46} parent=50 // loop_header
                  %s210 = sphi 0, %s214
                  %p211 = scmp.ge.s32.totalorder %s210, 1
                  %s215 = sphi %s186, %s186
                  %s216 = sphi %s180, %s180
                $region54: #{wnet_forward.46} parent=50 // loop_header_branch
                  %213 = sbr.rel (%p211) target = $region58
                $region55: #{wnet_forward.46} parent=50 // loop_body
                  %v217 = vld [vmem:[%s215] sm:$0xff]
                  %218 = vst [vmem:[%s216] sm:$0xff] %v217
                  %v219 = vld [vmem:[%s215 + $0x10] sm:$0xff]
                  %220 = vst [vmem:[%s216 + $0x8] sm:$0xff] %v219
                $region56: #{wnet_forward.46} parent=50 // loop_footer
                  %s214 = sadd.s32 1, %s210
                $region57: #{wnet_forward.46} parent=50 // loop_footer_branch
                  %209 = sbr.rel target = $region53
                $region58: #{wnet_forward.46} parent=50 // loop_exit
                  _
              $region51: #{wnet_forward.46} parent=35 // pred_fallthru
                _
              // Predicated region
              $region59: #{wnet_forward.46} parent=35 // pred_check
                _
              $region60: #{wnet_forward.46} parent=35 // pred_check_branch
                %222 = sbr.rel target = $region62
              $region61: #{wnet_forward.46} parent=35 // pred_region
                _
              $region62: #{wnet_forward.46} parent=35 // pred_fallthru
                _
            $region36: #{wnet_forward.46} parent=31 // pred_fallthru
              _
            // Predicated region
            $region37: #{wnet_forward.46} parent=31 // pred_check
              _
            $region38: #{wnet_forward.46} parent=31 // pred_check_branch
              %192 = sbr.rel target = $region40
            $region39: #{wnet_forward.46} parent=31 // pred_region
              %s194 = ssub.s32 256, 1
              loop: start=0, step=1, limit=1
              $region41: #{wnet_forward.46} parent=39 // loop_pre_header
                _
              $region42: #{wnet_forward.46} parent=39 // loop_header
                %s196 = sphi 0, %s200
                %p197 = scmp.ge.s32.totalorder %s196, 1
                %s201 = sphi %s186, %s186
                %s202 = sphi %s180, %s180
              $region43: #{wnet_forward.46} parent=39 // loop_header_branch
                %199 = sbr.rel (%p197) target = $region47
              $region44: #{wnet_forward.46} parent=39 // loop_body
                %v203 = vld [vmem:[%s201] sm:%s194]
                %204 = vst [vmem:[%s202] sm:%s194] %v203
                %v205 = vld [vmem:[%s201 + $0x10] sm:%s194]
                %206 = vst [vmem:[%s202 + $0x8] sm:%s194] %v205
              $region45: #{wnet_forward.46} parent=39 // loop_footer
                %s200 = sadd.s32 1, %s196
              $region46: #{wnet_forward.46} parent=39 // loop_footer_branch
                %195 = sbr.rel target = $region42
              $region47: #{wnet_forward.46} parent=39 // loop_exit
                _
            $region40: #{wnet_forward.46} parent=31 // pred_fallthru
              _
          $region32: #{wnet_forward.46} parent=27 // pred_fallthru
            _
          %223 = vnop
        $region28: #{wnet_forward.46} parent=23 // pred_fallthru
          _
      $region24: #{wnet_forward.46} parent=5 // pred_fallthru
        _
      %p224 = scmp.le.s32.totalorder 1, %s9
      %p225 = scmp.lt.s32.totalorder %s9, 3
      %p226 = pnand %p224, %p225
      %p227 = pneg %p226
      // Predicated region
      $region63: #{wnet_forward.46} parent=5 // pred_check
        _
      $region64: #{wnet_forward.46} parent=5 // pred_check_branch
        %229 = sbr.rel (%p226) target = $region66
      $region65: #{wnet_forward.46} parent=5 // pred_region
        %s230 = ssub.s32 %s9, 1
        %s231 = sand.u32 %s71, 1
        %s232 = sand.u32 %s71, 1
        %s233 = smul.addr %s232, 16
        %s234 = scalar_lea.vmem [#allocation3], %s233
        // Predicated region
        $region67: #{wnet_forward.46} parent=65 // pred_check
          %p235 = pneg %p84
        $region68: #{wnet_forward.46} parent=65 // pred_check_branch
          %237 = sbr.rel (%p235) target = $region70
        $region69: #{wnet_forward.46} parent=65 // pred_region
          _
        $region70: #{wnet_forward.46} parent=65 // pred_fallthru
          _
        %p238 = scmp.lt.s32.totalorder %s19, 0
        %s239 = scalar_select %p238, %s19, 0
        %p240 = scmp.lt.s32.totalorder %s21, 0
        %s241 = scalar_select %p240, %s21, 0
        %s242 = sadd.s32 %s241, %s239
        %s243 = smul.addr %s242, 2
        %s244 = scalar_lea.vmem %s0, %s243
        %p245 = pneg %p56
        %p246 = pneg %p53
        %s247 = sand.u32 %s71, 1
        %s248 = sand.u32 %s71, 1
        %s249 = smul.addr %s248, 16
        %s250 = scalar_lea.vmem [#allocation3], %s249
        %p251 = pneg %p84
        %p252 = pneg %p81
        %p253 = scmp.lt.s32.totalorder %s19, 0
        %s254 = scalar_select %p253, %s19, 0
        %s255 = smul.addr %s254, 4
        %s256 = scalar_lea.vmem %s2, %s255
        %p257 = pneg %p110
        %p258 = pneg %p107
        %p259 = pneg %p138
        %p260 = pneg %p135
        %s261 = smul.u32 2, %s20
        %p262 = scmp.lt.s32.totalorder %s19, 0
        %s263 = scalar_select %p262, %s19, 0
        %p264 = scmp.lt.s32.totalorder %s261, 3
        %s265 = scalar_select %p264, %s261, 3
        %s266 = smul.addr %s263, 4
        %s267 = sadd.s32 %s265, %s266
        %s268 = smul.addr %s267, 2
        %s269 = scalar_lea.vmem %s3, %s268
        %p270 = scmp.lt.s32.totalorder %s19, 0
        %s271 = scalar_select %p270, %s19, 0
        %p272 = scmp.lt.s32.totalorder %s21, 0
        %s273 = scalar_select %p272, %s21, 0
        %s274 = sadd.s32 %s273, %s271
        %s275 = smul.addr %s274, 2
        %s276 = scalar_lea.vmem %s0, %s275
        %s277 = smul.u32 2, %s21
        %s278 = smul.u32 2, %s20
        %p279 = scmp.lt.s32.totalorder %s19, 0
        %s280 = scalar_select %p279, %s19, 0
        %s281 = smul.addr %s280, 4
        %s282 = scalar_lea.vmem %s2, %s281
        %s283 = smul.u32 2, %s20
        %p284 = scmp.lt.s32.totalorder %s19, 0
        %s285 = scalar_select %p284, %s19, 0
        %p286 = scmp.lt.s32.totalorder %s283, 3
        %s287 = scalar_select %p286, %s283, 3
        %s288 = smul.addr %s285, 4
        %s289 = sadd.s32 %s287, %s288
        %s290 = smul.addr %s289, 2
        %s291 = scalar_lea.vmem %s3, %s290
        %s292 = smul.u32 2, %s20
        %p294 = scmp.eq.s32.totalorder %s21, 0
        // Predicated region
        $region71: #{wnet_forward.46} parent=65 // pred_check
          %p295 = pneg %p294
        $region72: #{wnet_forward.46} parent=65 // pred_check_branch
          %297 = sbr.rel (%p295) target = $region74
        $region73: #{wnet_forward.46} parent=65 // pred_region
          %298 = vst [vmem:[#allocation2] sm:$0xff] 0.0
        $region74: #{wnet_forward.46} parent=65 // pred_fallthru
          _
        %v299 = vld [vmem:[#allocation2] sm:$0xff]
        %v300 = vld [vmem:[%s276] sm:$0x3]
        %v301 = vld [vmem:[%s234] sm:$0xff]
        %v302 = vld [vmem:[%s234 + $0x8] sm:$0x11]
        %v305 = vunpack.c.l.b16 %v301
        %v306 = vunpack.c.h.b16 %v301
        %v307 = vunpack.c.l.b16 %v302
        %v308 = vunpack.c.h.b16 %v302
        %v309 = vpack.c.b16 %v307, %v305
        %v310 = vpack.c.b16 %v308, %v306
        %vm311 = vcmask 72704
        %v313 = vsel %vm311, %v300, 0
        %vm315 = vcmask 1043456
        %vm316 = vcmask 1044480
        %v317 = vsel %vm315, 4294967295, 65535
        %v318 = vsel %vm316, %v317, 0
        %v320 = vand.u32 %v309, %v318
        %v323 = vand.u32 %v310, %v318
        %325 = vmatpush.bf16.msra.mxu0 0
        %326 = vmatpush.bf16.msra.mxu0 0
        %327 = vmatpush.bf16.msra.mxu0 0
        %328 = vmatpush.bf16.msra.mxu0 0
        %329 = vmatpush.bf16.msra.mxu0 0
        %330 = vmatpush.bf16.msra.mxu0 0
        %331 = vmatpush.bf16.msra.mxu0 0
        %332 = vmatpush.bf16.msra.mxu0 %v320
        %333 = vmatmul.bf16.gmra.mxu0 %v313
        %v334 = vpop.f32.mrf.mxu0
        %v335 = vadd.f32 0.0, %v334
        %v336 = vpop.f32.mrf.mxu0
        %337 = vdwg.mxu0
        %338 = vmatpush.bf16.msra.mxu0 0
        %339 = vmatpush.bf16.msra.mxu0 0
        %340 = vmatpush.bf16.msra.mxu0 0
        %341 = vmatpush.bf16.msra.mxu0 0
        %342 = vmatpush.bf16.msra.mxu0 0
        %343 = vmatpush.bf16.msra.mxu0 0
        %344 = vmatpush.bf16.msra.mxu0 0
        %345 = vmatpush.bf16.msra.mxu0 %v323
        %346 = vmatmul.bf16.gmra.mxu0 %v313
        %v347 = vpop.f32.mrf.mxu0
        %v348 = vadd.f32 0.0, %v347
        %v349 = vpop.f32.mrf.mxu0
        %350 = vdwg.mxu0
        %v353 = vrot.slane %v348, 4
        %v354 = vsel %vm315, %v335, %v353
        %v356 = vadd.f32 %v299, %v354
        %357 = vst [vmem:[#allocation2] sm:$0xff] %v356
        // Predicated region
        $region75: #{wnet_forward.46} parent=65 // pred_check
          %p358 = pneg %p294
        $region76: #{wnet_forward.46} parent=65 // pred_check_branch
          %360 = sbr.rel (%p358) target = $region78
        $region77: #{wnet_forward.46} parent=65 // pred_region
          %v361 = vld [vmem:[#allocation2] sm:$0xff]
          %v362 = vld [vmem:[%s282] sm:$0xf]
          %364 = vset.pattern.permute.xlu0 0
          %365 = vperm.xlu0 %364, %v362
          %v366 = vpop.permute.xlu0 %365
          %v368 = vunpack.c.l.s4 839922192
          %v369 = vunpack.c.0.s8 %v368
          %v370 = vperm.slane %v366, %v369
          %v372 = vadd.f32 %v361, %v370
          %v373 = vmax.f32 %v372, 0.0
          %375 = vst [vmem:[#allocation1] ss:$2 sm:$0xff] %v373
          %v376 = vld.sshfl [vmem:[#allocation1] sm:$0xff pattern:$0x75316420]
          %v377 = vld.sshfl [vmem:[#allocation1 + $0x8] sm:$0xff pattern:$0x75316420]
          %v380 = vpack.c.bf16 %v377, %v376
          %v382 = vrot.slane %v380, 2
          %vm383 = vcmask 1041408
          %v386 = vsel %vm383, %v380, %v382
          %388 = vst [vmem:[%s291] sm:$0xf] %v386
        $region78: #{wnet_forward.46} parent=65 // pred_fallthru
          _
        %s389 = smul.u32 2, %s20
        %p390 = scmp.lt.s32.totalorder %s19, 0
        %s391 = scalar_select %p390, %s19, 0
        %p392 = scmp.lt.s32.totalorder %s389, 3
        %s393 = scalar_select %p392, %s389, 3
        %s394 = smul.addr %s391, 4
        %s395 = sadd.s32 %s393, %s394
        %s396 = smul.addr %s395, 2
        %s397 = scalar_lea.vmem %s3, %s396
        // Predicated region
        $region79: #{wnet_forward.46} parent=65 // pred_check
          %p398 = pneg %p135
        $region80: #{wnet_forward.46} parent=65 // pred_check_branch
          %400 = sbr.rel (%p398) target = $region82
        $region81: #{wnet_forward.46} parent=65 // pred_region
          %s401 = smul.u32 2, %s20
        $region82: #{wnet_forward.46} parent=65 // pred_fallthru
          _
      $region66: #{wnet_forward.46} parent=5 // pred_fallthru
        _
      %p402 = scmp.le.s32.totalorder 2, %s9
      // Predicated region
      $region83: #{wnet_forward.46} parent=5 // pred_check
        %p403 = pneg %p402
      $region84: #{wnet_forward.46} parent=5 // pred_check_branch
        %405 = sbr.rel (%p403) target = $region86
      $region85: #{wnet_forward.46} parent=5 // pred_region
        %s406 = ssub.s32 %s9, 2
        // Predicated region
        $region87: #{wnet_forward.46} parent=85 // pred_check
          %p407 = pneg %p141
        $region88: #{wnet_forward.46} parent=85 // pred_check_branch
          %409 = sbr.rel (%p407) target = $region90
        $region89: #{wnet_forward.46} parent=85 // pred_region
          %s410 = smul.u32 2, %s23
          %p411 = scmp.lt.s32.totalorder %s22, 0
          %s412 = scalar_select %p411, %s22, 0
          %p413 = scmp.lt.s32.totalorder %s410, 3
          %s414 = scalar_select %p413, %s410, 3
          %s415 = smul.addr %s412, 4
          %s416 = sadd.s32 %s414, %s415
          %s417 = smul.addr %s416, 2
          %s418 = scalar_lea.vmem %s3, %s417
        $region90: #{wnet_forward.46} parent=85 // pred_fallthru
          _
      $region86: #{wnet_forward.46} parent=5 // pred_fallthru
        _
    $region6: #{wnet_forward.46} parent=1 // loop_footer
      %s13 = sadd.s32 1, %s9
    $region7: #{wnet_forward.46} parent=1 // loop_footer_branch
      %8 = sbr.rel target = $region3
    $region8: #{wnet_forward.46} parent=1 // loop_exit
      _

// kernel: wnet_forward.47
$region0: #{wnet_forward.47}
  #allocation0 [shape = 'u32[]', space=smem, size = 0x4, offset = 0x4, fixed_abs, tag = 'smem constant byte address 0x4 - core index']
  #allocation1 [shape = 'u32[72,128]{1,0:T(1,128)}', space=vmem, size = 0x9000, scoped, tag = 'internal scratch']
  #allocation2 [shape = 'f32[4,256]{1,0:T(4,128)}', space=vmem, size = 0x1000, scoped, tag = 'scratch operand']
  %s0 = inlined_call_operand.vmem [shape: bf16[4,36], index: 0, kind: input, shape index: {}]
  %s1 = inlined_call_operand.vmem [shape: bf16[36,512], index: 1, kind: input, shape index: {}]
  %s2 = inlined_call_operand.vmem [shape: f32[4,1], index: 2, kind: input, shape index: {}]
  %s3 = inlined_call_operand.vmem [shape: bf16[4,512], index: 3, kind: output, shape index: {}]
  %s4 = sld [smem:[#allocation0]]
  $region91: #{wnet_forward.47} parent=0
    _
  %s6 = ssub.s32 1, %s4
  %s7 = scalar_select 0, %s6, %s4
  $region1: #{wnet_forward.47} parent=0
    #allocation3 [shape = 'u8[40960]{0}', space=vmem, size = 0xa000, scoped, tag = 'input window, operand 1']
    loop: start=0, step=1, limit=4
    $region2: #{wnet_forward.47} parent=1 // loop_pre_header
      _
    $region3: #{wnet_forward.47} parent=1 // loop_header
      %s9 = sphi 0, %s13
      %p10 = scmp.ge.s32.totalorder %s9, 4
      %s16 = sphi 0, %s35
      %s17 = sphi 0, %s31
      %s18 = sphi 0, %s27
      %s19 = sphi 0, %s16
      %s20 = sphi 0, %s17
      %s21 = sphi 0, %s18
      %s22 = sphi 0, %s19
      %s23 = sphi 0, %s20
      %s24 = sphi 0, %s21
      %s40 = sphi 0, %s42
      %s43 = sphi 0, %s40
      %s44 = sphi 0, %s43
      %s60 = sphi 0, %s44
      %s68 = sphi 0, %s70
      %s71 = sphi 0, %s68
      %s72 = sphi 0, %s71
      %s88 = sphi 0, %s72
      %s94 = sphi 0, %s96
      %s97 = sphi 0, %s94
      %s98 = sphi 0, %s97
      %s114 = sphi 0, %s98
      %s122 = sphi 0, %s124
      %s125 = sphi 0, %s122
      %s126 = sphi 0, %s125
      %s142 = sphi 0, %s126
    $region4: #{wnet_forward.47} parent=1 // loop_header_branch
      %12 = sbr.rel (%p10) target = $region8
    $region5: #{wnet_forward.47} parent=1 // loop_body
      %s14 = ssub.s32 %s9, 1
      %s15 = ssub.s32 %s9, 2
      %s25 = sadd.s32 1, %s18
      %p26 = scmp.ge.s32.totalorder %s25, 1
      %s27 = scalar_select %p26, 0, %s25
      %s28 = sadd.s32 1, %s17
      %s29 = scalar_select %p26, %s28, %s17
      %p30 = scmp.ge.s32.totalorder %s29, 2
      %s31 = scalar_select %p30, 0, %s29
      %s32 = sadd.s32 1, %s16
      %s33 = scalar_select %p30, %s32, %s16
      %p34 = scmp.ge.s32.totalorder %s33, 1
      %s35 = scalar_select %p34, 0, %s33
      %s36 = ssub.s32 %s16, %s35
      %s37 = ssub.s32 %s18, %s27
      %s38 = sor.u32 %s36, %s37
      %p39 = scmp.eq.s32.totalorder %s38, 0
      %s41 = sadd.s32 %s40, 1
      %s42 = scalar_select %p39, %s40, %s41
      %p45 = pneg %p39
      %p46 = scmp.eq.s32.totalorder %s9, 1
      %p47 = por %p45, %p46
      %p48 = scmp.ne.s32.totalorder %s40, %s43
      %p49 = scmp.eq.s32.totalorder %s9, 0
      %p50 = por %p48, %p49
      %p51 = scmp.ne.s32.totalorder %s40, %s43
      %p52 = scmp.eq.s32.totalorder %s14, 1
      %p53 = por %p51, %p52
      %p54 = scmp.ne.s32.totalorder %s43, %s44
      %p55 = scmp.eq.s32.totalorder %s14, 0
      %p56 = por %p54, %p55
      %p57 = scmp.ne.s32.totalorder %s43, %s44
      %p58 = scmp.eq.s32.totalorder %s15, 1
      %p59 = por %p57, %p58
      %p61 = scmp.ne.s32.totalorder %s44, %s60
      %p62 = scmp.eq.s32.totalorder %s15, 0
      %p63 = por %p61, %p62
      %s64 = ssub.s32 %s18, %s27
      %s65 = ssub.s32 %s17, %s31
      %s66 = sor.u32 %s64, %s65
      %p67 = scmp.eq.s32.totalorder %s66, 0
      %s69 = sadd.s32 %s68, 1
      %s70 = scalar_select %p67, %s68, %s69
      %p73 = pneg %p67
      %p74 = scmp.eq.s32.totalorder %s9, 1
      %p75 = por %p73, %p74
      %p76 = scmp.ne.s32.totalorder %s68, %s71
      %p77 = scmp.eq.s32.totalorder %s9, 0
      %p78 = por %p76, %p77
      %p79 = scmp.ne.s32.totalorder %s68, %s71
      %p80 = scmp.eq.s32.totalorder %s14, 1
      %p81 = por %p79, %p80
      %p82 = scmp.ne.s32.totalorder %s71, %s72
      %p83 = scmp.eq.s32.totalorder %s14, 0
      %p84 = por %p82, %p83
      %p85 = scmp.ne.s32.totalorder %s71, %s72
      %p86 = scmp.eq.s32.totalorder %s15, 1
      %p87 = por %p85, %p86
      %p89 = scmp.ne.s32.totalorder %s72, %s88
      %p90 = scmp.eq.s32.totalorder %s15, 0
      %p91 = por %p89, %p90
      %s92 = ssub.s32 %s16, %s35
      %p93 = scmp.eq.s32.totalorder %s92, 0
      %s95 = sadd.s32 %s94, 1
      %s96 = scalar_select %p93, %s94, %s95
      %p99 = pneg %p93
      %p100 = scmp.eq.s32.totalorder %s9, 1
      %p101 = por %p99, %p100
      %p102 = scmp.ne.s32.totalorder %s94, %s97
      %p103 = scmp.eq.s32.totalorder %s9, 0
      %p104 = por %p102, %p103
      %p105 = scmp.ne.s32.totalorder %s94, %s97
      %p106 = scmp.eq.s32.totalorder %s14, 1
      %p107 = por %p105, %p106
      %p108 = scmp.ne.s32.totalorder %s97, %s98
      %p109 = scmp.eq.s32.totalorder %s14, 0
      %p110 = por %p108, %p109
      %p111 = scmp.ne.s32.totalorder %s97, %s98
      %p112 = scmp.eq.s32.totalorder %s15, 1
      %p113 = por %p111, %p112
      %p115 = scmp.ne.s32.totalorder %s98, %s114
      %p116 = scmp.eq.s32.totalorder %s15, 0
      %p117 = por %p115, %p116
      %s118 = ssub.s32 %s16, %s35
      %s119 = ssub.s32 %s17, %s31
      %s120 = sor.u32 %s118, %s119
      %p121 = scmp.eq.s32.totalorder %s120, 0
      %s123 = sadd.s32 %s122, 1
      %s124 = scalar_select %p121, %s122, %s123
      %p127 = pneg %p121
      %p128 = scmp.eq.s32.totalorder %s9, 1
      %p129 = por %p127, %p128
      %p130 = scmp.ne.s32.totalorder %s122, %s125
      %p131 = scmp.eq.s32.totalorder %s9, 0
      %p132 = por %p130, %p131
      %p133 = scmp.ne.s32.totalorder %s122, %s125
      %p134 = scmp.eq.s32.totalorder %s14, 1
      %p135 = por %p133, %p134
      %p136 = scmp.ne.s32.totalorder %s125, %s126
      %p137 = scmp.eq.s32.totalorder %s14, 0
      %p138 = por %p136, %p137
      %p139 = scmp.ne.s32.totalorder %s125, %s126
      %p140 = scmp.eq.s32.totalorder %s15, 1
      %p141 = por %p139, %p140
      %p143 = scmp.ne.s32.totalorder %s126, %s142
      %p144 = scmp.eq.s32.totalorder %s15, 0
      %p145 = por %p143, %p144
      %p146 = scmp.le.s32.totalorder 1, %s9
      %p147 = scmp.lt.s32.totalorder %s9, 3
      %p148 = pnand %p146, %p147
      %p149 = pneg %p148
      // Predicated region
      $region9: #{wnet_forward.47} parent=5 // pred_check
        _
      $region10: #{wnet_forward.47} parent=5 // pred_check_branch
        %151 = sbr.rel (%p148) target = $region12
      $region11: #{wnet_forward.47} parent=5 // pred_region
        %s152 = ssub.s32 %s9, 1
        // Predicated region
        $region13: #{wnet_forward.47} parent=11 // pred_check
          %p153 = pneg %p56
        $region14: #{wnet_forward.47} parent=11 // pred_check_branch
          %155 = sbr.rel (%p153) target = $region16
        $region15: #{wnet_forward.47} parent=11 // pred_region
          %p156 = scmp.lt.s32.totalorder %s19, 0
          %s157 = scalar_select %p156, %s19, 0
          %p158 = scmp.lt.s32.totalorder %s21, 0
          %s159 = scalar_select %p158, %s21, 0
          %s160 = sadd.s32 %s159, %s157
          %s161 = smul.addr %s160, 2
          %s162 = scalar_lea.vmem %s0, %s161
        $region16: #{wnet_forward.47} parent=11 // pred_fallthru
          _
        // Predicated region
        $region17: #{wnet_forward.47} parent=11 // pred_check
          %p163 = pneg %p110
        $region18: #{wnet_forward.47} parent=11 // pred_check_branch
          %165 = sbr.rel (%p163) target = $region20
        $region19: #{wnet_forward.47} parent=11 // pred_region
          %p166 = scmp.lt.s32.totalorder %s19, 0
          %s167 = scalar_select %p166, %s19, 0
          %s168 = smul.addr %s167, 4
          %s169 = scalar_lea.vmem %s2, %s168
        $region20: #{wnet_forward.47} parent=11 // pred_fallthru
          _
      $region12: #{wnet_forward.47} parent=5 // pred_fallthru
        _
      %p170 = scmp.lt.s32.totalorder %s9, 2
      // Predicated region
      $region21: #{wnet_forward.47} parent=5 // pred_check
        %p171 = pneg %p170
      $region22: #{wnet_forward.47} parent=5 // pred_check_branch
        %173 = sbr.rel (%p171) target = $region24
      $region23: #{wnet_forward.47} parent=5 // pred_region
        // Predicated region
        $region25: #{wnet_forward.47} parent=23 // pred_check
          %p174 = pneg %p78
        $region26: #{wnet_forward.47} parent=23 // pred_check_branch
          %176 = sbr.rel (%p174) target = $region28
        $region27: #{wnet_forward.47} parent=23 // pred_region
          %s177 = sand.u32 %s68, 1
          %s178 = sand.u32 %s68, 1
          %s179 = smul.addr %s178, 40
          %s180 = scalar_lea.vmem [#allocation3], %s179
          %s181 = smul.u32 5, %s18
          %s182 = smul.u32 2, %s17
          %s183 = smul.addr %s181, 4
          %s184 = sadd.s32 %s182, %s183
          %s185 = smul.addr %s184, 4
          %s186 = scalar_lea.vmem %s1, %s185
          // Predicated region
          $region29: #{wnet_forward.47} parent=27 // pred_check
            _
          $region30: #{wnet_forward.47} parent=27 // pred_check_branch
            %188 = sbr.rel (0) target = $region32
          $region31: #{wnet_forward.47} parent=27 // pred_region
            // Predicated region
            $region33: #{wnet_forward.47} parent=31 // pred_check
              _
            $region34: #{wnet_forward.47} parent=31 // pred_check_branch
              %190 = sbr.rel (0) target = $region36
            $region35: #{wnet_forward.47} parent=31 // pred_region
              // Predicated region
              $region48: #{wnet_forward.47} parent=35 // pred_check
                _
              $region49: #{wnet_forward.47} parent=35 // pred_check_branch
                %214 = sbr.rel (0) target = $region51
              $region50: #{wnet_forward.47} parent=35 // pred_region
                loop: start=0, step=1, limit=1
                $region52: #{wnet_forward.47} parent=50 // loop_pre_header
                  _
                $region53: #{wnet_forward.47} parent=50 // loop_header
                  %s216 = sphi 0, %s220
                  %p217 = scmp.ge.s32.totalorder %s216, 1
                  %s221 = sphi %s186, %s186
                  %s222 = sphi %s180, %s180
                $region54: #{wnet_forward.47} parent=50 // loop_header_branch
                  %219 = sbr.rel (%p217) target = $region58
                $region55: #{wnet_forward.47} parent=50 // loop_body
                  %v223 = vld [vmem:[%s221] sm:$0xff]
                  %224 = vst [vmem:[%s222] sm:$0xff] %v223
                  %v225 = vld [vmem:[%s221 + $0x10] sm:$0xff]
                  %226 = vst [vmem:[%s222 + $0x8] sm:$0xff] %v225
                  %v227 = vld [vmem:[%s221 + $0x20] sm:$0xff]
                  %228 = vst [vmem:[%s222 + $0x10] sm:$0xff] %v227
                  %v229 = vld [vmem:[%s221 + $0x30] sm:$0xff]
                  %230 = vst [vmem:[%s222 + $0x18] sm:$0xff] %v229
                  %v231 = vld [vmem:[%s221 + $0x40] sm:$0xff]
                  %232 = vst [vmem:[%s222 + $0x20] sm:$0xff] %v231
                $region56: #{wnet_forward.47} parent=50 // loop_footer
                  %s220 = sadd.s32 1, %s216
                $region57: #{wnet_forward.47} parent=50 // loop_footer_branch
                  %215 = sbr.rel target = $region53
                $region58: #{wnet_forward.47} parent=50 // loop_exit
                  _
              $region51: #{wnet_forward.47} parent=35 // pred_fallthru
                _
              // Predicated region
              $region59: #{wnet_forward.47} parent=35 // pred_check
                _
              $region60: #{wnet_forward.47} parent=35 // pred_check_branch
                %234 = sbr.rel target = $region62
              $region61: #{wnet_forward.47} parent=35 // pred_region
                _
              $region62: #{wnet_forward.47} parent=35 // pred_fallthru
                _
            $region36: #{wnet_forward.47} parent=31 // pred_fallthru
              _
            // Predicated region
            $region37: #{wnet_forward.47} parent=31 // pred_check
              _
            $region38: #{wnet_forward.47} parent=31 // pred_check_branch
              %192 = sbr.rel target = $region40
            $region39: #{wnet_forward.47} parent=31 // pred_region
              %s194 = ssub.s32 256, 1
              loop: start=0, step=1, limit=1
              $region41: #{wnet_forward.47} parent=39 // loop_pre_header
                _
              $region42: #{wnet_forward.47} parent=39 // loop_header
                %s196 = sphi 0, %s200
                %p197 = scmp.ge.s32.totalorder %s196, 1
                %s201 = sphi %s186, %s186
                %s202 = sphi %s180, %s180
              $region43: #{wnet_forward.47} parent=39 // loop_header_branch
                %199 = sbr.rel (%p197) target = $region47
              $region44: #{wnet_forward.47} parent=39 // loop_body
                %v203 = vld [vmem:[%s201] sm:%s194]
                %204 = vst [vmem:[%s202] sm:%s194] %v203
                %v205 = vld [vmem:[%s201 + $0x10] sm:%s194]
                %206 = vst [vmem:[%s202 + $0x8] sm:%s194] %v205
                %v207 = vld [vmem:[%s201 + $0x20] sm:%s194]
                %208 = vst [vmem:[%s202 + $0x10] sm:%s194] %v207
                %v209 = vld [vmem:[%s201 + $0x30] sm:%s194]
                %210 = vst [vmem:[%s202 + $0x18] sm:%s194] %v209
                %v211 = vld [vmem:[%s201 + $0x40] sm:%s194]
                %212 = vst [vmem:[%s202 + $0x20] sm:%s194] %v211
              $region45: #{wnet_forward.47} parent=39 // loop_footer
                %s200 = sadd.s32 1, %s196
              $region46: #{wnet_forward.47} parent=39 // loop_footer_branch
                %195 = sbr.rel target = $region42
              $region47: #{wnet_forward.47} parent=39 // loop_exit
                _
            $region40: #{wnet_forward.47} parent=31 // pred_fallthru
              _
          $region32: #{wnet_forward.47} parent=27 // pred_fallthru
            _
          %235 = vnop
        $region28: #{wnet_forward.47} parent=23 // pred_fallthru
          _
      $region24: #{wnet_forward.47} parent=5 // pred_fallthru
        _
      %p236 = scmp.le.s32.totalorder 1, %s9
      %p237 = scmp.lt.s32.totalorder %s9, 3
      %p238 = pnand %p236, %p237
      %p239 = pneg %p238
      // Predicated region
      $region63: #{wnet_forward.47} parent=5 // pred_check
        _
      $region64: #{wnet_forward.47} parent=5 // pred_check_branch
        %241 = sbr.rel (%p238) target = $region66
      $region65: #{wnet_forward.47} parent=5 // pred_region
        %s242 = ssub.s32 %s9, 1
        %s243 = sand.u32 %s71, 1
        %s244 = sand.u32 %s71, 1
        %s245 = smul.addr %s244, 40
        %s246 = scalar_lea.vmem [#allocation3], %s245
        // Predicated region
        $region67: #{wnet_forward.47} parent=65 // pred_check
          %p247 = pneg %p84
        $region68: #{wnet_forward.47} parent=65 // pred_check_branch
          %249 = sbr.rel (%p247) target = $region70
        $region69: #{wnet_forward.47} parent=65 // pred_region
          _
        $region70: #{wnet_forward.47} parent=65 // pred_fallthru
          _
        %p250 = scmp.lt.s32.totalorder %s19, 0
        %s251 = scalar_select %p250, %s19, 0
        %p252 = scmp.lt.s32.totalorder %s21, 0
        %s253 = scalar_select %p252, %s21, 0
        %s254 = sadd.s32 %s253, %s251
        %s255 = smul.addr %s254, 2
        %s256 = scalar_lea.vmem %s0, %s255
        %p257 = pneg %p56
        %p258 = pneg %p53
        %s259 = sand.u32 %s71, 1
        %s260 = sand.u32 %s71, 1
        %s261 = smul.addr %s260, 40
        %s262 = scalar_lea.vmem [#allocation3], %s261
        %p263 = pneg %p84
        %p264 = pneg %p81
        %p265 = scmp.lt.s32.totalorder %s19, 0
        %s266 = scalar_select %p265, %s19, 0
        %s267 = smul.addr %s266, 4
        %s268 = scalar_lea.vmem %s2, %s267
        %p269 = pneg %p110
        %p270 = pneg %p107
        %p271 = pneg %p138
        %p272 = pneg %p135
        %s273 = smul.u32 2, %s20
        %p274 = scmp.lt.s32.totalorder %s19, 0
        %s275 = scalar_select %p274, %s19, 0
        %p276 = scmp.lt.s32.totalorder %s273, 3
        %s277 = scalar_select %p276, %s273, 3
        %s278 = smul.addr %s275, 4
        %s279 = sadd.s32 %s277, %s278
        %s280 = smul.addr %s279, 2
        %s281 = scalar_lea.vmem %s3, %s280
        %p282 = scmp.lt.s32.totalorder %s19, 0
        %s283 = scalar_select %p282, %s19, 0
        %p284 = scmp.lt.s32.totalorder %s21, 0
        %s285 = scalar_select %p284, %s21, 0
        %s286 = sadd.s32 %s285, %s283
        %s287 = smul.addr %s286, 2
        %s288 = scalar_lea.vmem %s0, %s287
        %s289 = smul.u32 5, %s21
        %s290 = smul.u32 2, %s20
        %p291 = scmp.lt.s32.totalorder %s19, 0
        %s292 = scalar_select %p291, %s19, 0
        %s293 = smul.addr %s292, 4
        %s294 = scalar_lea.vmem %s2, %s293
        %s295 = smul.u32 2, %s20
        %p296 = scmp.lt.s32.totalorder %s19, 0
        %s297 = scalar_select %p296, %s19, 0
        %p298 = scmp.lt.s32.totalorder %s295, 3
        %s299 = scalar_select %p298, %s295, 3
        %s300 = smul.addr %s297, 4
        %s301 = sadd.s32 %s299, %s300
        %s302 = smul.addr %s301, 2
        %s303 = scalar_lea.vmem %s3, %s302
        %s304 = smul.u32 2, %s20
        %p306 = scmp.eq.s32.totalorder %s21, 0
        // Predicated region
        $region71: #{wnet_forward.47} parent=65 // pred_check
          %p307 = pneg %p306
        $region72: #{wnet_forward.47} parent=65 // pred_check_branch
          %309 = sbr.rel (%p307) target = $region74
        $region73: #{wnet_forward.47} parent=65 // pred_region
          %310 = vst [vmem:[#allocation2] sm:$0xff] 0.0
        $region74: #{wnet_forward.47} parent=65 // pred_fallthru
          _
        %v311 = vld [vmem:[#allocation2] sm:$0xff]
        %v312 = vld [vmem:[%s288] sm:$0x3]
        %v313 = vld [vmem:[%s246] sm:$0xff]
        %v314 = vld [vmem:[%s246 + $0x8] sm:$0xff]
        %v315 = vld [vmem:[%s246 + $0x10] sm:$0xff]
        %v316 = vld [vmem:[%s246 + $0x18] sm:$0xff]
        %v317 = vld [vmem:[%s246 + $0x20] sm:$0x33]
        %v323 = vunpack.c.l.b16 %v313
        %v324 = vunpack.c.h.b16 %v313
        %v325 = vunpack.c.l.b16 %v314
        %v326 = vunpack.c.h.b16 %v314
        %v327 = vunpack.c.l.b16 %v315
        %v328 = vunpack.c.h.b16 %v315
        %v329 = vunpack.c.l.b16 %v316
        %v330 = vunpack.c.h.b16 %v316
        %v331 = vunpack.c.l.b16 %v317
        %v332 = vunpack.c.h.b16 %v317
        %v333 = vpack.c.b16 %v325, %v323
        %v334 = vpack.c.b16 %v326, %v324
        %v335 = vpack.c.b16 %v329, %v327
        %v336 = vpack.c.b16 %v330, %v328
        %v337 = vpack.c.b16 %v331, %v331
        %v338 = vpack.c.b16 %v332, %v332
        %vm343 = vcmask 293888
        %v345 = vsel %vm343, %v312, 0
        %vm347 = vcmask 1041408
        %v349 = vsel %vm347, %v337, 0
        %v352 = vsel %vm347, %v338, 0
        %354 = vmatpush.bf16.msra.mxu0 0
        %355 = vmatpush.bf16.msra.mxu0 0
        %356 = vmatpush.bf16.msra.mxu0 0
        %357 = vmatpush.bf16.msra.mxu0 0
        %358 = vmatpush.bf16.msra.mxu0 0
        %359 = vmatpush.bf16.msra.mxu0 %v349
        %360 = vmatpush.bf16.msra.mxu0 %v335
        %361 = vmatpush.bf16.msra.mxu0 %v333
        %362 = vmatmul.bf16.gmra.mxu0 %v345
        %v363 = vpop.f32.mrf.mxu0
        %v364 = vadd.f32 0.0, %v363
        %v365 = vpop.f32.mrf.mxu0
        %366 = vdwg.mxu0
        %367 = vmatpush.bf16.msra.mxu0 0
        %368 = vmatpush.bf16.msra.mxu0 0
        %369 = vmatpush.bf16.msra.mxu0 0
        %370 = vmatpush.bf16.msra.mxu0 0
        %371 = vmatpush.bf16.msra.mxu0 0
        %372 = vmatpush.bf16.msra.mxu0 %v352
        %373 = vmatpush.bf16.msra.mxu0 %v336
        %374 = vmatpush.bf16.msra.mxu0 %v334
        %375 = vmatmul.bf16.gmra.mxu0 %v345
        %v376 = vpop.f32.mrf.mxu0
        %v377 = vadd.f32 0.0, %v376
        %v378 = vpop.f32.mrf.mxu0
        %379 = vdwg.mxu0
        %v382 = vrot.slane %v377, 4
        %vm383 = vcmask 1043456
        %v384 = vsel %vm383, %v364, %v382
        %v386 = vadd.f32 %v311, %v384
        %387 = vst [vmem:[#allocation2] sm:$0xff] %v386
        // Predicated region
        $region75: #{wnet_forward.47} parent=65 // pred_check
          %p388 = pneg %p306
        $region76: #{wnet_forward.47} parent=65 // pred_check_branch
          %390 = sbr.rel (%p388) target = $region78
        $region77: #{wnet_forward.47} parent=65 // pred_region
          %v391 = vld [vmem:[#allocation2] sm:$0xff]
          %v392 = vld [vmem:[%s294] sm:$0xf]
          %394 = vset.pattern.permute.xlu0 0
          %395 = vperm.xlu0 %394, %v392
          %v396 = vpop.permute.xlu0 %395
          %v398 = vunpack.c.l.s4 839922192
          %v399 = vunpack.c.0.s8 %v398
          %v400 = vperm.slane %v396, %v399
          %v402 = vadd.f32 %v391, %v400
          %v403 = vmax.f32 %v402, 0.0
          %405 = vst [vmem:[#allocation1] ss:$2 sm:$0xff] %v403
          %v406 = vld.sshfl [vmem:[#allocation1] sm:$0xff pattern:$0x75316420]
          %v407 = vld.sshfl [vmem:[#allocation1 + $0x8] sm:$0xff pattern:$0x75316420]
          %v410 = vpack.c.bf16 %v407, %v406
          %v412 = vrot.slane %v410, 2
          %v415 = vsel %vm347, %v410, %v412
          %417 = vst [vmem:[%s303] sm:$0xf] %v415
        $region78: #{wnet_forward.47} parent=65 // pred_fallthru
          _
        %s418 = smul.u32 2, %s20
        %p419 = scmp.lt.s32.totalorder %s19, 0
        %s420 = scalar_select %p419, %s19, 0
        %p421 = scmp.lt.s32.totalorder %s418, 3
        %s422 = scalar_select %p421, %s418, 3
        %s423 = smul.addr %s420, 4
        %s424 = sadd.s32 %s422, %s423
        %s425 = smul.addr %s424, 2
        %s426 = scalar_lea.vmem %s3, %s425
        // Predicated region
        $region79: #{wnet_forward.47} parent=65 // pred_check
          %p427 = pneg %p135
        $region80: #{wnet_forward.47} parent=65 // pred_check_branch
          %429 = sbr.rel (%p427) target = $region82
        $region81: #{wnet_forward.47} parent=65 // pred_region
          %s430 = smul.u32 2, %s20
        $region82: #{wnet_forward.47} parent=65 // pred_fallthru
          _
      $region66: #{wnet_forward.47} parent=5 // pred_fallthru
        _
      %p431 = scmp.le.s32.totalorder 2, %s9
      // Predicated region
      $region83: #{wnet_forward.47} parent=5 // pred_check
        %p432 = pneg %p431
      $region84: #{wnet_forward.47} parent=5 // pred_check_branch
        %434 = sbr.rel (%p432) target = $region86
      $region85: #{wnet_forward.47} parent=5 // pred_region
        %s435 = ssub.s32 %s9, 2
        // Predicated region
        $region87: #{wnet_forward.47} parent=85 // pred_check
          %p436 = pneg %p141
        $region88: #{wnet_forward.47} parent=85 // pred_check_branch
          %438 = sbr.rel (%p436) target = $region90
        $region89: #{wnet_forward.47} parent=85 // pred_region
          %s439 = smul.u32 2, %s23
          %p440 = scmp.lt.s32.totalorder %s22, 0
          %s441 = scalar_select %p440, %s22, 0
          %p442 = scmp.lt.s32.totalorder %s439, 3
          %s443 = scalar_select %p442, %s439, 3
          %s444 = smul.addr %s441, 4
          %s445 = sadd.s32 %s443, %s444
          %s446 = smul.addr %s445, 2
          %s447 = scalar_lea.vmem %s3, %s446
        $region90: #{wnet_forward.47} parent=85 // pred_fallthru
          _
      $region86: #{wnet_forward.47} parent=5 // pred_fallthru
        _
    $region6: #{wnet_forward.47} parent=1 // loop_footer
      %s13 = sadd.s32 1, %s9
    $region7: #{wnet_forward.47} parent=1 // loop_footer_branch
      %8 = sbr.rel target = $region3
    $region8: #{wnet_forward.47} parent=1 // loop_exit
      _

// kernel: wnet_forward.48
$region0: #{wnet_forward.48}
  #allocation0 [shape = 'u32[]', space=smem, size = 0x4, offset = 0x4, fixed_abs, tag = 'smem constant byte address 0x4 - core index']
  #allocation1 [shape = 'u32[72,128]{1,0:T(1,128)}', space=vmem, size = 0x9000, scoped, tag = 'internal scratch']
  #allocation2 [shape = 'f32[8,128]{1,0:T(8,128)}', space=vmem, size = 0x1000, scoped, tag = 'scratch operand']
  %s0 = inlined_call_operand.vmem [shape: bf16[8,36], index: 0, kind: input, shape index: {}]
  %s1 = inlined_call_operand.vmem [shape: bf16[36,128], index: 1, kind: input, shape index: {}]
  %s2 = inlined_call_operand.vmem [shape: f32[8,1], index: 2, kind: input, shape index: {}]
  %s3 = inlined_call_operand.vmem [shape: bf16[8,128], index: 3, kind: output, shape index: {}]
  %s4 = sld [smem:[#allocation0]]
  $region30: #{wnet_forward.48} parent=0
    _
  %s6 = ssub.s32 1, %s4
  %s7 = scalar_select 0, %s6, %s4
  // Predicated region
  $region2: #{wnet_forward.48} parent=0 // pred_check
    _
  $region3: #{wnet_forward.48} parent=0 // pred_check_branch
    %9 = sbr.rel (0) target = $region5
  $region4: #{wnet_forward.48} parent=0 // pred_region
    _
  $region5: #{wnet_forward.48} parent=0 // pred_fallthru
    _
  // Predicated region
  $region6: #{wnet_forward.48} parent=0 // pred_check
    _
  $region7: #{wnet_forward.48} parent=0 // pred_check_branch
    %11 = sbr.rel (0) target = $region9
  $region8: #{wnet_forward.48} parent=0 // pred_region
    _
  $region9: #{wnet_forward.48} parent=0 // pred_fallthru
    _
  // Predicated region
  $region10: #{wnet_forward.48} parent=0 // pred_check
    _
  $region11: #{wnet_forward.48} parent=0 // pred_check_branch
    %13 = sbr.rel (0) target = $region13
  $region12: #{wnet_forward.48} parent=0 // pred_region
    _
  $region13: #{wnet_forward.48} parent=0 // pred_fallthru
    _
  %p15 = scmp.eq.s32.totalorder 0, 0
  // Predicated region
  $region14: #{wnet_forward.48} parent=0 // pred_check
    %p16 = pneg %p15
  $region15: #{wnet_forward.48} parent=0 // pred_check_branch
    %18 = sbr.rel (%p16) target = $region17
  $region16: #{wnet_forward.48} parent=0 // pred_region
    %19 = vst [vmem:[#allocation2] sm:$0xff] 0.0
  $region17: #{wnet_forward.48} parent=0 // pred_fallthru
    _
  %v20 = vld [vmem:[#allocation2] sm:$0xff]
  %v21 = vld [vmem:[%s0] sm:$0xf]
  %v22 = vld [vmem:[%s1] sm:$0xf]
  %v23 = vld [vmem:[%s1 + $0x4] sm:$0xf]
  %v24 = vld [vmem:[%s1 + $0x8] sm:$0xf]
  %v25 = vld [vmem:[%s1 + $0xc] sm:$0xf]
  %v26 = vld [vmem:[%s1 + $0x10] sm:$0x3]
  %v32 = vunpack.c.l.b16 %v22
  %v33 = vunpack.c.l.b16 %v23
  %v34 = vunpack.c.l.b16 %v24
  %v35 = vunpack.c.l.b16 %v25
  %v36 = vunpack.c.l.b16 %v26
  %v37 = vpack.c.b16 %v33, %v32
  %v38 = vpack.c.b16 %v35, %v34
  %v39 = vpack.c.b16 %v36, %v36
  %vm42 = vcmask 293888
  %v44 = vsel %vm42, %v21, 0
  %vm46 = vcmask 1041408
  %v48 = vsel %vm46, %v39, 0
  %50 = vmatpush.bf16.msra.mxu0 0
  %51 = vmatpush.bf16.msra.mxu0 0
  %52 = vmatpush.bf16.msra.mxu0 0
  %53 = vmatpush.bf16.msra.mxu0 0
  %54 = vmatpush.bf16.msra.mxu0 0
  %55 = vmatpush.bf16.msra.mxu0 %v48
  %56 = vmatpush.bf16.msra.mxu0 %v38
  %57 = vmatpush.bf16.msra.mxu0 %v37
  %58 = vmatmul.bf16.gmra.mxu0 %v44
  %v59 = vpop.f32.mrf.mxu0
  %v60 = vadd.f32 0.0, %v59
  %v61 = vpop.f32.mrf.mxu0
  %62 = vdwg.mxu0
  %v63 = vadd.f32 %v20, %v60
  %64 = vst [vmem:[#allocation2] sm:$0xff] %v63
  // Predicated region
  $region18: #{wnet_forward.48} parent=0 // pred_check
    %p65 = pneg %p15
  $region19: #{wnet_forward.48} parent=0 // pred_check_branch
    %67 = sbr.rel (%p65) target = $region21
  $region20: #{wnet_forward.48} parent=0 // pred_region
    %v68 = vld [vmem:[#allocation2] sm:$0xff]
    %v69 = vld [vmem:[%s2] sm:$0xff]
    %71 = vset.pattern.permute.xlu0 0
    %72 = vperm.xlu0 %71, %v69
    %v73 = vpop.permute.xlu0 %72
    %v75 = vadd.f32 %v68, %v73
    %v76 = vmax.f32 %v75, 0.0
    %v77 = vpack.c.bf16 %v76, %v76
    %78 = vst [vmem:[%s3] sm:$0xf] %v77
  $region21: #{wnet_forward.48} parent=0 // pred_fallthru
    _
  // Predicated region
  $region22: #{wnet_forward.48} parent=0 // pred_check
    _
  $region23: #{wnet_forward.48} parent=0 // pred_check_branch
    %80 = sbr.rel (0) target = $region25
  $region24: #{wnet_forward.48} parent=0 // pred_region
    _
  $region25: #{wnet_forward.48} parent=0 // pred_fallthru
    _
  // Predicated region
  $region26: #{wnet_forward.48} parent=0 // pred_check
    _
  $region27: #{wnet_forward.48} parent=0 // pred_check_branch
    %82 = sbr.rel (0) target = $region29
  $region28: #{wnet_forward.48} parent=0 // pred_region
    _
  $region29: #{wnet_forward.48} parent=0 // pred_fallthru
    _

// kernel: wnet_forward.49
$region0: #{wnet_forward.49}
  #allocation0 [shape = 'u32[]', space=smem, size = 0x4, offset = 0x4, fixed_abs, tag = 'smem constant byte address 0x4 - core index']
  #allocation1 [shape = 'u32[72,128]{1,0:T(1,128)}', space=vmem, size = 0x9000, scoped, tag = 'internal scratch']
  #allocation2 [shape = 'f32[8,128]{1,0:T(8,128)}', space=vmem, size = 0x1000, scoped, tag = 'scratch operand']
  %s0 = inlined_call_operand.vmem [shape: bf16[8,72], index: 0, kind: input, shape index: {}]
  %s1 = inlined_call_operand.vmem [shape: bf16[72,128], index: 1, kind: input, shape index: {}]
  %s2 = inlined_call_operand.vmem [shape: f32[8,1], index: 2, kind: input, shape index: {}]
  %s3 = inlined_call_operand.vmem [shape: bf16[8,128], index: 3, kind: output, shape index: {}]
  %s4 = sld [smem:[#allocation0]]
  $region30: #{wnet_forward.49} parent=0
    _
  %s6 = ssub.s32 1, %s4
  %s7 = scalar_select 0, %s6, %s4
  // Predicated region
  $region2: #{wnet_forward.49} parent=0 // pred_check
    _
  $region3: #{wnet_forward.49} parent=0 // pred_check_branch
    %9 = sbr.rel (0) target = $region5
  $region4: #{wnet_forward.49} parent=0 // pred_region
    _
  $region5: #{wnet_forward.49} parent=0 // pred_fallthru
    _
  // Predicated region
  $region6: #{wnet_forward.49} parent=0 // pred_check
    _
  $region7: #{wnet_forward.49} parent=0 // pred_check_branch
    %11 = sbr.rel (0) target = $region9
  $region8: #{wnet_forward.49} parent=0 // pred_region
    _
  $region9: #{wnet_forward.49} parent=0 // pred_fallthru
    _
  // Predicated region
  $region10: #{wnet_forward.49} parent=0 // pred_check
    _
  $region11: #{wnet_forward.49} parent=0 // pred_check_branch
    %13 = sbr.rel (0) target = $region13
  $region12: #{wnet_forward.49} parent=0 // pred_region
    _
  $region13: #{wnet_forward.49} parent=0 // pred_fallthru
    _
  %p15 = scmp.eq.s32.totalorder 0, 0
  // Predicated region
  $region14: #{wnet_forward.49} parent=0 // pred_check
    %p16 = pneg %p15
  $region15: #{wnet_forward.49} parent=0 // pred_check_branch
    %18 = sbr.rel (%p16) target = $region17
  $region16: #{wnet_forward.49} parent=0 // pred_region
    %19 = vst [vmem:[#allocation2] sm:$0xff] 0.0
  $region17: #{wnet_forward.49} parent=0 // pred_fallthru
    _
  %v20 = vld [vmem:[#allocation2] sm:$0xff]
  %v21 = vld [vmem:[%s0] sm:$0xf]
  %v22 = vld [vmem:[%s1] sm:$0xf]
  %v23 = vld [vmem:[%s1 + $0x4] sm:$0xf]
  %v24 = vld [vmem:[%s1 + $0x8] sm:$0xf]
  %v25 = vld [vmem:[%s1 + $0xc] sm:$0xf]
  %v26 = vld [vmem:[%s1 + $0x10] sm:$0xf]
  %v27 = vld [vmem:[%s1 + $0x14] sm:$0xf]
  %v28 = vld [vmem:[%s1 + $0x18] sm:$0xf]
  %v29 = vld [vmem:[%s1 + $0x1c] sm:$0xf]
  %v30 = vld [vmem:[%s1 + $0x20] sm:$0xf]
  %v40 = vunpack.c.l.b16 %v22
  %v41 = vunpack.c.l.b16 %v23
  %v42 = vunpack.c.l.b16 %v24
  %v43 = vunpack.c.l.b16 %v25
  %v44 = vunpack.c.l.b16 %v26
  %v45 = vunpack.c.l.b16 %v27
  %v46 = vunpack.c.l.b16 %v28
  %v47 = vunpack.c.l.b16 %v29
  %v48 = vunpack.c.l.b16 %v30
  %v49 = vpack.c.b16 %v41, %v40
  %v50 = vpack.c.b16 %v43, %v42
  %v51 = vpack.c.b16 %v45, %v44
  %v52 = vpack.c.b16 %v47, %v46
  %v53 = vpack.c.b16 %v48, %v48
  %vm58 = vcmask 588800
  %v60 = vsel %vm58, %v21, 0
  %vm62 = vcmask 1043456
  %v64 = vsel %vm62, %v53, 0
  %66 = vmatpush.bf16.msra.mxu0 0
  %67 = vmatpush.bf16.msra.mxu0 0
  %68 = vmatpush.bf16.msra.mxu0 0
  %69 = vmatpush.bf16.msra.mxu0 %v64
  %70 = vmatpush.bf16.msra.mxu0 %v52
  %71 = vmatpush.bf16.msra.mxu0 %v51
  %72 = vmatpush.bf16.msra.mxu0 %v50
  %73 = vmatpush.bf16.msra.mxu0 %v49
  %74 = vmatmul.bf16.gmra.mxu0 %v60
  %v75 = vpop.f32.mrf.mxu0
  %v76 = vadd.f32 0.0, %v75
  %v77 = vpop.f32.mrf.mxu0
  %78 = vdwg.mxu0
  %v79 = vadd.f32 %v20, %v76
  %80 = vst [vmem:[#allocation2] sm:$0xff] %v79
  // Predicated region
  $region18: #{wnet_forward.49} parent=0 // pred_check
    %p81 = pneg %p15
  $region19: #{wnet_forward.49} parent=0 // pred_check_branch
    %83 = sbr.rel (%p81) target = $region21
  $region20: #{wnet_forward.49} parent=0 // pred_region
    %v84 = vld [vmem:[#allocation2] sm:$0xff]
    %v85 = vld [vmem:[%s2] sm:$0xff]
    %87 = vset.pattern.permute.xlu0 0
    %88 = vperm.xlu0 %87, %v85
    %v89 = vpop.permute.xlu0 %88
    %v91 = vadd.f32 %v84, %v89
    %v92 = vmax.f32 %v91, 0.0
    %v93 = vpack.c.bf16 %v92, %v92
    %94 = vst [vmem:[%s3] sm:$0xf] %v93
  $region21: #{wnet_forward.49} parent=0 // pred_fallthru
    _
  // Predicated region
  $region22: #{wnet_forward.49} parent=0 // pred_check
    _
  $region23: #{wnet_forward.49} parent=0 // pred_check_branch
    %96 = sbr.rel (0) target = $region25
  $region24: #{wnet_forward.49} parent=0 // pred_region
    _
  $region25: #{wnet_forward.49} parent=0 // pred_fallthru
    _
  // Predicated region
  $region26: #{wnet_forward.49} parent=0 // pred_check
    _
  $region27: #{wnet_forward.49} parent=0 // pred_check_branch
    %98 = sbr.rel (0) target = $region29
  $region28: #{wnet_forward.49} parent=0 // pred_region
    _
  $region29: #{wnet_forward.49} parent=0 // pred_fallthru
    _

// kernel: wnet_forward.50
$region0: #{wnet_forward.50}
  #allocation0 [shape = 'u32[]', space=smem, size = 0x4, offset = 0x4, fixed_abs, tag = 'smem constant byte address 0x4 - core index']
  #allocation1 [shape = 'u32[72,128]{1,0:T(1,128)}', space=vmem, size = 0x9000, scoped, tag = 'internal scratch']
  #allocation2 [shape = 'f32[16,32]{1,0:T(8,128)}', space=vmem, size = 0x2000, scoped, tag = 'scratch operand']
  %s0 = inlined_call_operand.vmem [shape: bf16[16,72], index: 0, kind: input, shape index: {}]
  %s1 = inlined_call_operand.vmem [shape: bf16[72,32], index: 1, kind: input, shape index: {}]
  %s2 = inlined_call_operand.vmem [shape: f32[16,1], index: 2, kind: input, shape index: {}]
  %s3 = inlined_call_operand.vmem [shape: bf16[16,32], index: 3, kind: output, shape index: {}]
  %s4 = sld [smem:[#allocation0]]
  $region30: #{wnet_forward.50} parent=0
    _
  %s6 = ssub.s32 1, %s4
  %s7 = scalar_select 0, %s6, %s4
  // Predicated region
  $region2: #{wnet_forward.50} parent=0 // pred_check
    _
  $region3: #{wnet_forward.50} parent=0 // pred_check_branch
    %9 = sbr.rel (0) target = $region5
  $region4: #{wnet_forward.50} parent=0 // pred_region
    _
  $region5: #{wnet_forward.50} parent=0 // pred_fallthru
    _
  // Predicated region
  $region6: #{wnet_forward.50} parent=0 // pred_check
    _
  $region7: #{wnet_forward.50} parent=0 // pred_check_branch
    %11 = sbr.rel (0) target = $region9
  $region8: #{wnet_forward.50} parent=0 // pred_region
    _
  $region9: #{wnet_forward.50} parent=0 // pred_fallthru
    _
  // Predicated region
  $region10: #{wnet_forward.50} parent=0 // pred_check
    _
  $region11: #{wnet_forward.50} parent=0 // pred_check_branch
    %13 = sbr.rel (0) target = $region13
  $region12: #{wnet_forward.50} parent=0 // pred_region
    _
  $region13: #{wnet_forward.50} parent=0 // pred_fallthru
    _
  %p15 = scmp.eq.s32.totalorder 0, 0
  // Predicated region
  $region14: #{wnet_forward.50} parent=0 // pred_check
    %p16 = pneg %p15
  $region15: #{wnet_forward.50} parent=0 // pred_check_branch
    %18 = sbr.rel (%p16) target = $region17
  $region16: #{wnet_forward.50} parent=0 // pred_region
    %vm19 = vcmask 261120
    %20 = vst.msk [vmem:[#allocation2] sm:$0xff] %vm19, 0.0
    %21 = vst.msk [vmem:[#allocation2 + $0x8] sm:$0xff] %vm19, 0.0
  $region17: #{wnet_forward.50} parent=0 // pred_fallthru
    _
  %v22 = vld [vmem:[#allocation2] sm:$0xff]
  %v23 = vld [vmem:[#allocation2 + $0x8] sm:$0xff]
  %v24 = vld [vmem:[%s0] sm:$0xf]
  %v25 = vld [vmem:[%s0 + $0x4] sm:$0xf]
  %v26 = vld [vmem:[%s1] sm:$0xf]
  %v27 = vld [vmem:[%s1 + $0x4] sm:$0xf]
  %v28 = vld [vmem:[%s1 + $0x8] sm:$0xf]
  %v29 = vld [vmem:[%s1 + $0xc] sm:$0xf]
  %v30 = vld [vmem:[%s1 + $0x10] sm:$0xf]
  %v31 = vld [vmem:[%s1 + $0x14] sm:$0xf]
  %v32 = vld [vmem:[%s1 + $0x18] sm:$0xf]
  %v33 = vld [vmem:[%s1 + $0x1c] sm:$0xf]
  %v34 = vld [vmem:[%s1 + $0x20] sm:$0xf]
  %v37 = vunpack.c.l.b16 %v24
  %v38 = vunpack.c.l.b16 %v25
  %v39 = vpack.c.b16 %v38, %v37
  %v49 = vunpack.c.l.b16 %v26
  %v50 = vunpack.c.l.b16 %v27
  %v51 = vunpack.c.l.b16 %v28
  %v52 = vunpack.c.l.b16 %v29
  %v53 = vunpack.c.l.b16 %v30
  %v54 = vunpack.c.l.b16 %v31
  %v55 = vunpack.c.l.b16 %v32
  %v56 = vunpack.c.l.b16 %v33
  %v57 = vunpack.c.l.b16 %v34
  %v58 = vpack.c.b16 %v50, %v49
  %v59 = vpack.c.b16 %v52, %v51
  %v60 = vpack.c.b16 %v54, %v53
  %v61 = vpack.c.b16 %v56, %v55
  %v62 = vpack.c.b16 %v57, %v57
  %vm67 = vcmask 588800
  %v69 = vsel %vm67, %v39, 0
  %vm71 = vcmask 1043456
  %v73 = vsel %vm71, %v62, 0
  %75 = vmatpush.bf16.msra.mxu0 0
  %76 = vmatpush.bf16.msra.mxu0 0
  %77 = vmatpush.bf16.msra.mxu0 0
  %78 = vmatpush.bf16.msra.mxu0 %v73
  %79 = vmatpush.bf16.msra.mxu0 %v61
  %80 = vmatpush.bf16.msra.mxu0 %v60
  %81 = vmatpush.bf16.msra.mxu0 %v59
  %82 = vmatpush.bf16.msra.mxu0 %v58
  %83 = vmatmul.bf16.gmra.mxu0 %v69
  %v84 = vpop.f32.mrf.mxu0
  %v85 = vadd.f32 0.0, %v84
  %v86 = vpop.f32.mrf.mxu0
  %v87 = vadd.f32 0.0, %v86
  %88 = vdwg.mxu0
  %v89 = vadd.f32 %v22, %v85
  %v90 = vadd.f32 %v23, %v87
  %vm91 = vcmask 261120
  %92 = vst.msk [vmem:[#allocation2] sm:$0xff] %vm91, %v89
  %93 = vst.msk [vmem:[#allocation2 + $0x8] sm:$0xff] %vm91, %v90
  // Predicated region
  $region18: #{wnet_forward.50} parent=0 // pred_check
    %p94 = pneg %p15
  $region19: #{wnet_forward.50} parent=0 // pred_check_branch
    %96 = sbr.rel (%p94) target = $region21
  $region20: #{wnet_forward.50} parent=0 // pred_region
    %v97 = vld [vmem:[#allocation2] sm:$0xff]
    %v98 = vld [vmem:[#allocation2 + $0x8] sm:$0xff]
    %v99 = vld [vmem:[%s2] sm:$0xff]
    %v100 = vld [vmem:[%s2 + $0x8] sm:$0xff]
    %102 = vset.pattern.permute.xlu0 0
    %103 = vperm.xlu0 %102, %v99
    %v104 = vpop.permute.xlu0 %103
    %107 = vset.pattern.permute.xlu0 0
    %108 = vperm.xlu0 %107, %v100
    %v109 = vpop.permute.xlu0 %108
    %v111 = vadd.f32 %v97, %v104
    %v112 = vadd.f32 %v98, %v109
    %v113 = vmax.f32 %v111, 0.0
    %v114 = vmax.f32 %v112, 0.0
    %v115 = vpack.c.bf16 %v113, %v113
    %v116 = vpack.c.bf16 %v114, %v114
    %vm117 = vcmask 257024
    %118 = vst.msk [vmem:[%s3] sm:$0xf] %vm117, %v115
    %119 = vst.msk [vmem:[%s3 + $0x4] sm:$0xf] %vm117, %v116
  $region21: #{wnet_forward.50} parent=0 // pred_fallthru
    _
  // Predicated region
  $region22: #{wnet_forward.50} parent=0 // pred_check
    _
  $region23: #{wnet_forward.50} parent=0 // pred_check_branch
    %121 = sbr.rel (0) target = $region25
  $region24: #{wnet_forward.50} parent=0 // pred_region
    _
  $region25: #{wnet_forward.50} parent=0 // pred_fallthru
    _
  // Predicated region
  $region26: #{wnet_forward.50} parent=0 // pred_check
    _
  $region27: #{wnet_forward.50} parent=0 // pred_check_branch
    %123 = sbr.rel (0) target = $region29
  $region28: #{wnet_forward.50} parent=0 // pred_region
    _
  $region29: #{wnet_forward.50} parent=0 // pred_fallthru
    _

// kernel: wnet_forward.51
$region0: #{wnet_forward.51}
  #allocation0 [shape = 'u32[]', space=smem, size = 0x4, offset = 0x4, fixed_abs, tag = 'smem constant byte address 0x4 - core index']
  #allocation1 [shape = 'u32[72,128]{1,0:T(1,128)}', space=vmem, size = 0x9000, scoped, tag = 'internal scratch']
  #allocation2 [shape = 'f32[16,32]{1,0:T(8,128)}', space=vmem, size = 0x2000, scoped, tag = 'scratch operand']
  %s0 = inlined_call_operand.vmem [shape: bf16[16,144], index: 0, kind: input, shape index: {}]
  %s1 = inlined_call_operand.vmem [shape: bf16[144,32], index: 1, kind: input, shape index: {}]
  %s2 = inlined_call_operand.vmem [shape: f32[16,1], index: 2, kind: input, shape index: {}]
  %s3 = inlined_call_operand.vmem [shape: bf16[16,32], index: 3, kind: output, shape index: {}]
  %s4 = sld [smem:[#allocation0]]
  $region30: #{wnet_forward.51} parent=0
    _
  %s6 = ssub.s32 1, %s4
  %s7 = scalar_select 0, %s6, %s4
  // Predicated region
  $region2: #{wnet_forward.51} parent=0 // pred_check
    _
  $region3: #{wnet_forward.51} parent=0 // pred_check_branch
    %9 = sbr.rel (0) target = $region5
  $region4: #{wnet_forward.51} parent=0 // pred_region
    _
  $region5: #{wnet_forward.51} parent=0 // pred_fallthru
    _
  // Predicated region
  $region6: #{wnet_forward.51} parent=0 // pred_check
    _
  $region7: #{wnet_forward.51} parent=0 // pred_check_branch
    %11 = sbr.rel (0) target = $region9
  $region8: #{wnet_forward.51} parent=0 // pred_region
    _
  $region9: #{wnet_forward.51} parent=0 // pred_fallthru
    _
  // Predicated region
  $region10: #{wnet_forward.51} parent=0 // pred_check
    _
  $region11: #{wnet_forward.51} parent=0 // pred_check_branch
    %13 = sbr.rel (0) target = $region13
  $region12: #{wnet_forward.51} parent=0 // pred_region
    _
  $region13: #{wnet_forward.51} parent=0 // pred_fallthru
    _
  %p15 = scmp.eq.s32.totalorder 0, 0
  // Predicated region
  $region14: #{wnet_forward.51} parent=0 // pred_check
    %p16 = pneg %p15
  $region15: #{wnet_forward.51} parent=0 // pred_check_branch
    %18 = sbr.rel (%p16) target = $region17
  $region16: #{wnet_forward.51} parent=0 // pred_region
    %vm19 = vcmask 261120
    %20 = vst.msk [vmem:[#allocation2] sm:$0xff] %vm19, 0.0
    %21 = vst.msk [vmem:[#allocation2 + $0x8] sm:$0xff] %vm19, 0.0
  $region17: #{wnet_forward.51} parent=0 // pred_fallthru
    _
  %v22 = vld [vmem:[#allocation2] sm:$0xff]
  %v23 = vld [vmem:[#allocation2 + $0x8] sm:$0xff]
  %v24 = vld [vmem:[%s0] sm:$0xff]
  %v25 = vld [vmem:[%s0 + $0x8] sm:$0xff]
  %v26 = vld [vmem:[%s1] sm:$0xf]
  %v27 = vld [vmem:[%s1 + $0x4] sm:$0xf]
  %v28 = vld [vmem:[%s1 + $0x8] sm:$0xf]
  %v29 = vld [vmem:[%s1 + $0xc] sm:$0xf]
  %v30 = vld [vmem:[%s1 + $0x10] sm:$0xf]
  %v31 = vld [vmem:[%s1 + $0x14] sm:$0xf]
  %v32 = vld [vmem:[%s1 + $0x18] sm:$0xf]
  %v33 = vld [vmem:[%s1 + $0x1c] sm:$0xf]
  %v34 = vld [vmem:[%s1 + $0x20] sm:$0xf]
  %v35 = vld [vmem:[%s1 + $0x24] sm:$0xf]
  %v36 = vld [vmem:[%s1 + $0x28] sm:$0xf]
  %v37 = vld [vmem:[%s1 + $0x2c] sm:$0xf]
  %v38 = vld [vmem:[%s1 + $0x30] sm:$0xf]
  %v39 = vld [vmem:[%s1 + $0x34] sm:$0xf]
  %v40 = vld [vmem:[%s1 + $0x38] sm:$0xf]
  %v41 = vld [vmem:[%s1 + $0x3c] sm:$0xf]
  %v42 = vld [vmem:[%s1 + $0x40] sm:$0xf]
  %v43 = vld [vmem:[%s1 + $0x44] sm:$0xf]
  %v46 = vunpack.c.l.b16 %v24
  %v47 = vunpack.c.h.b16 %v24
  %v48 = vunpack.c.l.b16 %v25
  %v49 = vunpack.c.h.b16 %v25
  %v50 = vpack.c.b16 %v48, %v46
  %v51 = vpack.c.b16 %v49, %v47
  %v71 = vunpack.c.l.b16 %v26
  %v72 = vunpack.c.l.b16 %v27
  %v73 = vunpack.c.l.b16 %v28
  %v74 = vunpack.c.l.b16 %v29
  %v75 = vunpack.c.l.b16 %v30
  %v76 = vunpack.c.l.b16 %v31
  %v77 = vunpack.c.l.b16 %v32
  %v78 = vunpack.c.l.b16 %v33
  %v79 = vunpack.c.l.b16 %v34
  %v80 = vunpack.c.l.b16 %v35
  %v81 = vunpack.c.l.b16 %v36
  %v82 = vunpack.c.l.b16 %v37
  %v83 = vunpack.c.l.b16 %v38
  %v84 = vunpack.c.l.b16 %v39
  %v85 = vunpack.c.l.b16 %v40
  %v86 = vunpack.c.l.b16 %v41
  %v87 = vunpack.c.l.b16 %v42
  %v88 = vunpack.c.l.b16 %v43
  %v89 = vpack.c.b16 %v72, %v71
  %v90 = vpack.c.b16 %v74, %v73
  %v91 = vpack.c.b16 %v76, %v75
  %v92 = vpack.c.b16 %v78, %v77
  %v93 = vpack.c.b16 %v80, %v79
  %v94 = vpack.c.b16 %v82, %v81
  %v95 = vpack.c.b16 %v84, %v83
  %v96 = vpack.c.b16 %v86, %v85
  %v97 = vpack.c.b16 %v88, %v87
  %vm107 = vcmask 130048
  %v109 = vsel %vm107, %v51, 0
  %111 = vmatpush.bf16.msra.mxu0 %v96
  %112 = vmatpush.bf16.msra.mxu0 %v95
  %113 = vmatpush.bf16.msra.mxu0 %v94
  %114 = vmatpush.bf16.msra.mxu0 %v93
  %115 = vmatpush.bf16.msra.mxu0 %v92
  %116 = vmatpush.bf16.msra.mxu0 %v91
  %117 = vmatpush.bf16.msra.mxu0 %v90
  %118 = vmatpush.bf16.msra.mxu0 %v89
  %119 = vmatmul.bf16.gmra.mxu0 %v50
  %v120 = vpop.f32.mrf.mxu0
  %v121 = vadd.f32 0.0, %v120
  %v122 = vpop.f32.mrf.mxu0
  %v123 = vadd.f32 0.0, %v122
  %124 = vdwg.mxu0
  %125 = vmatpush.bf16.msra.mxu0 0
  %126 = vmatpush.bf16.msra.mxu0 0
  %127 = vmatpush.bf16.msra.mxu0 0
  %128 = vmatpush.bf16.msra.mxu0 0
  %129 = vmatpush.bf16.msra.mxu0 0
  %130 = vmatpush.bf16.msra.mxu0 0
  %131 = vmatpush.bf16.msra.mxu0 0
  %132 = vmatpush.bf16.msra.mxu0 %v97
  %133 = vmatmul.bf16.gmra.mxu0 %v109
  %v134 = vpop.f32.mrf.mxu0
  %v135 = vadd.f32 %v121, %v134
  %v136 = vpop.f32.mrf.mxu0
  %v137 = vadd.f32 %v123, %v136
  %138 = vdwg.mxu0
  %v139 = vadd.f32 %v22, %v135
  %v140 = vadd.f32 %v23, %v137
  %vm141 = vcmask 261120
  %142 = vst.msk [vmem:[#allocation2] sm:$0xff] %vm141, %v139
  %143 = vst.msk [vmem:[#allocation2 + $0x8] sm:$0xff] %vm141, %v140
  // Predicated region
  $region18: #{wnet_forward.51} parent=0 // pred_check
    %p144 = pneg %p15
  $region19: #{wnet_forward.51} parent=0 // pred_check_branch
    %146 = sbr.rel (%p144) target = $region21
  $region20: #{wnet_forward.51} parent=0 // pred_region
    %v147 = vld [vmem:[#allocation2] sm:$0xff]
    %v148 = vld [vmem:[#allocation2 + $0x8] sm:$0xff]
    %v149 = vld [vmem:[%s2] sm:$0xff]
    %v150 = vld [vmem:[%s2 + $0x8] sm:$0xff]
    %152 = vset.pattern.permute.xlu0 0
    %153 = vperm.xlu0 %152, %v149
    %v154 = vpop.permute.xlu0 %153
    %157 = vset.pattern.permute.xlu0 0
    %158 = vperm.xlu0 %157, %v150
    %v159 = vpop.permute.xlu0 %158
    %v161 = vadd.f32 %v147, %v154
    %v162 = vadd.f32 %v148, %v159
    %v163 = vmax.f32 %v161, 0.0
    %v164 = vmax.f32 %v162, 0.0
    %v165 = vpack.c.bf16 %v163, %v163
    %v166 = vpack.c.bf16 %v164, %v164
    %vm167 = vcmask 257024
    %168 = vst.msk [vmem:[%s3] sm:$0xf] %vm167, %v165
    %169 = vst.msk [vmem:[%s3 + $0x4] sm:$0xf] %vm167, %v166
  $region21: #{wnet_forward.51} parent=0 // pred_fallthru
    _
  // Predicated region
  $region22: #{wnet_forward.51} parent=0 // pred_check
    _
  $region23: #{wnet_forward.51} parent=0 // pred_check_branch
    %171 = sbr.rel (0) target = $region25
  $region24: #{wnet_forward.51} parent=0 // pred_region
    _
  $region25: #{wnet_forward.51} parent=0 // pred_fallthru
    _
  // Predicated region
  $region26: #{wnet_forward.51} parent=0 // pred_check
    _
  $region27: #{wnet_forward.51} parent=0 // pred_check_branch
    %173 = sbr.rel (0) target = $region29
  $region28: #{wnet_forward.51} parent=0 // pred_region
    _
  $region29: #{wnet_forward.51} parent=0 // pred_fallthru
    _

// kernel: wnet_forward.52
$region0: #{wnet_forward.52}
  #allocation0 [shape = 'u32[]', space=smem, size = 0x4, offset = 0x4, fixed_abs, tag = 'smem constant byte address 0x4 - core index']
  #allocation1 [shape = 'u32[72,128]{1,0:T(1,128)}', space=vmem, size = 0x9000, scoped, tag = 'internal scratch']
  #allocation2 [shape = 'f32[32,8]{1,0:T(8,128)}', space=vmem, size = 0x4000, scoped, tag = 'scratch operand']
  %s0 = inlined_call_operand.vmem [shape: bf16[32,144], index: 0, kind: input, shape index: {}]
  %s1 = inlined_call_operand.vmem [shape: bf16[144,8], index: 1, kind: input, shape index: {}]
  %s2 = inlined_call_operand.vmem [shape: f32[32,1], index: 2, kind: input, shape index: {}]
  %s3 = inlined_call_operand.vmem [shape: bf16[32,8], index: 3, kind: output, shape index: {}]
  %s4 = sld [smem:[#allocation0]]
  $region30: #{wnet_forward.52} parent=0
    _
  %s6 = ssub.s32 1, %s4
  %s7 = scalar_select 0, %s6, %s4
  // Predicated region
  $region2: #{wnet_forward.52} parent=0 // pred_check
    _
  $region3: #{wnet_forward.52} parent=0 // pred_check_branch
    %9 = sbr.rel (0) target = $region5
  $region4: #{wnet_forward.52} parent=0 // pred_region
    _
  $region5: #{wnet_forward.52} parent=0 // pred_fallthru
    _
  // Predicated region
  $region6: #{wnet_forward.52} parent=0 // pred_check
    _
  $region7: #{wnet_forward.52} parent=0 // pred_check_branch
    %11 = sbr.rel (0) target = $region9
  $region8: #{wnet_forward.52} parent=0 // pred_region
    _
  $region9: #{wnet_forward.52} parent=0 // pred_fallthru
    _
  // Predicated region
  $region10: #{wnet_forward.52} parent=0 // pred_check
    _
  $region11: #{wnet_forward.52} parent=0 // pred_check_branch
    %13 = sbr.rel (0) target = $region13
  $region12: #{wnet_forward.52} parent=0 // pred_region
    _
  $region13: #{wnet_forward.52} parent=0 // pred_fallthru
    _
  %p15 = scmp.eq.s32.totalorder 0, 0
  // Predicated region
  $region14: #{wnet_forward.52} parent=0 // pred_check
    %p16 = pneg %p15
  $region15: #{wnet_forward.52} parent=0 // pred_check_branch
    %18 = sbr.rel (%p16) target = $region17
  $region16: #{wnet_forward.52} parent=0 // pred_region
    %vm19 = vcmask 64512
    %20 = vst.msk [vmem:[#allocation2] sm:$0xff] %vm19, 0.0
    %21 = vst.msk [vmem:[#allocation2 + $0x8] sm:$0xff] %vm19, 0.0
    %22 = vst.msk [vmem:[#allocation2 + $0x10] sm:$0xff] %vm19, 0.0
    %23 = vst.msk [vmem:[#allocation2 + $0x18] sm:$0xff] %vm19, 0.0
  $region17: #{wnet_forward.52} parent=0 // pred_fallthru
    _
  %v24 = vld [vmem:[#allocation2] sm:$0xff]
  %v25 = vld [vmem:[#allocation2 + $0x8] sm:$0xff]
  %v26 = vld [vmem:[#allocation2 + $0x10] sm:$0xff]
  %v27 = vld [vmem:[#allocation2 + $0x18] sm:$0xff]
  %v28 = vld [vmem:[%s0] sm:$0xff]
  %v29 = vld [vmem:[%s0 + $0x8] sm:$0xff]
  %v30 = vld [vmem:[%s0 + $0x10] sm:$0xff]
  %v31 = vld [vmem:[%s0 + $0x18] sm:$0xff]
  %v32 = vld [vmem:[%s1] sm:$0xf]
  %v33 = vld [vmem:[%s1 + $0x4] sm:$0xf]
  %v34 = vld [vmem:[%s1 + $0x8] sm:$0xf]
  %v35 = vld [vmem:[%s1 + $0xc] sm:$0xf]
  %v36 = vld [vmem:[%s1 + $0x10] sm:$0xf]
  %v37 = vld [vmem:[%s1 + $0x14] sm:$0xf]
  %v38 = vld [vmem:[%s1 + $0x18] sm:$0xf]
  %v39 = vld [vmem:[%s1 + $0x1c] sm:$0xf]
  %v40 = vld [vmem:[%s1 + $0x20] sm:$0xf]
  %v41 = vld [vmem:[%s1 + $0x24] sm:$0xf]
  %v42 = vld [vmem:[%s1 + $0x28] sm:$0xf]
  %v43 = vld [vmem:[%s1 + $0x2c] sm:$0xf]
  %v44 = vld [vmem:[%s1 + $0x30] sm:$0xf]
  %v45 = vld [vmem:[%s1 + $0x34] sm:$0xf]
  %v46 = vld [vmem:[%s1 + $0x38] sm:$0xf]
  %v47 = vld [vmem:[%s1 + $0x3c] sm:$0xf]
  %v48 = vld [vmem:[%s1 + $0x40] sm:$0xf]
  %v49 = vld [vmem:[%s1 + $0x44] sm:$0xf]
  %v54 = vunpack.c.l.b16 %v28
  %v55 = vunpack.c.h.b16 %v28
  %v56 = vunpack.c.l.b16 %v29
  %v57 = vunpack.c.h.b16 %v29
  %v58 = vunpack.c.l.b16 %v30
  %v59 = vunpack.c.h.b16 %v30
  %v60 = vunpack.c.l.b16 %v31
  %v61 = vunpack.c.h.b16 %v31
  %v62 = vpack.c.b16 %v56, %v54
  %v63 = vpack.c.b16 %v57, %v55
  %v64 = vpack.c.b16 %v60, %v58
  %v65 = vpack.c.b16 %v61, %v59
  %v86 = vunpack.c.l.b16 %v32
  %v87 = vunpack.c.l.b16 %v33
  %v88 = vunpack.c.l.b16 %v34
  %v89 = vunpack.c.l.b16 %v35
  %v90 = vunpack.c.l.b16 %v36
  %v91 = vunpack.c.l.b16 %v37
  %v92 = vunpack.c.l.b16 %v38
  %v93 = vunpack.c.l.b16 %v39
  %v94 = vunpack.c.l.b16 %v40
  %v95 = vunpack.c.l.b16 %v41
  %v96 = vunpack.c.l.b16 %v42
  %v97 = vunpack.c.l.b16 %v43
  %v98 = vunpack.c.l.b16 %v44
  %v99 = vunpack.c.l.b16 %v45
  %v100 = vunpack.c.l.b16 %v46
  %v101 = vunpack.c.l.b16 %v47
  %v102 = vunpack.c.l.b16 %v48
  %v103 = vunpack.c.l.b16 %v49
  %v104 = vpack.c.b16 %v87, %v86
  %v105 = vpack.c.b16 %v89, %v88
  %v106 = vpack.c.b16 %v91, %v90
  %v107 = vpack.c.b16 %v93, %v92
  %v108 = vpack.c.b16 %v95, %v94
  %v109 = vpack.c.b16 %v97, %v96
  %v110 = vpack.c.b16 %v99, %v98
  %v111 = vpack.c.b16 %v101, %v100
  %v112 = vpack.c.b16 %v103, %v102
  %vm122 = vcmask 130048
  %v124 = vsel %vm122, %v63, 0
  %v127 = vsel %vm122, %v65, 0
  %129 = vmatpush.bf16.msra.mxu0 %v111
  %130 = vmatpush.bf16.msra.mxu0 %v110
  %131 = vmatpush.bf16.msra.mxu0 %v109
  %132 = vmatpush.bf16.msra.mxu0 %v108
  %133 = vmatpush.bf16.msra.mxu0 %v107
  %134 = vmatpush.bf16.msra.mxu0 %v106
  %135 = vmatpush.bf16.msra.mxu0 %v105
  %136 = vmatpush.bf16.msra.mxu0 %v104
  %137 = vmatmul.bf16.gmra.mxu0 %v62
  %v138 = vpop.f32.mrf.mxu0
  %v139 = vadd.f32 0.0, %v138
  %v140 = vpop.f32.mrf.mxu0
  %v141 = vadd.f32 0.0, %v140
  %142 = vmatmul.bf16.gmra.mxu0 %v64
  %v143 = vpop.f32.mrf.mxu0
  %v144 = vadd.f32 0.0, %v143
  %v145 = vpop.f32.mrf.mxu0
  %v146 = vadd.f32 0.0, %v145
  %147 = vdwg.mxu0
  %148 = vmatpush.bf16.msra.mxu0 0
  %149 = vmatpush.bf16.msra.mxu0 0
  %150 = vmatpush.bf16.msra.mxu0 0
  %151 = vmatpush.bf16.msra.mxu0 0
  %152 = vmatpush.bf16.msra.mxu0 0
  %153 = vmatpush.bf16.msra.mxu0 0
  %154 = vmatpush.bf16.msra.mxu0 0
  %155 = vmatpush.bf16.msra.mxu0 %v112
  %156 = vmatmul.bf16.gmra.mxu0 %v124
  %v157 = vpop.f32.mrf.mxu0
  %v158 = vadd.f32 %v139, %v157
  %v159 = vpop.f32.mrf.mxu0
  %v160 = vadd.f32 %v141, %v159
  %161 = vmatmul.bf16.gmra.mxu0 %v127
  %v162 = vpop.f32.mrf.mxu0
  %v163 = vadd.f32 %v144, %v162
  %v164 = vpop.f32.mrf.mxu0
  %v165 = vadd.f32 %v146, %v164
  %166 = vdwg.mxu0
  %v167 = vadd.f32 %v24, %v158
  %v168 = vadd.f32 %v25, %v160
  %v169 = vadd.f32 %v26, %v163
  %v170 = vadd.f32 %v27, %v165
  %vm171 = vcmask 64512
  %172 = vst.msk [vmem:[#allocation2] sm:$0xff] %vm171, %v167
  %173 = vst.msk [vmem:[#allocation2 + $0x8] sm:$0xff] %vm171, %v168
  %174 = vst.msk [vmem:[#allocation2 + $0x10] sm:$0xff] %vm171, %v169
  %175 = vst.msk [vmem:[#allocation2 + $0x18] sm:$0xff] %vm171, %v170
  // Predicated region
  $region18: #{wnet_forward.52} parent=0 // pred_check
    %p176 = pneg %p15
  $region19: #{wnet_forward.52} parent=0 // pred_check_branch
    %178 = sbr.rel (%p176) target = $region21
  $region20: #{wnet_forward.52} parent=0 // pred_region
    %v179 = vld [vmem:[#allocation2] sm:$0xff]
    %v180 = vld [vmem:[#allocation2 + $0x8] sm:$0xff]
    %v181 = vld [vmem:[#allocation2 + $0x10] sm:$0xff]
    %v182 = vld [vmem:[#allocation2 + $0x18] sm:$0xff]
    %v183 = vld [vmem:[%s2] sm:$0xff]
    %v184 = vld [vmem:[%s2 + $0x8] sm:$0xff]
    %v185 = vld [vmem:[%s2 + $0x10] sm:$0xff]
    %v186 = vld [vmem:[%s2 + $0x18] sm:$0xff]
    %188 = vset.pattern.permute.xlu0 0
    %189 = vperm.xlu0 %188, %v183
    %v190 = vpop.permute.xlu0 %189
    %193 = vset.pattern.permute.xlu0 0
    %194 = vperm.xlu0 %193, %v184
    %v195 = vpop.permute.xlu0 %194
    %198 = vset.pattern.permute.xlu0 0
    %199 = vperm.xlu0 %198, %v185
    %v200 = vpop.permute.xlu0 %199
    %203 = vset.pattern.permute.xlu0 0
    %204 = vperm.xlu0 %203, %v186
    %v205 = vpop.permute.xlu0 %204
    %v207 = vadd.f32 %v179, %v190
    %v208 = vadd.f32 %v180, %v195
    %v209 = vadd.f32 %v181, %v200
    %v210 = vadd.f32 %v182, %v205
    %v211 = vmax.f32 %v207, 0.0
    %v212 = vmax.f32 %v208, 0.0
    %v213 = vmax.f32 %v209, 0.0
    %v214 = vmax.f32 %v210, 0.0
    %v215 = vpack.c.bf16 %v211, %v211
    %v216 = vpack.c.bf16 %v212, %v212
    %v217 = vpack.c.bf16 %v213, %v213
    %v218 = vpack.c.bf16 %v214, %v214
    %vm219 = vcmask 60416
    %220 = vst.msk [vmem:[%s3] sm:$0xf] %vm219, %v215
    %221 = vst.msk [vmem:[%s3 + $0x4] sm:$0xf] %vm219, %v216
    %222 = vst.msk [vmem:[%s3 + $0x8] sm:$0xf] %vm219, %v217
    %223 = vst.msk [vmem:[%s3 + $0xc] sm:$0xf] %vm219, %v218
  $region21: #{wnet_forward.52} parent=0 // pred_fallthru
    _
  // Predicated region
  $region22: #{wnet_forward.52} parent=0 // pred_check
    _
  $region23: #{wnet_forward.52} parent=0 // pred_check_branch
    %225 = sbr.rel (0) target = $region25
  $region24: #{wnet_forward.52} parent=0 // pred_region
    _
  $region25: #{wnet_forward.52} parent=0 // pred_fallthru
    _
  // Predicated region
  $region26: #{wnet_forward.52} parent=0 // pred_check
    _
  $region27: #{wnet_forward.52} parent=0 // pred_check_branch
    %227 = sbr.rel (0) target = $region29
  $region28: #{wnet_forward.52} parent=0 // pred_region
    _
  $region29: #{wnet_forward.52} parent=0 // pred_fallthru
    _

// kernel: wnet_forward.53
$region0: #{wnet_forward.53}
  #allocation0 [shape = 'u32[]', space=smem, size = 0x4, offset = 0x4, fixed_abs, tag = 'smem constant byte address 0x4 - core index']
  #allocation1 [shape = 'u32[72,128]{1,0:T(1,128)}', space=vmem, size = 0x9000, scoped, tag = 'internal scratch']
  #allocation2 [shape = 'f32[32,8]{1,0:T(8,128)}', space=vmem, size = 0x4000, scoped, tag = 'scratch operand']
  %s0 = inlined_call_operand.vmem [shape: bf16[32,288], index: 0, kind: input, shape index: {}]
  %s1 = inlined_call_operand.vmem [shape: bf16[288,8], index: 1, kind: input, shape index: {}]
  %s2 = inlined_call_operand.vmem [shape: f32[32,1], index: 2, kind: input, shape index: {}]
  %s3 = inlined_call_operand.vmem [shape: bf16[32,8], index: 3, kind: output, shape index: {}]
  %s4 = sld [smem:[#allocation0]]
  $region30: #{wnet_forward.53} parent=0
    _
  %s6 = ssub.s32 1, %s4
  %s7 = scalar_select 0, %s6, %s4
  // Predicated region
  $region2: #{wnet_forward.53} parent=0 // pred_check
    _
  $region3: #{wnet_forward.53} parent=0 // pred_check_branch
    %9 = sbr.rel (0) target = $region5
  $region4: #{wnet_forward.53} parent=0 // pred_region
    _
  $region5: #{wnet_forward.53} parent=0 // pred_fallthru
    _
  // Predicated region
  $region6: #{wnet_forward.53} parent=0 // pred_check
    _
  $region7: #{wnet_forward.53} parent=0 // pred_check_branch
    %11 = sbr.rel (0) target = $region9
  $region8: #{wnet_forward.53} parent=0 // pred_region
    _
  $region9: #{wnet_forward.53} parent=0 // pred_fallthru
    _
  // Predicated region
  $region10: #{wnet_forward.53} parent=0 // pred_check
    _
  $region11: #{wnet_forward.53} parent=0 // pred_check_branch
    %13 = sbr.rel (0) target = $region13
  $region12: #{wnet_forward.53} parent=0 // pred_region
    _
  $region13: #{wnet_forward.53} parent=0 // pred_fallthru
    _
  %p15 = scmp.eq.s32.totalorder 0, 0
  // Predicated region
  $region14: #{wnet_forward.53} parent=0 // pred_check
    %p16 = pneg %p15
  $region15: #{wnet_forward.53} parent=0 // pred_check_branch
    %18 = sbr.rel (%p16) target = $region17
  $region16: #{wnet_forward.53} parent=0 // pred_region
    %vm19 = vcmask 64512
    %20 = vst.msk [vmem:[#allocation2] sm:$0xff] %vm19, 0.0
    %21 = vst.msk [vmem:[#allocation2 + $0x8] sm:$0xff] %vm19, 0.0
    %22 = vst.msk [vmem:[#allocation2 + $0x10] sm:$0xff] %vm19, 0.0
    %23 = vst.msk [vmem:[#allocation2 + $0x18] sm:$0xff] %vm19, 0.0
  $region17: #{wnet_forward.53} parent=0 // pred_fallthru
    _
  %v24 = vld [vmem:[#allocation2] sm:$0xff]
  %v25 = vld [vmem:[#allocation2 + $0x8] sm:$0xff]
  %v26 = vld [vmem:[#allocation2 + $0x10] sm:$0xff]
  %v27 = vld [vmem:[#allocation2 + $0x18] sm:$0xff]
  %v28 = vld [vmem:[%s0] sm:$0xff]
  %v29 = vld [vmem:[%s0 + $0x8] sm:$0xf]
  %v30 = vld [vmem:[%s0 + $0xc] sm:$0xff]
  %v31 = vld [vmem:[%s0 + $0x14] sm:$0xf]
  %v32 = vld [vmem:[%s0 + $0x18] sm:$0xff]
  %v33 = vld [vmem:[%s0 + $0x20] sm:$0xf]
  %v34 = vld [vmem:[%s0 + $0x24] sm:$0xff]
  %v35 = vld [vmem:[%s0 + $0x2c] sm:$0xf]
  %v36 = vld [vmem:[%s1] sm:$0xf]
  %v37 = vld [vmem:[%s1 + $0x4] sm:$0xf]
  %v38 = vld [vmem:[%s1 + $0x8] sm:$0xf]
  %v39 = vld [vmem:[%s1 + $0xc] sm:$0xf]
  %v40 = vld [vmem:[%s1 + $0x10] sm:$0xf]
  %v41 = vld [vmem:[%s1 + $0x14] sm:$0xf]
  %v42 = vld [vmem:[%s1 + $0x18] sm:$0xf]
  %v43 = vld [vmem:[%s1 + $0x1c] sm:$0xf]
  %v44 = vld [vmem:[%s1 + $0x20] sm:$0xf]
  %v45 = vld [vmem:[%s1 + $0x24] sm:$0xf]
  %v46 = vld [vmem:[%s1 + $0x28] sm:$0xf]
  %v47 = vld [vmem:[%s1 + $0x2c] sm:$0xf]
  %v48 = vld [vmem:[%s1 + $0x30] sm:$0xf]
  %v49 = vld [vmem:[%s1 + $0x34] sm:$0xf]
  %v50 = vld [vmem:[%s1 + $0x38] sm:$0xf]
  %v51 = vld [vmem:[%s1 + $0x3c] sm:$0xf]
  %v52 = vld [vmem:[%s1 + $0x40] sm:$0xf]
  %v53 = vld [vmem:[%s1 + $0x44] sm:$0xf]
  %v54 = vld [vmem:[%s1 + $0x48] sm:$0xf]
  %v55 = vld [vmem:[%s1 + $0x4c] sm:$0xf]
  %v56 = vld [vmem:[%s1 + $0x50] sm:$0xf]
  %v57 = vld [vmem:[%s1 + $0x54] sm:$0xf]
  %v58 = vld [vmem:[%s1 + $0x58] sm:$0xf]
  %v59 = vld [vmem:[%s1 + $0x5c] sm:$0xf]
  %v60 = vld [vmem:[%s1 + $0x60] sm:$0xf]
  %v61 = vld [vmem:[%s1 + $0x64] sm:$0xf]
  %v62 = vld [vmem:[%s1 + $0x68] sm:$0xf]
  %v63 = vld [vmem:[%s1 + $0x6c] sm:$0xf]
  %v64 = vld [vmem:[%s1 + $0x70] sm:$0xf]
  %v65 = vld [vmem:[%s1 + $0x74] sm:$0xf]
  %v66 = vld [vmem:[%s1 + $0x78] sm:$0xf]
  %v67 = vld [vmem:[%s1 + $0x7c] sm:$0xf]
  %v68 = vld [vmem:[%s1 + $0x80] sm:$0xf]
  %v69 = vld [vmem:[%s1 + $0x84] sm:$0xf]
  %v70 = vld [vmem:[%s1 + $0x88] sm:$0xf]
  %v71 = vld [vmem:[%s1 + $0x8c] sm:$0xf]
  %v80 = vunpack.c.l.b16 %v28
  %v81 = vunpack.c.h.b16 %v28
  %v82 = vunpack.c.l.b16 %v29
  %v83 = vunpack.c.l.b16 %v30
  %v84 = vunpack.c.h.b16 %v30
  %v85 = vunpack.c.l.b16 %v31
  %v86 = vunpack.c.l.b16 %v32
  %v87 = vunpack.c.h.b16 %v32
  %v88 = vunpack.c.l.b16 %v33
  %v89 = vunpack.c.l.b16 %v34
  %v90 = vunpack.c.h.b16 %v34
  %v91 = vunpack.c.l.b16 %v35
  %v92 = vpack.c.b16 %v83, %v80
  %v93 = vpack.c.b16 %v84, %v81
  %v94 = vpack.c.b16 %v85, %v82
  %v95 = vpack.c.b16 %v89, %v86
  %v96 = vpack.c.b16 %v90, %v87
  %v97 = vpack.c.b16 %v91, %v88
  %v138 = vunpack.c.l.b16 %v36
  %v139 = vunpack.c.l.b16 %v37
  %v140 = vunpack.c.l.b16 %v38
  %v141 = vunpack.c.l.b16 %v39
  %v142 = vunpack.c.l.b16 %v40
  %v143 = vunpack.c.l.b16 %v41
  %v144 = vunpack.c.l.b16 %v42
  %v145 = vunpack.c.l.b16 %v43
  %v146 = vunpack.c.l.b16 %v44
  %v147 = vunpack.c.l.b16 %v45
  %v148 = vunpack.c.l.b16 %v46
  %v149 = vunpack.c.l.b16 %v47
  %v150 = vunpack.c.l.b16 %v48
  %v151 = vunpack.c.l.b16 %v49
  %v152 = vunpack.c.l.b16 %v50
  %v153 = vunpack.c.l.b16 %v51
  %v154 = vunpack.c.l.b16 %v52
  %v155 = vunpack.c.l.b16 %v53
  %v156 = vunpack.c.l.b16 %v54
  %v157 = vunpack.c.l.b16 %v55
  %v158 = vunpack.c.l.b16 %v56
  %v159 = vunpack.c.l.b16 %v57
  %v160 = vunpack.c.l.b16 %v58
  %v161 = vunpack.c.l.b16 %v59
  %v162 = vunpack.c.l.b16 %v60
  %v163 = vunpack.c.l.b16 %v61
  %v164 = vunpack.c.l.b16 %v62
  %v165 = vunpack.c.l.b16 %v63
  %v166 = vunpack.c.l.b16 %v64
  %v167 = vunpack.c.l.b16 %v65
  %v168 = vunpack.c.l.b16 %v66
  %v169 = vunpack.c.l.b16 %v67
  %v170 = vunpack.c.l.b16 %v68
  %v171 = vunpack.c.l.b16 %v69
  %v172 = vunpack.c.l.b16 %v70
  %v173 = vunpack.c.l.b16 %v71
  %v174 = vpack.c.b16 %v139, %v138
  %v175 = vpack.c.b16 %v141, %v140
  %v176 = vpack.c.b16 %v143, %v142
  %v177 = vpack.c.b16 %v145, %v144
  %v178 = vpack.c.b16 %v147, %v146
  %v179 = vpack.c.b16 %v149, %v148
  %v180 = vpack.c.b16 %v151, %v150
  %v181 = vpack.c.b16 %v153, %v152
  %v182 = vpack.c.b16 %v155, %v154
  %v183 = vpack.c.b16 %v157, %v156
  %v184 = vpack.c.b16 %v159, %v158
  %v185 = vpack.c.b16 %v161, %v160
  %v186 = vpack.c.b16 %v163, %v162
  %v187 = vpack.c.b16 %v165, %v164
  %v188 = vpack.c.b16 %v167, %v166
  %v189 = vpack.c.b16 %v169, %v168
  %v190 = vpack.c.b16 %v171, %v170
  %v191 = vpack.c.b16 %v173, %v172
  %vm210 = vcmask 261120
  %v212 = vsel %vm210, %v94, 0
  %v215 = vsel %vm210, %v97, 0
  %217 = vmatpush.bf16.msra.mxu0 %v181
  %218 = vmatpush.bf16.msra.mxu0 %v180
  %219 = vmatpush.bf16.msra.mxu0 %v179
  %220 = vmatpush.bf16.msra.mxu0 %v178
  %221 = vmatpush.bf16.msra.mxu0 %v177
  %222 = vmatpush.bf16.msra.mxu0 %v176
  %223 = vmatpush.bf16.msra.mxu0 %v175
  %224 = vmatpush.bf16.msra.mxu0 %v174
  %225 = vmatmul.bf16.gmra.mxu0 %v92
  %v226 = vpop.f32.mrf.mxu0
  %v227 = vadd.f32 0.0, %v226
  %v228 = vpop.f32.mrf.mxu0
  %v229 = vadd.f32 0.0, %v228
  %230 = vmatmul.bf16.gmra.mxu0 %v95
  %v231 = vpop.f32.mrf.mxu0
  %v232 = vadd.f32 0.0, %v231
  %v233 = vpop.f32.mrf.mxu0
  %v234 = vadd.f32 0.0, %v233
  %235 = vdwg.mxu0
  %236 = vmatpush.bf16.msra.mxu0 %v189
  %237 = vmatpush.bf16.msra.mxu0 %v188
  %238 = vmatpush.bf16.msra.mxu0 %v187
  %239 = vmatpush.bf16.msra.mxu0 %v186
  %240 = vmatpush.bf16.msra.mxu0 %v185
  %241 = vmatpush.bf16.msra.mxu0 %v184
  %242 = vmatpush.bf16.msra.mxu0 %v183
  %243 = vmatpush.bf16.msra.mxu0 %v182
  %244 = vmatmul.bf16.gmra.mxu0 %v93
  %v245 = vpop.f32.mrf.mxu0
  %v246 = vadd.f32 %v227, %v245
  %v247 = vpop.f32.mrf.mxu0
  %v248 = vadd.f32 %v229, %v247
  %249 = vmatmul.bf16.gmra.mxu0 %v96
  %v250 = vpop.f32.mrf.mxu0
  %v251 = vadd.f32 %v232, %v250
  %v252 = vpop.f32.mrf.mxu0
  %v253 = vadd.f32 %v234, %v252
  %254 = vdwg.mxu0
  %255 = vmatpush.bf16.msra.mxu0 0
  %256 = vmatpush.bf16.msra.mxu0 0
  %257 = vmatpush.bf16.msra.mxu0 0
  %258 = vmatpush.bf16.msra.mxu0 0
  %259 = vmatpush.bf16.msra.mxu0 0
  %260 = vmatpush.bf16.msra.mxu0 0
  %261 = vmatpush.bf16.msra.mxu0 %v191
  %262 = vmatpush.bf16.msra.mxu0 %v190
  %263 = vmatmul.bf16.gmra.mxu0 %v212
  %v264 = vpop.f32.mrf.mxu0
  %v265 = vadd.f32 %v246, %v264
  %v266 = vpop.f32.mrf.mxu0
  %v267 = vadd.f32 %v248, %v266
  %268 = vmatmul.bf16.gmra.mxu0 %v215
  %v269 = vpop.f32.mrf.mxu0
  %v270 = vadd.f32 %v251, %v269
  %v271 = vpop.f32.mrf.mxu0
  %v272 = vadd.f32 %v253, %v271
  %273 = vdwg.mxu0
  %v274 = vadd.f32 %v24, %v265
  %v275 = vadd.f32 %v25, %v267
  %v276 = vadd.f32 %v26, %v270
  %v277 = vadd.f32 %v27, %v272
  %vm278 = vcmask 64512
  %279 = vst.msk [vmem:[#allocation2] sm:$0xff] %vm278, %v274
  %280 = vst.msk [vmem:[#allocation2 + $0x8] sm:$0xff] %vm278, %v275
  %281 = vst.msk [vmem:[#allocation2 + $0x10] sm:$0xff] %vm278, %v276
  %282 = vst.msk [vmem:[#allocation2 + $0x18] sm:$0xff] %vm278, %v277
  // Predicated region
  $region18: #{wnet_forward.53} parent=0 // pred_check
    %p283 = pneg %p15
  $region19: #{wnet_forward.53} parent=0 // pred_check_branch
    %285 = sbr.rel (%p283) target = $region21
  $region20: #{wnet_forward.53} parent=0 // pred_region
    %v286 = vld [vmem:[#allocation2] sm:$0xff]
    %v287 = vld [vmem:[#allocation2 + $0x8] sm:$0xff]
    %v288 = vld [vmem:[#allocation2 + $0x10] sm:$0xff]
    %v289 = vld [vmem:[#allocation2 + $0x18] sm:$0xff]
    %v290 = vld [vmem:[%s2] sm:$0xff]
    %v291 = vld [vmem:[%s2 + $0x8] sm:$0xff]
    %v292 = vld [vmem:[%s2 + $0x10] sm:$0xff]
    %v293 = vld [vmem:[%s2 + $0x18] sm:$0xff]
    %295 = vset.pattern.permute.xlu0 0
    %296 = vperm.xlu0 %295, %v290
    %v297 = vpop.permute.xlu0 %296
    %300 = vset.pattern.permute.xlu0 0
    %301 = vperm.xlu0 %300, %v291
    %v302 = vpop.permute.xlu0 %301
    %305 = vset.pattern.permute.xlu0 0
    %306 = vperm.xlu0 %305, %v292
    %v307 = vpop.permute.xlu0 %306
    %310 = vset.pattern.permute.xlu0 0
    %311 = vperm.xlu0 %310, %v293
    %v312 = vpop.permute.xlu0 %311
    %v314 = vadd.f32 %v286, %v297
    %v315 = vadd.f32 %v287, %v302
    %v316 = vadd.f32 %v288, %v307
    %v317 = vadd.f32 %v289, %v312
    %v318 = vmax.f32 %v314, 0.0
    %v319 = vmax.f32 %v315, 0.0
    %v320 = vmax.f32 %v316, 0.0
    %v321 = vmax.f32 %v317, 0.0
    %v322 = vpack.c.bf16 %v318, %v318
    %v323 = vpack.c.bf16 %v319, %v319
    %v324 = vpack.c.bf16 %v320, %v320
    %v325 = vpack.c.bf16 %v321, %v321
    %vm326 = vcmask 60416
    %327 = vst.msk [vmem:[%s3] sm:$0xf] %vm326, %v322
    %328 = vst.msk [vmem:[%s3 + $0x4] sm:$0xf] %vm326, %v323
    %329 = vst.msk [vmem:[%s3 + $0x8] sm:$0xf] %vm326, %v324
    %330 = vst.msk [vmem:[%s3 + $0xc] sm:$0xf] %vm326, %v325
  $region21: #{wnet_forward.53} parent=0 // pred_fallthru
    _
  // Predicated region
  $region22: #{wnet_forward.53} parent=0 // pred_check
    _
  $region23: #{wnet_forward.53} parent=0 // pred_check_branch
    %332 = sbr.rel (0) target = $region25
  $region24: #{wnet_forward.53} parent=0 // pred_region
    _
  $region25: #{wnet_forward.53} parent=0 // pred_fallthru
    _
  // Predicated region
  $region26: #{wnet_forward.53} parent=0 // pred_check
    _
  $region27: #{wnet_forward.53} parent=0 // pred_check_branch
    %334 = sbr.rel (0) target = $region29
  $region28: #{wnet_forward.53} parent=0 // pred_region
    _
  $region29: #{wnet_forward.53} parent=0 // pred_fallthru
    _

// kernel: wnet_forward.54
$region0: #{wnet_forward.54}
  #allocation0 [shape = 'u32[]', space=smem, size = 0x4, offset = 0x4, fixed_abs, tag = 'smem constant byte address 0x4 - core index']
  #allocation1 [shape = 'u32[72,128]{1,0:T(1,128)}', space=vmem, size = 0x9000, scoped, tag = 'internal scratch']
  #allocation2 [shape = 'f32[64,2]{1,0:T(8,128)}', space=vmem, size = 0x8000, scoped, tag = 'scratch operand']
  %s0 = inlined_call_operand.vmem [shape: bf16[64,288], index: 0, kind: input, shape index: {}]
  %s1 = inlined_call_operand.vmem [shape: bf16[288,2], index: 1, kind: input, shape index: {}]
  %s2 = inlined_call_operand.vmem [shape: f32[64,1], index: 2, kind: input, shape index: {}]
  %s3 = inlined_call_operand.vmem [shape: bf16[64,2], index: 3, kind: output, shape index: {}]
  %s4 = sld [smem:[#allocation0]]
  $region30: #{wnet_forward.54} parent=0
    _
  %s6 = ssub.s32 1, %s4
  %s7 = scalar_select 0, %s6, %s4
  // Predicated region
  $region2: #{wnet_forward.54} parent=0 // pred_check
    _
  $region3: #{wnet_forward.54} parent=0 // pred_check_branch
    %9 = sbr.rel (0) target = $region5
  $region4: #{wnet_forward.54} parent=0 // pred_region
    _
  $region5: #{wnet_forward.54} parent=0 // pred_fallthru
    _
  // Predicated region
  $region6: #{wnet_forward.54} parent=0 // pred_check
    _
  $region7: #{wnet_forward.54} parent=0 // pred_check_branch
    %11 = sbr.rel (0) target = $region9
  $region8: #{wnet_forward.54} parent=0 // pred_region
    _
  $region9: #{wnet_forward.54} parent=0 // pred_fallthru
    _
  // Predicated region
  $region10: #{wnet_forward.54} parent=0 // pred_check
    _
  $region11: #{wnet_forward.54} parent=0 // pred_check_branch
    %13 = sbr.rel (0) target = $region13
  $region12: #{wnet_forward.54} parent=0 // pred_region
    _
  $region13: #{wnet_forward.54} parent=0 // pred_fallthru
    _
  %p15 = scmp.eq.s32.totalorder 0, 0
  // Predicated region
  $region14: #{wnet_forward.54} parent=0 // pred_check
    %p16 = pneg %p15
  $region15: #{wnet_forward.54} parent=0 // pred_check_branch
    %18 = sbr.rel (%p16) target = $region17
  $region16: #{wnet_forward.54} parent=0 // pred_region
    %vm19 = vcmask 15360
    %20 = vst.msk [vmem:[#allocation2] sm:$0xff] %vm19, 0.0
    %21 = vst.msk [vmem:[#allocation2 + $0x8] sm:$0xff] %vm19, 0.0
    %22 = vst.msk [vmem:[#allocation2 + $0x10] sm:$0xff] %vm19, 0.0
    %23 = vst.msk [vmem:[#allocation2 + $0x18] sm:$0xff] %vm19, 0.0
    %24 = vst.msk [vmem:[#allocation2 + $0x20] sm:$0xff] %vm19, 0.0
    %25 = vst.msk [vmem:[#allocation2 + $0x28] sm:$0xff] %vm19, 0.0
    %26 = vst.msk [vmem:[#allocation2 + $0x30] sm:$0xff] %vm19, 0.0
    %27 = vst.msk [vmem:[#allocation2 + $0x38] sm:$0xff] %vm19, 0.0
  $region17: #{wnet_forward.54} parent=0 // pred_fallthru
    _
  %v28 = vld [vmem:[#allocation2] sm:$0xff]
  %v29 = vld [vmem:[#allocation2 + $0x8] sm:$0xff]
  %v30 = vld [vmem:[#allocation2 + $0x10] sm:$0xff]
  %v31 = vld [vmem:[#allocation2 + $0x18] sm:$0xff]
  %v32 = vld [vmem:[#allocation2 + $0x20] sm:$0xff]
  %v33 = vld [vmem:[#allocation2 + $0x28] sm:$0xff]
  %v34 = vld [vmem:[#allocation2 + $0x30] sm:$0xff]
  %v35 = vld [vmem:[#allocation2 + $0x38] sm:$0xff]
  %v36 = vld [vmem:[%s0] sm:$0xff]
  %v37 = vld [vmem:[%s0 + $0x8] sm:$0xf]
  %v38 = vld [vmem:[%s0 + $0xc] sm:$0xff]
  %v39 = vld [vmem:[%s0 + $0x14] sm:$0xf]
  %v40 = vld [vmem:[%s0 + $0x18] sm:$0xff]
  %v41 = vld [vmem:[%s0 + $0x20] sm:$0xf]
  %v42 = vld [vmem:[%s0 + $0x24] sm:$0xff]
  %v43 = vld [vmem:[%s0 + $0x2c] sm:$0xf]
  %v44 = vld [vmem:[%s0 + $0x30] sm:$0xff]
  %v45 = vld [vmem:[%s0 + $0x38] sm:$0xf]
  %v46 = vld [vmem:[%s0 + $0x3c] sm:$0xff]
  %v47 = vld [vmem:[%s0 + $0x44] sm:$0xf]
  %v48 = vld [vmem:[%s0 + $0x48] sm:$0xff]
  %v49 = vld [vmem:[%s0 + $0x50] sm:$0xf]
  %v50 = vld [vmem:[%s0 + $0x54] sm:$0xff]
  %v51 = vld [vmem:[%s0 + $0x5c] sm:$0xf]
  %v52 = vld [vmem:[%s1] sm:$0xf]
  %v53 = vld [vmem:[%s1 + $0x4] sm:$0xf]
  %v54 = vld [vmem:[%s1 + $0x8] sm:$0xf]
  %v55 = vld [vmem:[%s1 + $0xc] sm:$0xf]
  %v56 = vld [vmem:[%s1 + $0x10] sm:$0xf]
  %v57 = vld [vmem:[%s1 + $0x14] sm:$0xf]
  %v58 = vld [vmem:[%s1 + $0x18] sm:$0xf]
  %v59 = vld [vmem:[%s1 + $0x1c] sm:$0xf]
  %v60 = vld [vmem:[%s1 + $0x20] sm:$0xf]
  %v61 = vld [vmem:[%s1 + $0x24] sm:$0xf]
  %v62 = vld [vmem:[%s1 + $0x28] sm:$0xf]
  %v63 = vld [vmem:[%s1 + $0x2c] sm:$0xf]
  %v64 = vld [vmem:[%s1 + $0x30] sm:$0xf]
  %v65 = vld [vmem:[%s1 + $0x34] sm:$0xf]
  %v66 = vld [vmem:[%s1 + $0x38] sm:$0xf]
  %v67 = vld [vmem:[%s1 + $0x3c] sm:$0xf]
  %v68 = vld [vmem:[%s1 + $0x40] sm:$0xf]
  %v69 = vld [vmem:[%s1 + $0x44] sm:$0xf]
  %v70 = vld [vmem:[%s1 + $0x48] sm:$0xf]
  %v71 = vld [vmem:[%s1 + $0x4c] sm:$0xf]
  %v72 = vld [vmem:[%s1 + $0x50] sm:$0xf]
  %v73 = vld [vmem:[%s1 + $0x54] sm:$0xf]
  %v74 = vld [vmem:[%s1 + $0x58] sm:$0xf]
  %v75 = vld [vmem:[%s1 + $0x5c] sm:$0xf]
  %v76 = vld [vmem:[%s1 + $0x60] sm:$0xf]
  %v77 = vld [vmem:[%s1 + $0x64] sm:$0xf]
  %v78 = vld [vmem:[%s1 + $0x68] sm:$0xf]
  %v79 = vld [vmem:[%s1 + $0x6c] sm:$0xf]
  %v80 = vld [vmem:[%s1 + $0x70] sm:$0xf]
  %v81 = vld [vmem:[%s1 + $0x74] sm:$0xf]
  %v82 = vld [vmem:[%s1 + $0x78] sm:$0xf]
  %v83 = vld [vmem:[%s1 + $0x7c] sm:$0xf]
  %v84 = vld [vmem:[%s1 + $0x80] sm:$0xf]
  %v85 = vld [vmem:[%s1 + $0x84] sm:$0xf]
  %v86 = vld [vmem:[%s1 + $0x88] sm:$0xf]
  %v87 = vld [vmem:[%s1 + $0x8c] sm:$0xf]
  %v104 = vunpack.c.l.b16 %v36
  %v105 = vunpack.c.h.b16 %v36
  %v106 = vunpack.c.l.b16 %v37
  %v107 = vunpack.c.l.b16 %v38
  %v108 = vunpack.c.h.b16 %v38
  %v109 = vunpack.c.l.b16 %v39
  %v110 = vunpack.c.l.b16 %v40
  %v111 = vunpack.c.h.b16 %v40
  %v112 = vunpack.c.l.b16 %v41
  %v113 = vunpack.c.l.b16 %v42
  %v114 = vunpack.c.h.b16 %v42
  %v115 = vunpack.c.l.b16 %v43
  %v116 = vunpack.c.l.b16 %v44
  %v117 = vunpack.c.h.b16 %v44
  %v118 = vunpack.c.l.b16 %v45
  %v119 = vunpack.c.l.b16 %v46
  %v120 = vunpack.c.h.b16 %v46
  %v121 = vunpack.c.l.b16 %v47
  %v122 = vunpack.c.l.b16 %v48
  %v123 = vunpack.c.h.b16 %v48
  %v124 = vunpack.c.l.b16 %v49
  %v125 = vunpack.c.l.b16 %v50
  %v126 = vunpack.c.h.b16 %v50
  %v127 = vunpack.c.l.b16 %v51
  %v128 = vpack.c.b16 %v107, %v104
  %v129 = vpack.c.b16 %v108, %v105
  %v130 = vpack.c.b16 %v109, %v106
  %v131 = vpack.c.b16 %v113, %v110
  %v132 = vpack.c.b16 %v114, %v111
  %v133 = vpack.c.b16 %v115, %v112
  %v134 = vpack.c.b16 %v119, %v116
  %v135 = vpack.c.b16 %v120, %v117
  %v136 = vpack.c.b16 %v121, %v118
  %v137 = vpack.c.b16 %v125, %v122
  %v138 = vpack.c.b16 %v126, %v123
  %v139 = vpack.c.b16 %v127, %v124
  %v184 = vunpack.c.l.b16 %v52
  %v185 = vunpack.c.l.b16 %v53
  %v186 = vunpack.c.l.b16 %v54
  %v187 = vunpack.c.l.b16 %v55
  %v188 = vunpack.c.l.b16 %v56
  %v189 = vunpack.c.l.b16 %v57
  %v190 = vunpack.c.l.b16 %v58
  %v191 = vunpack.c.l.b16 %v59
  %v192 = vunpack.c.l.b16 %v60
  %v193 = vunpack.c.l.b16 %v61
  %v194 = vunpack.c.l.b16 %v62
  %v195 = vunpack.c.l.b16 %v63
  %v196 = vunpack.c.l.b16 %v64
  %v197 = vunpack.c.l.b16 %v65
  %v198 = vunpack.c.l.b16 %v66
  %v199 = vunpack.c.l.b16 %v67
  %v200 = vunpack.c.l.b16 %v68
  %v201 = vunpack.c.l.b16 %v69
  %v202 = vunpack.c.l.b16 %v70
  %v203 = vunpack.c.l.b16 %v71
  %v204 = vunpack.c.l.b16 %v72
  %v205 = vunpack.c.l.b16 %v73
  %v206 = vunpack.c.l.b16 %v74
  %v207 = vunpack.c.l.b16 %v75
  %v208 = vunpack.c.l.b16 %v76
  %v209 = vunpack.c.l.b16 %v77
  %v210 = vunpack.c.l.b16 %v78
  %v211 = vunpack.c.l.b16 %v79
  %v212 = vunpack.c.l.b16 %v80
  %v213 = vunpack.c.l.b16 %v81
  %v214 = vunpack.c.l.b16 %v82
  %v215 = vunpack.c.l.b16 %v83
  %v216 = vunpack.c.l.b16 %v84
  %v217 = vunpack.c.l.b16 %v85
  %v218 = vunpack.c.l.b16 %v86
  %v219 = vunpack.c.l.b16 %v87
  %v220 = vpack.c.b16 %v185, %v184
  %v221 = vpack.c.b16 %v187, %v186
  %v222 = vpack.c.b16 %v189, %v188
  %v223 = vpack.c.b16 %v191, %v190
  %v224 = vpack.c.b16 %v193, %v192
  %v225 = vpack.c.b16 %v195, %v194
  %v226 = vpack.c.b16 %v197, %v196
  %v227 = vpack.c.b16 %v199, %v198
  %v228 = vpack.c.b16 %v201, %v200
  %v229 = vpack.c.b16 %v203, %v202
  %v230 = vpack.c.b16 %v205, %v204
  %v231 = vpack.c.b16 %v207, %v206
  %v232 = vpack.c.b16 %v209, %v208
  %v233 = vpack.c.b16 %v211, %v210
  %v234 = vpack.c.b16 %v213, %v212
  %v235 = vpack.c.b16 %v215, %v214
  %v236 = vpack.c.b16 %v217, %v216
  %v237 = vpack.c.b16 %v219, %v218
  %vm256 = vcmask 261120
  %v258 = vsel %vm256, %v130, 0
  %v261 = vsel %vm256, %v133, 0
  %v264 = vsel %vm256, %v136, 0
  %v267 = vsel %vm256, %v139, 0
  %269 = vmatpush.bf16.msra.mxu0 %v227
  %270 = vmatpush.bf16.msra.mxu0 %v226
  %271 = vmatpush.bf16.msra.mxu0 %v225
  %272 = vmatpush.bf16.msra.mxu0 %v224
  %273 = vmatpush.bf16.msra.mxu0 %v223
  %274 = vmatpush.bf16.msra.mxu0 %v222
  %275 = vmatpush.bf16.msra.mxu0 %v221
  %276 = vmatpush.bf16.msra.mxu0 %v220
  %277 = vmatmul.bf16.gmra.mxu0 %v128
  %v278 = vpop.f32.mrf.mxu0
  %v279 = vadd.f32 0.0, %v278
  %v280 = vpop.f32.mrf.mxu0
  %v281 = vadd.f32 0.0, %v280
  %282 = vmatmul.bf16.gmra.mxu0 %v131
  %v283 = vpop.f32.mrf.mxu0
  %v284 = vadd.f32 0.0, %v283
  %v285 = vpop.f32.mrf.mxu0
  %v286 = vadd.f32 0.0, %v285
  %287 = vmatmul.bf16.gmra.mxu0 %v134
  %v288 = vpop.f32.mrf.mxu0
  %v289 = vadd.f32 0.0, %v288
  %v290 = vpop.f32.mrf.mxu0
  %v291 = vadd.f32 0.0, %v290
  %292 = vmatmul.bf16.gmra.mxu0 %v137
  %v293 = vpop.f32.mrf.mxu0
  %v294 = vadd.f32 0.0, %v293
  %v295 = vpop.f32.mrf.mxu0
  %v296 = vadd.f32 0.0, %v295
  %297 = vdwg.mxu0
  %298 = vmatpush.bf16.msra.mxu0 %v235
  %299 = vmatpush.bf16.msra.mxu0 %v234
  %300 = vmatpush.bf16.msra.mxu0 %v233
  %301 = vmatpush.bf16.msra.mxu0 %v232
  %302 = vmatpush.bf16.msra.mxu0 %v231
  %303 = vmatpush.bf16.msra.mxu0 %v230
  %304 = vmatpush.bf16.msra.mxu0 %v229
  %305 = vmatpush.bf16.msra.mxu0 %v228
  %306 = vmatmul.bf16.gmra.mxu0 %v129
  %v307 = vpop.f32.mrf.mxu0
  %v308 = vadd.f32 %v279, %v307
  %v309 = vpop.f32.mrf.mxu0
  %v310 = vadd.f32 %v281, %v309
  %311 = vmatmul.bf16.gmra.mxu0 %v132
  %v312 = vpop.f32.mrf.mxu0
  %v313 = vadd.f32 %v284, %v312
  %v314 = vpop.f32.mrf.mxu0
  %v315 = vadd.f32 %v286, %v314
  %316 = vmatmul.bf16.gmra.mxu0 %v135
  %v317 = vpop.f32.mrf.mxu0
  %v318 = vadd.f32 %v289, %v317
  %v319 = vpop.f32.mrf.mxu0
  %v320 = vadd.f32 %v291, %v319
  %321 = vmatmul.bf16.gmra.mxu0 %v138
  %v322 = vpop.f32.mrf.mxu0
  %v323 = vadd.f32 %v294, %v322
  %v324 = vpop.f32.mrf.mxu0
  %v325 = vadd.f32 %v296, %v324
  %326 = vdwg.mxu0
  %327 = vmatpush.bf16.msra.mxu0 0
  %328 = vmatpush.bf16.msra.mxu0 0
  %329 = vmatpush.bf16.msra.mxu0 0
  %330 = vmatpush.bf16.msra.mxu0 0
  %331 = vmatpush.bf16.msra.mxu0 0
  %332 = vmatpush.bf16.msra.mxu0 0
  %333 = vmatpush.bf16.msra.mxu0 %v237
  %334 = vmatpush.bf16.msra.mxu0 %v236
  %335 = vmatmul.bf16.gmra.mxu0 %v258
  %v336 = vpop.f32.mrf.mxu0
  %v337 = vadd.f32 %v308, %v336
  %v338 = vpop.f32.mrf.mxu0
  %v339 = vadd.f32 %v310, %v338
  %340 = vmatmul.bf16.gmra.mxu0 %v261
  %v341 = vpop.f32.mrf.mxu0
  %v342 = vadd.f32 %v313, %v341
  %v343 = vpop.f32.mrf.mxu0
  %v344 = vadd.f32 %v315, %v343
  %345 = vmatmul.bf16.gmra.mxu0 %v264
  %v346 = vpop.f32.mrf.mxu0
  %v347 = vadd.f32 %v318, %v346
  %v348 = vpop.f32.mrf.mxu0
  %v349 = vadd.f32 %v320, %v348
  %350 = vmatmul.bf16.gmra.mxu0 %v267
  %v351 = vpop.f32.mrf.mxu0
  %v352 = vadd.f32 %v323, %v351
  %v353 = vpop.f32.mrf.mxu0
  %v354 = vadd.f32 %v325, %v353
  %355 = vdwg.mxu0
  %v356 = vadd.f32 %v28, %v337
  %v357 = vadd.f32 %v29, %v339
  %v358 = vadd.f32 %v30, %v342
  %v359 = vadd.f32 %v31, %v344
  %v360 = vadd.f32 %v32, %v347
  %v361 = vadd.f32 %v33, %v349
  %v362 = vadd.f32 %v34, %v352
  %v363 = vadd.f32 %v35, %v354
  %vm364 = vcmask 15360
  %365 = vst.msk [vmem:[#allocation2] sm:$0xff] %vm364, %v356
  %366 = vst.msk [vmem:[#allocation2 + $0x8] sm:$0xff] %vm364, %v357
  %367 = vst.msk [vmem:[#allocation2 + $0x10] sm:$0xff] %vm364, %v358
  %368 = vst.msk [vmem:[#allocation2 + $0x18] sm:$0xff] %vm364, %v359
  %369 = vst.msk [vmem:[#allocation2 + $0x20] sm:$0xff] %vm364, %v360
  %370 = vst.msk [vmem:[#allocation2 + $0x28] sm:$0xff] %vm364, %v361
  %371 = vst.msk [vmem:[#allocation2 + $0x30] sm:$0xff] %vm364, %v362
  %372 = vst.msk [vmem:[#allocation2 + $0x38] sm:$0xff] %vm364, %v363
  // Predicated region
  $region18: #{wnet_forward.54} parent=0 // pred_check
    %p373 = pneg %p15
  $region19: #{wnet_forward.54} parent=0 // pred_check_branch
    %375 = sbr.rel (%p373) target = $region21
  $region20: #{wnet_forward.54} parent=0 // pred_region
    %v376 = vld [vmem:[#allocation2] sm:$0xff]
    %v377 = vld [vmem:[#allocation2 + $0x8] sm:$0xff]
    %v378 = vld [vmem:[#allocation2 + $0x10] sm:$0xff]
    %v379 = vld [vmem:[#allocation2 + $0x18] sm:$0xff]
    %v380 = vld [vmem:[#allocation2 + $0x20] sm:$0xff]
    %v381 = vld [vmem:[#allocation2 + $0x28] sm:$0xff]
    %v382 = vld [vmem:[#allocation2 + $0x30] sm:$0xff]
    %v383 = vld [vmem:[#allocation2 + $0x38] sm:$0xff]
    %v384 = vld [vmem:[%s2] sm:$0xff]
    %v385 = vld [vmem:[%s2 + $0x8] sm:$0xff]
    %v386 = vld [vmem:[%s2 + $0x10] sm:$0xff]
    %v387 = vld [vmem:[%s2 + $0x18] sm:$0xff]
    %v388 = vld [vmem:[%s2 + $0x20] sm:$0xff]
    %v389 = vld [vmem:[%s2 + $0x28] sm:$0xff]
    %v390 = vld [vmem:[%s2 + $0x30] sm:$0xff]
    %v391 = vld [vmem:[%s2 + $0x38] sm:$0xff]
    %393 = vset.pattern.permute.xlu0 0
    %394 = vperm.xlu0 %393, %v384
    %v395 = vpop.permute.xlu0 %394
    %398 = vset.pattern.permute.xlu0 0
    %399 = vperm.xlu0 %398, %v385
    %v400 = vpop.permute.xlu0 %399
    %403 = vset.pattern.permute.xlu0 0
    %404 = vperm.xlu0 %403, %v386
    %v405 = vpop.permute.xlu0 %404
    %408 = vset.pattern.permute.xlu0 0
    %409 = vperm.xlu0 %408, %v387
    %v410 = vpop.permute.xlu0 %409
    %413 = vset.pattern.permute.xlu0 0
    %414 = vperm.xlu0 %413, %v388
    %v415 = vpop.permute.xlu0 %414
    %418 = vset.pattern.permute.xlu0 0
    %419 = vperm.xlu0 %418, %v389
    %v420 = vpop.permute.xlu0 %419
    %423 = vset.pattern.permute.xlu0 0
    %424 = vperm.xlu0 %423, %v390
    %v425 = vpop.permute.xlu0 %424
    %428 = vset.pattern.permute.xlu0 0
    %429 = vperm.xlu0 %428, %v391
    %v430 = vpop.permute.xlu0 %429
    %v432 = vadd.f32 %v376, %v395
    %v433 = vadd.f32 %v377, %v400
    %v434 = vadd.f32 %v378, %v405
    %v435 = vadd.f32 %v379, %v410
    %v436 = vadd.f32 %v380, %v415
    %v437 = vadd.f32 %v381, %v420
    %v438 = vadd.f32 %v382, %v425
    %v439 = vadd.f32 %v383, %v430
    %v440 = vmax.f32 %v432, 0.0
    %v441 = vmax.f32 %v433, 0.0
    %v442 = vmax.f32 %v434, 0.0
    %v443 = vmax.f32 %v435, 0.0
    %v444 = vmax.f32 %v436, 0.0
    %v445 = vmax.f32 %v437, 0.0
    %v446 = vmax.f32 %v438, 0.0
    %v447 = vmax.f32 %v439, 0.0
    %v448 = vpack.c.bf16 %v440, %v440
    %v449 = vpack.c.bf16 %v441, %v441
    %v450 = vpack.c.bf16 %v442, %v442
    %v451 = vpack.c.bf16 %v443, %v443
    %v452 = vpack.c.bf16 %v444, %v444
    %v453 = vpack.c.bf16 %v445, %v445
    %v454 = vpack.c.bf16 %v446, %v446
    %v455 = vpack.c.bf16 %v447, %v447
    %vm456 = vcmask 11264
    %457 = vst.msk [vmem:[%s3] sm:$0xf] %vm456, %v448
    %458 = vst.msk [vmem:[%s3 + $0x4] sm:$0xf] %vm456, %v449
    %459 = vst.msk [vmem:[%s3 + $0x8] sm:$0xf] %vm456, %v450
    %460 = vst.msk [vmem:[%s3 + $0xc] sm:$0xf] %vm456, %v451
    %461 = vst.msk [vmem:[%s3 + $0x10] sm:$0xf] %vm456, %v452
    %462 = vst.msk [vmem:[%s3 + $0x14] sm:$0xf] %vm456, %v453
    %463 = vst.msk [vmem:[%s3 + $0x18] sm:$0xf] %vm456, %v454
    %464 = vst.msk [vmem:[%s3 + $0x1c] sm:$0xf] %vm456, %v455
  $region21: #{wnet_forward.54} parent=0 // pred_fallthru
    _
  // Predicated region
  $region22: #{wnet_forward.54} parent=0 // pred_check
    _
  $region23: #{wnet_forward.54} parent=0 // pred_check_branch
    %466 = sbr.rel (0) target = $region25
  $region24: #{wnet_forward.54} parent=0 // pred_region
    _
  $region25: #{wnet_forward.54} parent=0 // pred_fallthru
    _
  // Predicated region
  $region26: #{wnet_forward.54} parent=0 // pred_check
    _
  $region27: #{wnet_forward.54} parent=0 // pred_check_branch
    %468 = sbr.rel (0) target = $region29
  $region28: #{wnet_forward.54} parent=0 // pred_region
    _
  $region29: #{wnet_forward.54} parent=0 // pred_fallthru
    _

// kernel: wnet_forward.55
$region0: #{wnet_forward.55}
  #allocation0 [shape = 'u32[]', space=smem, size = 0x4, offset = 0x4, fixed_abs, tag = 'smem constant byte address 0x4 - core index']
  #allocation1 [shape = 'u32[72,128]{1,0:T(1,128)}', space=vmem, size = 0x9000, scoped, tag = 'internal scratch']
  #allocation2 [shape = 'f32[64,2]{1,0:T(8,128)}', space=vmem, size = 0x8000, scoped, tag = 'scratch operand']
  %s0 = inlined_call_operand.vmem [shape: bf16[64,576], index: 0, kind: input, shape index: {}]
  %s1 = inlined_call_operand.vmem [shape: bf16[576,2], index: 1, kind: input, shape index: {}]
  %s2 = inlined_call_operand.vmem [shape: f32[64,1], index: 2, kind: input, shape index: {}]
  %s3 = inlined_call_operand.vmem [shape: bf16[64,2], index: 3, kind: output, shape index: {}]
  %s4 = sld [smem:[#allocation0]]
  $region30: #{wnet_forward.55} parent=0
    _
  %s6 = ssub.s32 1, %s4
  %s7 = scalar_select 0, %s6, %s4
  // Predicated region
  $region2: #{wnet_forward.55} parent=0 // pred_check
    _
  $region3: #{wnet_forward.55} parent=0 // pred_check_branch
    %9 = sbr.rel (0) target = $region5
  $region4: #{wnet_forward.55} parent=0 // pred_region
    _
  $region5: #{wnet_forward.55} parent=0 // pred_fallthru
    _
  // Predicated region
  $region6: #{wnet_forward.55} parent=0 // pred_check
    _
  $region7: #{wnet_forward.55} parent=0 // pred_check_branch
    %11 = sbr.rel (0) target = $region9
  $region8: #{wnet_forward.55} parent=0 // pred_region
    _
  $region9: #{wnet_forward.55} parent=0 // pred_fallthru
    _
  // Predicated region
  $region10: #{wnet_forward.55} parent=0 // pred_check
    _
  $region11: #{wnet_forward.55} parent=0 // pred_check_branch
    %13 = sbr.rel (0) target = $region13
  $region12: #{wnet_forward.55} parent=0 // pred_region
    _
  $region13: #{wnet_forward.55} parent=0 // pred_fallthru
    _
  %p15 = scmp.eq.s32.totalorder 0, 0
  // Predicated region
  $region14: #{wnet_forward.55} parent=0 // pred_check
    %p16 = pneg %p15
  $region15: #{wnet_forward.55} parent=0 // pred_check_branch
    %18 = sbr.rel (%p16) target = $region17
  $region16: #{wnet_forward.55} parent=0 // pred_region
    %vm19 = vcmask 15360
    %20 = vst.msk [vmem:[#allocation2] sm:$0xff] %vm19, 0.0
    %21 = vst.msk [vmem:[#allocation2 + $0x8] sm:$0xff] %vm19, 0.0
    %22 = vst.msk [vmem:[#allocation2 + $0x10] sm:$0xff] %vm19, 0.0
    %23 = vst.msk [vmem:[#allocation2 + $0x18] sm:$0xff] %vm19, 0.0
    %24 = vst.msk [vmem:[#allocation2 + $0x20] sm:$0xff] %vm19, 0.0
    %25 = vst.msk [vmem:[#allocation2 + $0x28] sm:$0xff] %vm19, 0.0
    %26 = vst.msk [vmem:[#allocation2 + $0x30] sm:$0xff] %vm19, 0.0
    %27 = vst.msk [vmem:[#allocation2 + $0x38] sm:$0xff] %vm19, 0.0
  $region17: #{wnet_forward.55} parent=0 // pred_fallthru
    _
  %v28 = vld [vmem:[#allocation2] sm:$0xff]
  %v29 = vld [vmem:[#allocation2 + $0x8] sm:$0xff]
  %v30 = vld [vmem:[#allocation2 + $0x10] sm:$0xff]
  %v31 = vld [vmem:[#allocation2 + $0x18] sm:$0xff]
  %v32 = vld [vmem:[#allocation2 + $0x20] sm:$0xff]
  %v33 = vld [vmem:[#allocation2 + $0x28] sm:$0xff]
  %v34 = vld [vmem:[#allocation2 + $0x30] sm:$0xff]
  %v35 = vld [vmem:[#allocation2 + $0x38] sm:$0xff]
  %v36 = vld [vmem:[%s0] sm:$0xff]
  %v37 = vld [vmem:[%s0 + $0x8] sm:$0xff]
  %v38 = vld [vmem:[%s0 + $0x10] sm:$0xf]
  %v39 = vld [vmem:[%s0 + $0x14] sm:$0xff]
  %v40 = vld [vmem:[%s0 + $0x1c] sm:$0xff]
  %v41 = vld [vmem:[%s0 + $0x24] sm:$0xf]
  %v42 = vld [vmem:[%s0 + $0x28] sm:$0xff]
  %v43 = vld [vmem:[%s0 + $0x30] sm:$0xff]
  %v44 = vld [vmem:[%s0 + $0x38] sm:$0xf]
  %v45 = vld [vmem:[%s0 + $0x3c] sm:$0xff]
  %v46 = vld [vmem:[%s0 + $0x44] sm:$0xff]
  %v47 = vld [vmem:[%s0 + $0x4c] sm:$0xf]
  %v48 = vld [vmem:[%s0 + $0x50] sm:$0xff]
  %v49 = vld [vmem:[%s0 + $0x58] sm:$0xff]
  %v50 = vld [vmem:[%s0 + $0x60] sm:$0xf]
  %v51 = vld [vmem:[%s0 + $0x64] sm:$0xff]
  %v52 = vld [vmem:[%s0 + $0x6c] sm:$0xff]
  %v53 = vld [vmem:[%s0 + $0x74] sm:$0xf]
  %v54 = vld [vmem:[%s0 + $0x78] sm:$0xff]
  %v55 = vld [vmem:[%s0 + $0x80] sm:$0xff]
  %v56 = vld [vmem:[%s0 + $0x88] sm:$0xf]
  %v57 = vld [vmem:[%s0 + $0x8c] sm:$0xff]
  %v58 = vld [vmem:[%s0 + $0x94] sm:$0xff]
  %v59 = vld [vmem:[%s0 + $0x9c] sm:$0xf]
  %v60 = vld [vmem:[%s1] sm:$0xf]
  %v61 = vld [vmem:[%s1 + $0x4] sm:$0xf]
  %v62 = vld [vmem:[%s1 + $0x8] sm:$0xf]
  %v63 = vld [vmem:[%s1 + $0xc] sm:$0xf]
  %v64 = vld [vmem:[%s1 + $0x10] sm:$0xf]
  %v65 = vld [vmem:[%s1 + $0x14] sm:$0xf]
  %v66 = vld [vmem:[%s1 + $0x18] sm:$0xf]
  %v67 = vld [vmem:[%s1 + $0x1c] sm:$0xf]
  %v68 = vld [vmem:[%s1 + $0x20] sm:$0xf]
  %v69 = vld [vmem:[%s1 + $0x24] sm:$0xf]
  %v70 = vld [vmem:[%s1 + $0x28] sm:$0xf]
  %v71 = vld [vmem:[%s1 + $0x2c] sm:$0xf]
  %v72 = vld [vmem:[%s1 + $0x30] sm:$0xf]
  %v73 = vld [vmem:[%s1 + $0x34] sm:$0xf]
  %v74 = vld [vmem:[%s1 + $0x38] sm:$0xf]
  %v75 = vld [vmem:[%s1 + $0x3c] sm:$0xf]
  %v76 = vld [vmem:[%s1 + $0x40] sm:$0xf]
  %v77 = vld [vmem:[%s1 + $0x44] sm:$0xf]
  %v78 = vld [vmem:[%s1 + $0x48] sm:$0xf]
  %v79 = vld [vmem:[%s1 + $0x4c] sm:$0xf]
  %v80 = vld [vmem:[%s1 + $0x50] sm:$0xf]
  %v81 = vld [vmem:[%s1 + $0x54] sm:$0xf]
  %v82 = vld [vmem:[%s1 + $0x58] sm:$0xf]
  %v83 = vld [vmem:[%s1 + $0x5c] sm:$0xf]
  %v84 = vld [vmem:[%s1 + $0x60] sm:$0xf]
  %v85 = vld [vmem:[%s1 + $0x64] sm:$0xf]
  %v86 = vld [vmem:[%s1 + $0x68] sm:$0xf]
  %v87 = vld [vmem:[%s1 + $0x6c] sm:$0xf]
  %v88 = vld [vmem:[%s1 + $0x70] sm:$0xf]
  %v89 = vld [vmem:[%s1 + $0x74] sm:$0xf]
  %v90 = vld [vmem:[%s1 + $0x78] sm:$0xf]
  %v91 = vld [vmem:[%s1 + $0x7c] sm:$0xf]
  %v92 = vld [vmem:[%s1 + $0x80] sm:$0xf]
  %v93 = vld [vmem:[%s1 + $0x84] sm:$0xf]
  %v94 = vld [vmem:[%s1 + $0x88] sm:$0xf]
  %v95 = vld [vmem:[%s1 + $0x8c] sm:$0xf]
  %v96 = vld [vmem:[%s1 + $0x90] sm:$0xf]
  %v97 = vld [vmem:[%s1 + $0x94] sm:$0xf]
  %v98 = vld [vmem:[%s1 + $0x98] sm:$0xf]
  %v99 = vld [vmem:[%s1 + $0x9c] sm:$0xf]
  %v100 = vld [vmem:[%s1 + $0xa0] sm:$0xf]
  %v101 = vld [vmem:[%s1 + $0xa4] sm:$0xf]
  %v102 = vld [vmem:[%s1 + $0xa8] sm:$0xf]
  %v103 = vld [vmem:[%s1 + $0xac] sm:$0xf]
  %v104 = vld [vmem:[%s1 + $0xb0] sm:$0xf]
  %v105 = vld [vmem:[%s1 + $0xb4] sm:$0xf]
  %v106 = vld [vmem:[%s1 + $0xb8] sm:$0xf]
  %v107 = vld [vmem:[%s1 + $0xbc] sm:$0xf]
  %v108 = vld [vmem:[%s1 + $0xc0] sm:$0xf]
  %v109 = vld [vmem:[%s1 + $0xc4] sm:$0xf]
  %v110 = vld [vmem:[%s1 + $0xc8] sm:$0xf]
  %v111 = vld [vmem:[%s1 + $0xcc] sm:$0xf]
  %v112 = vld [vmem:[%s1 + $0xd0] sm:$0xf]
  %v113 = vld [vmem:[%s1 + $0xd4] sm:$0xf]
  %v114 = vld [vmem:[%s1 + $0xd8] sm:$0xf]
  %v115 = vld [vmem:[%s1 + $0xdc] sm:$0xf]
  %v116 = vld [vmem:[%s1 + $0xe0] sm:$0xf]
  %v117 = vld [vmem:[%s1 + $0xe4] sm:$0xf]
  %v118 = vld [vmem:[%s1 + $0xe8] sm:$0xf]
  %v119 = vld [vmem:[%s1 + $0xec] sm:$0xf]
  %v120 = vld [vmem:[%s1 + $0xf0] sm:$0xf]
  %v121 = vld [vmem:[%s1 + $0xf4] sm:$0xf]
  %v122 = vld [vmem:[%s1 + $0xf8] sm:$0xf]
  %v123 = vld [vmem:[%s1 + $0xfc] sm:$0xf]
  %v124 = vld [vmem:[%s1 + $0x100] sm:$0xf]
  %v125 = vld [vmem:[%s1 + $0x104] sm:$0xf]
  %v126 = vld [vmem:[%s1 + $0x108] sm:$0xf]
  %v127 = vld [vmem:[%s1 + $0x10c] sm:$0xf]
  %v128 = vld [vmem:[%s1 + $0x110] sm:$0xf]
  %v129 = vld [vmem:[%s1 + $0x114] sm:$0xf]
  %v130 = vld [vmem:[%s1 + $0x118] sm:$0xf]
  %v131 = vld [vmem:[%s1 + $0x11c] sm:$0xf]
  %v156 = vunpack.c.l.b16 %v36
  %v157 = vunpack.c.h.b16 %v36
  %v158 = vunpack.c.l.b16 %v37
  %v159 = vunpack.c.h.b16 %v37
  %v160 = vunpack.c.l.b16 %v38
  %v161 = vunpack.c.l.b16 %v39
  %v162 = vunpack.c.h.b16 %v39
  %v163 = vunpack.c.l.b16 %v40
  %v164 = vunpack.c.h.b16 %v40
  %v165 = vunpack.c.l.b16 %v41
  %v166 = vunpack.c.l.b16 %v42
  %v167 = vunpack.c.h.b16 %v42
  %v168 = vunpack.c.l.b16 %v43
  %v169 = vunpack.c.h.b16 %v43
  %v170 = vunpack.c.l.b16 %v44
  %v171 = vunpack.c.l.b16 %v45
  %v172 = vunpack.c.h.b16 %v45
  %v173 = vunpack.c.l.b16 %v46
  %v174 = vunpack.c.h.b16 %v46
  %v175 = vunpack.c.l.b16 %v47
  %v176 = vunpack.c.l.b16 %v48
  %v177 = vunpack.c.h.b16 %v48
  %v178 = vunpack.c.l.b16 %v49
  %v179 = vunpack.c.h.b16 %v49
  %v180 = vunpack.c.l.b16 %v50
  %v181 = vunpack.c.l.b16 %v51
  %v182 = vunpack.c.h.b16 %v51
  %v183 = vunpack.c.l.b16 %v52
  %v184 = vunpack.c.h.b16 %v52
  %v185 = vunpack.c.l.b16 %v53
  %v186 = vunpack.c.l.b16 %v54
  %v187 = vunpack.c.h.b16 %v54
  %v188 = vunpack.c.l.b16 %v55
  %v189 = vunpack.c.h.b16 %v55
  %v190 = vunpack.c.l.b16 %v56
  %v191 = vunpack.c.l.b16 %v57
  %v192 = vunpack.c.h.b16 %v57
  %v193 = vunpack.c.l.b16 %v58
  %v194 = vunpack.c.h.b16 %v58
  %v195 = vunpack.c.l.b16 %v59
  %v196 = vpack.c.b16 %v161, %v156
  %v197 = vpack.c.b16 %v162, %v157
  %v198 = vpack.c.b16 %v163, %v158
  %v199 = vpack.c.b16 %v164, %v159
  %v200 = vpack.c.b16 %v165, %v160
  %v201 = vpack.c.b16 %v171, %v166
  %v202 = vpack.c.b16 %v172, %v167
  %v203 = vpack.c.b16 %v173, %v168
  %v204 = vpack.c.b16 %v174, %v169
  %v205 = vpack.c.b16 %v175, %v170
  %v206 = vpack.c.b16 %v181, %v176
  %v207 = vpack.c.b16 %v182, %v177
  %v208 = vpack.c.b16 %v183, %v178
  %v209 = vpack.c.b16 %v184, %v179
  %v210 = vpack.c.b16 %v185, %v180
  %v211 = vpack.c.b16 %v191, %v186
  %v212 = vpack.c.b16 %v192, %v187
  %v213 = vpack.c.b16 %v193, %v188
  %v214 = vpack.c.b16 %v194, %v189
  %v215 = vpack.c.b16 %v195, %v190
  %v304 = vunpack.c.l.b16 %v60
  %v305 = vunpack.c.l.b16 %v61
  %v306 = vunpack.c.l.b16 %v62
  %v307 = vunpack.c.l.b16 %v63
  %v308 = vunpack.c.l.b16 %v64
  %v309 = vunpack.c.l.b16 %v65
  %v310 = vunpack.c.l.b16 %v66
  %v311 = vunpack.c.l.b16 %v67
  %v312 = vunpack.c.l.b16 %v68
  %v313 = vunpack.c.l.b16 %v69
  %v314 = vunpack.c.l.b16 %v70
  %v315 = vunpack.c.l.b16 %v71
  %v316 = vunpack.c.l.b16 %v72
  %v317 = vunpack.c.l.b16 %v73
  %v318 = vunpack.c.l.b16 %v74
  %v319 = vunpack.c.l.b16 %v75
  %v320 = vunpack.c.l.b16 %v76
  %v321 = vunpack.c.l.b16 %v77
  %v322 = vunpack.c.l.b16 %v78
  %v323 = vunpack.c.l.b16 %v79
  %v324 = vunpack.c.l.b16 %v80
  %v325 = vunpack.c.l.b16 %v81
  %v326 = vunpack.c.l.b16 %v82
  %v327 = vunpack.c.l.b16 %v83
  %v328 = vunpack.c.l.b16 %v84
  %v329 = vunpack.c.l.b16 %v85
  %v330 = vunpack.c.l.b16 %v86
  %v331 = vunpack.c.l.b16 %v87
  %v332 = vunpack.c.l.b16 %v88
  %v333 = vunpack.c.l.b16 %v89
  %v334 = vunpack.c.l.b16 %v90
  %v335 = vunpack.c.l.b16 %v91
  %v336 = vunpack.c.l.b16 %v92
  %v337 = vunpack.c.l.b16 %v93
  %v338 = vunpack.c.l.b16 %v94
  %v339 = vunpack.c.l.b16 %v95
  %v340 = vunpack.c.l.b16 %v96
  %v341 = vunpack.c.l.b16 %v97
  %v342 = vunpack.c.l.b16 %v98
  %v343 = vunpack.c.l.b16 %v99
  %v344 = vunpack.c.l.b16 %v100
  %v345 = vunpack.c.l.b16 %v101
  %v346 = vunpack.c.l.b16 %v102
  %v347 = vunpack.c.l.b16 %v103
  %v348 = vunpack.c.l.b16 %v104
  %v349 = vunpack.c.l.b16 %v105
  %v350 = vunpack.c.l.b16 %v106
  %v351 = vunpack.c.l.b16 %v107
  %v352 = vunpack.c.l.b16 %v108
  %v353 = vunpack.c.l.b16 %v109
  %v354 = vunpack.c.l.b16 %v110
  %v355 = vunpack.c.l.b16 %v111
  %v356 = vunpack.c.l.b16 %v112
  %v357 = vunpack.c.l.b16 %v113
  %v358 = vunpack.c.l.b16 %v114
  %v359 = vunpack.c.l.b16 %v115
  %v360 = vunpack.c.l.b16 %v116
  %v361 = vunpack.c.l.b16 %v117
  %v362 = vunpack.c.l.b16 %v118
  %v363 = vunpack.c.l.b16 %v119
  %v364 = vunpack.c.l.b16 %v120
  %v365 = vunpack.c.l.b16 %v121
  %v366 = vunpack.c.l.b16 %v122
  %v367 = vunpack.c.l.b16 %v123
  %v368 = vunpack.c.l.b16 %v124
  %v369 = vunpack.c.l.b16 %v125
  %v370 = vunpack.c.l.b16 %v126
  %v371 = vunpack.c.l.b16 %v127
  %v372 = vunpack.c.l.b16 %v128
  %v373 = vunpack.c.l.b16 %v129
  %v374 = vunpack.c.l.b16 %v130
  %v375 = vunpack.c.l.b16 %v131
  %v376 = vpack.c.b16 %v305, %v304
  %v377 = vpack.c.b16 %v307, %v306
  %v378 = vpack.c.b16 %v309, %v308
  %v379 = vpack.c.b16 %v311, %v310
  %v380 = vpack.c.b16 %v313, %v312
  %v381 = vpack.c.b16 %v315, %v314
  %v382 = vpack.c.b16 %v317, %v316
  %v383 = vpack.c.b16 %v319, %v318
  %v384 = vpack.c.b16 %v321, %v320
  %v385 = vpack.c.b16 %v323, %v322
  %v386 = vpack.c.b16 %v325, %v324
  %v387 = vpack.c.b16 %v327, %v326
  %v388 = vpack.c.b16 %v329, %v328
  %v389 = vpack.c.b16 %v331, %v330
  %v390 = vpack.c.b16 %v333, %v332
  %v391 = vpack.c.b16 %v335, %v334
  %v392 = vpack.c.b16 %v337, %v336
  %v393 = vpack.c.b16 %v339, %v338
  %v394 = vpack.c.b16 %v341, %v340
  %v395 = vpack.c.b16 %v343, %v342
  %v396 = vpack.c.b16 %v345, %v344
  %v397 = vpack.c.b16 %v347, %v346
  %v398 = vpack.c.b16 %v349, %v348
  %v399 = vpack.c.b16 %v351, %v350
  %v400 = vpack.c.b16 %v353, %v352
  %v401 = vpack.c.b16 %v355, %v354
  %v402 = vpack.c.b16 %v357, %v356
  %v403 = vpack.c.b16 %v359, %v358
  %v404 = vpack.c.b16 %v361, %v360
  %v405 = vpack.c.b16 %v363, %v362
  %v406 = vpack.c.b16 %v365, %v364
  %v407 = vpack.c.b16 %v367, %v366
  %v408 = vpack.c.b16 %v369, %v368
  %v409 = vpack.c.b16 %v371, %v370
  %v410 = vpack.c.b16 %v373, %v372
  %v411 = vpack.c.b16 %v375, %v374
  %vm448 = vcmask 523264
  %v450 = vsel %vm448, %v200, 0
  %v453 = vsel %vm448, %v205, 0
  %v456 = vsel %vm448, %v210, 0
  %v459 = vsel %vm448, %v215, 0
  %461 = vmatpush.bf16.msra.mxu0 %v383
  %462 = vmatpush.bf16.msra.mxu0 %v382
  %463 = vmatpush.bf16.msra.mxu0 %v381
  %464 = vmatpush.bf16.msra.mxu0 %v380
  %465 = vmatpush.bf16.msra.mxu0 %v379
  %466 = vmatpush.bf16.msra.mxu0 %v378
  %467 = vmatpush.bf16.msra.mxu0 %v377
  %468 = vmatpush.bf16.msra.mxu0 %v376
  %469 = vmatmul.bf16.gmra.mxu0 %v196
  %v470 = vpop.f32.mrf.mxu0
  %v471 = vadd.f32 0.0, %v470
  %v472 = vpop.f32.mrf.mxu0
  %v473 = vadd.f32 0.0, %v472
  %474 = vmatmul.bf16.gmra.mxu0 %v201
  %v475 = vpop.f32.mrf.mxu0
  %v476 = vadd.f32 0.0, %v475
  %v477 = vpop.f32.mrf.mxu0
  %v478 = vadd.f32 0.0, %v477
  %479 = vmatmul.bf16.gmra.mxu0 %v206
  %v480 = vpop.f32.mrf.mxu0
  %v481 = vadd.f32 0.0, %v480
  %v482 = vpop.f32.mrf.mxu0
  %v483 = vadd.f32 0.0, %v482
  %484 = vmatmul.bf16.gmra.mxu0 %v211
  %v485 = vpop.f32.mrf.mxu0
  %v486 = vadd.f32 0.0, %v485
  %v487 = vpop.f32.mrf.mxu0
  %v488 = vadd.f32 0.0, %v487
  %489 = vdwg.mxu0
  %490 = vmatpush.bf16.msra.mxu0 %v391
  %491 = vmatpush.bf16.msra.mxu0 %v390
  %492 = vmatpush.bf16.msra.mxu0 %v389
  %493 = vmatpush.bf16.msra.mxu0 %v388
  %494 = vmatpush.bf16.msra.mxu0 %v387
  %495 = vmatpush.bf16.msra.mxu0 %v386
  %496 = vmatpush.bf16.msra.mxu0 %v385
  %497 = vmatpush.bf16.msra.mxu0 %v384
  %498 = vmatmul.bf16.gmra.mxu0 %v197
  %v499 = vpop.f32.mrf.mxu0
  %v500 = vadd.f32 %v471, %v499
  %v501 = vpop.f32.mrf.mxu0
  %v502 = vadd.f32 %v473, %v501
  %503 = vmatmul.bf16.gmra.mxu0 %v202
  %v504 = vpop.f32.mrf.mxu0
  %v505 = vadd.f32 %v476, %v504
  %v506 = vpop.f32.mrf.mxu0
  %v507 = vadd.f32 %v478, %v506
  %508 = vmatmul.bf16.gmra.mxu0 %v207
  %v509 = vpop.f32.mrf.mxu0
  %v510 = vadd.f32 %v481, %v509
  %v511 = vpop.f32.mrf.mxu0
  %v512 = vadd.f32 %v483, %v511
  %513 = vmatmul.bf16.gmra.mxu0 %v212
  %v514 = vpop.f32.mrf.mxu0
  %v515 = vadd.f32 %v486, %v514
  %v516 = vpop.f32.mrf.mxu0
  %v517 = vadd.f32 %v488, %v516
  %518 = vdwg.mxu0
  %519 = vmatpush.bf16.msra.mxu0 %v399
  %520 = vmatpush.bf16.msra.mxu0 %v398
  %521 = vmatpush.bf16.msra.mxu0 %v397
  %522 = vmatpush.bf16.msra.mxu0 %v396
  %523 = vmatpush.bf16.msra.mxu0 %v395
  %524 = vmatpush.bf16.msra.mxu0 %v394
  %525 = vmatpush.bf16.msra.mxu0 %v393
  %526 = vmatpush.bf16.msra.mxu0 %v392
  %527 = vmatmul.bf16.gmra.mxu0 %v198
  %v528 = vpop.f32.mrf.mxu0
  %v529 = vadd.f32 %v500, %v528
  %v530 = vpop.f32.mrf.mxu0
  %v531 = vadd.f32 %v502, %v530
  %532 = vmatmul.bf16.gmra.mxu0 %v203
  %v533 = vpop.f32.mrf.mxu0
  %v534 = vadd.f32 %v505, %v533
  %v535 = vpop.f32.mrf.mxu0
  %v536 = vadd.f32 %v507, %v535
  %537 = vmatmul.bf16.gmra.mxu0 %v208
  %v538 = vpop.f32.mrf.mxu0
  %v539 = vadd.f32 %v510, %v538
  %v540 = vpop.f32.mrf.mxu0
  %v541 = vadd.f32 %v512, %v540
  %542 = vmatmul.bf16.gmra.mxu0 %v213
  %v543 = vpop.f32.mrf.mxu0
  %v544 = vadd.f32 %v515, %v543
  %v545 = vpop.f32.mrf.mxu0
  %v546 = vadd.f32 %v517, %v545
  %547 = vdwg.mxu0
  %548 = vmatpush.bf16.msra.mxu0 %v407
  %549 = vmatpush.bf16.msra.mxu0 %v406
  %550 = vmatpush.bf16.msra.mxu0 %v405
  %551 = vmatpush.bf16.msra.mxu0 %v404
  %552 = vmatpush.bf16.msra.mxu0 %v403
  %553 = vmatpush.bf16.msra.mxu0 %v402
  %554 = vmatpush.bf16.msra.mxu0 %v401
  %555 = vmatpush.bf16.msra.mxu0 %v400
  %556 = vmatmul.bf16.gmra.mxu0 %v199
  %v557 = vpop.f32.mrf.mxu0
  %v558 = vadd.f32 %v529, %v557
  %v559 = vpop.f32.mrf.mxu0
  %v560 = vadd.f32 %v531, %v559
  %561 = vmatmul.bf16.gmra.mxu0 %v204
  %v562 = vpop.f32.mrf.mxu0
  %v563 = vadd.f32 %v534, %v562
  %v564 = vpop.f32.mrf.mxu0
  %v565 = vadd.f32 %v536, %v564
  %566 = vmatmul.bf16.gmra.mxu0 %v209
  %v567 = vpop.f32.mrf.mxu0
  %v568 = vadd.f32 %v539, %v567
  %v569 = vpop.f32.mrf.mxu0
  %v570 = vadd.f32 %v541, %v569
  %571 = vmatmul.bf16.gmra.mxu0 %v214
  %v572 = vpop.f32.mrf.mxu0
  %v573 = vadd.f32 %v544, %v572
  %v574 = vpop.f32.mrf.mxu0
  %v575 = vadd.f32 %v546, %v574
  %576 = vdwg.mxu0
  %577 = vmatpush.bf16.msra.mxu0 0
  %578 = vmatpush.bf16.msra.mxu0 0
  %579 = vmatpush.bf16.msra.mxu0 0
  %580 = vmatpush.bf16.msra.mxu0 0
  %581 = vmatpush.bf16.msra.mxu0 %v411
  %582 = vmatpush.bf16.msra.mxu0 %v410
  %583 = vmatpush.bf16.msra.mxu0 %v409
  %584 = vmatpush.bf16.msra.mxu0 %v408
  %585 = vmatmul.bf16.gmra.mxu0 %v450
  %v586 = vpop.f32.mrf.mxu0
  %v587 = vadd.f32 %v558, %v586
  %v588 = vpop.f32.mrf.mxu0
  %v589 = vadd.f32 %v560, %v588
  %590 = vmatmul.bf16.gmra.mxu0 %v453
  %v591 = vpop.f32.mrf.mxu0
  %v592 = vadd.f32 %v563, %v591
  %v593 = vpop.f32.mrf.mxu0
  %v594 = vadd.f32 %v565, %v593
  %595 = vmatmul.bf16.gmra.mxu0 %v456
  %v596 = vpop.f32.mrf.mxu0
  %v597 = vadd.f32 %v568, %v596
  %v598 = vpop.f32.mrf.mxu0
  %v599 = vadd.f32 %v570, %v598
  %600 = vmatmul.bf16.gmra.mxu0 %v459
  %v601 = vpop.f32.mrf.mxu0
  %v602 = vadd.f32 %v573, %v601
  %v603 = vpop.f32.mrf.mxu0
  %v604 = vadd.f32 %v575, %v603
  %605 = vdwg.mxu0
  %v606 = vadd.f32 %v28, %v587
  %v607 = vadd.f32 %v29, %v589
  %v608 = vadd.f32 %v30, %v592
  %v609 = vadd.f32 %v31, %v594
  %v610 = vadd.f32 %v32, %v597
  %v611 = vadd.f32 %v33, %v599
  %v612 = vadd.f32 %v34, %v602
  %v613 = vadd.f32 %v35, %v604
  %vm614 = vcmask 15360
  %615 = vst.msk [vmem:[#allocation2] sm:$0xff] %vm614, %v606
  %616 = vst.msk [vmem:[#allocation2 + $0x8] sm:$0xff] %vm614, %v607
  %617 = vst.msk [vmem:[#allocation2 + $0x10] sm:$0xff] %vm614, %v608
  %618 = vst.msk [vmem:[#allocation2 + $0x18] sm:$0xff] %vm614, %v609
  %619 = vst.msk [vmem:[#allocation2 + $0x20] sm:$0xff] %vm614, %v610
  %620 = vst.msk [vmem:[#allocation2 + $0x28] sm:$0xff] %vm614, %v611
  %621 = vst.msk [vmem:[#allocation2 + $0x30] sm:$0xff] %vm614, %v612
  %622 = vst.msk [vmem:[#allocation2 + $0x38] sm:$0xff] %vm614, %v613
  // Predicated region
  $region18: #{wnet_forward.55} parent=0 // pred_check
    %p623 = pneg %p15
  $region19: #{wnet_forward.55} parent=0 // pred_check_branch
    %625 = sbr.rel (%p623) target = $region21
  $region20: #{wnet_forward.55} parent=0 // pred_region
    %v626 = vld [vmem:[#allocation2] sm:$0xff]
    %v627 = vld [vmem:[#allocation2 + $0x8] sm:$0xff]
    %v628 = vld [vmem:[#allocation2 + $0x10] sm:$0xff]
    %v629 = vld [vmem:[#allocation2 + $0x18] sm:$0xff]
    %v630 = vld [vmem:[#allocation2 + $0x20] sm:$0xff]
    %v631 = vld [vmem:[#allocation2 + $0x28] sm:$0xff]
    %v632 = vld [vmem:[#allocation2 + $0x30] sm:$0xff]
    %v633 = vld [vmem:[#allocation2 + $0x38] sm:$0xff]
    %v634 = vld [vmem:[%s2] sm:$0xff]
    %v635 = vld [vmem:[%s2 + $0x8] sm:$0xff]
    %v636 = vld [vmem:[%s2 + $0x10] sm:$0xff]
    %v637 = vld [vmem:[%s2 + $0x18] sm:$0xff]
    %v638 = vld [vmem:[%s2 + $0x20] sm:$0xff]
    %v639 = vld [vmem:[%s2 + $0x28] sm:$0xff]
    %v640 = vld [vmem:[%s2 + $0x30] sm:$0xff]
    %v641 = vld [vmem:[%s2 + $0x38] sm:$0xff]
    %643 = vset.pattern.permute.xlu0 0
    %644 = vperm.xlu0 %643, %v634
    %v645 = vpop.permute.xlu0 %644
    %648 = vset.pattern.permute.xlu0 0
    %649 = vperm.xlu0 %648, %v635
    %v650 = vpop.permute.xlu0 %649
    %653 = vset.pattern.permute.xlu0 0
    %654 = vperm.xlu0 %653, %v636
    %v655 = vpop.permute.xlu0 %654
    %658 = vset.pattern.permute.xlu0 0
    %659 = vperm.xlu0 %658, %v637
    %v660 = vpop.permute.xlu0 %659
    %663 = vset.pattern.permute.xlu0 0
    %664 = vperm.xlu0 %663, %v638
    %v665 = vpop.permute.xlu0 %664
    %668 = vset.pattern.permute.xlu0 0
    %669 = vperm.xlu0 %668, %v639
    %v670 = vpop.permute.xlu0 %669
    %673 = vset.pattern.permute.xlu0 0
    %674 = vperm.xlu0 %673, %v640
    %v675 = vpop.permute.xlu0 %674
    %678 = vset.pattern.permute.xlu0 0
    %679 = vperm.xlu0 %678, %v641
    %v680 = vpop.permute.xlu0 %679
    %v682 = vadd.f32 %v626, %v645
    %v683 = vadd.f32 %v627, %v650
    %v684 = vadd.f32 %v628, %v655
    %v685 = vadd.f32 %v629, %v660
    %v686 = vadd.f32 %v630, %v665
    %v687 = vadd.f32 %v631, %v670
    %v688 = vadd.f32 %v632, %v675
    %v689 = vadd.f32 %v633, %v680
    %v690 = vmax.f32 %v682, 0.0
    %v691 = vmax.f32 %v683, 0.0
    %v692 = vmax.f32 %v684, 0.0
    %v693 = vmax.f32 %v685, 0.0
    %v694 = vmax.f32 %v686, 0.0
    %v695 = vmax.f32 %v687, 0.0
    %v696 = vmax.f32 %v688, 0.0
    %v697 = vmax.f32 %v689, 0.0
    %v698 = vpack.c.bf16 %v690, %v690
    %v699 = vpack.c.bf16 %v691, %v691
    %v700 = vpack.c.bf16 %v692, %v692
    %v701 = vpack.c.bf16 %v693, %v693
    %v702 = vpack.c.bf16 %v694, %v694
    %v703 = vpack.c.bf16 %v695, %v695
    %v704 = vpack.c.bf16 %v696, %v696
    %v705 = vpack.c.bf16 %v697, %v697
    %vm706 = vcmask 11264
    %707 = vst.msk [vmem:[%s3] sm:$0xf] %vm706, %v698
    %708 = vst.msk [vmem:[%s3 + $0x4] sm:$0xf] %vm706, %v699
    %709 = vst.msk [vmem:[%s3 + $0x8] sm:$0xf] %vm706, %v700
    %710 = vst.msk [vmem:[%s3 + $0xc] sm:$0xf] %vm706, %v701
    %711 = vst.msk [vmem:[%s3 + $0x10] sm:$0xf] %vm706, %v702
    %712 = vst.msk [vmem:[%s3 + $0x14] sm:$0xf] %vm706, %v703
    %713 = vst.msk [vmem:[%s3 + $0x18] sm:$0xf] %vm706, %v704
    %714 = vst.msk [vmem:[%s3 + $0x1c] sm:$0xf] %vm706, %v705
  $region21: #{wnet_forward.55} parent=0 // pred_fallthru
    _
  // Predicated region
  $region22: #{wnet_forward.55} parent=0 // pred_check
    _
  $region23: #{wnet_forward.55} parent=0 // pred_check_branch
    %716 = sbr.rel (0) target = $region25
  $region24: #{wnet_forward.55} parent=0 // pred_region
    _
  $region25: #{wnet_forward.55} parent=0 // pred_fallthru
    _
  // Predicated region
  $region26: #{wnet_forward.55} parent=0 // pred_check
    _
  $region27: #{wnet_forward.55} parent=0 // pred_check_branch
    %718 = sbr.rel (0) target = $region29
  $region28: #{wnet_forward.55} parent=0 // pred_region
    _
  $region29: #{wnet_forward.55} parent=0 // pred_fallthru
    _

// kernel: wnet_forward.56
$region0: #{wnet_forward.56}
  #allocation0 [shape = 'u32[]', space=smem, size = 0x4, offset = 0x4, fixed_abs, tag = 'smem constant byte address 0x4 - core index']
  #allocation1 [shape = 'u32[72,128]{1,0:T(1,128)}', space=vmem, size = 0x9000, scoped, tag = 'internal scratch']
  #allocation2 [shape = 'f32[128,2]{1,0:T(8,128)}', space=vmem, size = 0x10000, scoped, tag = 'scratch operand']
  %s0 = inlined_call_operand.vmem [shape: bf16[128,64], index: 0, kind: input, shape index: {}]
  %s1 = inlined_call_operand.vmem [shape: bf16[64,2], index: 1, kind: input, shape index: {}]
  %s2 = inlined_call_operand.vmem [shape: f32[128,1], index: 2, kind: input, shape index: {}]
  %s3 = inlined_call_operand.vmem [shape: bf16[128,2], index: 3, kind: output, shape index: {}]
  %s4 = sld [smem:[#allocation0]]
  $region30: #{wnet_forward.56} parent=0
    _
  %s6 = ssub.s32 1, %s4
  %s7 = scalar_select 0, %s6, %s4
  // Predicated region
  $region2: #{wnet_forward.56} parent=0 // pred_check
    _
  $region3: #{wnet_forward.56} parent=0 // pred_check_branch
    %9 = sbr.rel (0) target = $region5
  $region4: #{wnet_forward.56} parent=0 // pred_region
    _
  $region5: #{wnet_forward.56} parent=0 // pred_fallthru
    _
  // Predicated region
  $region6: #{wnet_forward.56} parent=0 // pred_check
    _
  $region7: #{wnet_forward.56} parent=0 // pred_check_branch
    %11 = sbr.rel (0) target = $region9
  $region8: #{wnet_forward.56} parent=0 // pred_region
    _
  $region9: #{wnet_forward.56} parent=0 // pred_fallthru
    _
  // Predicated region
  $region10: #{wnet_forward.56} parent=0 // pred_check
    _
  $region11: #{wnet_forward.56} parent=0 // pred_check_branch
    %13 = sbr.rel (0) target = $region13
  $region12: #{wnet_forward.56} parent=0 // pred_region
    _
  $region13: #{wnet_forward.56} parent=0 // pred_fallthru
    _
  %p15 = scmp.eq.s32.totalorder 0, 0
  // Predicated region
  $region14: #{wnet_forward.56} parent=0 // pred_check
    %p16 = pneg %p15
  $region15: #{wnet_forward.56} parent=0 // pred_check_branch
    %18 = sbr.rel (%p16) target = $region17
  $region16: #{wnet_forward.56} parent=0 // pred_region
    %vm19 = vcmask 15360
    %20 = vst.msk [vmem:[#allocation2] sm:$0xff] %vm19, 0.0
    %21 = vst.msk [vmem:[#allocation2 + $0x8] sm:$0xff] %vm19, 0.0
    %22 = vst.msk [vmem:[#allocation2 + $0x10] sm:$0xff] %vm19, 0.0
    %23 = vst.msk [vmem:[#allocation2 + $0x18] sm:$0xff] %vm19, 0.0
    %24 = vst.msk [vmem:[#allocation2 + $0x20] sm:$0xff] %vm19, 0.0
    %25 = vst.msk [vmem:[#allocation2 + $0x28] sm:$0xff] %vm19, 0.0
    %26 = vst.msk [vmem:[#allocation2 + $0x30] sm:$0xff] %vm19, 0.0
    %27 = vst.msk [vmem:[#allocation2 + $0x38] sm:$0xff] %vm19, 0.0
    %28 = vst.msk [vmem:[#allocation2 + $0x40] sm:$0xff] %vm19, 0.0
    %29 = vst.msk [vmem:[#allocation2 + $0x48] sm:$0xff] %vm19, 0.0
    %30 = vst.msk [vmem:[#allocation2 + $0x50] sm:$0xff] %vm19, 0.0
    %31 = vst.msk [vmem:[#allocation2 + $0x58] sm:$0xff] %vm19, 0.0
    %32 = vst.msk [vmem:[#allocation2 + $0x60] sm:$0xff] %vm19, 0.0
    %33 = vst.msk [vmem:[#allocation2 + $0x68] sm:$0xff] %vm19, 0.0
    %34 = vst.msk [vmem:[#allocation2 + $0x70] sm:$0xff] %vm19, 0.0
    %35 = vst.msk [vmem:[#allocation2 + $0x78] sm:$0xff] %vm19, 0.0
  $region17: #{wnet_forward.56} parent=0 // pred_fallthru
    _
  %v36 = vld [vmem:[#allocation2] sm:$0xff]
  %v37 = vld [vmem:[#allocation2 + $0x8] sm:$0xff]
  %v38 = vld [vmem:[#allocation2 + $0x10] sm:$0xff]
  %v39 = vld [vmem:[#allocation2 + $0x18] sm:$0xff]
  %v40 = vld [vmem:[#allocation2 + $0x20] sm:$0xff]
  %v41 = vld [vmem:[#allocation2 + $0x28] sm:$0xff]
  %v42 = vld [vmem:[#allocation2 + $0x30] sm:$0xff]
  %v43 = vld [vmem:[#allocation2 + $0x38] sm:$0xff]
  %v44 = vld [vmem:[#allocation2 + $0x40] sm:$0xff]
  %v45 = vld [vmem:[#allocation2 + $0x48] sm:$0xff]
  %v46 = vld [vmem:[#allocation2 + $0x50] sm:$0xff]
  %v47 = vld [vmem:[#allocation2 + $0x58] sm:$0xff]
  %v48 = vld [vmem:[#allocation2 + $0x60] sm:$0xff]
  %v49 = vld [vmem:[#allocation2 + $0x68] sm:$0xff]
  %v50 = vld [vmem:[#allocation2 + $0x70] sm:$0xff]
  %v51 = vld [vmem:[#allocation2 + $0x78] sm:$0xff]
  %v52 = vld [vmem:[%s0] sm:$0xf]
  %v53 = vld [vmem:[%s0 + $0x4] sm:$0xf]
  %v54 = vld [vmem:[%s0 + $0x8] sm:$0xf]
  %v55 = vld [vmem:[%s0 + $0xc] sm:$0xf]
  %v56 = vld [vmem:[%s0 + $0x10] sm:$0xf]
  %v57 = vld [vmem:[%s0 + $0x14] sm:$0xf]
  %v58 = vld [vmem:[%s0 + $0x18] sm:$0xf]
  %v59 = vld [vmem:[%s0 + $0x1c] sm:$0xf]
  %v60 = vld [vmem:[%s0 + $0x20] sm:$0xf]
  %v61 = vld [vmem:[%s0 + $0x24] sm:$0xf]
  %v62 = vld [vmem:[%s0 + $0x28] sm:$0xf]
  %v63 = vld [vmem:[%s0 + $0x2c] sm:$0xf]
  %v64 = vld [vmem:[%s0 + $0x30] sm:$0xf]
  %v65 = vld [vmem:[%s0 + $0x34] sm:$0xf]
  %v66 = vld [vmem:[%s0 + $0x38] sm:$0xf]
  %v67 = vld [vmem:[%s0 + $0x3c] sm:$0xf]
  %v68 = vld [vmem:[%s1] sm:$0xf]
  %v69 = vld [vmem:[%s1 + $0x4] sm:$0xf]
  %v70 = vld [vmem:[%s1 + $0x8] sm:$0xf]
  %v71 = vld [vmem:[%s1 + $0xc] sm:$0xf]
  %v72 = vld [vmem:[%s1 + $0x10] sm:$0xf]
  %v73 = vld [vmem:[%s1 + $0x14] sm:$0xf]
  %v74 = vld [vmem:[%s1 + $0x18] sm:$0xf]
  %v75 = vld [vmem:[%s1 + $0x1c] sm:$0xf]
  %v92 = vunpack.c.l.b16 %v52
  %v93 = vunpack.c.l.b16 %v53
  %v94 = vunpack.c.l.b16 %v54
  %v95 = vunpack.c.l.b16 %v55
  %v96 = vunpack.c.l.b16 %v56
  %v97 = vunpack.c.l.b16 %v57
  %v98 = vunpack.c.l.b16 %v58
  %v99 = vunpack.c.l.b16 %v59
  %v100 = vunpack.c.l.b16 %v60
  %v101 = vunpack.c.l.b16 %v61
  %v102 = vunpack.c.l.b16 %v62
  %v103 = vunpack.c.l.b16 %v63
  %v104 = vunpack.c.l.b16 %v64
  %v105 = vunpack.c.l.b16 %v65
  %v106 = vunpack.c.l.b16 %v66
  %v107 = vunpack.c.l.b16 %v67
  %v108 = vpack.c.b16 %v93, %v92
  %v109 = vpack.c.b16 %v95, %v94
  %v110 = vpack.c.b16 %v97, %v96
  %v111 = vpack.c.b16 %v99, %v98
  %v112 = vpack.c.b16 %v101, %v100
  %v113 = vpack.c.b16 %v103, %v102
  %v114 = vpack.c.b16 %v105, %v104
  %v115 = vpack.c.b16 %v107, %v106
  %v124 = vunpack.c.l.b16 %v68
  %v125 = vunpack.c.l.b16 %v69
  %v126 = vunpack.c.l.b16 %v70
  %v127 = vunpack.c.l.b16 %v71
  %v128 = vunpack.c.l.b16 %v72
  %v129 = vunpack.c.l.b16 %v73
  %v130 = vunpack.c.l.b16 %v74
  %v131 = vunpack.c.l.b16 %v75
  %v132 = vpack.c.b16 %v125, %v124
  %v133 = vpack.c.b16 %v127, %v126
  %v134 = vpack.c.b16 %v129, %v128
  %v135 = vpack.c.b16 %v131, %v130
  %vm140 = vcmask 523264
  %v142 = vsel %vm140, %v108, 0
  %v145 = vsel %vm140, %v109, 0
  %v148 = vsel %vm140, %v110, 0
  %v151 = vsel %vm140, %v111, 0
  %v154 = vsel %vm140, %v112, 0
  %v157 = vsel %vm140, %v113, 0
  %v160 = vsel %vm140, %v114, 0
  %v163 = vsel %vm140, %v115, 0
  %165 = vmatpush.bf16.msra.mxu0 0
  %166 = vmatpush.bf16.msra.mxu0 0
  %167 = vmatpush.bf16.msra.mxu0 0
  %168 = vmatpush.bf16.msra.mxu0 0
  %169 = vmatpush.bf16.msra.mxu0 %v135
  %170 = vmatpush.bf16.msra.mxu0 %v134
  %171 = vmatpush.bf16.msra.mxu0 %v133
  %172 = vmatpush.bf16.msra.mxu0 %v132
  %173 = vmatmul.bf16.gmra.mxu0 %v142
  %v174 = vpop.f32.mrf.mxu0
  %v175 = vadd.f32 0.0, %v174
  %v176 = vpop.f32.mrf.mxu0
  %v177 = vadd.f32 0.0, %v176
  %178 = vmatmul.bf16.gmra.mxu0 %v145
  %v179 = vpop.f32.mrf.mxu0
  %v180 = vadd.f32 0.0, %v179
  %v181 = vpop.f32.mrf.mxu0
  %v182 = vadd.f32 0.0, %v181
  %183 = vmatmul.bf16.gmra.mxu0 %v148
  %v184 = vpop.f32.mrf.mxu0
  %v185 = vadd.f32 0.0, %v184
  %v186 = vpop.f32.mrf.mxu0
  %v187 = vadd.f32 0.0, %v186
  %188 = vmatmul.bf16.gmra.mxu0 %v151
  %v189 = vpop.f32.mrf.mxu0
  %v190 = vadd.f32 0.0, %v189
  %v191 = vpop.f32.mrf.mxu0
  %v192 = vadd.f32 0.0, %v191
  %193 = vmatmul.bf16.gmra.mxu0 %v154
  %v194 = vpop.f32.mrf.mxu0
  %v195 = vadd.f32 0.0, %v194
  %v196 = vpop.f32.mrf.mxu0
  %v197 = vadd.f32 0.0, %v196
  %198 = vmatmul.bf16.gmra.mxu0 %v157
  %v199 = vpop.f32.mrf.mxu0
  %v200 = vadd.f32 0.0, %v199
  %v201 = vpop.f32.mrf.mxu0
  %v202 = vadd.f32 0.0, %v201
  %203 = vmatmul.bf16.gmra.mxu0 %v160
  %v204 = vpop.f32.mrf.mxu0
  %v205 = vadd.f32 0.0, %v204
  %v206 = vpop.f32.mrf.mxu0
  %v207 = vadd.f32 0.0, %v206
  %208 = vmatmul.bf16.gmra.mxu0 %v163
  %v209 = vpop.f32.mrf.mxu0
  %v210 = vadd.f32 0.0, %v209
  %v211 = vpop.f32.mrf.mxu0
  %v212 = vadd.f32 0.0, %v211
  %213 = vdwg.mxu0
  %v214 = vadd.f32 %v36, %v175
  %v215 = vadd.f32 %v37, %v177
  %v216 = vadd.f32 %v38, %v180
  %v217 = vadd.f32 %v39, %v182
  %v218 = vadd.f32 %v40, %v185
  %v219 = vadd.f32 %v41, %v187
  %v220 = vadd.f32 %v42, %v190
  %v221 = vadd.f32 %v43, %v192
  %v222 = vadd.f32 %v44, %v195
  %v223 = vadd.f32 %v45, %v197
  %v224 = vadd.f32 %v46, %v200
  %v225 = vadd.f32 %v47, %v202
  %v226 = vadd.f32 %v48, %v205
  %v227 = vadd.f32 %v49, %v207
  %v228 = vadd.f32 %v50, %v210
  %v229 = vadd.f32 %v51, %v212
  %vm230 = vcmask 15360
  %231 = vst.msk [vmem:[#allocation2] sm:$0xff] %vm230, %v214
  %232 = vst.msk [vmem:[#allocation2 + $0x8] sm:$0xff] %vm230, %v215
  %233 = vst.msk [vmem:[#allocation2 + $0x10] sm:$0xff] %vm230, %v216
  %234 = vst.msk [vmem:[#allocation2 + $0x18] sm:$0xff] %vm230, %v217
  %235 = vst.msk [vmem:[#allocation2 + $0x20] sm:$0xff] %vm230, %v218
  %236 = vst.msk [vmem:[#allocation2 + $0x28] sm:$0xff] %vm230, %v219
  %237 = vst.msk [vmem:[#allocation2 + $0x30] sm:$0xff] %vm230, %v220
  %238 = vst.msk [vmem:[#allocation2 + $0x38] sm:$0xff] %vm230, %v221
  %239 = vst.msk [vmem:[#allocation2 + $0x40] sm:$0xff] %vm230, %v222
  %240 = vst.msk [vmem:[#allocation2 + $0x48] sm:$0xff] %vm230, %v223
  %241 = vst.msk [vmem:[#allocation2 + $0x50] sm:$0xff] %vm230, %v224
  %242 = vst.msk [vmem:[#allocation2 + $0x58] sm:$0xff] %vm230, %v225
  %243 = vst.msk [vmem:[#allocation2 + $0x60] sm:$0xff] %vm230, %v226
  %244 = vst.msk [vmem:[#allocation2 + $0x68] sm:$0xff] %vm230, %v227
  %245 = vst.msk [vmem:[#allocation2 + $0x70] sm:$0xff] %vm230, %v228
  %246 = vst.msk [vmem:[#allocation2 + $0x78] sm:$0xff] %vm230, %v229
  // Predicated region
  $region18: #{wnet_forward.56} parent=0 // pred_check
    %p247 = pneg %p15
  $region19: #{wnet_forward.56} parent=0 // pred_check_branch
    %249 = sbr.rel (%p247) target = $region21
  $region20: #{wnet_forward.56} parent=0 // pred_region
    %v250 = vld [vmem:[#allocation2] sm:$0xff]
    %v251 = vld [vmem:[#allocation2 + $0x8] sm:$0xff]
    %v252 = vld [vmem:[#allocation2 + $0x10] sm:$0xff]
    %v253 = vld [vmem:[#allocation2 + $0x18] sm:$0xff]
    %v254 = vld [vmem:[#allocation2 + $0x20] sm:$0xff]
    %v255 = vld [vmem:[#allocation2 + $0x28] sm:$0xff]
    %v256 = vld [vmem:[#allocation2 + $0x30] sm:$0xff]
    %v257 = vld [vmem:[#allocation2 + $0x38] sm:$0xff]
    %v258 = vld [vmem:[#allocation2 + $0x40] sm:$0xff]
    %v259 = vld [vmem:[#allocation2 + $0x48] sm:$0xff]
    %v260 = vld [vmem:[#allocation2 + $0x50] sm:$0xff]
    %v261 = vld [vmem:[#allocation2 + $0x58] sm:$0xff]
    %v262 = vld [vmem:[#allocation2 + $0x60] sm:$0xff]
    %v263 = vld [vmem:[#allocation2 + $0x68] sm:$0xff]
    %v264 = vld [vmem:[#allocation2 + $0x70] sm:$0xff]
    %v265 = vld [vmem:[#allocation2 + $0x78] sm:$0xff]
    %v266 = vld [vmem:[%s2] sm:$0xff]
    %v267 = vld [vmem:[%s2 + $0x8] sm:$0xff]
    %v268 = vld [vmem:[%s2 + $0x10] sm:$0xff]
    %v269 = vld [vmem:[%s2 + $0x18] sm:$0xff]
    %v270 = vld [vmem:[%s2 + $0x20] sm:$0xff]
    %v271 = vld [vmem:[%s2 + $0x28] sm:$0xff]
    %v272 = vld [vmem:[%s2 + $0x30] sm:$0xff]
    %v273 = vld [vmem:[%s2 + $0x38] sm:$0xff]
    %v274 = vld [vmem:[%s2 + $0x40] sm:$0xff]
    %v275 = vld [vmem:[%s2 + $0x48] sm:$0xff]
    %v276 = vld [vmem:[%s2 + $0x50] sm:$0xff]
    %v277 = vld [vmem:[%s2 + $0x58] sm:$0xff]
    %v278 = vld [vmem:[%s2 + $0x60] sm:$0xff]
    %v279 = vld [vmem:[%s2 + $0x68] sm:$0xff]
    %v280 = vld [vmem:[%s2 + $0x70] sm:$0xff]
    %v281 = vld [vmem:[%s2 + $0x78] sm:$0xff]
    %283 = vset.pattern.permute.xlu0 0
    %284 = vperm.xlu0 %283, %v266
    %v285 = vpop.permute.xlu0 %284
    %288 = vset.pattern.permute.xlu0 0
    %289 = vperm.xlu0 %288, %v267
    %v290 = vpop.permute.xlu0 %289
    %293 = vset.pattern.permute.xlu0 0
    %294 = vperm.xlu0 %293, %v268
    %v295 = vpop.permute.xlu0 %294
    %298 = vset.pattern.permute.xlu0 0
    %299 = vperm.xlu0 %298, %v269
    %v300 = vpop.permute.xlu0 %299
    %303 = vset.pattern.permute.xlu0 0
    %304 = vperm.xlu0 %303, %v270
    %v305 = vpop.permute.xlu0 %304
    %308 = vset.pattern.permute.xlu0 0
    %309 = vperm.xlu0 %308, %v271
    %v310 = vpop.permute.xlu0 %309
    %313 = vset.pattern.permute.xlu0 0
    %314 = vperm.xlu0 %313, %v272
    %v315 = vpop.permute.xlu0 %314
    %318 = vset.pattern.permute.xlu0 0
    %319 = vperm.xlu0 %318, %v273
    %v320 = vpop.permute.xlu0 %319
    %323 = vset.pattern.permute.xlu0 0
    %324 = vperm.xlu0 %323, %v274
    %v325 = vpop.permute.xlu0 %324
    %328 = vset.pattern.permute.xlu0 0
    %329 = vperm.xlu0 %328, %v275
    %v330 = vpop.permute.xlu0 %329
    %333 = vset.pattern.permute.xlu0 0
    %334 = vperm.xlu0 %333, %v276
    %v335 = vpop.permute.xlu0 %334
    %338 = vset.pattern.permute.xlu0 0
    %339 = vperm.xlu0 %338, %v277
    %v340 = vpop.permute.xlu0 %339
    %343 = vset.pattern.permute.xlu0 0
    %344 = vperm.xlu0 %343, %v278
    %v345 = vpop.permute.xlu0 %344
    %348 = vset.pattern.permute.xlu0 0
    %349 = vperm.xlu0 %348, %v279
    %v350 = vpop.permute.xlu0 %349
    %353 = vset.pattern.permute.xlu0 0
    %354 = vperm.xlu0 %353, %v280
    %v355 = vpop.permute.xlu0 %354
    %358 = vset.pattern.permute.xlu0 0
    %359 = vperm.xlu0 %358, %v281
    %v360 = vpop.permute.xlu0 %359
    %v362 = vadd.f32 %v250, %v285
    %v363 = vadd.f32 %v251, %v290
    %v364 = vadd.f32 %v252, %v295
    %v365 = vadd.f32 %v253, %v300
    %v366 = vadd.f32 %v254, %v305
    %v367 = vadd.f32 %v255, %v310
    %v368 = vadd.f32 %v256, %v315
    %v369 = vadd.f32 %v257, %v320
    %v370 = vadd.f32 %v258, %v325
    %v371 = vadd.f32 %v259, %v330
    %v372 = vadd.f32 %v260, %v335
    %v373 = vadd.f32 %v261, %v340
    %v374 = vadd.f32 %v262, %v345
    %v375 = vadd.f32 %v263, %v350
    %v376 = vadd.f32 %v264, %v355
    %v377 = vadd.f32 %v265, %v360
    %v378 = vpack.c.bf16 %v362, %v362
    %v379 = vpack.c.bf16 %v363, %v363
    %v380 = vpack.c.bf16 %v364, %v364
    %v381 = vpack.c.bf16 %v365, %v365
    %v382 = vpack.c.bf16 %v366, %v366
    %v383 = vpack.c.bf16 %v367, %v367
    %v384 = vpack.c.bf16 %v368, %v368
    %v385 = vpack.c.bf16 %v369, %v369
    %v386 = vpack.c.bf16 %v370, %v370
    %v387 = vpack.c.bf16 %v371, %v371
    %v388 = vpack.c.bf16 %v372, %v372
    %v389 = vpack.c.bf16 %v373, %v373
    %v390 = vpack.c.bf16 %v374, %v374
    %v391 = vpack.c.bf16 %v375, %v375
    %v392 = vpack.c.bf16 %v376, %v376
    %v393 = vpack.c.bf16 %v377, %v377
    %vm394 = vcmask 11264
    %395 = vst.msk [vmem:[%s3] sm:$0xf] %vm394, %v378
    %396 = vst.msk [vmem:[%s3 + $0x4] sm:$0xf] %vm394, %v379
    %397 = vst.msk [vmem:[%s3 + $0x8] sm:$0xf] %vm394, %v380
    %398 = vst.msk [vmem:[%s3 + $0xc] sm:$0xf] %vm394, %v381
    %399 = vst.msk [vmem:[%s3 + $0x10] sm:$0xf] %vm394, %v382
    %400 = vst.msk [vmem:[%s3 + $0x14] sm:$0xf] %vm394, %v383
    %401 = vst.msk [vmem:[%s3 + $0x18] sm:$0xf] %vm394, %v384
    %402 = vst.msk [vmem:[%s3 + $0x1c] sm:$0xf] %vm394, %v385
    %403 = vst.msk [vmem:[%s3 + $0x20] sm:$0xf] %vm394, %v386
    %404 = vst.msk [vmem:[%s3 + $0x24] sm:$0xf] %vm394, %v387
    %405 = vst.msk [vmem:[%s3 + $0x28] sm:$0xf] %vm394, %v388
    %406 = vst.msk [vmem:[%s3 + $0x2c] sm:$0xf] %vm394, %v389
    %407 = vst.msk [vmem:[%s3 + $0x30] sm:$0xf] %vm394, %v390
    %408 = vst.msk [vmem:[%s3 + $0x34] sm:$0xf] %vm394, %v391
    %409 = vst.msk [vmem:[%s3 + $0x38] sm:$0xf] %vm394, %v392
    %410 = vst.msk [vmem:[%s3 + $0x3c] sm:$0xf] %vm394, %v393
  $region21: #{wnet_forward.56} parent=0 // pred_fallthru
    _
  // Predicated region
  $region22: #{wnet_forward.56} parent=0 // pred_check
    _
  $region23: #{wnet_forward.56} parent=0 // pred_check_branch
    %412 = sbr.rel (0) target = $region25
  $region24: #{wnet_forward.56} parent=0 // pred_region
    _
  $region25: #{wnet_forward.56} parent=0 // pred_fallthru
    _
  // Predicated region
  $region26: #{wnet_forward.56} parent=0 // pred_check
    _
  $region27: #{wnet_forward.56} parent=0 // pred_check_branch
    %414 = sbr.rel (0) target = $region29
  $region28: #{wnet_forward.56} parent=0 // pred_region
    _
  $region29: #{wnet_forward.56} parent=0 // pred_fallthru
    _

// kernel: wnet_forward.59
$region0: #{wnet_forward.59}
  #allocation0 [shape = 'u32[]', space=smem, size = 0x4, offset = 0x4, fixed_abs, tag = 'smem constant byte address 0x4 - core index']
  #allocation1 [shape = 'u32[72,128]{1,0:T(1,128)}', space=vmem, size = 0x9000, scoped, tag = 'internal scratch']
  #allocation2 [shape = 'f32[64,8]{1,0:T(8,128)}', space=vmem, size = 0x8000, scoped, tag = 'scratch operand']
  %s0 = inlined_call_operand.vmem [shape: bf16[64,32], index: 0, kind: input, shape index: {}]
  %s1 = inlined_call_operand.vmem [shape: bf16[32,8], index: 1, kind: input, shape index: {}]
  %s2 = inlined_call_operand.vmem [shape: f32[64,1], index: 2, kind: input, shape index: {}]
  %s3 = inlined_call_operand.vmem [shape: bf16[64,8], index: 3, kind: output, shape index: {}]
  %s4 = sld [smem:[#allocation0]]
  $region30: #{wnet_forward.59} parent=0
    _
  %s6 = ssub.s32 1, %s4
  %s7 = scalar_select 0, %s6, %s4
  // Predicated region
  $region2: #{wnet_forward.59} parent=0 // pred_check
    _
  $region3: #{wnet_forward.59} parent=0 // pred_check_branch
    %9 = sbr.rel (0) target = $region5
  $region4: #{wnet_forward.59} parent=0 // pred_region
    _
  $region5: #{wnet_forward.59} parent=0 // pred_fallthru
    _
  // Predicated region
  $region6: #{wnet_forward.59} parent=0 // pred_check
    _
  $region7: #{wnet_forward.59} parent=0 // pred_check_branch
    %11 = sbr.rel (0) target = $region9
  $region8: #{wnet_forward.59} parent=0 // pred_region
    _
  $region9: #{wnet_forward.59} parent=0 // pred_fallthru
    _
  // Predicated region
  $region10: #{wnet_forward.59} parent=0 // pred_check
    _
  $region11: #{wnet_forward.59} parent=0 // pred_check_branch
    %13 = sbr.rel (0) target = $region13
  $region12: #{wnet_forward.59} parent=0 // pred_region
    _
  $region13: #{wnet_forward.59} parent=0 // pred_fallthru
    _
  %p15 = scmp.eq.s32.totalorder 0, 0
  // Predicated region
  $region14: #{wnet_forward.59} parent=0 // pred_check
    %p16 = pneg %p15
  $region15: #{wnet_forward.59} parent=0 // pred_check_branch
    %18 = sbr.rel (%p16) target = $region17
  $region16: #{wnet_forward.59} parent=0 // pred_region
    %vm19 = vcmask 64512
    %20 = vst.msk [vmem:[#allocation2] sm:$0xff] %vm19, 0.0
    %21 = vst.msk [vmem:[#allocation2 + $0x8] sm:$0xff] %vm19, 0.0
    %22 = vst.msk [vmem:[#allocation2 + $0x10] sm:$0xff] %vm19, 0.0
    %23 = vst.msk [vmem:[#allocation2 + $0x18] sm:$0xff] %vm19, 0.0
    %24 = vst.msk [vmem:[#allocation2 + $0x20] sm:$0xff] %vm19, 0.0
    %25 = vst.msk [vmem:[#allocation2 + $0x28] sm:$0xff] %vm19, 0.0
    %26 = vst.msk [vmem:[#allocation2 + $0x30] sm:$0xff] %vm19, 0.0
    %27 = vst.msk [vmem:[#allocation2 + $0x38] sm:$0xff] %vm19, 0.0
  $region17: #{wnet_forward.59} parent=0 // pred_fallthru
    _
  %v28 = vld [vmem:[#allocation2] sm:$0xff]
  %v29 = vld [vmem:[#allocation2 + $0x8] sm:$0xff]
  %v30 = vld [vmem:[#allocation2 + $0x10] sm:$0xff]
  %v31 = vld [vmem:[#allocation2 + $0x18] sm:$0xff]
  %v32 = vld [vmem:[#allocation2 + $0x20] sm:$0xff]
  %v33 = vld [vmem:[#allocation2 + $0x28] sm:$0xff]
  %v34 = vld [vmem:[#allocation2 + $0x30] sm:$0xff]
  %v35 = vld [vmem:[#allocation2 + $0x38] sm:$0xff]
  %v36 = vld [vmem:[%s0] sm:$0xf]
  %v37 = vld [vmem:[%s0 + $0x4] sm:$0xf]
  %v38 = vld [vmem:[%s0 + $0x8] sm:$0xf]
  %v39 = vld [vmem:[%s0 + $0xc] sm:$0xf]
  %v40 = vld [vmem:[%s0 + $0x10] sm:$0xf]
  %v41 = vld [vmem:[%s0 + $0x14] sm:$0xf]
  %v42 = vld [vmem:[%s0 + $0x18] sm:$0xf]
  %v43 = vld [vmem:[%s0 + $0x1c] sm:$0xf]
  %v44 = vld [vmem:[%s1] sm:$0xf]
  %v45 = vld [vmem:[%s1 + $0x4] sm:$0xf]
  %v46 = vld [vmem:[%s1 + $0x8] sm:$0xf]
  %v47 = vld [vmem:[%s1 + $0xc] sm:$0xf]
  %v56 = vunpack.c.l.b16 %v36
  %v57 = vunpack.c.l.b16 %v37
  %v58 = vunpack.c.l.b16 %v38
  %v59 = vunpack.c.l.b16 %v39
  %v60 = vunpack.c.l.b16 %v40
  %v61 = vunpack.c.l.b16 %v41
  %v62 = vunpack.c.l.b16 %v42
  %v63 = vunpack.c.l.b16 %v43
  %v64 = vpack.c.b16 %v57, %v56
  %v65 = vpack.c.b16 %v59, %v58
  %v66 = vpack.c.b16 %v61, %v60
  %v67 = vpack.c.b16 %v63, %v62
  %v72 = vunpack.c.l.b16 %v44
  %v73 = vunpack.c.l.b16 %v45
  %v74 = vunpack.c.l.b16 %v46
  %v75 = vunpack.c.l.b16 %v47
  %v76 = vpack.c.b16 %v73, %v72
  %v77 = vpack.c.b16 %v75, %v74
  %vm80 = vcmask 261120
  %v82 = vsel %vm80, %v64, 0
  %v85 = vsel %vm80, %v65, 0
  %v88 = vsel %vm80, %v66, 0
  %v91 = vsel %vm80, %v67, 0
  %93 = vmatpush.bf16.msra.mxu0 0
  %94 = vmatpush.bf16.msra.mxu0 0
  %95 = vmatpush.bf16.msra.mxu0 0
  %96 = vmatpush.bf16.msra.mxu0 0
  %97 = vmatpush.bf16.msra.mxu0 0
  %98 = vmatpush.bf16.msra.mxu0 0
  %99 = vmatpush.bf16.msra.mxu0 %v77
  %100 = vmatpush.bf16.msra.mxu0 %v76
  %101 = vmatmul.bf16.gmra.mxu0 %v82
  %v102 = vpop.f32.mrf.mxu0
  %v103 = vadd.f32 0.0, %v102
  %v104 = vpop.f32.mrf.mxu0
  %v105 = vadd.f32 0.0, %v104
  %106 = vmatmul.bf16.gmra.mxu0 %v85
  %v107 = vpop.f32.mrf.mxu0
  %v108 = vadd.f32 0.0, %v107
  %v109 = vpop.f32.mrf.mxu0
  %v110 = vadd.f32 0.0, %v109
  %111 = vmatmul.bf16.gmra.mxu0 %v88
  %v112 = vpop.f32.mrf.mxu0
  %v113 = vadd.f32 0.0, %v112
  %v114 = vpop.f32.mrf.mxu0
  %v115 = vadd.f32 0.0, %v114
  %116 = vmatmul.bf16.gmra.mxu0 %v91
  %v117 = vpop.f32.mrf.mxu0
  %v118 = vadd.f32 0.0, %v117
  %v119 = vpop.f32.mrf.mxu0
  %v120 = vadd.f32 0.0, %v119
  %121 = vdwg.mxu0
  %v122 = vadd.f32 %v28, %v103
  %v123 = vadd.f32 %v29, %v105
  %v124 = vadd.f32 %v30, %v108
  %v125 = vadd.f32 %v31, %v110
  %v126 = vadd.f32 %v32, %v113
  %v127 = vadd.f32 %v33, %v115
  %v128 = vadd.f32 %v34, %v118
  %v129 = vadd.f32 %v35, %v120
  %vm130 = vcmask 64512
  %131 = vst.msk [vmem:[#allocation2] sm:$0xff] %vm130, %v122
  %132 = vst.msk [vmem:[#allocation2 + $0x8] sm:$0xff] %vm130, %v123
  %133 = vst.msk [vmem:[#allocation2 + $0x10] sm:$0xff] %vm130, %v124
  %134 = vst.msk [vmem:[#allocation2 + $0x18] sm:$0xff] %vm130, %v125
  %135 = vst.msk [vmem:[#allocation2 + $0x20] sm:$0xff] %vm130, %v126
  %136 = vst.msk [vmem:[#allocation2 + $0x28] sm:$0xff] %vm130, %v127
  %137 = vst.msk [vmem:[#allocation2 + $0x30] sm:$0xff] %vm130, %v128
  %138 = vst.msk [vmem:[#allocation2 + $0x38] sm:$0xff] %vm130, %v129
  // Predicated region
  $region18: #{wnet_forward.59} parent=0 // pred_check
    %p139 = pneg %p15
  $region19: #{wnet_forward.59} parent=0 // pred_check_branch
    %141 = sbr.rel (%p139) target = $region21
  $region20: #{wnet_forward.59} parent=0 // pred_region
    %v142 = vld [vmem:[#allocation2] sm:$0xff]
    %v143 = vld [vmem:[#allocation2 + $0x8] sm:$0xff]
    %v144 = vld [vmem:[#allocation2 + $0x10] sm:$0xff]
    %v145 = vld [vmem:[#allocation2 + $0x18] sm:$0xff]
    %v146 = vld [vmem:[#allocation2 + $0x20] sm:$0xff]
    %v147 = vld [vmem:[#allocation2 + $0x28] sm:$0xff]
    %v148 = vld [vmem:[#allocation2 + $0x30] sm:$0xff]
    %v149 = vld [vmem:[#allocation2 + $0x38] sm:$0xff]
    %v150 = vld [vmem:[%s2] sm:$0xff]
    %v151 = vld [vmem:[%s2 + $0x8] sm:$0xff]
    %v152 = vld [vmem:[%s2 + $0x10] sm:$0xff]
    %v153 = vld [vmem:[%s2 + $0x18] sm:$0xff]
    %v154 = vld [vmem:[%s2 + $0x20] sm:$0xff]
    %v155 = vld [vmem:[%s2 + $0x28] sm:$0xff]
    %v156 = vld [vmem:[%s2 + $0x30] sm:$0xff]
    %v157 = vld [vmem:[%s2 + $0x38] sm:$0xff]
    %159 = vset.pattern.permute.xlu0 0
    %160 = vperm.xlu0 %159, %v150
    %v161 = vpop.permute.xlu0 %160
    %164 = vset.pattern.permute.xlu0 0
    %165 = vperm.xlu0 %164, %v151
    %v166 = vpop.permute.xlu0 %165
    %169 = vset.pattern.permute.xlu0 0
    %170 = vperm.xlu0 %169, %v152
    %v171 = vpop.permute.xlu0 %170
    %174 = vset.pattern.permute.xlu0 0
    %175 = vperm.xlu0 %174, %v153
    %v176 = vpop.permute.xlu0 %175
    %179 = vset.pattern.permute.xlu0 0
    %180 = vperm.xlu0 %179, %v154
    %v181 = vpop.permute.xlu0 %180
    %184 = vset.pattern.permute.xlu0 0
    %185 = vperm.xlu0 %184, %v155
    %v186 = vpop.permute.xlu0 %185
    %189 = vset.pattern.permute.xlu0 0
    %190 = vperm.xlu0 %189, %v156
    %v191 = vpop.permute.xlu0 %190
    %194 = vset.pattern.permute.xlu0 0
    %195 = vperm.xlu0 %194, %v157
    %v196 = vpop.permute.xlu0 %195
    %v198 = vadd.f32 %v142, %v161
    %v199 = vadd.f32 %v143, %v166
    %v200 = vadd.f32 %v144, %v171
    %v201 = vadd.f32 %v145, %v176
    %v202 = vadd.f32 %v146, %v181
    %v203 = vadd.f32 %v147, %v186
    %v204 = vadd.f32 %v148, %v191
    %v205 = vadd.f32 %v149, %v196
    %v206 = vpack.c.bf16 %v198, %v198
    %v207 = vpack.c.bf16 %v199, %v199
    %v208 = vpack.c.bf16 %v200, %v200
    %v209 = vpack.c.bf16 %v201, %v201
    %v210 = vpack.c.bf16 %v202, %v202
    %v211 = vpack.c.bf16 %v203, %v203
    %v212 = vpack.c.bf16 %v204, %v204
    %v213 = vpack.c.bf16 %v205, %v205
    %vm214 = vcmask 60416
    %215 = vst.msk [vmem:[%s3] sm:$0xf] %vm214, %v206
    %216 = vst.msk [vmem:[%s3 + $0x4] sm:$0xf] %vm214, %v207
    %217 = vst.msk [vmem:[%s3 + $0x8] sm:$0xf] %vm214, %v208
    %218 = vst.msk [vmem:[%s3 + $0xc] sm:$0xf] %vm214, %v209
    %219 = vst.msk [vmem:[%s3 + $0x10] sm:$0xf] %vm214, %v210
    %220 = vst.msk [vmem:[%s3 + $0x14] sm:$0xf] %vm214, %v211
    %221 = vst.msk [vmem:[%s3 + $0x18] sm:$0xf] %vm214, %v212
    %222 = vst.msk [vmem:[%s3 + $0x1c] sm:$0xf] %vm214, %v213
  $region21: #{wnet_forward.59} parent=0 // pred_fallthru
    _
  // Predicated region
  $region22: #{wnet_forward.59} parent=0 // pred_check
    _
  $region23: #{wnet_forward.59} parent=0 // pred_check_branch
    %224 = sbr.rel (0) target = $region25
  $region24: #{wnet_forward.59} parent=0 // pred_region
    _
  $region25: #{wnet_forward.59} parent=0 // pred_fallthru
    _
  // Predicated region
  $region26: #{wnet_forward.59} parent=0 // pred_check
    _
  $region27: #{wnet_forward.59} parent=0 // pred_check_branch
    %226 = sbr.rel (0) target = $region29
  $region28: #{wnet_forward.59} parent=0 // pred_region
    _
  $region29: #{wnet_forward.59} parent=0 // pred_fallthru
    _

// kernel: wnet_forward.57
$region0: #{wnet_forward.57}
  #allocation0 [shape = 'u32[]', space=smem, size = 0x4, offset = 0x4, fixed_abs, tag = 'smem constant byte address 0x4 - core index']
  #allocation1 [shape = 'u32[72,128]{1,0:T(1,128)}', space=vmem, size = 0x9000, scoped, tag = 'internal scratch']
  #allocation2 [shape = 'f32[32,8]{1,0:T(8,128)}', space=vmem, size = 0x4000, scoped, tag = 'scratch operand']
  %s0 = inlined_call_operand.vmem [shape: bf16[32,576], index: 0, kind: input, shape index: {}]
  %s1 = inlined_call_operand.vmem [shape: bf16[576,8], index: 1, kind: input, shape index: {}]
  %s2 = inlined_call_operand.vmem [shape: f32[32,1], index: 2, kind: input, shape index: {}]
  %s3 = inlined_call_operand.vmem [shape: bf16[32,8], index: 3, kind: output, shape index: {}]
  %s4 = sld [smem:[#allocation0]]
  $region30: #{wnet_forward.57} parent=0
    _
  %s6 = ssub.s32 1, %s4
  %s7 = scalar_select 0, %s6, %s4
  // Predicated region
  $region2: #{wnet_forward.57} parent=0 // pred_check
    _
  $region3: #{wnet_forward.57} parent=0 // pred_check_branch
    %9 = sbr.rel (0) target = $region5
  $region4: #{wnet_forward.57} parent=0 // pred_region
    _
  $region5: #{wnet_forward.57} parent=0 // pred_fallthru
    _
  // Predicated region
  $region6: #{wnet_forward.57} parent=0 // pred_check
    _
  $region7: #{wnet_forward.57} parent=0 // pred_check_branch
    %11 = sbr.rel (0) target = $region9
  $region8: #{wnet_forward.57} parent=0 // pred_region
    _
  $region9: #{wnet_forward.57} parent=0 // pred_fallthru
    _
  // Predicated region
  $region10: #{wnet_forward.57} parent=0 // pred_check
    _
  $region11: #{wnet_forward.57} parent=0 // pred_check_branch
    %13 = sbr.rel (0) target = $region13
  $region12: #{wnet_forward.57} parent=0 // pred_region
    _
  $region13: #{wnet_forward.57} parent=0 // pred_fallthru
    _
  %p15 = scmp.eq.s32.totalorder 0, 0
  // Predicated region
  $region14: #{wnet_forward.57} parent=0 // pred_check
    %p16 = pneg %p15
  $region15: #{wnet_forward.57} parent=0 // pred_check_branch
    %18 = sbr.rel (%p16) target = $region17
  $region16: #{wnet_forward.57} parent=0 // pred_region
    %vm19 = vcmask 64512
    %20 = vst.msk [vmem:[#allocation2] sm:$0xff] %vm19, 0.0
    %21 = vst.msk [vmem:[#allocation2 + $0x8] sm:$0xff] %vm19, 0.0
    %22 = vst.msk [vmem:[#allocation2 + $0x10] sm:$0xff] %vm19, 0.0
    %23 = vst.msk [vmem:[#allocation2 + $0x18] sm:$0xff] %vm19, 0.0
  $region17: #{wnet_forward.57} parent=0 // pred_fallthru
    _
  %v24 = vld [vmem:[#allocation2] sm:$0xff]
  %v25 = vld [vmem:[#allocation2 + $0x8] sm:$0xff]
  %v26 = vld [vmem:[#allocation2 + $0x10] sm:$0xff]
  %v27 = vld [vmem:[#allocation2 + $0x18] sm:$0xff]
  %v28 = vld [vmem:[%s0] sm:$0xff]
  %v29 = vld [vmem:[%s0 + $0x8] sm:$0xff]
  %v30 = vld [vmem:[%s0 + $0x10] sm:$0xf]
  %v31 = vld [vmem:[%s0 + $0x14] sm:$0xff]
  %v32 = vld [vmem:[%s0 + $0x1c] sm:$0xff]
  %v33 = vld [vmem:[%s0 + $0x24] sm:$0xf]
  %v34 = vld [vmem:[%s0 + $0x28] sm:$0xff]
  %v35 = vld [vmem:[%s0 + $0x30] sm:$0xff]
  %v36 = vld [vmem:[%s0 + $0x38] sm:$0xf]
  %v37 = vld [vmem:[%s0 + $0x3c] sm:$0xff]
  %v38 = vld [vmem:[%s0 + $0x44] sm:$0xff]
  %v39 = vld [vmem:[%s0 + $0x4c] sm:$0xf]
  %v40 = vld [vmem:[%s1] sm:$0xf]
  %v41 = vld [vmem:[%s1 + $0x4] sm:$0xf]
  %v42 = vld [vmem:[%s1 + $0x8] sm:$0xf]
  %v43 = vld [vmem:[%s1 + $0xc] sm:$0xf]
  %v44 = vld [vmem:[%s1 + $0x10] sm:$0xf]
  %v45 = vld [vmem:[%s1 + $0x14] sm:$0xf]
  %v46 = vld [vmem:[%s1 + $0x18] sm:$0xf]
  %v47 = vld [vmem:[%s1 + $0x1c] sm:$0xf]
  %v48 = vld [vmem:[%s1 + $0x20] sm:$0xf]
  %v49 = vld [vmem:[%s1 + $0x24] sm:$0xf]
  %v50 = vld [vmem:[%s1 + $0x28] sm:$0xf]
  %v51 = vld [vmem:[%s1 + $0x2c] sm:$0xf]
  %v52 = vld [vmem:[%s1 + $0x30] sm:$0xf]
  %v53 = vld [vmem:[%s1 + $0x34] sm:$0xf]
  %v54 = vld [vmem:[%s1 + $0x38] sm:$0xf]
  %v55 = vld [vmem:[%s1 + $0x3c] sm:$0xf]
  %v56 = vld [vmem:[%s1 + $0x40] sm:$0xf]
  %v57 = vld [vmem:[%s1 + $0x44] sm:$0xf]
  %v58 = vld [vmem:[%s1 + $0x48] sm:$0xf]
  %v59 = vld [vmem:[%s1 + $0x4c] sm:$0xf]
  %v60 = vld [vmem:[%s1 + $0x50] sm:$0xf]
  %v61 = vld [vmem:[%s1 + $0x54] sm:$0xf]
  %v62 = vld [vmem:[%s1 + $0x58] sm:$0xf]
  %v63 = vld [vmem:[%s1 + $0x5c] sm:$0xf]
  %v64 = vld [vmem:[%s1 + $0x60] sm:$0xf]
  %v65 = vld [vmem:[%s1 + $0x64] sm:$0xf]
  %v66 = vld [vmem:[%s1 + $0x68] sm:$0xf]
  %v67 = vld [vmem:[%s1 + $0x6c] sm:$0xf]
  %v68 = vld [vmem:[%s1 + $0x70] sm:$0xf]
  %v69 = vld [vmem:[%s1 + $0x74] sm:$0xf]
  %v70 = vld [vmem:[%s1 + $0x78] sm:$0xf]
  %v71 = vld [vmem:[%s1 + $0x7c] sm:$0xf]
  %v72 = vld [vmem:[%s1 + $0x80] sm:$0xf]
  %v73 = vld [vmem:[%s1 + $0x84] sm:$0xf]
  %v74 = vld [vmem:[%s1 + $0x88] sm:$0xf]
  %v75 = vld [vmem:[%s1 + $0x8c] sm:$0xf]
  %v76 = vld [vmem:[%s1 + $0x90] sm:$0xf]
  %v77 = vld [vmem:[%s1 + $0x94] sm:$0xf]
  %v78 = vld [vmem:[%s1 + $0x98] sm:$0xf]
  %v79 = vld [vmem:[%s1 + $0x9c] sm:$0xf]
  %v80 = vld [vmem:[%s1 + $0xa0] sm:$0xf]
  %v81 = vld [vmem:[%s1 + $0xa4] sm:$0xf]
  %v82 = vld [vmem:[%s1 + $0xa8] sm:$0xf]
  %v83 = vld [vmem:[%s1 + $0xac] sm:$0xf]
  %v84 = vld [vmem:[%s1 + $0xb0] sm:$0xf]
  %v85 = vld [vmem:[%s1 + $0xb4] sm:$0xf]
  %v86 = vld [vmem:[%s1 + $0xb8] sm:$0xf]
  %v87 = vld [vmem:[%s1 + $0xbc] sm:$0xf]
  %v88 = vld [vmem:[%s1 + $0xc0] sm:$0xf]
  %v89 = vld [vmem:[%s1 + $0xc4] sm:$0xf]
  %v90 = vld [vmem:[%s1 + $0xc8] sm:$0xf]
  %v91 = vld [vmem:[%s1 + $0xcc] sm:$0xf]
  %v92 = vld [vmem:[%s1 + $0xd0] sm:$0xf]
  %v93 = vld [vmem:[%s1 + $0xd4] sm:$0xf]
  %v94 = vld [vmem:[%s1 + $0xd8] sm:$0xf]
  %v95 = vld [vmem:[%s1 + $0xdc] sm:$0xf]
  %v96 = vld [vmem:[%s1 + $0xe0] sm:$0xf]
  %v97 = vld [vmem:[%s1 + $0xe4] sm:$0xf]
  %v98 = vld [vmem:[%s1 + $0xe8] sm:$0xf]
  %v99 = vld [vmem:[%s1 + $0xec] sm:$0xf]
  %v100 = vld [vmem:[%s1 + $0xf0] sm:$0xf]
  %v101 = vld [vmem:[%s1 + $0xf4] sm:$0xf]
  %v102 = vld [vmem:[%s1 + $0xf8] sm:$0xf]
  %v103 = vld [vmem:[%s1 + $0xfc] sm:$0xf]
  %v104 = vld [vmem:[%s1 + $0x100] sm:$0xf]
  %v105 = vld [vmem:[%s1 + $0x104] sm:$0xf]
  %v106 = vld [vmem:[%s1 + $0x108] sm:$0xf]
  %v107 = vld [vmem:[%s1 + $0x10c] sm:$0xf]
  %v108 = vld [vmem:[%s1 + $0x110] sm:$0xf]
  %v109 = vld [vmem:[%s1 + $0x114] sm:$0xf]
  %v110 = vld [vmem:[%s1 + $0x118] sm:$0xf]
  %v111 = vld [vmem:[%s1 + $0x11c] sm:$0xf]
  %v124 = vunpack.c.l.b16 %v28
  %v125 = vunpack.c.h.b16 %v28
  %v126 = vunpack.c.l.b16 %v29
  %v127 = vunpack.c.h.b16 %v29
  %v128 = vunpack.c.l.b16 %v30
  %v129 = vunpack.c.l.b16 %v31
  %v130 = vunpack.c.h.b16 %v31
  %v131 = vunpack.c.l.b16 %v32
  %v132 = vunpack.c.h.b16 %v32
  %v133 = vunpack.c.l.b16 %v33
  %v134 = vunpack.c.l.b16 %v34
  %v135 = vunpack.c.h.b16 %v34
  %v136 = vunpack.c.l.b16 %v35
  %v137 = vunpack.c.h.b16 %v35
  %v138 = vunpack.c.l.b16 %v36
  %v139 = vunpack.c.l.b16 %v37
  %v140 = vunpack.c.h.b16 %v37
  %v141 = vunpack.c.l.b16 %v38
  %v142 = vunpack.c.h.b16 %v38
  %v143 = vunpack.c.l.b16 %v39
  %v144 = vpack.c.b16 %v129, %v124
  %v145 = vpack.c.b16 %v130, %v125
  %v146 = vpack.c.b16 %v131, %v126
  %v147 = vpack.c.b16 %v132, %v127
  %v148 = vpack.c.b16 %v133, %v128
  %v149 = vpack.c.b16 %v139, %v134
  %v150 = vpack.c.b16 %v140, %v135
  %v151 = vpack.c.b16 %v141, %v136
  %v152 = vpack.c.b16 %v142, %v137
  %v153 = vpack.c.b16 %v143, %v138
  %v234 = vunpack.c.l.b16 %v40
  %v235 = vunpack.c.l.b16 %v41
  %v236 = vunpack.c.l.b16 %v42
  %v237 = vunpack.c.l.b16 %v43
  %v238 = vunpack.c.l.b16 %v44
  %v239 = vunpack.c.l.b16 %v45
  %v240 = vunpack.c.l.b16 %v46
  %v241 = vunpack.c.l.b16 %v47
  %v242 = vunpack.c.l.b16 %v48
  %v243 = vunpack.c.l.b16 %v49
  %v244 = vunpack.c.l.b16 %v50
  %v245 = vunpack.c.l.b16 %v51
  %v246 = vunpack.c.l.b16 %v52
  %v247 = vunpack.c.l.b16 %v53
  %v248 = vunpack.c.l.b16 %v54
  %v249 = vunpack.c.l.b16 %v55
  %v250 = vunpack.c.l.b16 %v56
  %v251 = vunpack.c.l.b16 %v57
  %v252 = vunpack.c.l.b16 %v58
  %v253 = vunpack.c.l.b16 %v59
  %v254 = vunpack.c.l.b16 %v60
  %v255 = vunpack.c.l.b16 %v61
  %v256 = vunpack.c.l.b16 %v62
  %v257 = vunpack.c.l.b16 %v63
  %v258 = vunpack.c.l.b16 %v64
  %v259 = vunpack.c.l.b16 %v65
  %v260 = vunpack.c.l.b16 %v66
  %v261 = vunpack.c.l.b16 %v67
  %v262 = vunpack.c.l.b16 %v68
  %v263 = vunpack.c.l.b16 %v69
  %v264 = vunpack.c.l.b16 %v70
  %v265 = vunpack.c.l.b16 %v71
  %v266 = vunpack.c.l.b16 %v72
  %v267 = vunpack.c.l.b16 %v73
  %v268 = vunpack.c.l.b16 %v74
  %v269 = vunpack.c.l.b16 %v75
  %v270 = vunpack.c.l.b16 %v76
  %v271 = vunpack.c.l.b16 %v77
  %v272 = vunpack.c.l.b16 %v78
  %v273 = vunpack.c.l.b16 %v79
  %v274 = vunpack.c.l.b16 %v80
  %v275 = vunpack.c.l.b16 %v81
  %v276 = vunpack.c.l.b16 %v82
  %v277 = vunpack.c.l.b16 %v83
  %v278 = vunpack.c.l.b16 %v84
  %v279 = vunpack.c.l.b16 %v85
  %v280 = vunpack.c.l.b16 %v86
  %v281 = vunpack.c.l.b16 %v87
  %v282 = vunpack.c.l.b16 %v88
  %v283 = vunpack.c.l.b16 %v89
  %v284 = vunpack.c.l.b16 %v90
  %v285 = vunpack.c.l.b16 %v91
  %v286 = vunpack.c.l.b16 %v92
  %v287 = vunpack.c.l.b16 %v93
  %v288 = vunpack.c.l.b16 %v94
  %v289 = vunpack.c.l.b16 %v95
  %v290 = vunpack.c.l.b16 %v96
  %v291 = vunpack.c.l.b16 %v97
  %v292 = vunpack.c.l.b16 %v98
  %v293 = vunpack.c.l.b16 %v99
  %v294 = vunpack.c.l.b16 %v100
  %v295 = vunpack.c.l.b16 %v101
  %v296 = vunpack.c.l.b16 %v102
  %v297 = vunpack.c.l.b16 %v103
  %v298 = vunpack.c.l.b16 %v104
  %v299 = vunpack.c.l.b16 %v105
  %v300 = vunpack.c.l.b16 %v106
  %v301 = vunpack.c.l.b16 %v107
  %v302 = vunpack.c.l.b16 %v108
  %v303 = vunpack.c.l.b16 %v109
  %v304 = vunpack.c.l.b16 %v110
  %v305 = vunpack.c.l.b16 %v111
  %v306 = vpack.c.b16 %v235, %v234
  %v307 = vpack.c.b16 %v237, %v236
  %v308 = vpack.c.b16 %v239, %v238
  %v309 = vpack.c.b16 %v241, %v240
  %v310 = vpack.c.b16 %v243, %v242
  %v311 = vpack.c.b16 %v245, %v244
  %v312 = vpack.c.b16 %v247, %v246
  %v313 = vpack.c.b16 %v249, %v248
  %v314 = vpack.c.b16 %v251, %v250
  %v315 = vpack.c.b16 %v253, %v252
  %v316 = vpack.c.b16 %v255, %v254
  %v317 = vpack.c.b16 %v257, %v256
  %v318 = vpack.c.b16 %v259, %v258
  %v319 = vpack.c.b16 %v261, %v260
  %v320 = vpack.c.b16 %v263, %v262
  %v321 = vpack.c.b16 %v265, %v264
  %v322 = vpack.c.b16 %v267, %v266
  %v323 = vpack.c.b16 %v269, %v268
  %v324 = vpack.c.b16 %v271, %v270
  %v325 = vpack.c.b16 %v273, %v272
  %v326 = vpack.c.b16 %v275, %v274
  %v327 = vpack.c.b16 %v277, %v276
  %v328 = vpack.c.b16 %v279, %v278
  %v329 = vpack.c.b16 %v281, %v280
  %v330 = vpack.c.b16 %v283, %v282
  %v331 = vpack.c.b16 %v285, %v284
  %v332 = vpack.c.b16 %v287, %v286
  %v333 = vpack.c.b16 %v289, %v288
  %v334 = vpack.c.b16 %v291, %v290
  %v335 = vpack.c.b16 %v293, %v292
  %v336 = vpack.c.b16 %v295, %v294
  %v337 = vpack.c.b16 %v297, %v296
  %v338 = vpack.c.b16 %v299, %v298
  %v339 = vpack.c.b16 %v301, %v300
  %v340 = vpack.c.b16 %v303, %v302
  %v341 = vpack.c.b16 %v305, %v304
  %vm378 = vcmask 523264
  %v380 = vsel %vm378, %v148, 0
  %v383 = vsel %vm378, %v153, 0
  %385 = vmatpush.bf16.msra.mxu0 %v313
  %386 = vmatpush.bf16.msra.mxu0 %v312
  %387 = vmatpush.bf16.msra.mxu0 %v311
  %388 = vmatpush.bf16.msra.mxu0 %v310
  %389 = vmatpush.bf16.msra.mxu0 %v309
  %390 = vmatpush.bf16.msra.mxu0 %v308
  %391 = vmatpush.bf16.msra.mxu0 %v307
  %392 = vmatpush.bf16.msra.mxu0 %v306
  %393 = vmatmul.bf16.gmra.mxu0 %v144
  %v394 = vpop.f32.mrf.mxu0
  %v395 = vadd.f32 0.0, %v394
  %v396 = vpop.f32.mrf.mxu0
  %v397 = vadd.f32 0.0, %v396
  %398 = vmatmul.bf16.gmra.mxu0 %v149
  %v399 = vpop.f32.mrf.mxu0
  %v400 = vadd.f32 0.0, %v399
  %v401 = vpop.f32.mrf.mxu0
  %v402 = vadd.f32 0.0, %v401
  %403 = vdwg.mxu0
  %404 = vmatpush.bf16.msra.mxu0 %v321
  %405 = vmatpush.bf16.msra.mxu0 %v320
  %406 = vmatpush.bf16.msra.mxu0 %v319
  %407 = vmatpush.bf16.msra.mxu0 %v318
  %408 = vmatpush.bf16.msra.mxu0 %v317
  %409 = vmatpush.bf16.msra.mxu0 %v316
  %410 = vmatpush.bf16.msra.mxu0 %v315
  %411 = vmatpush.bf16.msra.mxu0 %v314
  %412 = vmatmul.bf16.gmra.mxu0 %v145
  %v413 = vpop.f32.mrf.mxu0
  %v414 = vadd.f32 %v395, %v413
  %v415 = vpop.f32.mrf.mxu0
  %v416 = vadd.f32 %v397, %v415
  %417 = vmatmul.bf16.gmra.mxu0 %v150
  %v418 = vpop.f32.mrf.mxu0
  %v419 = vadd.f32 %v400, %v418
  %v420 = vpop.f32.mrf.mxu0
  %v421 = vadd.f32 %v402, %v420
  %422 = vdwg.mxu0
  %423 = vmatpush.bf16.msra.mxu0 %v329
  %424 = vmatpush.bf16.msra.mxu0 %v328
  %425 = vmatpush.bf16.msra.mxu0 %v327
  %426 = vmatpush.bf16.msra.mxu0 %v326
  %427 = vmatpush.bf16.msra.mxu0 %v325
  %428 = vmatpush.bf16.msra.mxu0 %v324
  %429 = vmatpush.bf16.msra.mxu0 %v323
  %430 = vmatpush.bf16.msra.mxu0 %v322
  %431 = vmatmul.bf16.gmra.mxu0 %v146
  %v432 = vpop.f32.mrf.mxu0
  %v433 = vadd.f32 %v414, %v432
  %v434 = vpop.f32.mrf.mxu0
  %v435 = vadd.f32 %v416, %v434
  %436 = vmatmul.bf16.gmra.mxu0 %v151
  %v437 = vpop.f32.mrf.mxu0
  %v438 = vadd.f32 %v419, %v437
  %v439 = vpop.f32.mrf.mxu0
  %v440 = vadd.f32 %v421, %v439
  %441 = vdwg.mxu0
  %442 = vmatpush.bf16.msra.mxu0 %v337
  %443 = vmatpush.bf16.msra.mxu0 %v336
  %444 = vmatpush.bf16.msra.mxu0 %v335
  %445 = vmatpush.bf16.msra.mxu0 %v334
  %446 = vmatpush.bf16.msra.mxu0 %v333
  %447 = vmatpush.bf16.msra.mxu0 %v332
  %448 = vmatpush.bf16.msra.mxu0 %v331
  %449 = vmatpush.bf16.msra.mxu0 %v330
  %450 = vmatmul.bf16.gmra.mxu0 %v147
  %v451 = vpop.f32.mrf.mxu0
  %v452 = vadd.f32 %v433, %v451
  %v453 = vpop.f32.mrf.mxu0
  %v454 = vadd.f32 %v435, %v453
  %455 = vmatmul.bf16.gmra.mxu0 %v152
  %v456 = vpop.f32.mrf.mxu0
  %v457 = vadd.f32 %v438, %v456
  %v458 = vpop.f32.mrf.mxu0
  %v459 = vadd.f32 %v440, %v458
  %460 = vdwg.mxu0
  %461 = vmatpush.bf16.msra.mxu0 0
  %462 = vmatpush.bf16.msra.mxu0 0
  %463 = vmatpush.bf16.msra.mxu0 0
  %464 = vmatpush.bf16.msra.mxu0 0
  %465 = vmatpush.bf16.msra.mxu0 %v341
  %466 = vmatpush.bf16.msra.mxu0 %v340
  %467 = vmatpush.bf16.msra.mxu0 %v339
  %468 = vmatpush.bf16.msra.mxu0 %v338
  %469 = vmatmul.bf16.gmra.mxu0 %v380
  %v470 = vpop.f32.mrf.mxu0
  %v471 = vadd.f32 %v452, %v470
  %v472 = vpop.f32.mrf.mxu0
  %v473 = vadd.f32 %v454, %v472
  %474 = vmatmul.bf16.gmra.mxu0 %v383
  %v475 = vpop.f32.mrf.mxu0
  %v476 = vadd.f32 %v457, %v475
  %v477 = vpop.f32.mrf.mxu0
  %v478 = vadd.f32 %v459, %v477
  %479 = vdwg.mxu0
  %v480 = vadd.f32 %v24, %v471
  %v481 = vadd.f32 %v25, %v473
  %v482 = vadd.f32 %v26, %v476
  %v483 = vadd.f32 %v27, %v478
  %vm484 = vcmask 64512
  %485 = vst.msk [vmem:[#allocation2] sm:$0xff] %vm484, %v480
  %486 = vst.msk [vmem:[#allocation2 + $0x8] sm:$0xff] %vm484, %v481
  %487 = vst.msk [vmem:[#allocation2 + $0x10] sm:$0xff] %vm484, %v482
  %488 = vst.msk [vmem:[#allocation2 + $0x18] sm:$0xff] %vm484, %v483
  // Predicated region
  $region18: #{wnet_forward.57} parent=0 // pred_check
    %p489 = pneg %p15
  $region19: #{wnet_forward.57} parent=0 // pred_check_branch
    %491 = sbr.rel (%p489) target = $region21
  $region20: #{wnet_forward.57} parent=0 // pred_region
    %v492 = vld [vmem:[#allocation2] sm:$0xff]
    %v493 = vld [vmem:[#allocation2 + $0x8] sm:$0xff]
    %v494 = vld [vmem:[#allocation2 + $0x10] sm:$0xff]
    %v495 = vld [vmem:[#allocation2 + $0x18] sm:$0xff]
    %v496 = vld [vmem:[%s2] sm:$0xff]
    %v497 = vld [vmem:[%s2 + $0x8] sm:$0xff]
    %v498 = vld [vmem:[%s2 + $0x10] sm:$0xff]
    %v499 = vld [vmem:[%s2 + $0x18] sm:$0xff]
    %501 = vset.pattern.permute.xlu0 0
    %502 = vperm.xlu0 %501, %v496
    %v503 = vpop.permute.xlu0 %502
    %506 = vset.pattern.permute.xlu0 0
    %507 = vperm.xlu0 %506, %v497
    %v508 = vpop.permute.xlu0 %507
    %511 = vset.pattern.permute.xlu0 0
    %512 = vperm.xlu0 %511, %v498
    %v513 = vpop.permute.xlu0 %512
    %516 = vset.pattern.permute.xlu0 0
    %517 = vperm.xlu0 %516, %v499
    %v518 = vpop.permute.xlu0 %517
    %v520 = vadd.f32 %v492, %v503
    %v521 = vadd.f32 %v493, %v508
    %v522 = vadd.f32 %v494, %v513
    %v523 = vadd.f32 %v495, %v518
    %v524 = vmax.f32 %v520, 0.0
    %v525 = vmax.f32 %v521, 0.0
    %v526 = vmax.f32 %v522, 0.0
    %v527 = vmax.f32 %v523, 0.0
    %v528 = vpack.c.bf16 %v524, %v524
    %v529 = vpack.c.bf16 %v525, %v525
    %v530 = vpack.c.bf16 %v526, %v526
    %v531 = vpack.c.bf16 %v527, %v527
    %vm532 = vcmask 60416
    %533 = vst.msk [vmem:[%s3] sm:$0xf] %vm532, %v528
    %534 = vst.msk [vmem:[%s3 + $0x4] sm:$0xf] %vm532, %v529
    %535 = vst.msk [vmem:[%s3 + $0x8] sm:$0xf] %vm532, %v530
    %536 = vst.msk [vmem:[%s3 + $0xc] sm:$0xf] %vm532, %v531
  $region21: #{wnet_forward.57} parent=0 // pred_fallthru
    _
  // Predicated region
  $region22: #{wnet_forward.57} parent=0 // pred_check
    _
  $region23: #{wnet_forward.57} parent=0 // pred_check_branch
    %538 = sbr.rel (0) target = $region25
  $region24: #{wnet_forward.57} parent=0 // pred_region
    _
  $region25: #{wnet_forward.57} parent=0 // pred_fallthru
    _
  // Predicated region
  $region26: #{wnet_forward.57} parent=0 // pred_check
    _
  $region27: #{wnet_forward.57} parent=0 // pred_check_branch
    %540 = sbr.rel (0) target = $region29
  $region28: #{wnet_forward.57} parent=0 // pred_region
    _
  $region29: #{wnet_forward.57} parent=0 // pred_fallthru
    _

// kernel: wnet_forward.62
$region0: #{wnet_forward.62}
  #allocation0 [shape = 'u32[]', space=smem, size = 0x4, offset = 0x4, fixed_abs, tag = 'smem constant byte address 0x4 - core index']
  #allocation1 [shape = 'u32[72,128]{1,0:T(1,128)}', space=vmem, size = 0x9000, scoped, tag = 'internal scratch']
  #allocation2 [shape = 'f32[32,32]{1,0:T(8,128)}', space=vmem, size = 0x4000, scoped, tag = 'scratch operand']
  %s0 = inlined_call_operand.vmem [shape: bf16[32,16], index: 0, kind: input, shape index: {}]
  %s1 = inlined_call_operand.vmem [shape: bf16[16,32], index: 1, kind: input, shape index: {}]
  %s2 = inlined_call_operand.vmem [shape: f32[32,1], index: 2, kind: input, shape index: {}]
  %s3 = inlined_call_operand.vmem [shape: bf16[32,32], index: 3, kind: output, shape index: {}]
  %s4 = sld [smem:[#allocation0]]
  $region30: #{wnet_forward.62} parent=0
    _
  %s6 = ssub.s32 1, %s4
  %s7 = scalar_select 0, %s6, %s4
  // Predicated region
  $region2: #{wnet_forward.62} parent=0 // pred_check
    _
  $region3: #{wnet_forward.62} parent=0 // pred_check_branch
    %9 = sbr.rel (0) target = $region5
  $region4: #{wnet_forward.62} parent=0 // pred_region
    _
  $region5: #{wnet_forward.62} parent=0 // pred_fallthru
    _
  // Predicated region
  $region6: #{wnet_forward.62} parent=0 // pred_check
    _
  $region7: #{wnet_forward.62} parent=0 // pred_check_branch
    %11 = sbr.rel (0) target = $region9
  $region8: #{wnet_forward.62} parent=0 // pred_region
    _
  $region9: #{wnet_forward.62} parent=0 // pred_fallthru
    _
  // Predicated region
  $region10: #{wnet_forward.62} parent=0 // pred_check
    _
  $region11: #{wnet_forward.62} parent=0 // pred_check_branch
    %13 = sbr.rel (0) target = $region13
  $region12: #{wnet_forward.62} parent=0 // pred_region
    _
  $region13: #{wnet_forward.62} parent=0 // pred_fallthru
    _
  %p15 = scmp.eq.s32.totalorder 0, 0
  // Predicated region
  $region14: #{wnet_forward.62} parent=0 // pred_check
    %p16 = pneg %p15
  $region15: #{wnet_forward.62} parent=0 // pred_check_branch
    %18 = sbr.rel (%p16) target = $region17
  $region16: #{wnet_forward.62} parent=0 // pred_region
    %vm19 = vcmask 261120
    %20 = vst.msk [vmem:[#allocation2] sm:$0xff] %vm19, 0.0
    %21 = vst.msk [vmem:[#allocation2 + $0x8] sm:$0xff] %vm19, 0.0
    %22 = vst.msk [vmem:[#allocation2 + $0x10] sm:$0xff] %vm19, 0.0
    %23 = vst.msk [vmem:[#allocation2 + $0x18] sm:$0xff] %vm19, 0.0
  $region17: #{wnet_forward.62} parent=0 // pred_fallthru
    _
  %v24 = vld [vmem:[#allocation2] sm:$0xff]
  %v25 = vld [vmem:[#allocation2 + $0x8] sm:$0xff]
  %v26 = vld [vmem:[#allocation2 + $0x10] sm:$0xff]
  %v27 = vld [vmem:[#allocation2 + $0x18] sm:$0xff]
  %v28 = vld [vmem:[%s0] sm:$0xf]
  %v29 = vld [vmem:[%s0 + $0x4] sm:$0xf]
  %v30 = vld [vmem:[%s0 + $0x8] sm:$0xf]
  %v31 = vld [vmem:[%s0 + $0xc] sm:$0xf]
  %v32 = vld [vmem:[%s1] sm:$0xf]
  %v33 = vld [vmem:[%s1 + $0x4] sm:$0xf]
  %v38 = vunpack.c.l.b16 %v28
  %v39 = vunpack.c.l.b16 %v29
  %v40 = vunpack.c.l.b16 %v30
  %v41 = vunpack.c.l.b16 %v31
  %v42 = vpack.c.b16 %v39, %v38
  %v43 = vpack.c.b16 %v41, %v40
  %v46 = vunpack.c.l.b16 %v32
  %v47 = vunpack.c.l.b16 %v33
  %v48 = vpack.c.b16 %v47, %v46
  %vm50 = vcmask 130048
  %v52 = vsel %vm50, %v42, 0
  %v55 = vsel %vm50, %v43, 0
  %57 = vmatpush.bf16.msra.mxu0 0
  %58 = vmatpush.bf16.msra.mxu0 0
  %59 = vmatpush.bf16.msra.mxu0 0
  %60 = vmatpush.bf16.msra.mxu0 0
  %61 = vmatpush.bf16.msra.mxu0 0
  %62 = vmatpush.bf16.msra.mxu0 0
  %63 = vmatpush.bf16.msra.mxu0 0
  %64 = vmatpush.bf16.msra.mxu0 %v48
  %65 = vmatmul.bf16.gmra.mxu0 %v52
  %v66 = vpop.f32.mrf.mxu0
  %v67 = vadd.f32 0.0, %v66
  %v68 = vpop.f32.mrf.mxu0
  %v69 = vadd.f32 0.0, %v68
  %70 = vmatmul.bf16.gmra.mxu0 %v55
  %v71 = vpop.f32.mrf.mxu0
  %v72 = vadd.f32 0.0, %v71
  %v73 = vpop.f32.mrf.mxu0
  %v74 = vadd.f32 0.0, %v73
  %75 = vdwg.mxu0
  %v76 = vadd.f32 %v24, %v67
  %v77 = vadd.f32 %v25, %v69
  %v78 = vadd.f32 %v26, %v72
  %v79 = vadd.f32 %v27, %v74
  %vm80 = vcmask 261120
  %81 = vst.msk [vmem:[#allocation2] sm:$0xff] %vm80, %v76
  %82 = vst.msk [vmem:[#allocation2 + $0x8] sm:$0xff] %vm80, %v77
  %83 = vst.msk [vmem:[#allocation2 + $0x10] sm:$0xff] %vm80, %v78
  %84 = vst.msk [vmem:[#allocation2 + $0x18] sm:$0xff] %vm80, %v79
  // Predicated region
  $region18: #{wnet_forward.62} parent=0 // pred_check
    %p85 = pneg %p15
  $region19: #{wnet_forward.62} parent=0 // pred_check_branch
    %87 = sbr.rel (%p85) target = $region21
  $region20: #{wnet_forward.62} parent=0 // pred_region
    %v88 = vld [vmem:[#allocation2] sm:$0xff]
    %v89 = vld [vmem:[#allocation2 + $0x8] sm:$0xff]
    %v90 = vld [vmem:[#allocation2 + $0x10] sm:$0xff]
    %v91 = vld [vmem:[#allocation2 + $0x18] sm:$0xff]
    %v92 = vld [vmem:[%s2] sm:$0xff]
    %v93 = vld [vmem:[%s2 + $0x8] sm:$0xff]
    %v94 = vld [vmem:[%s2 + $0x10] sm:$0xff]
    %v95 = vld [vmem:[%s2 + $0x18] sm:$0xff]
    %97 = vset.pattern.permute.xlu0 0
    %98 = vperm.xlu0 %97, %v92
    %v99 = vpop.permute.xlu0 %98
    %102 = vset.pattern.permute.xlu0 0
    %103 = vperm.xlu0 %102, %v93
    %v104 = vpop.permute.xlu0 %103
    %107 = vset.pattern.permute.xlu0 0
    %108 = vperm.xlu0 %107, %v94
    %v109 = vpop.permute.xlu0 %108
    %112 = vset.pattern.permute.xlu0 0
    %113 = vperm.xlu0 %112, %v95
    %v114 = vpop.permute.xlu0 %113
    %v116 = vadd.f32 %v88, %v99
    %v117 = vadd.f32 %v89, %v104
    %v118 = vadd.f32 %v90, %v109
    %v119 = vadd.f32 %v91, %v114
    %v120 = vpack.c.bf16 %v116, %v116
    %v121 = vpack.c.bf16 %v117, %v117
    %v122 = vpack.c.bf16 %v118, %v118
    %v123 = vpack.c.bf16 %v119, %v119
    %vm124 = vcmask 257024
    %125 = vst.msk [vmem:[%s3] sm:$0xf] %vm124, %v120
    %126 = vst.msk [vmem:[%s3 + $0x4] sm:$0xf] %vm124, %v121
    %127 = vst.msk [vmem:[%s3 + $0x8] sm:$0xf] %vm124, %v122
    %128 = vst.msk [vmem:[%s3 + $0xc] sm:$0xf] %vm124, %v123
  $region21: #{wnet_forward.62} parent=0 // pred_fallthru
    _
  // Predicated region
  $region22: #{wnet_forward.62} parent=0 // pred_check
    _
  $region23: #{wnet_forward.62} parent=0 // pred_check_branch
    %130 = sbr.rel (0) target = $region25
  $region24: #{wnet_forward.62} parent=0 // pred_region
    _
  $region25: #{wnet_forward.62} parent=0 // pred_fallthru
    _
  // Predicated region
  $region26: #{wnet_forward.62} parent=0 // pred_check
    _
  $region27: #{wnet_forward.62} parent=0 // pred_check_branch
    %132 = sbr.rel (0) target = $region29
  $region28: #{wnet_forward.62} parent=0 // pred_region
    _
  $region29: #{wnet_forward.62} parent=0 // pred_fallthru
    _

// kernel: wnet_forward.60
$region0: #{wnet_forward.60}
  #allocation0 [shape = 'u32[]', space=smem, size = 0x4, offset = 0x4, fixed_abs, tag = 'smem constant byte address 0x4 - core index']
  #allocation1 [shape = 'u32[72,128]{1,0:T(1,128)}', space=vmem, size = 0x9000, scoped, tag = 'internal scratch']
  #allocation2 [shape = 'f32[16,32]{1,0:T(8,128)}', space=vmem, size = 0x2000, scoped, tag = 'scratch operand']
  %s0 = inlined_call_operand.vmem [shape: bf16[16,288], index: 0, kind: input, shape index: {}]
  %s1 = inlined_call_operand.vmem [shape: bf16[288,32], index: 1, kind: input, shape index: {}]
  %s2 = inlined_call_operand.vmem [shape: f32[16,1], index: 2, kind: input, shape index: {}]
  %s3 = inlined_call_operand.vmem [shape: bf16[16,32], index: 3, kind: output, shape index: {}]
  %s4 = sld [smem:[#allocation0]]
  $region30: #{wnet_forward.60} parent=0
    _
  %s6 = ssub.s32 1, %s4
  %s7 = scalar_select 0, %s6, %s4
  // Predicated region
  $region2: #{wnet_forward.60} parent=0 // pred_check
    _
  $region3: #{wnet_forward.60} parent=0 // pred_check_branch
    %9 = sbr.rel (0) target = $region5
  $region4: #{wnet_forward.60} parent=0 // pred_region
    _
  $region5: #{wnet_forward.60} parent=0 // pred_fallthru
    _
  // Predicated region
  $region6: #{wnet_forward.60} parent=0 // pred_check
    _
  $region7: #{wnet_forward.60} parent=0 // pred_check_branch
    %11 = sbr.rel (0) target = $region9
  $region8: #{wnet_forward.60} parent=0 // pred_region
    _
  $region9: #{wnet_forward.60} parent=0 // pred_fallthru
    _
  // Predicated region
  $region10: #{wnet_forward.60} parent=0 // pred_check
    _
  $region11: #{wnet_forward.60} parent=0 // pred_check_branch
    %13 = sbr.rel (0) target = $region13
  $region12: #{wnet_forward.60} parent=0 // pred_region
    _
  $region13: #{wnet_forward.60} parent=0 // pred_fallthru
    _
  %p15 = scmp.eq.s32.totalorder 0, 0
  // Predicated region
  $region14: #{wnet_forward.60} parent=0 // pred_check
    %p16 = pneg %p15
  $region15: #{wnet_forward.60} parent=0 // pred_check_branch
    %18 = sbr.rel (%p16) target = $region17
  $region16: #{wnet_forward.60} parent=0 // pred_region
    %vm19 = vcmask 261120
    %20 = vst.msk [vmem:[#allocation2] sm:$0xff] %vm19, 0.0
    %21 = vst.msk [vmem:[#allocation2 + $0x8] sm:$0xff] %vm19, 0.0
  $region17: #{wnet_forward.60} parent=0 // pred_fallthru
    _
  %v22 = vld [vmem:[#allocation2] sm:$0xff]
  %v23 = vld [vmem:[#allocation2 + $0x8] sm:$0xff]
  %v24 = vld [vmem:[%s0] sm:$0xff]
  %v25 = vld [vmem:[%s0 + $0x8] sm:$0xf]
  %v26 = vld [vmem:[%s0 + $0xc] sm:$0xff]
  %v27 = vld [vmem:[%s0 + $0x14] sm:$0xf]
  %v28 = vld [vmem:[%s1] sm:$0xf]
  %v29 = vld [vmem:[%s1 + $0x4] sm:$0xf]
  %v30 = vld [vmem:[%s1 + $0x8] sm:$0xf]
  %v31 = vld [vmem:[%s1 + $0xc] sm:$0xf]
  %v32 = vld [vmem:[%s1 + $0x10] sm:$0xf]
  %v33 = vld [vmem:[%s1 + $0x14] sm:$0xf]
  %v34 = vld [vmem:[%s1 + $0x18] sm:$0xf]
  %v35 = vld [vmem:[%s1 + $0x1c] sm:$0xf]
  %v36 = vld [vmem:[%s1 + $0x20] sm:$0xf]
  %v37 = vld [vmem:[%s1 + $0x24] sm:$0xf]
  %v38 = vld [vmem:[%s1 + $0x28] sm:$0xf]
  %v39 = vld [vmem:[%s1 + $0x2c] sm:$0xf]
  %v40 = vld [vmem:[%s1 + $0x30] sm:$0xf]
  %v41 = vld [vmem:[%s1 + $0x34] sm:$0xf]
  %v42 = vld [vmem:[%s1 + $0x38] sm:$0xf]
  %v43 = vld [vmem:[%s1 + $0x3c] sm:$0xf]
  %v44 = vld [vmem:[%s1 + $0x40] sm:$0xf]
  %v45 = vld [vmem:[%s1 + $0x44] sm:$0xf]
  %v46 = vld [vmem:[%s1 + $0x48] sm:$0xf]
  %v47 = vld [vmem:[%s1 + $0x4c] sm:$0xf]
  %v48 = vld [vmem:[%s1 + $0x50] sm:$0xf]
  %v49 = vld [vmem:[%s1 + $0x54] sm:$0xf]
  %v50 = vld [vmem:[%s1 + $0x58] sm:$0xf]
  %v51 = vld [vmem:[%s1 + $0x5c] sm:$0xf]
  %v52 = vld [vmem:[%s1 + $0x60] sm:$0xf]
  %v53 = vld [vmem:[%s1 + $0x64] sm:$0xf]
  %v54 = vld [vmem:[%s1 + $0x68] sm:$0xf]
  %v55 = vld [vmem:[%s1 + $0x6c] sm:$0xf]
  %v56 = vld [vmem:[%s1 + $0x70] sm:$0xf]
  %v57 = vld [vmem:[%s1 + $0x74] sm:$0xf]
  %v58 = vld [vmem:[%s1 + $0x78] sm:$0xf]
  %v59 = vld [vmem:[%s1 + $0x7c] sm:$0xf]
  %v60 = vld [vmem:[%s1 + $0x80] sm:$0xf]
  %v61 = vld [vmem:[%s1 + $0x84] sm:$0xf]
  %v62 = vld [vmem:[%s1 + $0x88] sm:$0xf]
  %v63 = vld [vmem:[%s1 + $0x8c] sm:$0xf]
  %v68 = vunpack.c.l.b16 %v24
  %v69 = vunpack.c.h.b16 %v24
  %v70 = vunpack.c.l.b16 %v25
  %v71 = vunpack.c.l.b16 %v26
  %v72 = vunpack.c.h.b16 %v26
  %v73 = vunpack.c.l.b16 %v27
  %v74 = vpack.c.b16 %v71, %v68
  %v75 = vpack.c.b16 %v72, %v69
  %v76 = vpack.c.b16 %v73, %v70
  %v115 = vunpack.c.l.b16 %v28
  %v116 = vunpack.c.l.b16 %v29
  %v117 = vunpack.c.l.b16 %v30
  %v118 = vunpack.c.l.b16 %v31
  %v119 = vunpack.c.l.b16 %v32
  %v120 = vunpack.c.l.b16 %v33
  %v121 = vunpack.c.l.b16 %v34
  %v122 = vunpack.c.l.b16 %v35
  %v123 = vunpack.c.l.b16 %v36
  %v124 = vunpack.c.l.b16 %v37
  %v125 = vunpack.c.l.b16 %v38
  %v126 = vunpack.c.l.b16 %v39
  %v127 = vunpack.c.l.b16 %v40
  %v128 = vunpack.c.l.b16 %v41
  %v129 = vunpack.c.l.b16 %v42
  %v130 = vunpack.c.l.b16 %v43
  %v131 = vunpack.c.l.b16 %v44
  %v132 = vunpack.c.l.b16 %v45
  %v133 = vunpack.c.l.b16 %v46
  %v134 = vunpack.c.l.b16 %v47
  %v135 = vunpack.c.l.b16 %v48
  %v136 = vunpack.c.l.b16 %v49
  %v137 = vunpack.c.l.b16 %v50
  %v138 = vunpack.c.l.b16 %v51
  %v139 = vunpack.c.l.b16 %v52
  %v140 = vunpack.c.l.b16 %v53
  %v141 = vunpack.c.l.b16 %v54
  %v142 = vunpack.c.l.b16 %v55
  %v143 = vunpack.c.l.b16 %v56
  %v144 = vunpack.c.l.b16 %v57
  %v145 = vunpack.c.l.b16 %v58
  %v146 = vunpack.c.l.b16 %v59
  %v147 = vunpack.c.l.b16 %v60
  %v148 = vunpack.c.l.b16 %v61
  %v149 = vunpack.c.l.b16 %v62
  %v150 = vunpack.c.l.b16 %v63
  %v151 = vpack.c.b16 %v116, %v115
  %v152 = vpack.c.b16 %v118, %v117
  %v153 = vpack.c.b16 %v120, %v119
  %v154 = vpack.c.b16 %v122, %v121
  %v155 = vpack.c.b16 %v124, %v123
  %v156 = vpack.c.b16 %v126, %v125
  %v157 = vpack.c.b16 %v128, %v127
  %v158 = vpack.c.b16 %v130, %v129
  %v159 = vpack.c.b16 %v132, %v131
  %v160 = vpack.c.b16 %v134, %v133
  %v161 = vpack.c.b16 %v136, %v135
  %v162 = vpack.c.b16 %v138, %v137
  %v163 = vpack.c.b16 %v140, %v139
  %v164 = vpack.c.b16 %v142, %v141
  %v165 = vpack.c.b16 %v144, %v143
  %v166 = vpack.c.b16 %v146, %v145
  %v167 = vpack.c.b16 %v148, %v147
  %v168 = vpack.c.b16 %v150, %v149
  %vm187 = vcmask 261120
  %v189 = vsel %vm187, %v76, 0
  %191 = vmatpush.bf16.msra.mxu0 %v158
  %192 = vmatpush.bf16.msra.mxu0 %v157
  %193 = vmatpush.bf16.msra.mxu0 %v156
  %194 = vmatpush.bf16.msra.mxu0 %v155
  %195 = vmatpush.bf16.msra.mxu0 %v154
  %196 = vmatpush.bf16.msra.mxu0 %v153
  %197 = vmatpush.bf16.msra.mxu0 %v152
  %198 = vmatpush.bf16.msra.mxu0 %v151
  %199 = vmatmul.bf16.gmra.mxu0 %v74
  %v200 = vpop.f32.mrf.mxu0
  %v201 = vadd.f32 0.0, %v200
  %v202 = vpop.f32.mrf.mxu0
  %v203 = vadd.f32 0.0, %v202
  %204 = vdwg.mxu0
  %205 = vmatpush.bf16.msra.mxu0 %v166
  %206 = vmatpush.bf16.msra.mxu0 %v165
  %207 = vmatpush.bf16.msra.mxu0 %v164
  %208 = vmatpush.bf16.msra.mxu0 %v163
  %209 = vmatpush.bf16.msra.mxu0 %v162
  %210 = vmatpush.bf16.msra.mxu0 %v161
  %211 = vmatpush.bf16.msra.mxu0 %v160
  %212 = vmatpush.bf16.msra.mxu0 %v159
  %213 = vmatmul.bf16.gmra.mxu0 %v75
  %v214 = vpop.f32.mrf.mxu0
  %v215 = vadd.f32 %v201, %v214
  %v216 = vpop.f32.mrf.mxu0
  %v217 = vadd.f32 %v203, %v216
  %218 = vdwg.mxu0
  %219 = vmatpush.bf16.msra.mxu0 0
  %220 = vmatpush.bf16.msra.mxu0 0
  %221 = vmatpush.bf16.msra.mxu0 0
  %222 = vmatpush.bf16.msra.mxu0 0
  %223 = vmatpush.bf16.msra.mxu0 0
  %224 = vmatpush.bf16.msra.mxu0 0
  %225 = vmatpush.bf16.msra.mxu0 %v168
  %226 = vmatpush.bf16.msra.mxu0 %v167
  %227 = vmatmul.bf16.gmra.mxu0 %v189
  %v228 = vpop.f32.mrf.mxu0
  %v229 = vadd.f32 %v215, %v228
  %v230 = vpop.f32.mrf.mxu0
  %v231 = vadd.f32 %v217, %v230
  %232 = vdwg.mxu0
  %v233 = vadd.f32 %v22, %v229
  %v234 = vadd.f32 %v23, %v231
  %235 = vst.msk [vmem:[#allocation2] sm:$0xff] %vm187, %v233
  %236 = vst.msk [vmem:[#allocation2 + $0x8] sm:$0xff] %vm187, %v234
  // Predicated region
  $region18: #{wnet_forward.60} parent=0 // pred_check
    %p237 = pneg %p15
  $region19: #{wnet_forward.60} parent=0 // pred_check_branch
    %239 = sbr.rel (%p237) target = $region21
  $region20: #{wnet_forward.60} parent=0 // pred_region
    %v240 = vld [vmem:[#allocation2] sm:$0xff]
    %v241 = vld [vmem:[#allocation2 + $0x8] sm:$0xff]
    %v242 = vld [vmem:[%s2] sm:$0xff]
    %v243 = vld [vmem:[%s2 + $0x8] sm:$0xff]
    %245 = vset.pattern.permute.xlu0 0
    %246 = vperm.xlu0 %245, %v242
    %v247 = vpop.permute.xlu0 %246
    %250 = vset.pattern.permute.xlu0 0
    %251 = vperm.xlu0 %250, %v243
    %v252 = vpop.permute.xlu0 %251
    %v254 = vadd.f32 %v240, %v247
    %v255 = vadd.f32 %v241, %v252
    %v256 = vmax.f32 %v254, 0.0
    %v257 = vmax.f32 %v255, 0.0
    %v258 = vpack.c.bf16 %v256, %v256
    %v259 = vpack.c.bf16 %v257, %v257
    %vm260 = vcmask 257024
    %261 = vst.msk [vmem:[%s3] sm:$0xf] %vm260, %v258
    %262 = vst.msk [vmem:[%s3 + $0x4] sm:$0xf] %vm260, %v259
  $region21: #{wnet_forward.60} parent=0 // pred_fallthru
    _
  // Predicated region
  $region22: #{wnet_forward.60} parent=0 // pred_check
    _
  $region23: #{wnet_forward.60} parent=0 // pred_check_branch
    %264 = sbr.rel (0) target = $region25
  $region24: #{wnet_forward.60} parent=0 // pred_region
    _
  $region25: #{wnet_forward.60} parent=0 // pred_fallthru
    _
  // Predicated region
  $region26: #{wnet_forward.60} parent=0 // pred_check
    _
  $region27: #{wnet_forward.60} parent=0 // pred_check_branch
    %266 = sbr.rel (0) target = $region29
  $region28: #{wnet_forward.60} parent=0 // pred_region
    _
  $region29: #{wnet_forward.60} parent=0 // pred_fallthru
    _

// kernel: wnet_forward.63
$region0: #{wnet_forward.63}
  #allocation0 [shape = 'u32[]', space=smem, size = 0x4, offset = 0x4, fixed_abs, tag = 'smem constant byte address 0x4 - core index']
  #allocation1 [shape = 'u32[72,128]{1,0:T(1,128)}', space=vmem, size = 0x9000, scoped, tag = 'internal scratch']
  #allocation2 [shape = 'f32[8,128]{1,0:T(8,128)}', space=vmem, size = 0x1000, scoped, tag = 'scratch operand']
  %s0 = inlined_call_operand.vmem [shape: bf16[8,144], index: 0, kind: input, shape index: {}]
  %s1 = inlined_call_operand.vmem [shape: bf16[144,128], index: 1, kind: input, shape index: {}]
  %s2 = inlined_call_operand.vmem [shape: f32[8,1], index: 2, kind: input, shape index: {}]
  %s3 = inlined_call_operand.vmem [shape: bf16[8,128], index: 3, kind: output, shape index: {}]
  %s4 = sld [smem:[#allocation0]]
  $region30: #{wnet_forward.63} parent=0
    _
  %s6 = ssub.s32 1, %s4
  %s7 = scalar_select 0, %s6, %s4
  // Predicated region
  $region2: #{wnet_forward.63} parent=0 // pred_check
    _
  $region3: #{wnet_forward.63} parent=0 // pred_check_branch
    %9 = sbr.rel (0) target = $region5
  $region4: #{wnet_forward.63} parent=0 // pred_region
    _
  $region5: #{wnet_forward.63} parent=0 // pred_fallthru
    _
  // Predicated region
  $region6: #{wnet_forward.63} parent=0 // pred_check
    _
  $region7: #{wnet_forward.63} parent=0 // pred_check_branch
    %11 = sbr.rel (0) target = $region9
  $region8: #{wnet_forward.63} parent=0 // pred_region
    _
  $region9: #{wnet_forward.63} parent=0 // pred_fallthru
    _
  // Predicated region
  $region10: #{wnet_forward.63} parent=0 // pred_check
    _
  $region11: #{wnet_forward.63} parent=0 // pred_check_branch
    %13 = sbr.rel (0) target = $region13
  $region12: #{wnet_forward.63} parent=0 // pred_region
    _
  $region13: #{wnet_forward.63} parent=0 // pred_fallthru
    _
  %p15 = scmp.eq.s32.totalorder 0, 0
  // Predicated region
  $region14: #{wnet_forward.63} parent=0 // pred_check
    %p16 = pneg %p15
  $region15: #{wnet_forward.63} parent=0 // pred_check_branch
    %18 = sbr.rel (%p16) target = $region17
  $region16: #{wnet_forward.63} parent=0 // pred_region
    %19 = vst [vmem:[#allocation2] sm:$0xff] 0.0
  $region17: #{wnet_forward.63} parent=0 // pred_fallthru
    _
  %v20 = vld [vmem:[#allocation2] sm:$0xff]
  %v21 = vld [vmem:[%s0] sm:$0xff]
  %v22 = vld [vmem:[%s1] sm:$0xf]
  %v23 = vld [vmem:[%s1 + $0x4] sm:$0xf]
  %v24 = vld [vmem:[%s1 + $0x8] sm:$0xf]
  %v25 = vld [vmem:[%s1 + $0xc] sm:$0xf]
  %v26 = vld [vmem:[%s1 + $0x10] sm:$0xf]
  %v27 = vld [vmem:[%s1 + $0x14] sm:$0xf]
  %v28 = vld [vmem:[%s1 + $0x18] sm:$0xf]
  %v29 = vld [vmem:[%s1 + $0x1c] sm:$0xf]
  %v30 = vld [vmem:[%s1 + $0x20] sm:$0xf]
  %v31 = vld [vmem:[%s1 + $0x24] sm:$0xf]
  %v32 = vld [vmem:[%s1 + $0x28] sm:$0xf]
  %v33 = vld [vmem:[%s1 + $0x2c] sm:$0xf]
  %v34 = vld [vmem:[%s1 + $0x30] sm:$0xf]
  %v35 = vld [vmem:[%s1 + $0x34] sm:$0xf]
  %v36 = vld [vmem:[%s1 + $0x38] sm:$0xf]
  %v37 = vld [vmem:[%s1 + $0x3c] sm:$0xf]
  %v38 = vld [vmem:[%s1 + $0x40] sm:$0xf]
  %v39 = vld [vmem:[%s1 + $0x44] sm:$0xf]
  %v41 = vunpack.c.l.b16 %v21
  %v42 = vunpack.c.h.b16 %v21
  %v43 = vpack.c.b16 %v41, %v41
  %v44 = vpack.c.b16 %v42, %v42
  %v64 = vunpack.c.l.b16 %v22
  %v65 = vunpack.c.l.b16 %v23
  %v66 = vunpack.c.l.b16 %v24
  %v67 = vunpack.c.l.b16 %v25
  %v68 = vunpack.c.l.b16 %v26
  %v69 = vunpack.c.l.b16 %v27
  %v70 = vunpack.c.l.b16 %v28
  %v71 = vunpack.c.l.b16 %v29
  %v72 = vunpack.c.l.b16 %v30
  %v73 = vunpack.c.l.b16 %v31
  %v74 = vunpack.c.l.b16 %v32
  %v75 = vunpack.c.l.b16 %v33
  %v76 = vunpack.c.l.b16 %v34
  %v77 = vunpack.c.l.b16 %v35
  %v78 = vunpack.c.l.b16 %v36
  %v79 = vunpack.c.l.b16 %v37
  %v80 = vunpack.c.l.b16 %v38
  %v81 = vunpack.c.l.b16 %v39
  %v82 = vpack.c.b16 %v65, %v64
  %v83 = vpack.c.b16 %v67, %v66
  %v84 = vpack.c.b16 %v69, %v68
  %v85 = vpack.c.b16 %v71, %v70
  %v86 = vpack.c.b16 %v73, %v72
  %v87 = vpack.c.b16 %v75, %v74
  %v88 = vpack.c.b16 %v77, %v76
  %v89 = vpack.c.b16 %v79, %v78
  %v90 = vpack.c.b16 %v81, %v80
  %vm100 = vcmask 130048
  %v102 = vsel %vm100, %v44, 0
  %104 = vmatpush.bf16.msra.mxu0 %v89
  %105 = vmatpush.bf16.msra.mxu0 %v88
  %106 = vmatpush.bf16.msra.mxu0 %v87
  %107 = vmatpush.bf16.msra.mxu0 %v86
  %108 = vmatpush.bf16.msra.mxu0 %v85
  %109 = vmatpush.bf16.msra.mxu0 %v84
  %110 = vmatpush.bf16.msra.mxu0 %v83
  %111 = vmatpush.bf16.msra.mxu0 %v82
  %112 = vmatmul.bf16.gmra.mxu0 %v43
  %v113 = vpop.f32.mrf.mxu0
  %v114 = vadd.f32 0.0, %v113
  %v115 = vpop.f32.mrf.mxu0
  %116 = vdwg.mxu0
  %117 = vmatpush.bf16.msra.mxu0 0
  %118 = vmatpush.bf16.msra.mxu0 0
  %119 = vmatpush.bf16.msra.mxu0 0
  %120 = vmatpush.bf16.msra.mxu0 0
  %121 = vmatpush.bf16.msra.mxu0 0
  %122 = vmatpush.bf16.msra.mxu0 0
  %123 = vmatpush.bf16.msra.mxu0 0
  %124 = vmatpush.bf16.msra.mxu0 %v90
  %125 = vmatmul.bf16.gmra.mxu0 %v102
  %v126 = vpop.f32.mrf.mxu0
  %v127 = vadd.f32 %v114, %v126
  %v128 = vpop.f32.mrf.mxu0
  %129 = vdwg.mxu0
  %v130 = vadd.f32 %v20, %v127
  %131 = vst [vmem:[#allocation2] sm:$0xff] %v130
  // Predicated region
  $region18: #{wnet_forward.63} parent=0 // pred_check
    %p132 = pneg %p15
  $region19: #{wnet_forward.63} parent=0 // pred_check_branch
    %134 = sbr.rel (%p132) target = $region21
  $region20: #{wnet_forward.63} parent=0 // pred_region
    %v135 = vld [vmem:[#allocation2] sm:$0xff]
    %v136 = vld [vmem:[%s2] sm:$0xff]
    %138 = vset.pattern.permute.xlu0 0
    %139 = vperm.xlu0 %138, %v136
    %v140 = vpop.permute.xlu0 %139
    %v142 = vadd.f32 %v135, %v140
    %v143 = vmax.f32 %v142, 0.0
    %v144 = vpack.c.bf16 %v143, %v143
    %145 = vst [vmem:[%s3] sm:$0xf] %v144
  $region21: #{wnet_forward.63} parent=0 // pred_fallthru
    _
  // Predicated region
  $region22: #{wnet_forward.63} parent=0 // pred_check
    _
  $region23: #{wnet_forward.63} parent=0 // pred_check_branch
    %147 = sbr.rel (0) target = $region25
  $region24: #{wnet_forward.63} parent=0 // pred_region
    _
  $region25: #{wnet_forward.63} parent=0 // pred_fallthru
    _
  // Predicated region
  $region26: #{wnet_forward.63} parent=0 // pred_check
    _
  $region27: #{wnet_forward.63} parent=0 // pred_check_branch
    %149 = sbr.rel (0) target = $region29
  $region28: #{wnet_forward.63} parent=0 // pred_region
    _
  $region29: #{wnet_forward.63} parent=0 // pred_fallthru
    _

// kernel: wnet_forward.65
$region0: #{wnet_forward.65}
  #allocation0 [shape = 'u32[]', space=smem, size = 0x4, offset = 0x4, fixed_abs, tag = 'smem constant byte address 0x4 - core index']
  #allocation1 [shape = 'u32[72,128]{1,0:T(1,128)}', space=vmem, size = 0x9000, scoped, tag = 'internal scratch']
  #allocation2 [shape = 'f32[16,128]{1,0:T(8,128)}', space=vmem, size = 0x2000, scoped, tag = 'scratch operand']
  %s0 = inlined_call_operand.vmem [shape: bf16[16,8], index: 0, kind: input, shape index: {}]
  %s1 = inlined_call_operand.vmem [shape: bf16[8,128], index: 1, kind: input, shape index: {}]
  %s2 = inlined_call_operand.vmem [shape: f32[16,1], index: 2, kind: input, shape index: {}]
  %s3 = inlined_call_operand.vmem [shape: bf16[16,128], index: 3, kind: output, shape index: {}]
  %s4 = sld [smem:[#allocation0]]
  $region30: #{wnet_forward.65} parent=0
    _
  %s6 = ssub.s32 1, %s4
  %s7 = scalar_select 0, %s6, %s4
  // Predicated region
  $region2: #{wnet_forward.65} parent=0 // pred_check
    _
  $region3: #{wnet_forward.65} parent=0 // pred_check_branch
    %9 = sbr.rel (0) target = $region5
  $region4: #{wnet_forward.65} parent=0 // pred_region
    _
  $region5: #{wnet_forward.65} parent=0 // pred_fallthru
    _
  // Predicated region
  $region6: #{wnet_forward.65} parent=0 // pred_check
    _
  $region7: #{wnet_forward.65} parent=0 // pred_check_branch
    %11 = sbr.rel (0) target = $region9
  $region8: #{wnet_forward.65} parent=0 // pred_region
    _
  $region9: #{wnet_forward.65} parent=0 // pred_fallthru
    _
  // Predicated region
  $region10: #{wnet_forward.65} parent=0 // pred_check
    _
  $region11: #{wnet_forward.65} parent=0 // pred_check_branch
    %13 = sbr.rel (0) target = $region13
  $region12: #{wnet_forward.65} parent=0 // pred_region
    _
  $region13: #{wnet_forward.65} parent=0 // pred_fallthru
    _
  %p15 = scmp.eq.s32.totalorder 0, 0
  // Predicated region
  $region14: #{wnet_forward.65} parent=0 // pred_check
    %p16 = pneg %p15
  $region15: #{wnet_forward.65} parent=0 // pred_check_branch
    %18 = sbr.rel (%p16) target = $region17
  $region16: #{wnet_forward.65} parent=0 // pred_region
    %19 = vst [vmem:[#allocation2] sm:$0xff] 0.0
    %20 = vst [vmem:[#allocation2 + $0x8] sm:$0xff] 0.0
  $region17: #{wnet_forward.65} parent=0 // pred_fallthru
    _
  %v21 = vld [vmem:[#allocation2] sm:$0xff]
  %v22 = vld [vmem:[#allocation2 + $0x8] sm:$0xff]
  %v23 = vld [vmem:[%s0] sm:$0xf]
  %v24 = vld [vmem:[%s0 + $0x4] sm:$0xf]
  %v25 = vld [vmem:[%s1] sm:$0xf]
  %v28 = vunpack.c.l.b16 %v23
  %v29 = vunpack.c.l.b16 %v24
  %v30 = vpack.c.b16 %v29, %v28
  %vm31 = vcmask 64512
  %v33 = vsel %vm31, %v30, 0
  %vm35 = vcmask 1043456
  %v37 = vsel %vm35, %v25, 0
  %39 = vmatpush.bf16.msra.mxu0 0
  %40 = vmatpush.bf16.msra.mxu0 0
  %41 = vmatpush.bf16.msra.mxu0 0
  %42 = vmatpush.bf16.msra.mxu0 0
  %43 = vmatpush.bf16.msra.mxu0 0
  %44 = vmatpush.bf16.msra.mxu0 0
  %45 = vmatpush.bf16.msra.mxu0 0
  %46 = vmatpush.bf16.msra.mxu0 %v37
  %47 = vmatmul.bf16.gmra.mxu0 %v33
  %v48 = vpop.f32.mrf.mxu0
  %v49 = vadd.f32 0.0, %v48
  %v50 = vpop.f32.mrf.mxu0
  %v51 = vadd.f32 0.0, %v50
  %52 = vdwg.mxu0
  %v53 = vadd.f32 %v21, %v49
  %v54 = vadd.f32 %v22, %v51
  %55 = vst [vmem:[#allocation2] sm:$0xff] %v53
  %56 = vst [vmem:[#allocation2 + $0x8] sm:$0xff] %v54
  // Predicated region
  $region18: #{wnet_forward.65} parent=0 // pred_check
    %p57 = pneg %p15
  $region19: #{wnet_forward.65} parent=0 // pred_check_branch
    %59 = sbr.rel (%p57) target = $region21
  $region20: #{wnet_forward.65} parent=0 // pred_region
    %v60 = vld [vmem:[#allocation2] sm:$0xff]
    %v61 = vld [vmem:[#allocation2 + $0x8] sm:$0xff]
    %v62 = vld [vmem:[%s2] sm:$0xff]
    %v63 = vld [vmem:[%s2 + $0x8] sm:$0xff]
    %65 = vset.pattern.permute.xlu0 0
    %66 = vperm.xlu0 %65, %v62
    %v67 = vpop.permute.xlu0 %66
    %70 = vset.pattern.permute.xlu0 0
    %71 = vperm.xlu0 %70, %v63
    %v72 = vpop.permute.xlu0 %71
    %v74 = vadd.f32 %v60, %v67
    %v75 = vadd.f32 %v61, %v72
    %v76 = vpack.c.bf16 %v74, %v74
    %v77 = vpack.c.bf16 %v75, %v75
    %78 = vst [vmem:[%s3] sm:$0xf] %v76
    %79 = vst [vmem:[%s3 + $0x4] sm:$0xf] %v77
  $region21: #{wnet_forward.65} parent=0 // pred_fallthru
    _
  // Predicated region
  $region22: #{wnet_forward.65} parent=0 // pred_check
    _
  $region23: #{wnet_forward.65} parent=0 // pred_check_branch
    %81 = sbr.rel (0) target = $region25
  $region24: #{wnet_forward.65} parent=0 // pred_region
    _
  $region25: #{wnet_forward.65} parent=0 // pred_fallthru
    _
  // Predicated region
  $region26: #{wnet_forward.65} parent=0 // pred_check
    _
  $region27: #{wnet_forward.65} parent=0 // pred_check_branch
    %83 = sbr.rel (0) target = $region29
  $region28: #{wnet_forward.65} parent=0 // pred_region
    _
  $region29: #{wnet_forward.65} parent=0 // pred_fallthru
    _

// kernel: wnet_forward.68
$region0: #{wnet_forward.68}
  #allocation0 [shape = 'u32[]', space=smem, size = 0x4, offset = 0x4, fixed_abs, tag = 'smem constant byte address 0x4 - core index']
  #allocation1 [shape = 'u32[72,128]{1,0:T(1,128)}', space=vmem, size = 0x9000, scoped, tag = 'internal scratch']
  #allocation2 [shape = 'f32[1,256]{1,0:T(1,128)}', space=vmem, size = 0x400, scoped, tag = 'scratch operand']
  #allocation3 [shape = 'f32[1,1]{1,0:T(1,128)S(1)}', space=vmem, size = 0x200, scoped, tag = 'scoped memory for wnet_forward.68']
  %s0 = inlined_call_operand.vmem [shape: bf16[1,4], index: 0, kind: input, shape index: {}]
  %s1 = inlined_call_operand.vmem [shape: bf16[4,512], index: 1, kind: input, shape index: {}]
  %s2 = inlined_call_operand.<no memory space> [shape: f32[1,1], index: 2, kind: input, shape index: {}]
  %s3 = inlined_call_operand.vmem [shape: f32[1,512], index: 3, kind: output, shape index: {}]
  %s4 = sld [smem:[#allocation0]]
  $region53: #{wnet_forward.68} parent=0
    _
  %s6 = ssub.s32 1, %s4
  %s7 = scalar_select 0, %s6, %s4
  %v8 = vstv %s2
  %9 = vst [vmem:[#allocation3] sm:$0x1] %v8
  loop: start=0, step=1, limit=4
  $region2: #{wnet_forward.68} parent=0 // loop_pre_header
    _
  $region3: #{wnet_forward.68} parent=0 // loop_header
    %s11 = sphi 0, %s15
    %p12 = scmp.ge.s32.totalorder %s11, 4
    %s18 = sphi 0, %s37
    %s19 = sphi 0, %s33
    %s20 = sphi 0, %s29
    %s21 = sphi 0, %s18
    %s22 = sphi 0, %s19
    %s23 = sphi 0, %s20
    %s24 = sphi 0, %s21
    %s25 = sphi 0, %s22
    %s26 = sphi 0, %s23
    %s42 = sphi 0, %s44
    %s45 = sphi 0, %s42
    %s46 = sphi 0, %s45
    %s62 = sphi 0, %s46
    %s70 = sphi 0, %s72
    %s73 = sphi 0, %s70
    %s74 = sphi 0, %s73
    %s90 = sphi 0, %s74
    %s96 = sphi 0, %s98
    %s99 = sphi 0, %s96
    %s100 = sphi 0, %s99
    %s116 = sphi 0, %s100
    %s124 = sphi 0, %s126
    %s127 = sphi 0, %s124
    %s128 = sphi 0, %s127
    %s144 = sphi 0, %s128
  $region4: #{wnet_forward.68} parent=0 // loop_header_branch
    %14 = sbr.rel (%p12) target = $region8
  $region5: #{wnet_forward.68} parent=0 // loop_body
    %s16 = ssub.s32 %s11, 1
    %s17 = ssub.s32 %s11, 2
    %s27 = sadd.s32 1, %s20
    %p28 = scmp.ge.s32.totalorder %s27, 1
    %s29 = scalar_select %p28, 0, %s27
    %s30 = sadd.s32 1, %s19
    %s31 = scalar_select %p28, %s30, %s19
    %p32 = scmp.ge.s32.totalorder %s31, 2
    %s33 = scalar_select %p32, 0, %s31
    %s34 = sadd.s32 1, %s18
    %s35 = scalar_select %p32, %s34, %s18
    %p36 = scmp.ge.s32.totalorder %s35, 1
    %s37 = scalar_select %p36, 0, %s35
    %s38 = ssub.s32 %s18, %s37
    %s39 = ssub.s32 %s20, %s29
    %s40 = sor.u32 %s38, %s39
    %p41 = scmp.eq.s32.totalorder %s40, 0
    %s43 = sadd.s32 %s42, 1
    %s44 = scalar_select %p41, %s42, %s43
    %p47 = pneg %p41
    %p48 = scmp.eq.s32.totalorder %s11, 1
    %p49 = por %p47, %p48
    %p50 = scmp.ne.s32.totalorder %s42, %s45
    %p51 = scmp.eq.s32.totalorder %s11, 0
    %p52 = por %p50, %p51
    %p53 = scmp.ne.s32.totalorder %s42, %s45
    %p54 = scmp.eq.s32.totalorder %s16, 1
    %p55 = por %p53, %p54
    %p56 = scmp.ne.s32.totalorder %s45, %s46
    %p57 = scmp.eq.s32.totalorder %s16, 0
    %p58 = por %p56, %p57
    %p59 = scmp.ne.s32.totalorder %s45, %s46
    %p60 = scmp.eq.s32.totalorder %s17, 1
    %p61 = por %p59, %p60
    %p63 = scmp.ne.s32.totalorder %s46, %s62
    %p64 = scmp.eq.s32.totalorder %s17, 0
    %p65 = por %p63, %p64
    %s66 = ssub.s32 %s20, %s29
    %s67 = ssub.s32 %s19, %s33
    %s68 = sor.u32 %s66, %s67
    %p69 = scmp.eq.s32.totalorder %s68, 0
    %s71 = sadd.s32 %s70, 1
    %s72 = scalar_select %p69, %s70, %s71
    %p75 = pneg %p69
    %p76 = scmp.eq.s32.totalorder %s11, 1
    %p77 = por %p75, %p76
    %p78 = scmp.ne.s32.totalorder %s70, %s73
    %p79 = scmp.eq.s32.totalorder %s11, 0
    %p80 = por %p78, %p79
    %p81 = scmp.ne.s32.totalorder %s70, %s73
    %p82 = scmp.eq.s32.totalorder %s16, 1
    %p83 = por %p81, %p82
    %p84 = scmp.ne.s32.totalorder %s73, %s74
    %p85 = scmp.eq.s32.totalorder %s16, 0
    %p86 = por %p84, %p85
    %p87 = scmp.ne.s32.totalorder %s73, %s74
    %p88 = scmp.eq.s32.totalorder %s17, 1
    %p89 = por %p87, %p88
    %p91 = scmp.ne.s32.totalorder %s74, %s90
    %p92 = scmp.eq.s32.totalorder %s17, 0
    %p93 = por %p91, %p92
    %s94 = ssub.s32 %s18, %s37
    %p95 = scmp.eq.s32.totalorder %s94, 0
    %s97 = sadd.s32 %s96, 1
    %s98 = scalar_select %p95, %s96, %s97
    %p101 = pneg %p95
    %p102 = scmp.eq.s32.totalorder %s11, 1
    %p103 = por %p101, %p102
    %p104 = scmp.ne.s32.totalorder %s96, %s99
    %p105 = scmp.eq.s32.totalorder %s11, 0
    %p106 = por %p104, %p105
    %p107 = scmp.ne.s32.totalorder %s96, %s99
    %p108 = scmp.eq.s32.totalorder %s16, 1
    %p109 = por %p107, %p108
    %p110 = scmp.ne.s32.totalorder %s99, %s100
    %p111 = scmp.eq.s32.totalorder %s16, 0
    %p112 = por %p110, %p111
    %p113 = scmp.ne.s32.totalorder %s99, %s100
    %p114 = scmp.eq.s32.totalorder %s17, 1
    %p115 = por %p113, %p114
    %p117 = scmp.ne.s32.totalorder %s100, %s116
    %p118 = scmp.eq.s32.totalorder %s17, 0
    %p119 = por %p117, %p118
    %s120 = ssub.s32 %s18, %s37
    %s121 = ssub.s32 %s19, %s33
    %s122 = sor.u32 %s120, %s121
    %p123 = scmp.eq.s32.totalorder %s122, 0
    %s125 = sadd.s32 %s124, 1
    %s126 = scalar_select %p123, %s124, %s125
    %p129 = pneg %p123
    %p130 = scmp.eq.s32.totalorder %s11, 1
    %p131 = por %p129, %p130
    %p132 = scmp.ne.s32.totalorder %s124, %s127
    %p133 = scmp.eq.s32.totalorder %s11, 0
    %p134 = por %p132, %p133
    %p135 = scmp.ne.s32.totalorder %s124, %s127
    %p136 = scmp.eq.s32.totalorder %s16, 1
    %p137 = por %p135, %p136
    %p138 = scmp.ne.s32.totalorder %s127, %s128
    %p139 = scmp.eq.s32.totalorder %s16, 0
    %p140 = por %p138, %p139
    %p141 = scmp.ne.s32.totalorder %s127, %s128
    %p142 = scmp.eq.s32.totalorder %s17, 1
    %p143 = por %p141, %p142
    %p145 = scmp.ne.s32.totalorder %s128, %s144
    %p146 = scmp.eq.s32.totalorder %s17, 0
    %p147 = por %p145, %p146
    %p148 = scmp.le.s32.totalorder 1, %s11
    %p149 = scmp.lt.s32.totalorder %s11, 3
    %p150 = pnand %p148, %p149
    %p151 = pneg %p150
    // Predicated region
    $region9: #{wnet_forward.68} parent=5 // pred_check
      _
    $region10: #{wnet_forward.68} parent=5 // pred_check_branch
      %153 = sbr.rel (%p150) target = $region12
    $region11: #{wnet_forward.68} parent=5 // pred_region
      %s154 = ssub.s32 %s11, 1
      // Predicated region
      $region13: #{wnet_forward.68} parent=11 // pred_check
        %p155 = pneg %p58
      $region14: #{wnet_forward.68} parent=11 // pred_check_branch
        %157 = sbr.rel (%p155) target = $region16
      $region15: #{wnet_forward.68} parent=11 // pred_region
        %p158 = scmp.lt.s32.totalorder %s21, 0
        %s159 = scalar_select %p158, %s21, 0
        %p160 = scmp.lt.s32.totalorder %s23, 0
        %s161 = scalar_select %p160, %s23, 0
        %s162 = sadd.s32 %s161, %s159
        %s163 = scalar_lea.vmem %s0, %s162
      $region16: #{wnet_forward.68} parent=11 // pred_fallthru
        _
      // Predicated region
      $region17: #{wnet_forward.68} parent=11 // pred_check
        %p164 = pneg %p112
      $region18: #{wnet_forward.68} parent=11 // pred_check_branch
        %166 = sbr.rel (%p164) target = $region20
      $region19: #{wnet_forward.68} parent=11 // pred_region
        %p167 = scmp.lt.s32.totalorder %s21, 0
        %s168 = scalar_select %p167, %s21, 0
        %s169 = scalar_lea.vmem [#allocation3], %s168
      $region20: #{wnet_forward.68} parent=11 // pred_fallthru
        _
    $region12: #{wnet_forward.68} parent=5 // pred_fallthru
      _
    %p170 = scmp.lt.s32.totalorder %s11, 2
    // Predicated region
    $region21: #{wnet_forward.68} parent=5 // pred_check
      %p171 = pneg %p170
    $region22: #{wnet_forward.68} parent=5 // pred_check_branch
      %173 = sbr.rel (%p171) target = $region24
    $region23: #{wnet_forward.68} parent=5 // pred_region
      // Predicated region
      $region25: #{wnet_forward.68} parent=23 // pred_check
        %p174 = pneg %p80
      $region26: #{wnet_forward.68} parent=23 // pred_check_branch
        %176 = sbr.rel (%p174) target = $region28
      $region27: #{wnet_forward.68} parent=23 // pred_region
        %s177 = smul.u32 2, %s19
        %p178 = scmp.lt.s32.totalorder %s20, 0
        %s179 = scalar_select %p178, %s20, 0
        %p180 = scmp.lt.s32.totalorder %s177, 3
        %s181 = scalar_select %p180, %s177, 3
        %s182 = smul.addr %s179, 4
        %s183 = sadd.s32 %s181, %s182
        %s184 = smul.addr %s183, 2
        %s185 = scalar_lea.vmem %s1, %s184
        %s186 = smul.u32 2, %s19
      $region28: #{wnet_forward.68} parent=23 // pred_fallthru
        _
    $region24: #{wnet_forward.68} parent=5 // pred_fallthru
      _
    %p187 = scmp.le.s32.totalorder 1, %s11
    %p188 = scmp.lt.s32.totalorder %s11, 3
    %p189 = pnand %p187, %p188
    %p190 = pneg %p189
    // Predicated region
    $region29: #{wnet_forward.68} parent=5 // pred_check
      _
    $region30: #{wnet_forward.68} parent=5 // pred_check_branch
      %192 = sbr.rel (%p189) target = $region32
    $region31: #{wnet_forward.68} parent=5 // pred_region
      %s193 = ssub.s32 %s11, 1
      %p194 = scmp.lt.s32.totalorder %s21, 0
      %s195 = scalar_select %p194, %s21, 0
      %p196 = scmp.lt.s32.totalorder %s23, 0
      %s197 = scalar_select %p196, %s23, 0
      %s198 = sadd.s32 %s197, %s195
      %s199 = scalar_lea.vmem %s0, %s198
      %p200 = pneg %p58
      %p201 = pneg %p55
      %s202 = smul.u32 2, %s22
      %p203 = scmp.lt.s32.totalorder %s23, 0
      %s204 = scalar_select %p203, %s23, 0
      %p205 = scmp.lt.s32.totalorder %s202, 3
      %s206 = scalar_select %p205, %s202, 3
      %s207 = smul.addr %s204, 4
      %s208 = sadd.s32 %s206, %s207
      %s209 = smul.addr %s208, 2
      %s210 = scalar_lea.vmem %s1, %s209
      %p211 = pneg %p86
      %p212 = pneg %p83
      %p213 = scmp.lt.s32.totalorder %s21, 0
      %s214 = scalar_select %p213, %s21, 0
      %s215 = scalar_lea.vmem [#allocation3], %s214
      %p216 = pneg %p112
      %p217 = pneg %p109
      %p218 = pneg %p140
      %p219 = pneg %p137
      %s220 = smul.u32 2, %s22
      %p221 = scmp.lt.s32.totalorder %s21, 0
      %s222 = scalar_select %p221, %s21, 0
      %p223 = scmp.lt.s32.totalorder %s220, 3
      %s224 = scalar_select %p223, %s220, 3
      %s225 = smul.addr %s222, 4
      %s226 = sadd.s32 %s224, %s225
      %s227 = scalar_lea.vmem %s3, %s226
      %p228 = scmp.lt.s32.totalorder %s21, 0
      %s229 = scalar_select %p228, %s21, 0
      %p230 = scmp.lt.s32.totalorder %s23, 0
      %s231 = scalar_select %p230, %s23, 0
      %s232 = sadd.s32 %s231, %s229
      %s233 = scalar_lea.vmem %s0, %s232
      %s234 = smul.u32 2, %s22
      %p235 = scmp.lt.s32.totalorder %s23, 0
      %s236 = scalar_select %p235, %s23, 0
      %p237 = scmp.lt.s32.totalorder %s234, 3
      %s238 = scalar_select %p237, %s234, 3
      %s239 = smul.addr %s236, 4
      %s240 = sadd.s32 %s238, %s239
      %s241 = smul.addr %s240, 2
      %s242 = scalar_lea.vmem %s1, %s241
      %s243 = smul.u32 2, %s22
      %p244 = scmp.lt.s32.totalorder %s21, 0
      %s245 = scalar_select %p244, %s21, 0
      %s246 = scalar_lea.vmem [#allocation3], %s245
      %s247 = smul.u32 2, %s22
      %p248 = scmp.lt.s32.totalorder %s21, 0
      %s249 = scalar_select %p248, %s21, 0
      %p250 = scmp.lt.s32.totalorder %s247, 3
      %s251 = scalar_select %p250, %s247, 3
      %s252 = smul.addr %s249, 4
      %s253 = sadd.s32 %s251, %s252
      %s254 = scalar_lea.vmem %s3, %s253
      %s255 = smul.u32 2, %s22
      %p257 = scmp.eq.s32.totalorder %s23, 0
      // Predicated region
      $region33: #{wnet_forward.68} parent=31 // pred_check
        %p258 = pneg %p257
      $region34: #{wnet_forward.68} parent=31 // pred_check_branch
        %260 = sbr.rel (%p258) target = $region36
      $region35: #{wnet_forward.68} parent=31 // pred_region
        %v261 = vlaneseq
        %vm262 = vcmp.ge.s32.totalorder %v261, 0
        %vm263 = vcmp.lt.s32.totalorder %v261, 256
        %vm264 = vmand %vm262, %vm263
        %265 = vst.msk [vmem:[#allocation2] sm:$0x3] %vm264, 0.0
      $region36: #{wnet_forward.68} parent=31 // pred_fallthru
        _
      %v266 = vld [vmem:[#allocation2] sm:$0x3]
      %v267 = vld [vmem:[%s233] sm:$0x1]
      %v268 = vld [vmem:[%s242] sm:$0xf]
      %270 = vst [vmem:[#allocation1] ss:$4 sm:$0xff] %v268
      %v271 = vld.sshfl [vmem:[#allocation1] sm:$0xff pattern:$0x73625140]
      %v272 = vld.sshfl [vmem:[#allocation1 + $0x8] sm:$0xff pattern:$0x73625140]
      %vm273 = vcmask 31744
      %v275 = vsel %vm273, %v267, 0
      %vm277 = vcmask 1041408
      %v278 = vsel %vm277, %v271, 0
      %v280 = vsel %vm277, %v272, 0
      %282 = vmatpush.bf16.msra.mxu0 0
      %283 = vmatpush.bf16.msra.mxu0 0
      %284 = vmatpush.bf16.msra.mxu0 0
      %285 = vmatpush.bf16.msra.mxu0 0
      %286 = vmatpush.bf16.msra.mxu0 0
      %287 = vmatpush.bf16.msra.mxu0 0
      %288 = vmatpush.bf16.msra.mxu0 0
      %289 = vmatpush.bf16.msra.mxu0 %v278
      %290 = vmatmul.bf16.gmra.mxu0 %v275
      %v291 = vpop.f32.mrf.mxu0
      %v292 = vadd.f32 0.0, %v291
      %v293 = vpop.f32.mrf.mxu0
      %294 = vdwg.mxu0
      %295 = vmatpush.bf16.msra.mxu0 0
      %296 = vmatpush.bf16.msra.mxu0 0
      %297 = vmatpush.bf16.msra.mxu0 0
      %298 = vmatpush.bf16.msra.mxu0 0
      %299 = vmatpush.bf16.msra.mxu0 0
      %300 = vmatpush.bf16.msra.mxu0 0
      %301 = vmatpush.bf16.msra.mxu0 0
      %302 = vmatpush.bf16.msra.mxu0 %v280
      %303 = vmatmul.bf16.gmra.mxu0 %v275
      %v304 = vpop.f32.mrf.mxu0
      %v305 = vadd.f32 0.0, %v304
      %v306 = vpop.f32.mrf.mxu0
      %307 = vdwg.mxu0
      %v310 = vrot.slane %v305, 7
      %vm311 = vcmask 1040384
      %v312 = vsel %vm311, %v292, %v310
      %v314 = vadd.f32 %v266, %v312
      %v315 = vlaneseq
      %vm316 = vcmp.ge.s32.totalorder %v315, 0
      %vm317 = vcmp.lt.s32.totalorder %v315, 256
      %vm318 = vmand %vm316, %vm317
      %319 = vst.msk [vmem:[#allocation2] sm:$0x3] %vm318, %v314
      // Predicated region
      $region37: #{wnet_forward.68} parent=31 // pred_check
        %p320 = pneg %p257
      $region38: #{wnet_forward.68} parent=31 // pred_check_branch
        %322 = sbr.rel (%p320) target = $region40
      $region39: #{wnet_forward.68} parent=31 // pred_region
        %v323 = vld [vmem:[#allocation2] sm:$0x3]
        %v324 = vld [vmem:[%s246] sm:$0x1]
        %326 = vset.pattern.permute.xlu0 0
        %327 = vperm.xlu0 %326, %v324
        %v328 = vpop.permute.xlu0 %327
        %v330 = vperm.slane %v328, 0
        %v331 = vadd.f32 %v323, %v330
        %332 = vst.msk [vmem:[%s254] sm:$0x3] %vm318, %v331
      $region40: #{wnet_forward.68} parent=31 // pred_fallthru
        _
      %s333 = smul.u32 2, %s22
      %p334 = scmp.lt.s32.totalorder %s21, 0
      %s335 = scalar_select %p334, %s21, 0
      %p336 = scmp.lt.s32.totalorder %s333, 3
      %s337 = scalar_select %p336, %s333, 3
      %s338 = smul.addr %s335, 4
      %s339 = sadd.s32 %s337, %s338
      %s340 = scalar_lea.vmem %s3, %s339
      // Predicated region
      $region41: #{wnet_forward.68} parent=31 // pred_check
        %p341 = pneg %p137
      $region42: #{wnet_forward.68} parent=31 // pred_check_branch
        %343 = sbr.rel (%p341) target = $region44
      $region43: #{wnet_forward.68} parent=31 // pred_region
        %s344 = smul.u32 2, %s22
      $region44: #{wnet_forward.68} parent=31 // pred_fallthru
        _
    $region32: #{wnet_forward.68} parent=5 // pred_fallthru
      _
    %p345 = scmp.le.s32.totalorder 2, %s11
    // Predicated region
    $region45: #{wnet_forward.68} parent=5 // pred_check
      %p346 = pneg %p345
    $region46: #{wnet_forward.68} parent=5 // pred_check_branch
      %348 = sbr.rel (%p346) target = $region48
    $region47: #{wnet_forward.68} parent=5 // pred_region
      %s349 = ssub.s32 %s11, 2
      // Predicated region
      $region49: #{wnet_forward.68} parent=47 // pred_check
        %p350 = pneg %p143
      $region50: #{wnet_forward.68} parent=47 // pred_check_branch
        %352 = sbr.rel (%p350) target = $region52
      $region51: #{wnet_forward.68} parent=47 // pred_region
        %s353 = smul.u32 2, %s25
        %p354 = scmp.lt.s32.totalorder %s24, 0
        %s355 = scalar_select %p354, %s24, 0
        %p356 = scmp.lt.s32.totalorder %s353, 3
        %s357 = scalar_select %p356, %s353, 3
        %s358 = smul.addr %s355, 4
        %s359 = sadd.s32 %s357, %s358
        %s360 = scalar_lea.vmem %s3, %s359
      $region52: #{wnet_forward.68} parent=47 // pred_fallthru
        _
    $region48: #{wnet_forward.68} parent=5 // pred_fallthru
      _
  $region6: #{wnet_forward.68} parent=0 // loop_footer
    %s15 = sadd.s32 1, %s11
  $region7: #{wnet_forward.68} parent=0 // loop_footer_branch
    %10 = sbr.rel target = $region3
  $region8: #{wnet_forward.68} parent=0 // loop_exit
    _

// kernel: wnet_forward.66
$region0: #{wnet_forward.66}
  #allocation0 [shape = 'u32[]', space=smem, size = 0x4, offset = 0x4, fixed_abs, tag = 'smem constant byte address 0x4 - core index']
  #allocation1 [shape = 'u32[72,128]{1,0:T(1,128)}', space=vmem, size = 0x9000, scoped, tag = 'internal scratch']
  #allocation2 [shape = 'f32[4,256]{1,0:T(4,128)}', space=vmem, size = 0x1000, scoped, tag = 'scratch operand']
  %s0 = inlined_call_operand.vmem [shape: bf16[4,72], index: 0, kind: input, shape index: {}]
  %s1 = inlined_call_operand.vmem [shape: bf16[72,512], index: 1, kind: input, shape index: {}]
  %s2 = inlined_call_operand.vmem [shape: f32[4,1], index: 2, kind: input, shape index: {}]
  %s3 = inlined_call_operand.vmem [shape: bf16[4,512], index: 3, kind: output, shape index: {}]
  %s4 = sld [smem:[#allocation0]]
  $region91: #{wnet_forward.66} parent=0
    _
  %s6 = ssub.s32 1, %s4
  %s7 = scalar_select 0, %s6, %s4
  $region1: #{wnet_forward.66} parent=0
    #allocation3 [shape = 'u8[73728]{0}', space=vmem, size = 0x12000, scoped, tag = 'input window, operand 1']
    loop: start=0, step=1, limit=4
    $region2: #{wnet_forward.66} parent=1 // loop_pre_header
      _
    $region3: #{wnet_forward.66} parent=1 // loop_header
      %s9 = sphi 0, %s13
      %p10 = scmp.ge.s32.totalorder %s9, 4
      %s16 = sphi 0, %s35
      %s17 = sphi 0, %s31
      %s18 = sphi 0, %s27
      %s19 = sphi 0, %s16
      %s20 = sphi 0, %s17
      %s21 = sphi 0, %s18
      %s22 = sphi 0, %s19
      %s23 = sphi 0, %s20
      %s24 = sphi 0, %s21
      %s40 = sphi 0, %s42
      %s43 = sphi 0, %s40
      %s44 = sphi 0, %s43
      %s60 = sphi 0, %s44
      %s68 = sphi 0, %s70
      %s71 = sphi 0, %s68
      %s72 = sphi 0, %s71
      %s88 = sphi 0, %s72
      %s94 = sphi 0, %s96
      %s97 = sphi 0, %s94
      %s98 = sphi 0, %s97
      %s114 = sphi 0, %s98
      %s122 = sphi 0, %s124
      %s125 = sphi 0, %s122
      %s126 = sphi 0, %s125
      %s142 = sphi 0, %s126
    $region4: #{wnet_forward.66} parent=1 // loop_header_branch
      %12 = sbr.rel (%p10) target = $region8
    $region5: #{wnet_forward.66} parent=1 // loop_body
      %s14 = ssub.s32 %s9, 1
      %s15 = ssub.s32 %s9, 2
      %s25 = sadd.s32 1, %s18
      %p26 = scmp.ge.s32.totalorder %s25, 1
      %s27 = scalar_select %p26, 0, %s25
      %s28 = sadd.s32 1, %s17
      %s29 = scalar_select %p26, %s28, %s17
      %p30 = scmp.ge.s32.totalorder %s29, 2
      %s31 = scalar_select %p30, 0, %s29
      %s32 = sadd.s32 1, %s16
      %s33 = scalar_select %p30, %s32, %s16
      %p34 = scmp.ge.s32.totalorder %s33, 1
      %s35 = scalar_select %p34, 0, %s33
      %s36 = ssub.s32 %s16, %s35
      %s37 = ssub.s32 %s18, %s27
      %s38 = sor.u32 %s36, %s37
      %p39 = scmp.eq.s32.totalorder %s38, 0
      %s41 = sadd.s32 %s40, 1
      %s42 = scalar_select %p39, %s40, %s41
      %p45 = pneg %p39
      %p46 = scmp.eq.s32.totalorder %s9, 1
      %p47 = por %p45, %p46
      %p48 = scmp.ne.s32.totalorder %s40, %s43
      %p49 = scmp.eq.s32.totalorder %s9, 0
      %p50 = por %p48, %p49
      %p51 = scmp.ne.s32.totalorder %s40, %s43
      %p52 = scmp.eq.s32.totalorder %s14, 1
      %p53 = por %p51, %p52
      %p54 = scmp.ne.s32.totalorder %s43, %s44
      %p55 = scmp.eq.s32.totalorder %s14, 0
      %p56 = por %p54, %p55
      %p57 = scmp.ne.s32.totalorder %s43, %s44
      %p58 = scmp.eq.s32.totalorder %s15, 1
      %p59 = por %p57, %p58
      %p61 = scmp.ne.s32.totalorder %s44, %s60
      %p62 = scmp.eq.s32.totalorder %s15, 0
      %p63 = por %p61, %p62
      %s64 = ssub.s32 %s18, %s27
      %s65 = ssub.s32 %s17, %s31
      %s66 = sor.u32 %s64, %s65
      %p67 = scmp.eq.s32.totalorder %s66, 0
      %s69 = sadd.s32 %s68, 1
      %s70 = scalar_select %p67, %s68, %s69
      %p73 = pneg %p67
      %p74 = scmp.eq.s32.totalorder %s9, 1
      %p75 = por %p73, %p74
      %p76 = scmp.ne.s32.totalorder %s68, %s71
      %p77 = scmp.eq.s32.totalorder %s9, 0
      %p78 = por %p76, %p77
      %p79 = scmp.ne.s32.totalorder %s68, %s71
      %p80 = scmp.eq.s32.totalorder %s14, 1
      %p81 = por %p79, %p80
      %p82 = scmp.ne.s32.totalorder %s71, %s72
      %p83 = scmp.eq.s32.totalorder %s14, 0
      %p84 = por %p82, %p83
      %p85 = scmp.ne.s32.totalorder %s71, %s72
      %p86 = scmp.eq.s32.totalorder %s15, 1
      %p87 = por %p85, %p86
      %p89 = scmp.ne.s32.totalorder %s72, %s88
      %p90 = scmp.eq.s32.totalorder %s15, 0
      %p91 = por %p89, %p90
      %s92 = ssub.s32 %s16, %s35
      %p93 = scmp.eq.s32.totalorder %s92, 0
      %s95 = sadd.s32 %s94, 1
      %s96 = scalar_select %p93, %s94, %s95
      %p99 = pneg %p93
      %p100 = scmp.eq.s32.totalorder %s9, 1
      %p101 = por %p99, %p100
      %p102 = scmp.ne.s32.totalorder %s94, %s97
      %p103 = scmp.eq.s32.totalorder %s9, 0
      %p104 = por %p102, %p103
      %p105 = scmp.ne.s32.totalorder %s94, %s97
      %p106 = scmp.eq.s32.totalorder %s14, 1
      %p107 = por %p105, %p106
      %p108 = scmp.ne.s32.totalorder %s97, %s98
      %p109 = scmp.eq.s32.totalorder %s14, 0
      %p110 = por %p108, %p109
      %p111 = scmp.ne.s32.totalorder %s97, %s98
      %p112 = scmp.eq.s32.totalorder %s15, 1
      %p113 = por %p111, %p112
      %p115 = scmp.ne.s32.totalorder %s98, %s114
      %p116 = scmp.eq.s32.totalorder %s15, 0
      %p117 = por %p115, %p116
      %s118 = ssub.s32 %s16, %s35
      %s119 = ssub.s32 %s17, %s31
      %s120 = sor.u32 %s118, %s119
      %p121 = scmp.eq.s32.totalorder %s120, 0
      %s123 = sadd.s32 %s122, 1
      %s124 = scalar_select %p121, %s122, %s123
      %p127 = pneg %p121
      %p128 = scmp.eq.s32.totalorder %s9, 1
      %p129 = por %p127, %p128
      %p130 = scmp.ne.s32.totalorder %s122, %s125
      %p131 = scmp.eq.s32.totalorder %s9, 0
      %p132 = por %p130, %p131
      %p133 = scmp.ne.s32.totalorder %s122, %s125
      %p134 = scmp.eq.s32.totalorder %s14, 1
      %p135 = por %p133, %p134
      %p136 = scmp.ne.s32.totalorder %s125, %s126
      %p137 = scmp.eq.s32.totalorder %s14, 0
      %p138 = por %p136, %p137
      %p139 = scmp.ne.s32.totalorder %s125, %s126
      %p140 = scmp.eq.s32.totalorder %s15, 1
      %p141 = por %p139, %p140
      %p143 = scmp.ne.s32.totalorder %s126, %s142
      %p144 = scmp.eq.s32.totalorder %s15, 0
      %p145 = por %p143, %p144
      %p146 = scmp.le.s32.totalorder 1, %s9
      %p147 = scmp.lt.s32.totalorder %s9, 3
      %p148 = pnand %p146, %p147
      %p149 = pneg %p148
      // Predicated region
      $region9: #{wnet_forward.66} parent=5 // pred_check
        _
      $region10: #{wnet_forward.66} parent=5 // pred_check_branch
        %151 = sbr.rel (%p148) target = $region12
      $region11: #{wnet_forward.66} parent=5 // pred_region
        %s152 = ssub.s32 %s9, 1
        // Predicated region
        $region13: #{wnet_forward.66} parent=11 // pred_check
          %p153 = pneg %p56
        $region14: #{wnet_forward.66} parent=11 // pred_check_branch
          %155 = sbr.rel (%p153) target = $region16
        $region15: #{wnet_forward.66} parent=11 // pred_region
          %p156 = scmp.lt.s32.totalorder %s19, 0
          %s157 = scalar_select %p156, %s19, 0
          %p158 = scmp.lt.s32.totalorder %s21, 0
          %s159 = scalar_select %p158, %s21, 0
          %s160 = sadd.s32 %s159, %s157
          %s161 = smul.addr %s160, 2
          %s162 = scalar_lea.vmem %s0, %s161
        $region16: #{wnet_forward.66} parent=11 // pred_fallthru
          _
        // Predicated region
        $region17: #{wnet_forward.66} parent=11 // pred_check
          %p163 = pneg %p110
        $region18: #{wnet_forward.66} parent=11 // pred_check_branch
          %165 = sbr.rel (%p163) target = $region20
        $region19: #{wnet_forward.66} parent=11 // pred_region
          %p166 = scmp.lt.s32.totalorder %s19, 0
          %s167 = scalar_select %p166, %s19, 0
          %s168 = smul.addr %s167, 4
          %s169 = scalar_lea.vmem %s2, %s168
        $region20: #{wnet_forward.66} parent=11 // pred_fallthru
          _
      $region12: #{wnet_forward.66} parent=5 // pred_fallthru
        _
      %p170 = scmp.lt.s32.totalorder %s9, 2
      // Predicated region
      $region21: #{wnet_forward.66} parent=5 // pred_check
        %p171 = pneg %p170
      $region22: #{wnet_forward.66} parent=5 // pred_check_branch
        %173 = sbr.rel (%p171) target = $region24
      $region23: #{wnet_forward.66} parent=5 // pred_region
        // Predicated region
        $region25: #{wnet_forward.66} parent=23 // pred_check
          %p174 = pneg %p78
        $region26: #{wnet_forward.66} parent=23 // pred_check_branch
          %176 = sbr.rel (%p174) target = $region28
        $region27: #{wnet_forward.66} parent=23 // pred_region
          %s177 = sand.u32 %s68, 1
          %s178 = sand.u32 %s68, 1
          %s179 = smul.addr %s178, 72
          %s180 = scalar_lea.vmem [#allocation3], %s179
          %s181 = smul.u32 9, %s18
          %s182 = smul.u32 2, %s17
          %s183 = smul.addr %s181, 4
          %s184 = sadd.s32 %s182, %s183
          %s185 = smul.addr %s184, 4
          %s186 = scalar_lea.vmem %s1, %s185
          // Predicated region
          $region29: #{wnet_forward.66} parent=27 // pred_check
            _
          $region30: #{wnet_forward.66} parent=27 // pred_check_branch
            %188 = sbr.rel (0) target = $region32
          $region31: #{wnet_forward.66} parent=27 // pred_region
            // Predicated region
            $region33: #{wnet_forward.66} parent=31 // pred_check
              _
            $region34: #{wnet_forward.66} parent=31 // pred_check_branch
              %190 = sbr.rel (0) target = $region36
            $region35: #{wnet_forward.66} parent=31 // pred_region
              // Predicated region
              $region48: #{wnet_forward.66} parent=35 // pred_check
                _
              $region49: #{wnet_forward.66} parent=35 // pred_check_branch
                %222 = sbr.rel (0) target = $region51
              $region50: #{wnet_forward.66} parent=35 // pred_region
                loop: start=0, step=1, limit=1
                $region52: #{wnet_forward.66} parent=50 // loop_pre_header
                  _
                $region53: #{wnet_forward.66} parent=50 // loop_header
                  %s224 = sphi 0, %s228
                  %p225 = scmp.ge.s32.totalorder %s224, 1
                  %s229 = sphi %s186, %s186
                  %s230 = sphi %s180, %s180
                $region54: #{wnet_forward.66} parent=50 // loop_header_branch
                  %227 = sbr.rel (%p225) target = $region58
                $region55: #{wnet_forward.66} parent=50 // loop_body
                  %v231 = vld [vmem:[%s229] sm:$0xff]
                  %232 = vst [vmem:[%s230] sm:$0xff] %v231
                  %v233 = vld [vmem:[%s229 + $0x10] sm:$0xff]
                  %234 = vst [vmem:[%s230 + $0x8] sm:$0xff] %v233
                  %v235 = vld [vmem:[%s229 + $0x20] sm:$0xff]
                  %236 = vst [vmem:[%s230 + $0x10] sm:$0xff] %v235
                  %v237 = vld [vmem:[%s229 + $0x30] sm:$0xff]
                  %238 = vst [vmem:[%s230 + $0x18] sm:$0xff] %v237
                  %v239 = vld [vmem:[%s229 + $0x40] sm:$0xff]
                  %240 = vst [vmem:[%s230 + $0x20] sm:$0xff] %v239
                  %v241 = vld [vmem:[%s229 + $0x50] sm:$0xff]
                  %242 = vst [vmem:[%s230 + $0x28] sm:$0xff] %v241
                  %v243 = vld [vmem:[%s229 + $0x60] sm:$0xff]
                  %244 = vst [vmem:[%s230 + $0x30] sm:$0xff] %v243
                  %v245 = vld [vmem:[%s229 + $0x70] sm:$0xff]
                  %246 = vst [vmem:[%s230 + $0x38] sm:$0xff] %v245
                  %v247 = vld [vmem:[%s229 + $0x80] sm:$0xff]
                  %248 = vst [vmem:[%s230 + $0x40] sm:$0xff] %v247
                $region56: #{wnet_forward.66} parent=50 // loop_footer
                  %s228 = sadd.s32 1, %s224
                $region57: #{wnet_forward.66} parent=50 // loop_footer_branch
                  %223 = sbr.rel target = $region53
                $region58: #{wnet_forward.66} parent=50 // loop_exit
                  _
              $region51: #{wnet_forward.66} parent=35 // pred_fallthru
                _
              // Predicated region
              $region59: #{wnet_forward.66} parent=35 // pred_check
                _
              $region60: #{wnet_forward.66} parent=35 // pred_check_branch
                %250 = sbr.rel target = $region62
              $region61: #{wnet_forward.66} parent=35 // pred_region
                _
              $region62: #{wnet_forward.66} parent=35 // pred_fallthru
                _
            $region36: #{wnet_forward.66} parent=31 // pred_fallthru
              _
            // Predicated region
            $region37: #{wnet_forward.66} parent=31 // pred_check
              _
            $region38: #{wnet_forward.66} parent=31 // pred_check_branch
              %192 = sbr.rel target = $region40
            $region39: #{wnet_forward.66} parent=31 // pred_region
              %s194 = ssub.s32 256, 1
              loop: start=0, step=1, limit=1
              $region41: #{wnet_forward.66} parent=39 // loop_pre_header
                _
              $region42: #{wnet_forward.66} parent=39 // loop_header
                %s196 = sphi 0, %s200
                %p197 = scmp.ge.s32.totalorder %s196, 1
                %s201 = sphi %s186, %s186
                %s202 = sphi %s180, %s180
              $region43: #{wnet_forward.66} parent=39 // loop_header_branch
                %199 = sbr.rel (%p197) target = $region47
              $region44: #{wnet_forward.66} parent=39 // loop_body
                %v203 = vld [vmem:[%s201] sm:%s194]
                %204 = vst [vmem:[%s202] sm:%s194] %v203
                %v205 = vld [vmem:[%s201 + $0x10] sm:%s194]
                %206 = vst [vmem:[%s202 + $0x8] sm:%s194] %v205
                %v207 = vld [vmem:[%s201 + $0x20] sm:%s194]
                %208 = vst [vmem:[%s202 + $0x10] sm:%s194] %v207
                %v209 = vld [vmem:[%s201 + $0x30] sm:%s194]
                %210 = vst [vmem:[%s202 + $0x18] sm:%s194] %v209
                %v211 = vld [vmem:[%s201 + $0x40] sm:%s194]
                %212 = vst [vmem:[%s202 + $0x20] sm:%s194] %v211
                %v213 = vld [vmem:[%s201 + $0x50] sm:%s194]
                %214 = vst [vmem:[%s202 + $0x28] sm:%s194] %v213
                %v215 = vld [vmem:[%s201 + $0x60] sm:%s194]
                %216 = vst [vmem:[%s202 + $0x30] sm:%s194] %v215
                %v217 = vld [vmem:[%s201 + $0x70] sm:%s194]
                %218 = vst [vmem:[%s202 + $0x38] sm:%s194] %v217
                %v219 = vld [vmem:[%s201 + $0x80] sm:%s194]
                %220 = vst [vmem:[%s202 + $0x40] sm:%s194] %v219
              $region45: #{wnet_forward.66} parent=39 // loop_footer
                %s200 = sadd.s32 1, %s196
              $region46: #{wnet_forward.66} parent=39 // loop_footer_branch
                %195 = sbr.rel target = $region42
              $region47: #{wnet_forward.66} parent=39 // loop_exit
                _
            $region40: #{wnet_forward.66} parent=31 // pred_fallthru
              _
          $region32: #{wnet_forward.66} parent=27 // pred_fallthru
            _
          %251 = vnop
        $region28: #{wnet_forward.66} parent=23 // pred_fallthru
          _
      $region24: #{wnet_forward.66} parent=5 // pred_fallthru
        _
      %p252 = scmp.le.s32.totalorder 1, %s9
      %p253 = scmp.lt.s32.totalorder %s9, 3
      %p254 = pnand %p252, %p253
      %p255 = pneg %p254
      // Predicated region
      $region63: #{wnet_forward.66} parent=5 // pred_check
        _
      $region64: #{wnet_forward.66} parent=5 // pred_check_branch
        %257 = sbr.rel (%p254) target = $region66
      $region65: #{wnet_forward.66} parent=5 // pred_region
        %s258 = ssub.s32 %s9, 1
        %s259 = sand.u32 %s71, 1
        %s260 = sand.u32 %s71, 1
        %s261 = smul.addr %s260, 72
        %s262 = scalar_lea.vmem [#allocation3], %s261
        // Predicated region
        $region67: #{wnet_forward.66} parent=65 // pred_check
          %p263 = pneg %p84
        $region68: #{wnet_forward.66} parent=65 // pred_check_branch
          %265 = sbr.rel (%p263) target = $region70
        $region69: #{wnet_forward.66} parent=65 // pred_region
          _
        $region70: #{wnet_forward.66} parent=65 // pred_fallthru
          _
        %p266 = scmp.lt.s32.totalorder %s19, 0
        %s267 = scalar_select %p266, %s19, 0
        %p268 = scmp.lt.s32.totalorder %s21, 0
        %s269 = scalar_select %p268, %s21, 0
        %s270 = sadd.s32 %s269, %s267
        %s271 = smul.addr %s270, 2
        %s272 = scalar_lea.vmem %s0, %s271
        %p273 = pneg %p56
        %p274 = pneg %p53
        %s275 = sand.u32 %s71, 1
        %s276 = sand.u32 %s71, 1
        %s277 = smul.addr %s276, 72
        %s278 = scalar_lea.vmem [#allocation3], %s277
        %p279 = pneg %p84
        %p280 = pneg %p81
        %p281 = scmp.lt.s32.totalorder %s19, 0
        %s282 = scalar_select %p281, %s19, 0
        %s283 = smul.addr %s282, 4
        %s284 = scalar_lea.vmem %s2, %s283
        %p285 = pneg %p110
        %p286 = pneg %p107
        %p287 = pneg %p138
        %p288 = pneg %p135
        %s289 = smul.u32 2, %s20
        %p290 = scmp.lt.s32.totalorder %s19, 0
        %s291 = scalar_select %p290, %s19, 0
        %p292 = scmp.lt.s32.totalorder %s289, 3
        %s293 = scalar_select %p292, %s289, 3
        %s294 = smul.addr %s291, 4
        %s295 = sadd.s32 %s293, %s294
        %s296 = smul.addr %s295, 2
        %s297 = scalar_lea.vmem %s3, %s296
        %p298 = scmp.lt.s32.totalorder %s19, 0
        %s299 = scalar_select %p298, %s19, 0
        %p300 = scmp.lt.s32.totalorder %s21, 0
        %s301 = scalar_select %p300, %s21, 0
        %s302 = sadd.s32 %s301, %s299
        %s303 = smul.addr %s302, 2
        %s304 = scalar_lea.vmem %s0, %s303
        %s305 = smul.u32 9, %s21
        %s306 = smul.u32 2, %s20
        %p307 = scmp.lt.s32.totalorder %s19, 0
        %s308 = scalar_select %p307, %s19, 0
        %s309 = smul.addr %s308, 4
        %s310 = scalar_lea.vmem %s2, %s309
        %s311 = smul.u32 2, %s20
        %p312 = scmp.lt.s32.totalorder %s19, 0
        %s313 = scalar_select %p312, %s19, 0
        %p314 = scmp.lt.s32.totalorder %s311, 3
        %s315 = scalar_select %p314, %s311, 3
        %s316 = smul.addr %s313, 4
        %s317 = sadd.s32 %s315, %s316
        %s318 = smul.addr %s317, 2
        %s319 = scalar_lea.vmem %s3, %s318
        %s320 = smul.u32 2, %s20
        %p322 = scmp.eq.s32.totalorder %s21, 0
        // Predicated region
        $region71: #{wnet_forward.66} parent=65 // pred_check
          %p323 = pneg %p322
        $region72: #{wnet_forward.66} parent=65 // pred_check_branch
          %325 = sbr.rel (%p323) target = $region74
        $region73: #{wnet_forward.66} parent=65 // pred_region
          %326 = vst [vmem:[#allocation2] sm:$0xff] 0.0
        $region74: #{wnet_forward.66} parent=65 // pred_fallthru
          _
        %v327 = vld [vmem:[#allocation2] sm:$0xff]
        %v328 = vld [vmem:[%s304] sm:$0x3]
        %v329 = vld [vmem:[%s262] sm:$0xff]
        %v330 = vld [vmem:[%s262 + $0x8] sm:$0xff]
        %v331 = vld [vmem:[%s262 + $0x10] sm:$0xff]
        %v332 = vld [vmem:[%s262 + $0x18] sm:$0xff]
        %v333 = vld [vmem:[%s262 + $0x20] sm:$0xff]
        %v334 = vld [vmem:[%s262 + $0x28] sm:$0xff]
        %v335 = vld [vmem:[%s262 + $0x30] sm:$0xff]
        %v336 = vld [vmem:[%s262 + $0x38] sm:$0xff]
        %v337 = vld [vmem:[%s262 + $0x40] sm:$0xff]
        %v347 = vunpack.c.l.b16 %v329
        %v348 = vunpack.c.h.b16 %v329
        %v349 = vunpack.c.l.b16 %v330
        %v350 = vunpack.c.h.b16 %v330
        %v351 = vunpack.c.l.b16 %v331
        %v352 = vunpack.c.h.b16 %v331
        %v353 = vunpack.c.l.b16 %v332
        %v354 = vunpack.c.h.b16 %v332
        %v355 = vunpack.c.l.b16 %v333
        %v356 = vunpack.c.h.b16 %v333
        %v357 = vunpack.c.l.b16 %v334
        %v358 = vunpack.c.h.b16 %v334
        %v359 = vunpack.c.l.b16 %v335
        %v360 = vunpack.c.h.b16 %v335
        %v361 = vunpack.c.l.b16 %v336
        %v362 = vunpack.c.h.b16 %v336
        %v363 = vunpack.c.l.b16 %v337
        %v364 = vunpack.c.h.b16 %v337
        %v365 = vpack.c.b16 %v349, %v347
        %v366 = vpack.c.b16 %v350, %v348
        %v367 = vpack.c.b16 %v353, %v351
        %v368 = vpack.c.b16 %v354, %v352
        %v369 = vpack.c.b16 %v357, %v355
        %v370 = vpack.c.b16 %v358, %v356
        %v371 = vpack.c.b16 %v361, %v359
        %v372 = vpack.c.b16 %v362, %v360
        %v373 = vpack.c.b16 %v363, %v363
        %v374 = vpack.c.b16 %v364, %v364
        %vm383 = vcmask 588800
        %v385 = vsel %vm383, %v328, 0
        %vm387 = vcmask 1043456
        %v389 = vsel %vm387, %v373, 0
        %v392 = vsel %vm387, %v374, 0
        %394 = vmatpush.bf16.msra.mxu0 0
        %395 = vmatpush.bf16.msra.mxu0 0
        %396 = vmatpush.bf16.msra.mxu0 0
        %397 = vmatpush.bf16.msra.mxu0 %v389
        %398 = vmatpush.bf16.msra.mxu0 %v371
        %399 = vmatpush.bf16.msra.mxu0 %v369
        %400 = vmatpush.bf16.msra.mxu0 %v367
        %401 = vmatpush.bf16.msra.mxu0 %v365
        %402 = vmatmul.bf16.gmra.mxu0 %v385
        %v403 = vpop.f32.mrf.mxu0
        %v404 = vadd.f32 0.0, %v403
        %v405 = vpop.f32.mrf.mxu0
        %406 = vdwg.mxu0
        %407 = vmatpush.bf16.msra.mxu0 0
        %408 = vmatpush.bf16.msra.mxu0 0
        %409 = vmatpush.bf16.msra.mxu0 0
        %410 = vmatpush.bf16.msra.mxu0 %v392
        %411 = vmatpush.bf16.msra.mxu0 %v372
        %412 = vmatpush.bf16.msra.mxu0 %v370
        %413 = vmatpush.bf16.msra.mxu0 %v368
        %414 = vmatpush.bf16.msra.mxu0 %v366
        %415 = vmatmul.bf16.gmra.mxu0 %v385
        %v416 = vpop.f32.mrf.mxu0
        %v417 = vadd.f32 0.0, %v416
        %v418 = vpop.f32.mrf.mxu0
        %419 = vdwg.mxu0
        %v422 = vrot.slane %v417, 4
        %v423 = vsel %vm387, %v404, %v422
        %v425 = vadd.f32 %v327, %v423
        %426 = vst [vmem:[#allocation2] sm:$0xff] %v425
        // Predicated region
        $region75: #{wnet_forward.66} parent=65 // pred_check
          %p427 = pneg %p322
        $region76: #{wnet_forward.66} parent=65 // pred_check_branch
          %429 = sbr.rel (%p427) target = $region78
        $region77: #{wnet_forward.66} parent=65 // pred_region
          %v430 = vld [vmem:[#allocation2] sm:$0xff]
          %v431 = vld [vmem:[%s310] sm:$0xf]
          %433 = vset.pattern.permute.xlu0 0
          %434 = vperm.xlu0 %433, %v431
          %v435 = vpop.permute.xlu0 %434
          %v437 = vunpack.c.l.s4 839922192
          %v438 = vunpack.c.0.s8 %v437
          %v439 = vperm.slane %v435, %v438
          %v441 = vadd.f32 %v430, %v439
          %v442 = vmax.f32 %v441, 0.0
          %444 = vst [vmem:[#allocation1] ss:$2 sm:$0xff] %v442
          %v445 = vld.sshfl [vmem:[#allocation1] sm:$0xff pattern:$0x75316420]
          %v446 = vld.sshfl [vmem:[#allocation1 + $0x8] sm:$0xff pattern:$0x75316420]
          %v449 = vpack.c.bf16 %v446, %v445
          %v451 = vrot.slane %v449, 2
          %vm452 = vcmask 1041408
          %v455 = vsel %vm452, %v449, %v451
          %457 = vst [vmem:[%s319] sm:$0xf] %v455
        $region78: #{wnet_forward.66} parent=65 // pred_fallthru
          _
        %s458 = smul.u32 2, %s20
        %p459 = scmp.lt.s32.totalorder %s19, 0
        %s460 = scalar_select %p459, %s19, 0
        %p461 = scmp.lt.s32.totalorder %s458, 3
        %s462 = scalar_select %p461, %s458, 3
        %s463 = smul.addr %s460, 4
        %s464 = sadd.s32 %s462, %s463
        %s465 = smul.addr %s464, 2
        %s466 = scalar_lea.vmem %s3, %s465
        // Predicated region
        $region79: #{wnet_forward.66} parent=65 // pred_check
          %p467 = pneg %p135
        $region80: #{wnet_forward.66} parent=65 // pred_check_branch
          %469 = sbr.rel (%p467) target = $region82
        $region81: #{wnet_forward.66} parent=65 // pred_region
          %s470 = smul.u32 2, %s20
        $region82: #{wnet_forward.66} parent=65 // pred_fallthru
          _
      $region66: #{wnet_forward.66} parent=5 // pred_fallthru
        _
      %p471 = scmp.le.s32.totalorder 2, %s9
      // Predicated region
      $region83: #{wnet_forward.66} parent=5 // pred_check
        %p472 = pneg %p471
      $region84: #{wnet_forward.66} parent=5 // pred_check_branch
        %474 = sbr.rel (%p472) target = $region86
      $region85: #{wnet_forward.66} parent=5 // pred_region
        %s475 = ssub.s32 %s9, 2
        // Predicated region
        $region87: #{wnet_forward.66} parent=85 // pred_check
          %p476 = pneg %p141
        $region88: #{wnet_forward.66} parent=85 // pred_check_branch
          %478 = sbr.rel (%p476) target = $region90
        $region89: #{wnet_forward.66} parent=85 // pred_region
          %s479 = smul.u32 2, %s23
          %p480 = scmp.lt.s32.totalorder %s22, 0
          %s481 = scalar_select %p480, %s22, 0
          %p482 = scmp.lt.s32.totalorder %s479, 3
          %s483 = scalar_select %p482, %s479, 3
          %s484 = smul.addr %s481, 4
          %s485 = sadd.s32 %s483, %s484
          %s486 = smul.addr %s485, 2
          %s487 = scalar_lea.vmem %s3, %s486
        $region90: #{wnet_forward.66} parent=85 // pred_fallthru
          _
      $region86: #{wnet_forward.66} parent=5 // pred_fallthru
        _
    $region6: #{wnet_forward.66} parent=1 // loop_footer
      %s13 = sadd.s32 1, %s9
    $region7: #{wnet_forward.66} parent=1 // loop_footer_branch
      %8 = sbr.rel target = $region3
    $region8: #{wnet_forward.66} parent=1 // loop_exit
      _

</llo_original>
